<compile_context>
chip_gen: v7x
topology: tpu7x:2x2x1
jax: 0.10.0
libtpu: 0.0.40
codegen_flags: <defaults>
</compile_context>

<pallas_src>
import functools

import jax
import jax.numpy as jnp
from jax import lax
from jax.experimental import pallas as pl
from jax.experimental.pallas import tpu as pltpu

EPS = 1e-5  # nn.BatchNorm2d default eps


def _round_up(x, m):
    return (x + m - 1) // m * m


def _vmem_limit_bytes():
    """VMEM scoped limit: ~3/4 of physical, capped at 96 MiB (48 MiB fallback)."""
    cap = None
    try:
        cap = getattr(pltpu.get_tpu_info(), "vmem_capacity_bytes", None)
        if cap is not None:
            cap = int(cap)
    except Exception:
        cap = None
    if not cap:
        return 48 * 1024 * 1024          # safe on every generation (<= 64 MiB v7x)
    return int(min(cap * 3 // 4, 96 * 1024 * 1024))


def _make_conv_stats_kernel(nb, h_out, w_out, c_in, k, stride, c_p):
    """Phase 1: fused im2col conv (K*K shifted-window MXU matmuls) + BN stats."""
    rows = nb * h_out * w_out

    def kernel(x_ref, w_ref, y_ref, sum_ref, sumsq_ref):
        # x_ref: (nb, Hp, Wp, C_in)  zero-padded NHWC activations (bf16)
        # w_ref: (K*K, C_in, C_p)    tap-major weights (bf16)
        @pl.when(pl.program_id(1) == 0)
        def _():
            sum_ref[...] = jnp.zeros_like(sum_ref)
            sumsq_ref[...] = jnp.zeros_like(sumsq_ref)

        acc = jnp.zeros((rows, c_p), jnp.float32)
        for t in range(k * k):
            ki, kj = t // k, t % k
            if stride == 1:
                hsl, wsl = pl.ds(ki, h_out), pl.ds(kj, w_out)
            else:
                hsl, wsl = pl.ds(ki, h_out, stride), pl.ds(kj, w_out, stride)
            xw = x_ref[:, hsl, wsl, :].reshape(rows, c_in)
            acc = acc + jnp.dot(xw, w_ref[t],
                                preferred_element_type=jnp.float32)

        y_ref[...] = acc.astype(y_ref.dtype)          # bf16 intermediate store
        sum_ref[...] += jnp.sum(acc, axis=0).reshape(1, 1, c_p)
        sumsq_ref[...] += jnp.sum(acc * acc, axis=0).reshape(1, 1, c_p)

    return kernel


def _bn_relu_kernel(y_ref, scale_ref, shift_ref, o_ref):
    """Phase 2: folded BN (y*scale + shift) then ReLU; cast folded into store."""
    y = y_ref[...].astype(jnp.float32)
    o_ref[...] = jnp.maximum(y * scale_ref[...] + shift_ref[...], 0.0
                             ).astype(o_ref.dtype)


def conv_bn_act(x, weight, gamma, beta, *, stride=1, padding=1, eps=EPS,
                target_rows=1024, target_rows_phase2=4096):
    N, C_in, H, W = x.shape
    C_out, _, K, _ = weight.shape
    H_out = (H + 2 * padding - K) // stride + 1
    W_out = (W + 2 * padding - K) // stride + 1
    rpi = H_out * W_out                       # output rows per image
    M = N * rpi

    # ---- tiling choices ----------------------------------------------------
    # Images per phase-1 grid step: aim for >= target_rows output rows per step
    # (>=512 rows reaches ~85% of HBM BW), keeping nb a divisor of N so the
    # batch never needs padding.
    nb = max(1, min(N, -(-target_rows // rpi)))
    while N % nb:
        nb -= 1
    rows = nb * rpi
    grid_m = N // nb
    # Keep the M tile 8-row aligned unless it is the whole array.
    if grid_m > 1 and rows % 8 != 0:
        nb, rows, grid_m = N, M, 1

    # Leading "parallel" axis of 2 gives v7x's two TensorCores independent
    # halves of the M tiles (statistics become per-core partials).
    nsplit = 2 if (grid_m >= 2 and grid_m % 2 == 0) else 1
    grid_i = grid_m // nsplit

    # Lane padding: 128 minimum; 256 when C_out >= 256 to fill the 256-wide MXU
    # of v6e/v7x (simple_net channel counts >= 256 are multiples of 256).
    align = 256 if C_out >= 256 else 128
    C_p = _round_up(C_out, align)

    vmem_limit = _vmem_limit_bytes()

    # ---- operand prep: single pass each, bf16 BEFORE padding ----------------
    Hp, Wp = H + 2 * padding, W + 2 * padding
    x_nhwc = jnp.transpose(x, (0, 2, 3, 1)).astype(jnp.bfloat16)
    xp = jnp.pad(x_nhwc,
                 ((0, 0), (padding, padding), (padding, padding), (0, 0)))
    # Tap-major weights: w_taps[ki*K+kj, ci, co] = weight[co, ci, ki, kj]
    w_taps = jnp.transpose(weight, (2, 3, 1, 0)).reshape(K * K, C_in, C_out)
    w_taps = jnp.pad(w_taps, ((0, 0), (0, 0), (0, C_p - C_out))
                     ).astype(jnp.bfloat16)

    # ---- phase 1: fused conv + streaming sum / sumsq ------------------------
    kernel1 = _make_conv_stats_kernel(nb, H_out, W_out, C_in, K, stride, C_p)

    w_spec_kwargs = {}
    if w_taps.size * w_taps.dtype.itemsize > (2 << 20):
        # Grid-invariant multi-MiB weight block: don't double-buffer it.
        w_spec_kwargs = dict(pipeline_mode=pl.Buffered(1))
    w_spec = pl.BlockSpec((K * K, C_in, C_p), lambda s, i: (0, 0, 0),
                          **w_spec_kwargs)

    y_p, psum, psumsq = pl.pallas_call(
        kernel1,
        out_shape=(
            jax.ShapeDtypeStruct((M, C_p), jnp.bfloat16),         # conv output
            jax.ShapeDtypeStruct((nsplit, 1, C_p), jnp.float32),  # per-split sum
            jax.ShapeDtypeStruct((nsplit, 1, C_p), jnp.float32),  # per-split sumsq
        ),
        grid_spec=pl.GridSpec(
            grid=(nsplit, grid_i),
            in_specs=[
                pl.BlockSpec((nb, Hp, Wp, C_in),
                             lambda s, i: (s * grid_i + i, 0, 0, 0)),
                w_spec,
            ],
            out_specs=(
                pl.BlockSpec((rows, C_p), lambda s, i: (s * grid_i + i, 0)),
                pl.BlockSpec((1, 1, C_p), lambda s, i: (s, 0, 0)),  # resident acc
                pl.BlockSpec((1, 1, C_p), lambda s, i: (s, 0, 0)),  # resident acc
            ),
        ),
        compiler_params=pltpu.CompilerParams(
            dimension_semantics=("parallel", "arbitrary"),
            vmem_limit_bytes=vmem_limit),
    )(xp, w_taps)

    # ---- fold BN into a single scale/shift (tiny [1, C_p] math, f32) --------
    ch_sum = jnp.sum(psum, axis=0)        # (1, C_p)
    ch_sumsq = jnp.sum(psumsq, axis=0)    # (1, C_p)
    inv_m = jnp.float32(1.0 / M)
    mean = ch_sum * inv_m
    # TODO(synk): single-pass E[y^2]-E[y]^2 can lose precision when |mean|>>std;
    # switch to a compensated / Welford-style merge if such channels appear.
    var = jnp.maximum(ch_sumsq * inv_m - mean * mean, 0.0)   # biased (training)
    gamma_p = jnp.pad(gamma.astype(jnp.float32), (0, C_p - C_out)).reshape(1, C_p)
    beta_p = jnp.pad(beta.astype(jnp.float32), (0, C_p - C_out)).reshape(1, C_p)
    scale = gamma_p * lax.rsqrt(var + eps)
    shift = beta_p - mean * scale

    # ---- phase 2: normalize + ReLU with a larger tile (pure streaming) ------
    g = 1
    for c in range(1, grid_m + 1):
        if grid_m % c == 0 and c * rows <= target_rows_phase2:
            g = c
    tile2 = g * rows
    grid2 = grid_m // g

    out_p = pl.pallas_call(
        _bn_relu_kernel,
        out_shape=jax.ShapeDtypeStruct((M, C_p), x.dtype),
        grid_spec=pl.GridSpec(
            grid=(grid2,),
            in_specs=[
                pl.BlockSpec((tile2, C_p), lambda i: (i, 0)),
                pl.BlockSpec((1, C_p), lambda i: (0, 0)),   # grid-invariant scale
                pl.BlockSpec((1, C_p), lambda i: (0, 0)),   # grid-invariant shift
            ],
            out_specs=pl.BlockSpec((tile2, C_p), lambda i: (i, 0)),
        ),
        compiler_params=pltpu.CompilerParams(
            dimension_semantics=("parallel",),
            vmem_limit_bytes=vmem_limit),
    )(y_p, scale, shift)

    out = out_p[:, :C_out].reshape(N, H_out, W_out, C_out)
    # Module contract is NCHW output; NHWC consumers could read `out` directly
    # and skip this transpose.
    return jnp.transpose(out, (0, 3, 1, 2))


def _reference(x, weight, gamma, beta, *, stride=1, padding=1):
    y = lax.conv_general_dilated(
        x, weight, window_strides=(stride, stride),
        padding=[(padding, padding), (padding, padding)],
        dimension_numbers=("NCHW", "OIHW", "NCHW"))
    mean = y.mean(axis=(0, 2, 3), keepdims=True)
    var = jnp.square(y - mean).mean(axis=(0, 2, 3), keepdims=True)
    y_hat = (y - mean) * lax.rsqrt(var + EPS)
    out = y_hat * gamma.reshape(1, -1, 1, 1) + beta.reshape(1, -1, 1, 1)
    return jnp.maximum(out, 0.0)


if __name__ == "__main__":
    key = jax.random.PRNGKey(0)
    kx, kw = jax.random.split(key)

    # Small CIFAR-like shapes consistent with the module (NCHW input).
    N, C_in, H, W = 2, 4, 16, 16
    C_out, K, stride, padding = 8, 3, 1, 1

    x = jax.random.normal(kx, (N, C_in, H, W), dtype=jnp.float32)
    # Conv2d default init: U(-b, b), b = 1/sqrt(fan_in); bias=False.
    fan_in = C_in * K * K
    bound = 1.0 / (fan_in ** 0.5)
    weight = jax.random.uniform(kw, (C_out, C_in, K, K),
                                minval=-bound, maxval=bound, dtype=jnp.float32)
    gamma = jnp.ones((C_out,), jnp.float32)   # BatchNorm2d default weight
    beta = jnp.zeros((C_out,), jnp.float32)   # BatchNorm2d default bias

    fwd = jax.jit(functools.partial(conv_bn_act, stride=stride, padding=padding))
    y = fwd(x, weight, gamma, beta)
    jax.block_until_ready(y)

    assert y.shape == (N, C_out, H, W)
    y_ref = _reference(x, weight, gamma, beta, stride=stride, padding=padding)
    # bf16 MXU operands (f32 accumulation) => relaxed tolerance vs f32 reference.
    assert jnp.allclose(y, y_ref, atol=3e-2, rtol=3e-2), "mismatch vs reference"
    print("KERNEL_OK")
</pallas_src>

<mosaic_0001>
module attributes {stable_mosaic.version = 11 : i64} {
  func.func @_bn_relu_kernel(%arg0: i32, %arg1: memref<512x128xbf16, #tpu.memory_space<vmem>>, %arg2: memref<1x128xf32, #tpu.memory_space<vmem>>, %arg3: memref<1x128xf32, #tpu.memory_space<vmem>>, %arg4: memref<512x128xf32, #tpu.memory_space<vmem>>) attributes {dimension_semantics = [#tpu.dimension_semantics<parallel>], iteration_bounds = array<i64: 1>, scalar_prefetch = 0 : i64, scratch_operands = 0 : i64, tpu.core_type = #tpu.core_type<tc>, window_params = [{transform_indices = @transform_0, window_bounds = array<i64: 512, 128>}, {pipeline_mode = #tpu.pipeline_mode<synchronous>, transform_indices = @transform_1, window_bounds = array<i64: 1, 128>}, {pipeline_mode = #tpu.pipeline_mode<synchronous>, transform_indices = @transform_2, window_bounds = array<i64: 1, 128>}, {transform_indices = @transform_3, window_bounds = array<i64: 512, 128>}]} {
    %c0 = arith.constant 0 : index
    %c0_0 = arith.constant 0 : index
    %0 = vector.load %arg1[%c0, %c0_0] : memref<512x128xbf16, #tpu.memory_space<vmem>>, vector<512x128xbf16>
    %1 = arith.extf %0 : vector<512x128xbf16> to vector<512x128xf32>
    %c0_1 = arith.constant 0 : index
    %c0_2 = arith.constant 0 : index
    %2 = vector.load %arg2[%c0_1, %c0_2] : memref<1x128xf32, #tpu.memory_space<vmem>>, vector<1x128xf32>
    %3 = vector.broadcast %2 : vector<1x128xf32> to vector<512x128xf32>
    %4 = arith.mulf %1, %3 : vector<512x128xf32>
    %c0_3 = arith.constant 0 : index
    %c0_4 = arith.constant 0 : index
    %5 = vector.load %arg3[%c0_3, %c0_4] : memref<1x128xf32, #tpu.memory_space<vmem>>, vector<1x128xf32>
    %6 = vector.broadcast %5 : vector<1x128xf32> to vector<512x128xf32>
    %7 = arith.addf %4, %6 : vector<512x128xf32>
    %cst = arith.constant 0.000000e+00 : f32
    %8 = vector.broadcast %cst : f32 to vector<512x128xf32>
    %9 = arith.maximumf %7, %8 : vector<512x128xf32>
    %c0_5 = arith.constant 0 : index
    %c0_6 = arith.constant 0 : index
    %10 = vector.load %arg4[%c0_5, %c0_6] : memref<512x128xf32, #tpu.memory_space<vmem>>, vector<512x128xf32>
    tpu.vector_store %arg4[%c0_5, %c0_6], %9 {strides = array<i32>} : memref<512x128xf32, #tpu.memory_space<vmem>>, vector<512x128xf32>,
    return
  }
  func.func @transform_0(%arg0: i32) -> (i32, i32) {
    %c0_i32 = arith.constant 0 : i32
    %c0_i32_0 = arith.constant 0 : i32
    return %arg0, %c0_i32 : i32, i32
  }
  func.func @transform_1(%arg0: i32) -> (i32, i32) {
    %c0_i32 = arith.constant 0 : i32
    %c0_i32_0 = arith.constant 0 : i32
    %c0_i32_1 = arith.constant 0 : i32
    return %c0_i32, %c0_i32_0 : i32, i32
  }
  func.func @transform_2(%arg0: i32) -> (i32, i32) {
    %c0_i32 = arith.constant 0 : i32
    %c0_i32_0 = arith.constant 0 : i32
    %c0_i32_1 = arith.constant 0 : i32
    return %c0_i32, %c0_i32_0 : i32, i32
  }
  func.func @transform_3(%arg0: i32) -> (i32, i32) {
    %c0_i32 = arith.constant 0 : i32
    %c0_i32_0 = arith.constant 0 : i32
    return %arg0, %c0_i32 : i32, i32
  }
}

module attributes {stable_mosaic.version = 11 : i64} {
  func.func @kernel(%arg0: i32, %arg1: i32, %arg2: memref<2x18x18x4xbf16, #tpu.memory_space<vmem>>, %arg3: memref<9x4x128xbf16, #tpu.memory_space<vmem>>, %arg4: memref<512x128xbf16, #tpu.memory_space<vmem>>, %arg5: memref<1x1x128xf32, #tpu.memory_space<vmem>>, %arg6: memref<1x1x128xf32, #tpu.memory_space<vmem>>) attributes {dimension_semantics = [#tpu.dimension_semantics<parallel>, #tpu.dimension_semantics<arbitrary>], iteration_bounds = array<i64: 1, 1>, scalar_prefetch = 0 : i64, scratch_operands = 0 : i64, tpu.core_type = #tpu.core_type<tc>, window_params = [{transform_indices = @transform_0, window_bounds = array<i64: 2, 18, 18, 4>}, {pipeline_mode = #tpu.pipeline_mode<synchronous>, transform_indices = @transform_1, window_bounds = array<i64: 9, 4, 128>}, {transform_indices = @transform_2, window_bounds = array<i64: 512, 128>}, {transform_indices = @transform_3, window_bounds = array<i64: 1, 1, 128>}, {transform_indices = @transform_4, window_bounds = array<i64: 1, 1, 128>}]} {
    %c0_i32 = arith.constant 0 : i32
    %0 = arith.cmpi eq, %arg1, %c0_i32 : i32
    %1 = arith.extui %0 : i1 to i32
    %c0_i32_0 = arith.constant 0 : i32
    %2 = arith.cmpi ne, %1, %c0_i32_0 : i32
    scf.if %2 {
      %cst_80 = arith.constant 0.000000e+00 : f32
      %71 = vector.broadcast %cst_80 : f32 to vector<1x1x128xf32>
      %c0_81 = arith.constant 0 : index
      %c0_82 = arith.constant 0 : index
      %c0_83 = arith.constant 0 : index
      %72 = vector.load %arg5[%c0_81, %c0_82, %c0_83] : memref<1x1x128xf32, #tpu.memory_space<vmem>>, vector<1x1x128xf32>
      tpu.vector_store %arg5[%c0_81, %c0_82, %c0_83], %71 {strides = array<i32>} : memref<1x1x128xf32, #tpu.memory_space<vmem>>, vector<1x1x128xf32>,
      %cst_84 = arith.constant 0.000000e+00 : f32
      %73 = vector.broadcast %cst_84 : f32 to vector<1x1x128xf32>
      %c0_85 = arith.constant 0 : index
      %c0_86 = arith.constant 0 : index
      %c0_87 = arith.constant 0 : index
      %74 = vector.load %arg6[%c0_85, %c0_86, %c0_87] : memref<1x1x128xf32, #tpu.memory_space<vmem>>, vector<1x1x128xf32>
      tpu.vector_store %arg6[%c0_85, %c0_86, %c0_87], %73 {strides = array<i32>} : memref<1x1x128xf32, #tpu.memory_space<vmem>>, vector<1x1x128xf32>,
    } else {
    }
    %cst = arith.constant 0.000000e+00 : f32
    %3 = vector.broadcast %cst : f32 to vector<512x128xf32>
    %c0 = arith.constant 0 : index
    %c0_1 = arith.constant 0 : index
    %c0_2 = arith.constant 0 : index
    %c0_3 = arith.constant 0 : index
    %4 = vector.load %arg2[%c0, %c0_1, %c0_2, %c0_3] : memref<2x18x18x4xbf16, #tpu.memory_space<vmem>>, vector<2x16x16x4xbf16>
    %5 = vector.shape_cast %4 : vector<2x16x16x4xbf16> to vector<512x4xbf16>
    %c0_4 = arith.constant 0 : index
    %c0_5 = arith.constant 0 : index
    %c0_6 = arith.constant 0 : index
    %6 = vector.load %arg3[%c0_4, %c0_5, %c0_6] : memref<9x4x128xbf16, #tpu.memory_space<vmem>>, vector<1x4x128xbf16>
    %7 = vector.shape_cast %6 : vector<1x4x128xbf16> to vector<4x128xbf16>
    %cst_7 = arith.constant dense<0.000000e+00> : vector<512x128xf32>
    %8 = tpu.matmul %5, %7, %cst_7 {dimension_numbers = #tpu.dot_dimension_numbers<[1], [0], [0], [1], [0, 0, 1, 1], [], []>} : vector<512x4xbf16>, vector<4x128xbf16>, vector<512x128xf32> -> vector<512x128xf32>
    %9 = arith.addf %3, %8 : vector<512x128xf32>
    %c0_8 = arith.constant 0 : index
    %c0_9 = arith.constant 0 : index
    %c1 = arith.constant 1 : index
    %c0_10 = arith.constant 0 : index
    %10 = vector.load %arg2[%c0_8, %c0_9, %c1, %c0_10] : memref<2x18x18x4xbf16, #tpu.memory_space<vmem>>, vector<2x16x16x4xbf16>
    %11 = vector.shape_cast %10 : vector<2x16x16x4xbf16> to vector<512x4xbf16>
    %c1_11 = arith.constant 1 : index
    %c0_12 = arith.constant 0 : index
    %c0_13 = arith.constant 0 : index
    %12 = vector.load %arg3[%c1_11, %c0_12, %c0_13] : memref<9x4x128xbf16, #tpu.memory_space<vmem>>, vector<1x4x128xbf16>
    %13 = vector.shape_cast %12 : vector<1x4x128xbf16> to vector<4x128xbf16>
    %cst_14 = arith.constant dense<0.000000e+00> : vector<512x128xf32>
    %14 = tpu.matmul %11, %13, %cst_14 {dimension_numbers = #tpu.dot_dimension_numbers<[1], [0], [0], [1], [0, 0, 1, 1], [], []>} : vector<512x4xbf16>, vector<4x128xbf16>, vector<512x128xf32> -> vector<512x128xf32>
    %15 = arith.addf %9, %14 : vector<512x128xf32>
    %c0_15 = arith.constant 0 : index
    %c0_16 = arith.constant 0 : index
    %c2 = arith.constant 2 : index
    %c0_17 = arith.constant 0 : index
    %16 = vector.load %arg2[%c0_15, %c0_16, %c2, %c0_17] : memref<2x18x18x4xbf16, #tpu.memory_space<vmem>>, vector<2x16x16x4xbf16>
    %17 = vector.shape_cast %16 : vector<2x16x16x4xbf16> to vector<512x4xbf16>
    %c2_18 = arith.constant 2 : index
    %c0_19 = arith.constant 0 : index
    %c0_20 = arith.constant 0 : index
    %18 = vector.load %arg3[%c2_18, %c0_19, %c0_20] : memref<9x4x128xbf16, #tpu.memory_space<vmem>>, vector<1x4x128xbf16>
    %19 = vector.shape_cast %18 : vector<1x4x128xbf16> to vector<4x128xbf16>
    %cst_21 = arith.constant dense<0.000000e+00> : vector<512x128xf32>
    %20 = tpu.matmul %17, %19, %cst_21 {dimension_numbers = #tpu.dot_dimension_numbers<[1], [0], [0], [1], [0, 0, 1, 1], [], []>} : vector<512x4xbf16>, vector<4x128xbf16>, vector<512x128xf32> -> vector<512x128xf32>
    %21 = arith.addf %15, %20 : vector<512x128xf32>
    %c0_22 = arith.constant 0 : index
    %c1_23 = arith.constant 1 : index
    %c0_24 = arith.constant 0 : index
    %c0_25 = arith.constant 0 : index
    %22 = vector.load %arg2[%c0_22, %c1_23, %c0_24, %c0_25] : memref<2x18x18x4xbf16, #tpu.memory_space<vmem>>, vector<2x16x16x4xbf16>
    %23 = vector.shape_cast %22 : vector<2x16x16x4xbf16> to vector<512x4xbf16>
    %c3 = arith.constant 3 : index
    %c0_26 = arith.constant 0 : index
    %c0_27 = arith.constant 0 : index
    %24 = vector.load %arg3[%c3, %c0_26, %c0_27] : memref<9x4x128xbf16, #tpu.memory_space<vmem>>, vector<1x4x128xbf16>
    %25 = vector.shape_cast %24 : vector<1x4x128xbf16> to vector<4x128xbf16>
    %cst_28 = arith.constant dense<0.000000e+00> : vector<512x128xf32>
    %26 = tpu.matmul %23, %25, %cst_28 {dimension_numbers = #tpu.dot_dimension_numbers<[1], [0], [0], [1], [0, 0, 1, 1], [], []>} : vector<512x4xbf16>, vector<4x128xbf16>, vector<512x128xf32> -> vector<512x128xf32>
    %27 = arith.addf %21, %26 : vector<512x128xf32>
    %c0_29 = arith.constant 0 : index
    %c1_30 = arith.constant 1 : index
    %c1_31 = arith.constant 1 : index
    %c0_32 = arith.constant 0 : index
    %28 = vector.load %arg2[%c0_29, %c1_30, %c1_31, %c0_32] : memref<2x18x18x4xbf16, #tpu.memory_space<vmem>>, vector<2x16x16x4xbf16>
    %29 = vector.shape_cast %28 : vector<2x16x16x4xbf16> to vector<512x4xbf16>
    %c4 = arith.constant 4 : index
    %c0_33 = arith.constant 0 : index
    %c0_34 = arith.constant 0 : index
    %30 = vector.load %arg3[%c4, %c0_33, %c0_34] : memref<9x4x128xbf16, #tpu.memory_space<vmem>>, vector<1x4x128xbf16>
    %31 = vector.shape_cast %30 : vector<1x4x128xbf16> to vector<4x128xbf16>
    %cst_35 = arith.constant dense<0.000000e+00> : vector<512x128xf32>
    %32 = tpu.matmul %29, %31, %cst_35 {dimension_numbers = #tpu.dot_dimension_numbers<[1], [0], [0], [1], [0, 0, 1, 1], [], []>} : vector<512x4xbf16>, vector<4x128xbf16>, vector<512x128xf32> -> vector<512x128xf32>
    %33 = arith.addf %27, %32 : vector<512x128xf32>
    %c0_36 = arith.constant 0 : index
    %c1_37 = arith.constant 1 : index
    %c2_38 = arith.constant 2 : index
    %c0_39 = arith.constant 0 : index
    %34 = vector.load %arg2[%c0_36, %c1_37, %c2_38, %c0_39] : memref<2x18x18x4xbf16, #tpu.memory_space<vmem>>, vector<2x16x16x4xbf16>
    %35 = vector.shape_cast %34 : vector<2x16x16x4xbf16> to vector<512x4xbf16>
    %c5 = arith.constant 5 : index
    %c0_40 = arith.constant 0 : index
    %c0_41 = arith.constant 0 : index
    %36 = vector.load %arg3[%c5, %c0_40, %c0_41] : memref<9x4x128xbf16, #tpu.memory_space<vmem>>, vector<1x4x128xbf16>
    %37 = vector.shape_cast %36 : vector<1x4x128xbf16> to vector<4x128xbf16>
    %cst_42 = arith.constant dense<0.000000e+00> : vector<512x128xf32>
    %38 = tpu.matmul %35, %37, %cst_42 {dimension_numbers = #tpu.dot_dimension_numbers<[1], [0], [0], [1], [0, 0, 1, 1], [], []>} : vector<512x4xbf16>, vector<4x128xbf16>, vector<512x128xf32> -> vector<512x128xf32>
    %39 = arith.addf %33, %38 : vector<512x128xf32>
    %c0_43 = arith.constant 0 : index
    %c2_44 = arith.constant 2 : index
    %c0_45 = arith.constant 0 : index
    %c0_46 = arith.constant 0 : index
    %40 = vector.load %arg2[%c0_43, %c2_44, %c0_45, %c0_46] : memref<2x18x18x4xbf16, #tpu.memory_space<vmem>>, vector<2x16x16x4xbf16>
    %41 = vector.shape_cast %40 : vector<2x16x16x4xbf16> to vector<512x4xbf16>
    %c6 = arith.constant 6 : index
    %c0_47 = arith.constant 0 : index
    %c0_48 = arith.constant 0 : index
    %42 = vector.load %arg3[%c6, %c0_47, %c0_48] : memref<9x4x128xbf16, #tpu.memory_space<vmem>>, vector<1x4x128xbf16>
    %43 = vector.shape_cast %42 : vector<1x4x128xbf16> to vector<4x128xbf16>
    %cst_49 = arith.constant dense<0.000000e+00> : vector<512x128xf32>
    %44 = tpu.matmul %41, %43, %cst_49 {dimension_numbers = #tpu.dot_dimension_numbers<[1], [0], [0], [1], [0, 0, 1, 1], [], []>} : vector<512x4xbf16>, vector<4x128xbf16>, vector<512x128xf32> -> vector<512x128xf32>
    %45 = arith.addf %39, %44 : vector<512x128xf32>
    %c0_50 = arith.constant 0 : index
    %c2_51 = arith.constant 2 : index
    %c1_52 = arith.constant 1 : index
    %c0_53 = arith.constant 0 : index
    %46 = vector.load %arg2[%c0_50, %c2_51, %c1_52, %c0_53] : memref<2x18x18x4xbf16, #tpu.memory_space<vmem>>, vector<2x16x16x4xbf16>
    %47 = vector.shape_cast %46 : vector<2x16x16x4xbf16> to vector<512x4xbf16>
    %c7 = arith.constant 7 : index
    %c0_54 = arith.constant 0 : index
    %c0_55 = arith.constant 0 : index
    %48 = vector.load %arg3[%c7, %c0_54, %c0_55] : memref<9x4x128xbf16, #tpu.memory_space<vmem>>, vector<1x4x128xbf16>
    %49 = vector.shape_cast %48 : vector<1x4x128xbf16> to vector<4x128xbf16>
    %cst_56 = arith.constant dense<0.000000e+00> : vector<512x128xf32>
    %50 = tpu.matmul %47, %49, %cst_56 {dimension_numbers = #tpu.dot_dimension_numbers<[1], [0], [0], [1], [0, 0, 1, 1], [], []>} : vector<512x4xbf16>, vector<4x128xbf16>, vector<512x128xf32> -> vector<512x128xf32>
    %51 = arith.addf %45, %50 : vector<512x128xf32>
    %c0_57 = arith.constant 0 : index
    %c2_58 = arith.constant 2 : index
    %c2_59 = arith.constant 2 : index
    %c0_60 = arith.constant 0 : index
    %52 = vector.load %arg2[%c0_57, %c2_58, %c2_59, %c0_60] : memref<2x18x18x4xbf16, #tpu.memory_space<vmem>>, vector<2x16x16x4xbf16>
    %53 = vector.shape_cast %52 : vector<2x16x16x4xbf16> to vector<512x4xbf16>
    %c8 = arith.constant 8 : index
    %c0_61 = arith.constant 0 : index
    %c0_62 = arith.constant 0 : index
    %54 = vector.load %arg3[%c8, %c0_61, %c0_62] : memref<9x4x128xbf16, #tpu.memory_space<vmem>>, vector<1x4x128xbf16>
    %55 = vector.shape_cast %54 : vector<1x4x128xbf16> to vector<4x128xbf16>
    %cst_63 = arith.constant dense<0.000000e+00> : vector<512x128xf32>
    %56 = tpu.matmul %53, %55, %cst_63 {dimension_numbers = #tpu.dot_dimension_numbers<[1], [0], [0], [1], [0, 0, 1, 1], [], []>} : vector<512x4xbf16>, vector<4x128xbf16>, vector<512x128xf32> -> vector<512x128xf32>
    %57 = arith.addf %51, %56 : vector<512x128xf32>
    %58 = arith.truncf %57 : vector<512x128xf32> to vector<512x128xbf16>
    %c0_64 = arith.constant 0 : index
    %c0_65 = arith.constant 0 : index
    %59 = vector.load %arg4[%c0_64, %c0_65] : memref<512x128xbf16, #tpu.memory_space<vmem>>, vector<512x128xbf16>
    tpu.vector_store %arg4[%c0_64, %c0_65], %58 {strides = array<i32>} : memref<512x128xbf16, #tpu.memory_space<vmem>>, vector<512x128xbf16>,
    %c0_66 = arith.constant 0 : index
    %c0_67 = arith.constant 0 : index
    %c0_68 = arith.constant 0 : index
    %60 = vector.load %arg5[%c0_66, %c0_67, %c0_68] : memref<1x1x128xf32, #tpu.memory_space<vmem>>, vector<1x1x128xf32>
    %cst_69 = arith.constant dense<0.000000e+00> : vector<128xf32>
    %61 = vector.multi_reduction <add>, %57, %cst_69 [0] : vector<512x128xf32> to vector<128xf32>
    %62 = vector.shape_cast %61 : vector<128xf32> to vector<1x1x128xf32>
    %63 = arith.addf %60, %62 : vector<1x1x128xf32>
    %c0_70 = arith.constant 0 : index
    %c0_71 = arith.constant 0 : index
    %c0_72 = arith.constant 0 : index
    %64 = vector.load %arg5[%c0_70, %c0_71, %c0_72] : memref<1x1x128xf32, #tpu.memory_space<vmem>>, vector<1x1x128xf32>
    tpu.vector_store %arg5[%c0_70, %c0_71, %c0_72], %63 {strides = array<i32>} : memref<1x1x128xf32, #tpu.memory_space<vmem>>, vector<1x1x128xf32>,
    %c0_73 = arith.constant 0 : index
    %c0_74 = arith.constant 0 : index
    %c0_75 = arith.constant 0 : index
    %65 = vector.load %arg6[%c0_73, %c0_74, %c0_75] : memref<1x1x128xf32, #tpu.memory_space<vmem>>, vector<1x1x128xf32>
    %66 = arith.mulf %57, %57 : vector<512x128xf32>
    %cst_76 = arith.constant dense<0.000000e+00> : vector<128xf32>
    %67 = vector.multi_reduction <add>, %66, %cst_76 [0] : vector<512x128xf32> to vector<128xf32>
    %68 = vector.shape_cast %67 : vector<128xf32> to vector<1x1x128xf32>
    %69 = arith.addf %65, %68 : vector<1x1x128xf32>
    %c0_77 = arith.constant 0 : index
    %c0_78 = arith.constant 0 : index
    %c0_79 = arith.constant 0 : index
    %70 = vector.load %arg6[%c0_77, %c0_78, %c0_79] : memref<1x1x128xf32, #tpu.memory_space<vmem>>, vector<1x1x128xf32>
    tpu.vector_store %arg6[%c0_77, %c0_78, %c0_79], %69 {strides = array<i32>} : memref<1x1x128xf32, #tpu.memory_space<vmem>>, vector<1x1x128xf32>,
    return
  }
  func.func @transform_0(%arg0: i32, %arg1: i32) -> (i32, i32, i32, i32) {
    %c1_i32 = arith.constant 1 : i32
    %0 = arith.muli %arg0, %c1_i32 : i32
    %1 = arith.addi %0, %arg1 : i32
    %c0_i32 = arith.constant 0 : i32
    %c0_i32_0 = arith.constant 0 : i32
    %c0_i32_1 = arith.constant 0 : i32
    %c0_i32_2 = arith.constant 0 : i32
    return %1, %c0_i32, %c0_i32_0, %c0_i32_1 : i32, i32, i32, i32
  }
  func.func @transform_1(%arg0: i32, %arg1: i32) -> (i32, i32, i32) {
    %c0_i32 = arith.constant 0 : i32
    %c0_i32_0 = arith.constant 0 : i32
    %c0_i32_1 = arith.constant 0 : i32
    %c0_i32_2 = arith.constant 0 : i32
    return %c0_i32, %c0_i32_0, %c0_i32_1 : i32, i32, i32
  }
  func.func @transform_2(%arg0: i32, %arg1: i32) -> (i32, i32) {
    %c1_i32 = arith.constant 1 : i32
    %0 = arith.muli %arg0, %c1_i32 : i32
    %1 = arith.addi %0, %arg1 : i32
    %c0_i32 = arith.constant 0 : i32
    %c0_i32_0 = arith.constant 0 : i32
    return %1, %c0_i32 : i32, i32
  }
  func.func @transform_3(%arg0: i32, %arg1: i32) -> (i32, i32, i32) {
    %c0_i32 = arith.constant 0 : i32
    %c0_i32_0 = arith.constant 0 : i32
    %c0_i32_1 = arith.constant 0 : i32
    return %arg0, %c0_i32, %c0_i32_0 : i32, i32, i32
  }
  func.func @transform_4(%arg0: i32, %arg1: i32) -> (i32, i32, i32) {
    %c0_i32 = arith.constant 0 : i32
    %c0_i32_0 = arith.constant 0 : i32
    %c0_i32_1 = arith.constant 0 : i32
    return %arg0, %c0_i32, %c0_i32_0 : i32, i32, i32
  }
}

</mosaic_0001>

<llo_original>
// kernel: conv_bn_act.3
$region0: #{conv_bn_act.3}
  #allocation0 [shape = 'u32[]', space=smem, size = 0x4, offset = 0x4, fixed_abs, tag = 'smem constant byte address 0x4 - core index']
  #allocation1 [shape = 'u32[144,128]{1,0:T(1,128)}', space=vmem, size = 0x12000, scoped, tag = 'internal scratch']
  %s0 = inlined_call_operand.vmem [shape: bf16[512,128], index: 0, kind: input, shape index: {}]
  %s1 = inlined_call_operand.vmem [shape: f32[1,128], index: 1, kind: input, shape index: {}]
  %s2 = inlined_call_operand.vmem [shape: f32[1,128], index: 2, kind: input, shape index: {}]
  %s3 = inlined_call_operand.vmem [shape: f32[512,128], index: 3, kind: output, shape index: {}]
  %s4 = sld [smem:[#allocation0]]
  $region22: #{conv_bn_act.3} parent=0
    _
  %s6 = ssub.s32 1, %s4
  %s7 = scalar_select 0, %s6, %s4
  // Predicated region
  $region2: #{conv_bn_act.3} parent=0 // pred_check
    _
  $region3: #{conv_bn_act.3} parent=0 // pred_check_branch
    %9 = sbr.rel (0) target = $region5
  $region4: #{conv_bn_act.3} parent=0 // pred_region
    _
  $region5: #{conv_bn_act.3} parent=0 // pred_fallthru
    _
  // Predicated region
  $region6: #{conv_bn_act.3} parent=0 // pred_check
    _
  $region7: #{conv_bn_act.3} parent=0 // pred_check_branch
    %11 = sbr.rel (0) target = $region9
  $region8: #{conv_bn_act.3} parent=0 // pred_region
    _
  $region9: #{conv_bn_act.3} parent=0 // pred_fallthru
    _
  // Predicated region
  $region10: #{conv_bn_act.3} parent=0 // pred_check
    _
  $region11: #{conv_bn_act.3} parent=0 // pred_check_branch
    %13 = sbr.rel (0) target = $region13
  $region12: #{conv_bn_act.3} parent=0 // pred_region
    _
  $region13: #{conv_bn_act.3} parent=0 // pred_fallthru
    _
  %v14 = vld [vmem:[%s0] sm:$0xf]
  %v15 = vld [vmem:[%s0 + $0x4] sm:$0xf]
  %v16 = vld [vmem:[%s0 + $0x8] sm:$0xf]
  %v17 = vld [vmem:[%s0 + $0xc] sm:$0xf]
  %v18 = vld [vmem:[%s0 + $0x10] sm:$0xf]
  %v19 = vld [vmem:[%s0 + $0x14] sm:$0xf]
  %v20 = vld [vmem:[%s0 + $0x18] sm:$0xf]
  %v21 = vld [vmem:[%s0 + $0x1c] sm:$0xf]
  %v22 = vld [vmem:[%s0 + $0x20] sm:$0xf]
  %v23 = vld [vmem:[%s0 + $0x24] sm:$0xf]
  %v24 = vld [vmem:[%s0 + $0x28] sm:$0xf]
  %v25 = vld [vmem:[%s0 + $0x2c] sm:$0xf]
  %v26 = vld [vmem:[%s0 + $0x30] sm:$0xf]
  %v27 = vld [vmem:[%s0 + $0x34] sm:$0xf]
  %v28 = vld [vmem:[%s0 + $0x38] sm:$0xf]
  %v29 = vld [vmem:[%s0 + $0x3c] sm:$0xf]
  %v30 = vld [vmem:[%s0 + $0x40] sm:$0xf]
  %v31 = vld [vmem:[%s0 + $0x44] sm:$0xf]
  %v32 = vld [vmem:[%s0 + $0x48] sm:$0xf]
  %v33 = vld [vmem:[%s0 + $0x4c] sm:$0xf]
  %v34 = vld [vmem:[%s0 + $0x50] sm:$0xf]
  %v35 = vld [vmem:[%s0 + $0x54] sm:$0xf]
  %v36 = vld [vmem:[%s0 + $0x58] sm:$0xf]
  %v37 = vld [vmem:[%s0 + $0x5c] sm:$0xf]
  %v38 = vld [vmem:[%s0 + $0x60] sm:$0xf]
  %v39 = vld [vmem:[%s0 + $0x64] sm:$0xf]
  %v40 = vld [vmem:[%s0 + $0x68] sm:$0xf]
  %v41 = vld [vmem:[%s0 + $0x6c] sm:$0xf]
  %v42 = vld [vmem:[%s0 + $0x70] sm:$0xf]
  %v43 = vld [vmem:[%s0 + $0x74] sm:$0xf]
  %v44 = vld [vmem:[%s0 + $0x78] sm:$0xf]
  %v45 = vld [vmem:[%s0 + $0x7c] sm:$0xf]
  %v46 = vld [vmem:[%s0 + $0x80] sm:$0xf]
  %v47 = vld [vmem:[%s0 + $0x84] sm:$0xf]
  %v48 = vld [vmem:[%s0 + $0x88] sm:$0xf]
  %v49 = vld [vmem:[%s0 + $0x8c] sm:$0xf]
  %v50 = vld [vmem:[%s0 + $0x90] sm:$0xf]
  %v51 = vld [vmem:[%s0 + $0x94] sm:$0xf]
  %v52 = vld [vmem:[%s0 + $0x98] sm:$0xf]
  %v53 = vld [vmem:[%s0 + $0x9c] sm:$0xf]
  %v54 = vld [vmem:[%s0 + $0xa0] sm:$0xf]
  %v55 = vld [vmem:[%s0 + $0xa4] sm:$0xf]
  %v56 = vld [vmem:[%s0 + $0xa8] sm:$0xf]
  %v57 = vld [vmem:[%s0 + $0xac] sm:$0xf]
  %v58 = vld [vmem:[%s0 + $0xb0] sm:$0xf]
  %v59 = vld [vmem:[%s0 + $0xb4] sm:$0xf]
  %v60 = vld [vmem:[%s0 + $0xb8] sm:$0xf]
  %v61 = vld [vmem:[%s0 + $0xbc] sm:$0xf]
  %v62 = vld [vmem:[%s0 + $0xc0] sm:$0xf]
  %v63 = vld [vmem:[%s0 + $0xc4] sm:$0xf]
  %v64 = vld [vmem:[%s0 + $0xc8] sm:$0xf]
  %v65 = vld [vmem:[%s0 + $0xcc] sm:$0xf]
  %v66 = vld [vmem:[%s0 + $0xd0] sm:$0xf]
  %v67 = vld [vmem:[%s0 + $0xd4] sm:$0xf]
  %v68 = vld [vmem:[%s0 + $0xd8] sm:$0xf]
  %v69 = vld [vmem:[%s0 + $0xdc] sm:$0xf]
  %v70 = vld [vmem:[%s0 + $0xe0] sm:$0xf]
  %v71 = vld [vmem:[%s0 + $0xe4] sm:$0xf]
  %v72 = vld [vmem:[%s0 + $0xe8] sm:$0xf]
  %v73 = vld [vmem:[%s0 + $0xec] sm:$0xf]
  %v74 = vld [vmem:[%s0 + $0xf0] sm:$0xf]
  %v75 = vld [vmem:[%s0 + $0xf4] sm:$0xf]
  %v76 = vld [vmem:[%s0 + $0xf8] sm:$0xf]
  %v77 = vld [vmem:[%s0 + $0xfc] sm:$0xf]
  %v78 = vunpack.c.l.bf16 %v14
  %v79 = vunpack.c.l.bf16 %v15
  %v80 = vunpack.c.l.bf16 %v16
  %v81 = vunpack.c.l.bf16 %v17
  %v82 = vunpack.c.l.bf16 %v18
  %v83 = vunpack.c.l.bf16 %v19
  %v84 = vunpack.c.l.bf16 %v20
  %v85 = vunpack.c.l.bf16 %v21
  %v86 = vunpack.c.l.bf16 %v22
  %v87 = vunpack.c.l.bf16 %v23
  %v88 = vunpack.c.l.bf16 %v24
  %v89 = vunpack.c.l.bf16 %v25
  %v90 = vunpack.c.l.bf16 %v26
  %v91 = vunpack.c.l.bf16 %v27
  %v92 = vunpack.c.l.bf16 %v28
  %v93 = vunpack.c.l.bf16 %v29
  %v94 = vunpack.c.l.bf16 %v30
  %v95 = vunpack.c.l.bf16 %v31
  %v96 = vunpack.c.l.bf16 %v32
  %v97 = vunpack.c.l.bf16 %v33
  %v98 = vunpack.c.l.bf16 %v34
  %v99 = vunpack.c.l.bf16 %v35
  %v100 = vunpack.c.l.bf16 %v36
  %v101 = vunpack.c.l.bf16 %v37
  %v102 = vunpack.c.l.bf16 %v38
  %v103 = vunpack.c.l.bf16 %v39
  %v104 = vunpack.c.l.bf16 %v40
  %v105 = vunpack.c.l.bf16 %v41
  %v106 = vunpack.c.l.bf16 %v42
  %v107 = vunpack.c.l.bf16 %v43
  %v108 = vunpack.c.l.bf16 %v44
  %v109 = vunpack.c.l.bf16 %v45
  %v110 = vunpack.c.l.bf16 %v46
  %v111 = vunpack.c.l.bf16 %v47
  %v112 = vunpack.c.l.bf16 %v48
  %v113 = vunpack.c.l.bf16 %v49
  %v114 = vunpack.c.l.bf16 %v50
  %v115 = vunpack.c.l.bf16 %v51
  %v116 = vunpack.c.l.bf16 %v52
  %v117 = vunpack.c.l.bf16 %v53
  %v118 = vunpack.c.l.bf16 %v54
  %v119 = vunpack.c.l.bf16 %v55
  %v120 = vunpack.c.l.bf16 %v56
  %v121 = vunpack.c.l.bf16 %v57
  %v122 = vunpack.c.l.bf16 %v58
  %v123 = vunpack.c.l.bf16 %v59
  %v124 = vunpack.c.l.bf16 %v60
  %v125 = vunpack.c.l.bf16 %v61
  %v126 = vunpack.c.l.bf16 %v62
  %v127 = vunpack.c.l.bf16 %v63
  %v128 = vunpack.c.l.bf16 %v64
  %v129 = vunpack.c.l.bf16 %v65
  %v130 = vunpack.c.l.bf16 %v66
  %v131 = vunpack.c.l.bf16 %v67
  %v132 = vunpack.c.l.bf16 %v68
  %v133 = vunpack.c.l.bf16 %v69
  %v134 = vunpack.c.l.bf16 %v70
  %v135 = vunpack.c.l.bf16 %v71
  %v136 = vunpack.c.l.bf16 %v72
  %v137 = vunpack.c.l.bf16 %v73
  %v138 = vunpack.c.l.bf16 %v74
  %v139 = vunpack.c.l.bf16 %v75
  %v140 = vunpack.c.l.bf16 %v76
  %v141 = vunpack.c.l.bf16 %v77
  %v142 = vld [vmem:[%s1] sm:$0x1]
  %v144 = vlaneseq
  %v145 = vshrl.u32 %v144, 7
  %v146 = vsub.s32 0, %v145
  %v147 = vrot.slane %v142, %v146
  %v149 = vmul.f32 %v78, %v147
  %v150 = vmul.f32 %v79, %v147
  %v151 = vmul.f32 %v80, %v147
  %v152 = vmul.f32 %v81, %v147
  %v153 = vmul.f32 %v82, %v147
  %v154 = vmul.f32 %v83, %v147
  %v155 = vmul.f32 %v84, %v147
  %v156 = vmul.f32 %v85, %v147
  %v157 = vmul.f32 %v86, %v147
  %v158 = vmul.f32 %v87, %v147
  %v159 = vmul.f32 %v88, %v147
  %v160 = vmul.f32 %v89, %v147
  %v161 = vmul.f32 %v90, %v147
  %v162 = vmul.f32 %v91, %v147
  %v163 = vmul.f32 %v92, %v147
  %v164 = vmul.f32 %v93, %v147
  %v165 = vmul.f32 %v94, %v147
  %v166 = vmul.f32 %v95, %v147
  %v167 = vmul.f32 %v96, %v147
  %v168 = vmul.f32 %v97, %v147
  %v169 = vmul.f32 %v98, %v147
  %v170 = vmul.f32 %v99, %v147
  %v171 = vmul.f32 %v100, %v147
  %v172 = vmul.f32 %v101, %v147
  %v173 = vmul.f32 %v102, %v147
  %v174 = vmul.f32 %v103, %v147
  %v175 = vmul.f32 %v104, %v147
  %v176 = vmul.f32 %v105, %v147
  %v177 = vmul.f32 %v106, %v147
  %v178 = vmul.f32 %v107, %v147
  %v179 = vmul.f32 %v108, %v147
  %v180 = vmul.f32 %v109, %v147
  %v181 = vmul.f32 %v110, %v147
  %v182 = vmul.f32 %v111, %v147
  %v183 = vmul.f32 %v112, %v147
  %v184 = vmul.f32 %v113, %v147
  %v185 = vmul.f32 %v114, %v147
  %v186 = vmul.f32 %v115, %v147
  %v187 = vmul.f32 %v116, %v147
  %v188 = vmul.f32 %v117, %v147
  %v189 = vmul.f32 %v118, %v147
  %v190 = vmul.f32 %v119, %v147
  %v191 = vmul.f32 %v120, %v147
  %v192 = vmul.f32 %v121, %v147
  %v193 = vmul.f32 %v122, %v147
  %v194 = vmul.f32 %v123, %v147
  %v195 = vmul.f32 %v124, %v147
  %v196 = vmul.f32 %v125, %v147
  %v197 = vmul.f32 %v126, %v147
  %v198 = vmul.f32 %v127, %v147
  %v199 = vmul.f32 %v128, %v147
  %v200 = vmul.f32 %v129, %v147
  %v201 = vmul.f32 %v130, %v147
  %v202 = vmul.f32 %v131, %v147
  %v203 = vmul.f32 %v132, %v147
  %v204 = vmul.f32 %v133, %v147
  %v205 = vmul.f32 %v134, %v147
  %v206 = vmul.f32 %v135, %v147
  %v207 = vmul.f32 %v136, %v147
  %v208 = vmul.f32 %v137, %v147
  %v209 = vmul.f32 %v138, %v147
  %v210 = vmul.f32 %v139, %v147
  %v211 = vmul.f32 %v140, %v147
  %v212 = vmul.f32 %v141, %v147
  %v213 = vld [vmem:[%s2] sm:$0x1]
  %v215 = vlaneseq
  %v216 = vshrl.u32 %v215, 7
  %v217 = vsub.s32 0, %v216
  %v218 = vrot.slane %v213, %v217
  %v220 = vadd.f32 %v149, %v218
  %v221 = vadd.f32 %v150, %v218
  %v222 = vadd.f32 %v151, %v218
  %v223 = vadd.f32 %v152, %v218
  %v224 = vadd.f32 %v153, %v218
  %v225 = vadd.f32 %v154, %v218
  %v226 = vadd.f32 %v155, %v218
  %v227 = vadd.f32 %v156, %v218
  %v228 = vadd.f32 %v157, %v218
  %v229 = vadd.f32 %v158, %v218
  %v230 = vadd.f32 %v159, %v218
  %v231 = vadd.f32 %v160, %v218
  %v232 = vadd.f32 %v161, %v218
  %v233 = vadd.f32 %v162, %v218
  %v234 = vadd.f32 %v163, %v218
  %v235 = vadd.f32 %v164, %v218
  %v236 = vadd.f32 %v165, %v218
  %v237 = vadd.f32 %v166, %v218
  %v238 = vadd.f32 %v167, %v218
  %v239 = vadd.f32 %v168, %v218
  %v240 = vadd.f32 %v169, %v218
  %v241 = vadd.f32 %v170, %v218
  %v242 = vadd.f32 %v171, %v218
  %v243 = vadd.f32 %v172, %v218
  %v244 = vadd.f32 %v173, %v218
  %v245 = vadd.f32 %v174, %v218
  %v246 = vadd.f32 %v175, %v218
  %v247 = vadd.f32 %v176, %v218
  %v248 = vadd.f32 %v177, %v218
  %v249 = vadd.f32 %v178, %v218
  %v250 = vadd.f32 %v179, %v218
  %v251 = vadd.f32 %v180, %v218
  %v252 = vadd.f32 %v181, %v218
  %v253 = vadd.f32 %v182, %v218
  %v254 = vadd.f32 %v183, %v218
  %v255 = vadd.f32 %v184, %v218
  %v256 = vadd.f32 %v185, %v218
  %v257 = vadd.f32 %v186, %v218
  %v258 = vadd.f32 %v187, %v218
  %v259 = vadd.f32 %v188, %v218
  %v260 = vadd.f32 %v189, %v218
  %v261 = vadd.f32 %v190, %v218
  %v262 = vadd.f32 %v191, %v218
  %v263 = vadd.f32 %v192, %v218
  %v264 = vadd.f32 %v193, %v218
  %v265 = vadd.f32 %v194, %v218
  %v266 = vadd.f32 %v195, %v218
  %v267 = vadd.f32 %v196, %v218
  %v268 = vadd.f32 %v197, %v218
  %v269 = vadd.f32 %v198, %v218
  %v270 = vadd.f32 %v199, %v218
  %v271 = vadd.f32 %v200, %v218
  %v272 = vadd.f32 %v201, %v218
  %v273 = vadd.f32 %v202, %v218
  %v274 = vadd.f32 %v203, %v218
  %v275 = vadd.f32 %v204, %v218
  %v276 = vadd.f32 %v205, %v218
  %v277 = vadd.f32 %v206, %v218
  %v278 = vadd.f32 %v207, %v218
  %v279 = vadd.f32 %v208, %v218
  %v280 = vadd.f32 %v209, %v218
  %v281 = vadd.f32 %v210, %v218
  %v282 = vadd.f32 %v211, %v218
  %v283 = vadd.f32 %v212, %v218
  %v284 = vmax.f32 %v220, 0.0
  %v285 = vmax.f32 %v221, 0.0
  %v286 = vmax.f32 %v222, 0.0
  %v287 = vmax.f32 %v223, 0.0
  %v288 = vmax.f32 %v224, 0.0
  %v289 = vmax.f32 %v225, 0.0
  %v290 = vmax.f32 %v226, 0.0
  %v291 = vmax.f32 %v227, 0.0
  %v292 = vmax.f32 %v228, 0.0
  %v293 = vmax.f32 %v229, 0.0
  %v294 = vmax.f32 %v230, 0.0
  %v295 = vmax.f32 %v231, 0.0
  %v296 = vmax.f32 %v232, 0.0
  %v297 = vmax.f32 %v233, 0.0
  %v298 = vmax.f32 %v234, 0.0
  %v299 = vmax.f32 %v235, 0.0
  %v300 = vmax.f32 %v236, 0.0
  %v301 = vmax.f32 %v237, 0.0
  %v302 = vmax.f32 %v238, 0.0
  %v303 = vmax.f32 %v239, 0.0
  %v304 = vmax.f32 %v240, 0.0
  %v305 = vmax.f32 %v241, 0.0
  %v306 = vmax.f32 %v242, 0.0
  %v307 = vmax.f32 %v243, 0.0
  %v308 = vmax.f32 %v244, 0.0
  %v309 = vmax.f32 %v245, 0.0
  %v310 = vmax.f32 %v246, 0.0
  %v311 = vmax.f32 %v247, 0.0
  %v312 = vmax.f32 %v248, 0.0
  %v313 = vmax.f32 %v249, 0.0
  %v314 = vmax.f32 %v250, 0.0
  %v315 = vmax.f32 %v251, 0.0
  %v316 = vmax.f32 %v252, 0.0
  %v317 = vmax.f32 %v253, 0.0
  %v318 = vmax.f32 %v254, 0.0
  %v319 = vmax.f32 %v255, 0.0
  %v320 = vmax.f32 %v256, 0.0
  %v321 = vmax.f32 %v257, 0.0
  %v322 = vmax.f32 %v258, 0.0
  %v323 = vmax.f32 %v259, 0.0
  %v324 = vmax.f32 %v260, 0.0
  %v325 = vmax.f32 %v261, 0.0
  %v326 = vmax.f32 %v262, 0.0
  %v327 = vmax.f32 %v263, 0.0
  %v328 = vmax.f32 %v264, 0.0
  %v329 = vmax.f32 %v265, 0.0
  %v330 = vmax.f32 %v266, 0.0
  %v331 = vmax.f32 %v267, 0.0
  %v332 = vmax.f32 %v268, 0.0
  %v333 = vmax.f32 %v269, 0.0
  %v334 = vmax.f32 %v270, 0.0
  %v335 = vmax.f32 %v271, 0.0
  %v336 = vmax.f32 %v272, 0.0
  %v337 = vmax.f32 %v273, 0.0
  %v338 = vmax.f32 %v274, 0.0
  %v339 = vmax.f32 %v275, 0.0
  %v340 = vmax.f32 %v276, 0.0
  %v341 = vmax.f32 %v277, 0.0
  %v342 = vmax.f32 %v278, 0.0
  %v343 = vmax.f32 %v279, 0.0
  %v344 = vmax.f32 %v280, 0.0
  %v345 = vmax.f32 %v281, 0.0
  %v346 = vmax.f32 %v282, 0.0
  %v347 = vmax.f32 %v283, 0.0
  %348 = vst [vmem:[%s3] sm:$0xff] %v284
  %349 = vst [vmem:[%s3 + $0x8] sm:$0xff] %v285
  %350 = vst [vmem:[%s3 + $0x10] sm:$0xff] %v286
  %351 = vst [vmem:[%s3 + $0x18] sm:$0xff] %v287
  %352 = vst [vmem:[%s3 + $0x20] sm:$0xff] %v288
  %353 = vst [vmem:[%s3 + $0x28] sm:$0xff] %v289
  %354 = vst [vmem:[%s3 + $0x30] sm:$0xff] %v290
  %355 = vst [vmem:[%s3 + $0x38] sm:$0xff] %v291
  %356 = vst [vmem:[%s3 + $0x40] sm:$0xff] %v292
  %357 = vst [vmem:[%s3 + $0x48] sm:$0xff] %v293
  %358 = vst [vmem:[%s3 + $0x50] sm:$0xff] %v294
  %359 = vst [vmem:[%s3 + $0x58] sm:$0xff] %v295
  %360 = vst [vmem:[%s3 + $0x60] sm:$0xff] %v296
  %361 = vst [vmem:[%s3 + $0x68] sm:$0xff] %v297
  %362 = vst [vmem:[%s3 + $0x70] sm:$0xff] %v298
  %363 = vst [vmem:[%s3 + $0x78] sm:$0xff] %v299
  %364 = vst [vmem:[%s3 + $0x80] sm:$0xff] %v300
  %365 = vst [vmem:[%s3 + $0x88] sm:$0xff] %v301
  %366 = vst [vmem:[%s3 + $0x90] sm:$0xff] %v302
  %367 = vst [vmem:[%s3 + $0x98] sm:$0xff] %v303
  %368 = vst [vmem:[%s3 + $0xa0] sm:$0xff] %v304
  %369 = vst [vmem:[%s3 + $0xa8] sm:$0xff] %v305
  %370 = vst [vmem:[%s3 + $0xb0] sm:$0xff] %v306
  %371 = vst [vmem:[%s3 + $0xb8] sm:$0xff] %v307
  %372 = vst [vmem:[%s3 + $0xc0] sm:$0xff] %v308
  %373 = vst [vmem:[%s3 + $0xc8] sm:$0xff] %v309
  %374 = vst [vmem:[%s3 + $0xd0] sm:$0xff] %v310
  %375 = vst [vmem:[%s3 + $0xd8] sm:$0xff] %v311
  %376 = vst [vmem:[%s3 + $0xe0] sm:$0xff] %v312
  %377 = vst [vmem:[%s3 + $0xe8] sm:$0xff] %v313
  %378 = vst [vmem:[%s3 + $0xf0] sm:$0xff] %v314
  %379 = vst [vmem:[%s3 + $0xf8] sm:$0xff] %v315
  %380 = vst [vmem:[%s3 + $0x100] sm:$0xff] %v316
  %381 = vst [vmem:[%s3 + $0x108] sm:$0xff] %v317
  %382 = vst [vmem:[%s3 + $0x110] sm:$0xff] %v318
  %383 = vst [vmem:[%s3 + $0x118] sm:$0xff] %v319
  %384 = vst [vmem:[%s3 + $0x120] sm:$0xff] %v320
  %385 = vst [vmem:[%s3 + $0x128] sm:$0xff] %v321
  %386 = vst [vmem:[%s3 + $0x130] sm:$0xff] %v322
  %387 = vst [vmem:[%s3 + $0x138] sm:$0xff] %v323
  %388 = vst [vmem:[%s3 + $0x140] sm:$0xff] %v324
  %389 = vst [vmem:[%s3 + $0x148] sm:$0xff] %v325
  %390 = vst [vmem:[%s3 + $0x150] sm:$0xff] %v326
  %391 = vst [vmem:[%s3 + $0x158] sm:$0xff] %v327
  %392 = vst [vmem:[%s3 + $0x160] sm:$0xff] %v328
  %393 = vst [vmem:[%s3 + $0x168] sm:$0xff] %v329
  %394 = vst [vmem:[%s3 + $0x170] sm:$0xff] %v330
  %395 = vst [vmem:[%s3 + $0x178] sm:$0xff] %v331
  %396 = vst [vmem:[%s3 + $0x180] sm:$0xff] %v332
  %397 = vst [vmem:[%s3 + $0x188] sm:$0xff] %v333
  %398 = vst [vmem:[%s3 + $0x190] sm:$0xff] %v334
  %399 = vst [vmem:[%s3 + $0x198] sm:$0xff] %v335
  %400 = vst [vmem:[%s3 + $0x1a0] sm:$0xff] %v336
  %401 = vst [vmem:[%s3 + $0x1a8] sm:$0xff] %v337
  %402 = vst [vmem:[%s3 + $0x1b0] sm:$0xff] %v338
  %403 = vst [vmem:[%s3 + $0x1b8] sm:$0xff] %v339
  %404 = vst [vmem:[%s3 + $0x1c0] sm:$0xff] %v340
  %405 = vst [vmem:[%s3 + $0x1c8] sm:$0xff] %v341
  %406 = vst [vmem:[%s3 + $0x1d0] sm:$0xff] %v342
  %407 = vst [vmem:[%s3 + $0x1d8] sm:$0xff] %v343
  %408 = vst [vmem:[%s3 + $0x1e0] sm:$0xff] %v344
  %409 = vst [vmem:[%s3 + $0x1e8] sm:$0xff] %v345
  %410 = vst [vmem:[%s3 + $0x1f0] sm:$0xff] %v346
  %411 = vst [vmem:[%s3 + $0x1f8] sm:$0xff] %v347
  // Predicated region
  $region14: #{conv_bn_act.3} parent=0 // pred_check
    _
  $region15: #{conv_bn_act.3} parent=0 // pred_check_branch
    %413 = sbr.rel (0) target = $region17
  $region16: #{conv_bn_act.3} parent=0 // pred_region
    _
  $region17: #{conv_bn_act.3} parent=0 // pred_fallthru
    _
  // Predicated region
  $region18: #{conv_bn_act.3} parent=0 // pred_check
    _
  $region19: #{conv_bn_act.3} parent=0 // pred_check_branch
    %415 = sbr.rel (0) target = $region21
  $region20: #{conv_bn_act.3} parent=0 // pred_region
    _
  $region21: #{conv_bn_act.3} parent=0 // pred_fallthru
    _

// kernel: conv_bn_act.2
$region0: #{conv_bn_act.2}
  #allocation0 [shape = 'u32[]', space=smem, size = 0x4, offset = 0x4, fixed_abs, tag = 'smem constant byte address 0x4 - core index']
  #allocation1 [shape = 'u32[144,128]{1,0:T(1,128)}', space=vmem, size = 0x12000, scoped, tag = 'internal scratch']
  %s0 = inlined_call_operand.vmem [shape: bf16[2,18,18,4], index: 0, kind: input, shape index: {}]
  %s1 = inlined_call_operand.vmem [shape: bf16[9,4,128], index: 1, kind: input, shape index: {}]
  %s2 = inlined_call_operand.vmem [shape: bf16[512,128], index: 2, kind: output, shape index: {0}]
  %s3 = inlined_call_operand.vmem [shape: f32[1,1,128], index: 3, kind: output, shape index: {1}]
  %s4 = inlined_call_operand.vmem [shape: f32[1,1,128], index: 4, kind: output, shape index: {2}]
  %5 = xla_tuple %s2, %s3, %s4
  %s6 = sld [smem:[#allocation0]]
  $region38: #{conv_bn_act.2} parent=0
    _
  %s8 = ssub.s32 1, %s6
  %s9 = scalar_select 0, %s8, %s6
  // Predicated region
  $region2: #{conv_bn_act.2} parent=0 // pred_check
    _
  $region3: #{conv_bn_act.2} parent=0 // pred_check_branch
    %11 = sbr.rel (0) target = $region5
  $region4: #{conv_bn_act.2} parent=0 // pred_region
    %s12 = sadd.s32 0, 0
    %s13 = smul.u32 2, %s12
    %p14 = scmp.lt.s32.totalorder %s13, 1
    %s15 = scalar_select %p14, %s13, 1
    %s16 = smul.addr %s15, 54
    %s17 = smul.addr %s16, 4
    %s18 = scalar_lea.vmem %s0, %s17
    %s19 = sadd.s32 0, 0
    %s20 = smul.u32 2, %s19
  $region5: #{conv_bn_act.2} parent=0 // pred_fallthru
    _
  // Predicated region
  $region6: #{conv_bn_act.2} parent=0 // pred_check
    _
  $region7: #{conv_bn_act.2} parent=0 // pred_check_branch
    %22 = sbr.rel (0) target = $region9
  $region8: #{conv_bn_act.2} parent=0 // pred_region
    _
  $region9: #{conv_bn_act.2} parent=0 // pred_fallthru
    _
  %s23 = sadd.s32 0, 0
  %s24 = smul.u32 2, %s23
  %p25 = scmp.lt.s32.totalorder %s24, 1
  %s26 = scalar_select %p25, %s24, 1
  %s27 = smul.addr %s26, 54
  %s28 = smul.addr %s27, 4
  %s29 = scalar_lea.vmem %s0, %s28
  %s30 = sadd.s32 0, 0
  %s31 = smul.u32 64, %s30
  %p32 = scmp.lt.s32.totalorder %s31, 63
  %s33 = scalar_select %p32, %s31, 63
  %s34 = smul.addr %s33, 4
  %s35 = scalar_lea.vmem %s2, %s34
  %s36 = sadd.s32 0, 0
  %s37 = smul.u32 2, %s36
  %p38 = scmp.lt.s32.totalorder %s37, 1
  %s39 = scalar_select %p38, %s37, 1
  %s40 = smul.addr %s39, 54
  %s41 = smul.addr %s40, 4
  %s42 = scalar_lea.vmem %s0, %s41
  %s43 = sadd.s32 0, 0
  %s44 = smul.u32 2, %s43
  %s45 = sadd.s32 0, 0
  %s46 = smul.u32 64, %s45
  %p47 = scmp.lt.s32.totalorder %s46, 63
  %s48 = scalar_select %p47, %s46, 63
  %s49 = smul.addr %s48, 4
  %s50 = scalar_lea.vmem %s2, %s49
  %s51 = sadd.s32 0, 0
  %s52 = smul.u32 64, %s51
  %p54 = scmp.eq.s32.totalorder 0, 0
  // Predicated region
  $region10: #{conv_bn_act.2} parent=0 // pred_check
    %p55 = pneg %p54
  $region11: #{conv_bn_act.2} parent=0 // pred_check_branch
    %57 = sbr.rel (%p55) target = $region13
  $region12: #{conv_bn_act.2} parent=0 // pred_region
    %58 = vst [vmem:[%s3] sm:$0x1] 0.0
    %59 = vst [vmem:[%s4] sm:$0x1] 0.0
  $region13: #{conv_bn_act.2} parent=0 // pred_fallthru
    _
  %v60 = vld [vmem:[%s42] sm:$0xf]
  %v61 = vld [vmem:[%s42 + $0x4] sm:$0xf]
  %v62 = vld [vmem:[%s42 + $0xc] sm:$0xf]
  %v63 = vld [vmem:[%s42 + $0x10] sm:$0xf]
  %v64 = vld [vmem:[%s42 + $0x18] sm:$0xf]
  %v65 = vld [vmem:[%s42 + $0x1c] sm:$0xf]
  %v66 = vld [vmem:[%s42 + $0x24] sm:$0xf]
  %v67 = vld [vmem:[%s42 + $0x28] sm:$0xf]
  %v68 = vld [vmem:[%s42 + $0x30] sm:$0xf]
  %v69 = vld [vmem:[%s42 + $0x34] sm:$0xf]
  %v70 = vld [vmem:[%s42 + $0x3c] sm:$0xf]
  %v71 = vld [vmem:[%s42 + $0x40] sm:$0xf]
  %v72 = vld [vmem:[%s42 + $0x48] sm:$0xf]
  %v73 = vld [vmem:[%s42 + $0x4c] sm:$0xf]
  %v74 = vld [vmem:[%s42 + $0x54] sm:$0xf]
  %v75 = vld [vmem:[%s42 + $0x58] sm:$0xf]
  %v76 = vld [vmem:[%s42 + $0x60] sm:$0xf]
  %v77 = vld [vmem:[%s42 + $0x64] sm:$0xf]
  %v78 = vld [vmem:[%s42 + $0x6c] sm:$0xf]
  %v79 = vld [vmem:[%s42 + $0x70] sm:$0xf]
  %v80 = vld [vmem:[%s42 + $0x78] sm:$0xf]
  %v81 = vld [vmem:[%s42 + $0x7c] sm:$0xf]
  %v82 = vld [vmem:[%s42 + $0x84] sm:$0xf]
  %v83 = vld [vmem:[%s42 + $0x88] sm:$0xf]
  %v84 = vld [vmem:[%s42 + $0x90] sm:$0xf]
  %v85 = vld [vmem:[%s42 + $0x94] sm:$0xf]
  %v86 = vld [vmem:[%s42 + $0x9c] sm:$0xf]
  %v87 = vld [vmem:[%s42 + $0xa0] sm:$0xf]
  %v88 = vld [vmem:[%s42 + $0xa8] sm:$0xf]
  %v89 = vld [vmem:[%s42 + $0xac] sm:$0xf]
  %v90 = vld [vmem:[%s42 + $0xb4] sm:$0xf]
  %v91 = vld [vmem:[%s42 + $0xb8] sm:$0xf]
  %v92 = vld [vmem:[%s42 + $0xd8] sm:$0xf]
  %v93 = vld [vmem:[%s42 + $0xdc] sm:$0xf]
  %v94 = vld [vmem:[%s42 + $0xe4] sm:$0xf]
  %v95 = vld [vmem:[%s42 + $0xe8] sm:$0xf]
  %v96 = vld [vmem:[%s42 + $0xf0] sm:$0xf]
  %v97 = vld [vmem:[%s42 + $0xf4] sm:$0xf]
  %v98 = vld [vmem:[%s42 + $0xfc] sm:$0xf]
  %v99 = vld [vmem:[%s42 + $0x100] sm:$0xf]
  %v100 = vld [vmem:[%s42 + $0x108] sm:$0xf]
  %v101 = vld [vmem:[%s42 + $0x10c] sm:$0xf]
  %v102 = vld [vmem:[%s42 + $0x114] sm:$0xf]
  %v103 = vld [vmem:[%s42 + $0x118] sm:$0xf]
  %v104 = vld [vmem:[%s42 + $0x120] sm:$0xf]
  %v105 = vld [vmem:[%s42 + $0x124] sm:$0xf]
  %v106 = vld [vmem:[%s42 + $0x12c] sm:$0xf]
  %v107 = vld [vmem:[%s42 + $0x130] sm:$0xf]
  %v108 = vld [vmem:[%s42 + $0x138] sm:$0xf]
  %v109 = vld [vmem:[%s42 + $0x13c] sm:$0xf]
  %v110 = vld [vmem:[%s42 + $0x144] sm:$0xf]
  %v111 = vld [vmem:[%s42 + $0x148] sm:$0xf]
  %v112 = vld [vmem:[%s42 + $0x150] sm:$0xf]
  %v113 = vld [vmem:[%s42 + $0x154] sm:$0xf]
  %v114 = vld [vmem:[%s42 + $0x15c] sm:$0xf]
  %v115 = vld [vmem:[%s42 + $0x160] sm:$0xf]
  %v116 = vld [vmem:[%s42 + $0x168] sm:$0xf]
  %v117 = vld [vmem:[%s42 + $0x16c] sm:$0xf]
  %v118 = vld [vmem:[%s42 + $0x174] sm:$0xf]
  %v119 = vld [vmem:[%s42 + $0x178] sm:$0xf]
  %v120 = vld [vmem:[%s42 + $0x180] sm:$0xf]
  %v121 = vld [vmem:[%s42 + $0x184] sm:$0xf]
  %v122 = vld [vmem:[%s42 + $0x18c] sm:$0xf]
  %v123 = vld [vmem:[%s42 + $0x190] sm:$0xf]
  %v124 = vld [vmem:[%s1] sm:$0x3]
  %v125 = vld [vmem:[%s42 + $0x8] sm:$0x1]
  %v126 = vld [vmem:[%s42 + $0x14] sm:$0x1]
  %v127 = vld [vmem:[%s42 + $0x20] sm:$0x1]
  %v128 = vld [vmem:[%s42 + $0x2c] sm:$0x1]
  %v129 = vld [vmem:[%s42 + $0x38] sm:$0x1]
  %v130 = vld [vmem:[%s42 + $0x44] sm:$0x1]
  %v131 = vld [vmem:[%s42 + $0x50] sm:$0x1]
  %v132 = vld [vmem:[%s42 + $0x5c] sm:$0x1]
  %v133 = vld [vmem:[%s42 + $0x68] sm:$0x1]
  %v134 = vld [vmem:[%s42 + $0x74] sm:$0x1]
  %v135 = vld [vmem:[%s42 + $0x80] sm:$0x1]
  %v136 = vld [vmem:[%s42 + $0x8c] sm:$0x1]
  %v137 = vld [vmem:[%s42 + $0x98] sm:$0x1]
  %v138 = vld [vmem:[%s42 + $0xa4] sm:$0x1]
  %v139 = vld [vmem:[%s42 + $0xb0] sm:$0x1]
  %v140 = vld [vmem:[%s42 + $0xbc] sm:$0x1]
  %v141 = vld [vmem:[%s42 + $0xe0] sm:$0x1]
  %v142 = vld [vmem:[%s42 + $0xec] sm:$0x1]
  %v143 = vld [vmem:[%s42 + $0xf8] sm:$0x1]
  %v144 = vld [vmem:[%s42 + $0x104] sm:$0x1]
  %v145 = vld [vmem:[%s42 + $0x110] sm:$0x1]
  %v146 = vld [vmem:[%s42 + $0x11c] sm:$0x1]
  %v147 = vld [vmem:[%s42 + $0x128] sm:$0x1]
  %v148 = vld [vmem:[%s42 + $0x134] sm:$0x1]
  %v149 = vld [vmem:[%s42 + $0x140] sm:$0x1]
  %v150 = vld [vmem:[%s42 + $0x14c] sm:$0x1]
  %v151 = vld [vmem:[%s42 + $0x158] sm:$0x1]
  %v152 = vld [vmem:[%s42 + $0x164] sm:$0x1]
  %v153 = vld [vmem:[%s42 + $0x170] sm:$0x1]
  %v154 = vld [vmem:[%s42 + $0x17c] sm:$0x1]
  %v155 = vld [vmem:[%s42 + $0x188] sm:$0x1]
  %v156 = vld [vmem:[%s42 + $0x194] sm:$0x1]
  %vm157 = vsmask.f32 3328
  %vm158 = vsmask.f32 7440
  %vm159 = vmor %vm157, %vm158
  %v161 = vshrl.u32 %v60, 16
  %v163 = vrot.slane %v161, 4
  %v164 = vshll.u32 %v60, 16
  %v166 = vrot.slane %v164, 5
  %v167 = vor.u32 %v163, %v166
  %v168 = vrot.slane %v167, 4
  %v170 = vshll.u32 %v61, 16
  %v172 = vrot.slane %v170, 5
  %v173 = vsel %vm159, %v168, %v172
  %v174 = vshrl.u32 %v61, 16
  %v176 = vrot.slane %v174, 4
  %v177 = vor.u32 %v176, %v172
  %v178 = vrot.slane %v177, 4
  %v180 = vshll.u32 %v125, 16
  %v182 = vrot.slane %v180, 5
  %v183 = vsel %vm159, %v178, %v182
  %v185 = vshrl.u32 %v62, 16
  %v187 = vrot.slane %v185, 4
  %v188 = vshll.u32 %v62, 16
  %v190 = vrot.slane %v188, 5
  %v191 = vor.u32 %v187, %v190
  %v192 = vrot.slane %v191, 4
  %v194 = vshll.u32 %v63, 16
  %v196 = vrot.slane %v194, 5
  %v197 = vsel %vm159, %v192, %v196
  %v198 = vshrl.u32 %v63, 16
  %v200 = vrot.slane %v198, 4
  %v201 = vor.u32 %v200, %v196
  %v202 = vrot.slane %v201, 4
  %v204 = vshll.u32 %v126, 16
  %v206 = vrot.slane %v204, 5
  %v207 = vsel %vm159, %v202, %v206
  %v209 = vshrl.u32 %v64, 16
  %v211 = vrot.slane %v209, 4
  %v212 = vshll.u32 %v64, 16
  %v214 = vrot.slane %v212, 5
  %v215 = vor.u32 %v211, %v214
  %v216 = vrot.slane %v215, 4
  %v218 = vshll.u32 %v65, 16
  %v220 = vrot.slane %v218, 5
  %v221 = vsel %vm159, %v216, %v220
  %v222 = vshrl.u32 %v65, 16
  %v224 = vrot.slane %v222, 4
  %v225 = vor.u32 %v224, %v220
  %v226 = vrot.slane %v225, 4
  %v228 = vshll.u32 %v127, 16
  %v230 = vrot.slane %v228, 5
  %v231 = vsel %vm159, %v226, %v230
  %v233 = vshrl.u32 %v66, 16
  %v235 = vrot.slane %v233, 4
  %v236 = vshll.u32 %v66, 16
  %v238 = vrot.slane %v236, 5
  %v239 = vor.u32 %v235, %v238
  %v240 = vrot.slane %v239, 4
  %v242 = vshll.u32 %v67, 16
  %v244 = vrot.slane %v242, 5
  %v245 = vsel %vm159, %v240, %v244
  %v246 = vshrl.u32 %v67, 16
  %v248 = vrot.slane %v246, 4
  %v249 = vor.u32 %v248, %v244
  %v250 = vrot.slane %v249, 4
  %v252 = vshll.u32 %v128, 16
  %v254 = vrot.slane %v252, 5
  %v255 = vsel %vm159, %v250, %v254
  %v257 = vshrl.u32 %v68, 16
  %v259 = vrot.slane %v257, 4
  %v260 = vshll.u32 %v68, 16
  %v262 = vrot.slane %v260, 5
  %v263 = vor.u32 %v259, %v262
  %v264 = vrot.slane %v263, 4
  %v266 = vshll.u32 %v69, 16
  %v268 = vrot.slane %v266, 5
  %v269 = vsel %vm159, %v264, %v268
  %v270 = vshrl.u32 %v69, 16
  %v272 = vrot.slane %v270, 4
  %v273 = vor.u32 %v272, %v268
  %v274 = vrot.slane %v273, 4
  %v276 = vshll.u32 %v129, 16
  %v278 = vrot.slane %v276, 5
  %v279 = vsel %vm159, %v274, %v278
  %v281 = vshrl.u32 %v70, 16
  %v283 = vrot.slane %v281, 4
  %v284 = vshll.u32 %v70, 16
  %v286 = vrot.slane %v284, 5
  %v287 = vor.u32 %v283, %v286
  %v288 = vrot.slane %v287, 4
  %v290 = vshll.u32 %v71, 16
  %v292 = vrot.slane %v290, 5
  %v293 = vsel %vm159, %v288, %v292
  %v294 = vshrl.u32 %v71, 16
  %v296 = vrot.slane %v294, 4
  %v297 = vor.u32 %v296, %v292
  %v298 = vrot.slane %v297, 4
  %v300 = vshll.u32 %v130, 16
  %v302 = vrot.slane %v300, 5
  %v303 = vsel %vm159, %v298, %v302
  %v305 = vshrl.u32 %v72, 16
  %v307 = vrot.slane %v305, 4
  %v308 = vshll.u32 %v72, 16
  %v310 = vrot.slane %v308, 5
  %v311 = vor.u32 %v307, %v310
  %v312 = vrot.slane %v311, 4
  %v314 = vshll.u32 %v73, 16
  %v316 = vrot.slane %v314, 5
  %v317 = vsel %vm159, %v312, %v316
  %v318 = vshrl.u32 %v73, 16
  %v320 = vrot.slane %v318, 4
  %v321 = vor.u32 %v320, %v316
  %v322 = vrot.slane %v321, 4
  %v324 = vshll.u32 %v131, 16
  %v326 = vrot.slane %v324, 5
  %v327 = vsel %vm159, %v322, %v326
  %v329 = vshrl.u32 %v74, 16
  %v331 = vrot.slane %v329, 4
  %v332 = vshll.u32 %v74, 16
  %v334 = vrot.slane %v332, 5
  %v335 = vor.u32 %v331, %v334
  %v336 = vrot.slane %v335, 4
  %v338 = vshll.u32 %v75, 16
  %v340 = vrot.slane %v338, 5
  %v341 = vsel %vm159, %v336, %v340
  %v342 = vshrl.u32 %v75, 16
  %v344 = vrot.slane %v342, 4
  %v345 = vor.u32 %v344, %v340
  %v346 = vrot.slane %v345, 4
  %v348 = vshll.u32 %v132, 16
  %v350 = vrot.slane %v348, 5
  %v351 = vsel %vm159, %v346, %v350
  %v353 = vshrl.u32 %v76, 16
  %v355 = vrot.slane %v353, 4
  %v356 = vshll.u32 %v76, 16
  %v358 = vrot.slane %v356, 5
  %v359 = vor.u32 %v355, %v358
  %v360 = vrot.slane %v359, 4
  %v362 = vshll.u32 %v77, 16
  %v364 = vrot.slane %v362, 5
  %v365 = vsel %vm159, %v360, %v364
  %v366 = vshrl.u32 %v77, 16
  %v368 = vrot.slane %v366, 4
  %v369 = vor.u32 %v368, %v364
  %v370 = vrot.slane %v369, 4
  %v372 = vshll.u32 %v133, 16
  %v374 = vrot.slane %v372, 5
  %v375 = vsel %vm159, %v370, %v374
  %v377 = vshrl.u32 %v78, 16
  %v379 = vrot.slane %v377, 4
  %v380 = vshll.u32 %v78, 16
  %v382 = vrot.slane %v380, 5
  %v383 = vor.u32 %v379, %v382
  %v384 = vrot.slane %v383, 4
  %v386 = vshll.u32 %v79, 16
  %v388 = vrot.slane %v386, 5
  %v389 = vsel %vm159, %v384, %v388
  %v390 = vshrl.u32 %v79, 16
  %v392 = vrot.slane %v390, 4
  %v393 = vor.u32 %v392, %v388
  %v394 = vrot.slane %v393, 4
  %v396 = vshll.u32 %v134, 16
  %v398 = vrot.slane %v396, 5
  %v399 = vsel %vm159, %v394, %v398
  %v401 = vshrl.u32 %v80, 16
  %v403 = vrot.slane %v401, 4
  %v404 = vshll.u32 %v80, 16
  %v406 = vrot.slane %v404, 5
  %v407 = vor.u32 %v403, %v406
  %v408 = vrot.slane %v407, 4
  %v410 = vshll.u32 %v81, 16
  %v412 = vrot.slane %v410, 5
  %v413 = vsel %vm159, %v408, %v412
  %v414 = vshrl.u32 %v81, 16
  %v416 = vrot.slane %v414, 4
  %v417 = vor.u32 %v416, %v412
  %v418 = vrot.slane %v417, 4
  %v420 = vshll.u32 %v135, 16
  %v422 = vrot.slane %v420, 5
  %v423 = vsel %vm159, %v418, %v422
  %v425 = vshrl.u32 %v82, 16
  %v427 = vrot.slane %v425, 4
  %v428 = vshll.u32 %v82, 16
  %v430 = vrot.slane %v428, 5
  %v431 = vor.u32 %v427, %v430
  %v432 = vrot.slane %v431, 4
  %v434 = vshll.u32 %v83, 16
  %v436 = vrot.slane %v434, 5
  %v437 = vsel %vm159, %v432, %v436
  %v438 = vshrl.u32 %v83, 16
  %v440 = vrot.slane %v438, 4
  %v441 = vor.u32 %v440, %v436
  %v442 = vrot.slane %v441, 4
  %v444 = vshll.u32 %v136, 16
  %v446 = vrot.slane %v444, 5
  %v447 = vsel %vm159, %v442, %v446
  %v449 = vshrl.u32 %v84, 16
  %v451 = vrot.slane %v449, 4
  %v452 = vshll.u32 %v84, 16
  %v454 = vrot.slane %v452, 5
  %v455 = vor.u32 %v451, %v454
  %v456 = vrot.slane %v455, 4
  %v458 = vshll.u32 %v85, 16
  %v460 = vrot.slane %v458, 5
  %v461 = vsel %vm159, %v456, %v460
  %v462 = vshrl.u32 %v85, 16
  %v464 = vrot.slane %v462, 4
  %v465 = vor.u32 %v464, %v460
  %v466 = vrot.slane %v465, 4
  %v468 = vshll.u32 %v137, 16
  %v470 = vrot.slane %v468, 5
  %v471 = vsel %vm159, %v466, %v470
  %v473 = vshrl.u32 %v86, 16
  %v475 = vrot.slane %v473, 4
  %v476 = vshll.u32 %v86, 16
  %v478 = vrot.slane %v476, 5
  %v479 = vor.u32 %v475, %v478
  %v480 = vrot.slane %v479, 4
  %v482 = vshll.u32 %v87, 16
  %v484 = vrot.slane %v482, 5
  %v485 = vsel %vm159, %v480, %v484
  %v486 = vshrl.u32 %v87, 16
  %v488 = vrot.slane %v486, 4
  %v489 = vor.u32 %v488, %v484
  %v490 = vrot.slane %v489, 4
  %v492 = vshll.u32 %v138, 16
  %v494 = vrot.slane %v492, 5
  %v495 = vsel %vm159, %v490, %v494
  %v497 = vshrl.u32 %v88, 16
  %v499 = vrot.slane %v497, 4
  %v500 = vshll.u32 %v88, 16
  %v502 = vrot.slane %v500, 5
  %v503 = vor.u32 %v499, %v502
  %v504 = vrot.slane %v503, 4
  %v506 = vshll.u32 %v89, 16
  %v508 = vrot.slane %v506, 5
  %v509 = vsel %vm159, %v504, %v508
  %v510 = vshrl.u32 %v89, 16
  %v512 = vrot.slane %v510, 4
  %v513 = vor.u32 %v512, %v508
  %v514 = vrot.slane %v513, 4
  %v516 = vshll.u32 %v139, 16
  %v518 = vrot.slane %v516, 5
  %v519 = vsel %vm159, %v514, %v518
  %v521 = vshrl.u32 %v90, 16
  %v523 = vrot.slane %v521, 4
  %v524 = vshll.u32 %v90, 16
  %v526 = vrot.slane %v524, 5
  %v527 = vor.u32 %v523, %v526
  %v528 = vrot.slane %v527, 4
  %v530 = vshll.u32 %v91, 16
  %v532 = vrot.slane %v530, 5
  %v533 = vsel %vm159, %v528, %v532
  %v534 = vshrl.u32 %v91, 16
  %v536 = vrot.slane %v534, 4
  %v537 = vor.u32 %v536, %v532
  %v538 = vrot.slane %v537, 4
  %v540 = vshll.u32 %v140, 16
  %v542 = vrot.slane %v540, 5
  %v543 = vsel %vm159, %v538, %v542
  %v545 = vshrl.u32 %v92, 16
  %v547 = vrot.slane %v545, 4
  %v548 = vshll.u32 %v92, 16
  %v550 = vrot.slane %v548, 5
  %v551 = vor.u32 %v547, %v550
  %v552 = vrot.slane %v551, 4
  %v554 = vshll.u32 %v93, 16
  %v556 = vrot.slane %v554, 5
  %v557 = vsel %vm159, %v552, %v556
  %v558 = vshrl.u32 %v93, 16
  %v560 = vrot.slane %v558, 4
  %v561 = vor.u32 %v560, %v556
  %v562 = vrot.slane %v561, 4
  %v564 = vshll.u32 %v141, 16
  %v566 = vrot.slane %v564, 5
  %v567 = vsel %vm159, %v562, %v566
  %v569 = vshrl.u32 %v94, 16
  %v571 = vrot.slane %v569, 4
  %v572 = vshll.u32 %v94, 16
  %v574 = vrot.slane %v572, 5
  %v575 = vor.u32 %v571, %v574
  %v576 = vrot.slane %v575, 4
  %v578 = vshll.u32 %v95, 16
  %v580 = vrot.slane %v578, 5
  %v581 = vsel %vm159, %v576, %v580
  %v582 = vshrl.u32 %v95, 16
  %v584 = vrot.slane %v582, 4
  %v585 = vor.u32 %v584, %v580
  %v586 = vrot.slane %v585, 4
  %v588 = vshll.u32 %v142, 16
  %v590 = vrot.slane %v588, 5
  %v591 = vsel %vm159, %v586, %v590
  %v593 = vshrl.u32 %v96, 16
  %v595 = vrot.slane %v593, 4
  %v596 = vshll.u32 %v96, 16
  %v598 = vrot.slane %v596, 5
  %v599 = vor.u32 %v595, %v598
  %v600 = vrot.slane %v599, 4
  %v602 = vshll.u32 %v97, 16
  %v604 = vrot.slane %v602, 5
  %v605 = vsel %vm159, %v600, %v604
  %v606 = vshrl.u32 %v97, 16
  %v608 = vrot.slane %v606, 4
  %v609 = vor.u32 %v608, %v604
  %v610 = vrot.slane %v609, 4
  %v612 = vshll.u32 %v143, 16
  %v614 = vrot.slane %v612, 5
  %v615 = vsel %vm159, %v610, %v614
  %v617 = vshrl.u32 %v98, 16
  %v619 = vrot.slane %v617, 4
  %v620 = vshll.u32 %v98, 16
  %v622 = vrot.slane %v620, 5
  %v623 = vor.u32 %v619, %v622
  %v624 = vrot.slane %v623, 4
  %v626 = vshll.u32 %v99, 16
  %v628 = vrot.slane %v626, 5
  %v629 = vsel %vm159, %v624, %v628
  %v630 = vshrl.u32 %v99, 16
  %v632 = vrot.slane %v630, 4
  %v633 = vor.u32 %v632, %v628
  %v634 = vrot.slane %v633, 4
  %v636 = vshll.u32 %v144, 16
  %v638 = vrot.slane %v636, 5
  %v639 = vsel %vm159, %v634, %v638
  %v641 = vshrl.u32 %v100, 16
  %v643 = vrot.slane %v641, 4
  %v644 = vshll.u32 %v100, 16
  %v646 = vrot.slane %v644, 5
  %v647 = vor.u32 %v643, %v646
  %v648 = vrot.slane %v647, 4
  %v650 = vshll.u32 %v101, 16
  %v652 = vrot.slane %v650, 5
  %v653 = vsel %vm159, %v648, %v652
  %v654 = vshrl.u32 %v101, 16
  %v656 = vrot.slane %v654, 4
  %v657 = vor.u32 %v656, %v652
  %v658 = vrot.slane %v657, 4
  %v660 = vshll.u32 %v145, 16
  %v662 = vrot.slane %v660, 5
  %v663 = vsel %vm159, %v658, %v662
  %v665 = vshrl.u32 %v102, 16
  %v667 = vrot.slane %v665, 4
  %v668 = vshll.u32 %v102, 16
  %v670 = vrot.slane %v668, 5
  %v671 = vor.u32 %v667, %v670
  %v672 = vrot.slane %v671, 4
  %v674 = vshll.u32 %v103, 16
  %v676 = vrot.slane %v674, 5
  %v677 = vsel %vm159, %v672, %v676
  %v678 = vshrl.u32 %v103, 16
  %v680 = vrot.slane %v678, 4
  %v681 = vor.u32 %v680, %v676
  %v682 = vrot.slane %v681, 4
  %v684 = vshll.u32 %v146, 16
  %v686 = vrot.slane %v684, 5
  %v687 = vsel %vm159, %v682, %v686
  %v689 = vshrl.u32 %v104, 16
  %v691 = vrot.slane %v689, 4
  %v692 = vshll.u32 %v104, 16
  %v694 = vrot.slane %v692, 5
  %v695 = vor.u32 %v691, %v694
  %v696 = vrot.slane %v695, 4
  %v698 = vshll.u32 %v105, 16
  %v700 = vrot.slane %v698, 5
  %v701 = vsel %vm159, %v696, %v700
  %v702 = vshrl.u32 %v105, 16
  %v704 = vrot.slane %v702, 4
  %v705 = vor.u32 %v704, %v700
  %v706 = vrot.slane %v705, 4
  %v708 = vshll.u32 %v147, 16
  %v710 = vrot.slane %v708, 5
  %v711 = vsel %vm159, %v706, %v710
  %v713 = vshrl.u32 %v106, 16
  %v715 = vrot.slane %v713, 4
  %v716 = vshll.u32 %v106, 16
  %v718 = vrot.slane %v716, 5
  %v719 = vor.u32 %v715, %v718
  %v720 = vrot.slane %v719, 4
  %v722 = vshll.u32 %v107, 16
  %v724 = vrot.slane %v722, 5
  %v725 = vsel %vm159, %v720, %v724
  %v726 = vshrl.u32 %v107, 16
  %v728 = vrot.slane %v726, 4
  %v729 = vor.u32 %v728, %v724
  %v730 = vrot.slane %v729, 4
  %v732 = vshll.u32 %v148, 16
  %v734 = vrot.slane %v732, 5
  %v735 = vsel %vm159, %v730, %v734
  %v737 = vshrl.u32 %v108, 16
  %v739 = vrot.slane %v737, 4
  %v740 = vshll.u32 %v108, 16
  %v742 = vrot.slane %v740, 5
  %v743 = vor.u32 %v739, %v742
  %v744 = vrot.slane %v743, 4
  %v746 = vshll.u32 %v109, 16
  %v748 = vrot.slane %v746, 5
  %v749 = vsel %vm159, %v744, %v748
  %v750 = vshrl.u32 %v109, 16
  %v752 = vrot.slane %v750, 4
  %v753 = vor.u32 %v752, %v748
  %v754 = vrot.slane %v753, 4
  %v756 = vshll.u32 %v149, 16
  %v758 = vrot.slane %v756, 5
  %v759 = vsel %vm159, %v754, %v758
  %v761 = vshrl.u32 %v110, 16
  %v763 = vrot.slane %v761, 4
  %v764 = vshll.u32 %v110, 16
  %v766 = vrot.slane %v764, 5
  %v767 = vor.u32 %v763, %v766
  %v768 = vrot.slane %v767, 4
  %v770 = vshll.u32 %v111, 16
  %v772 = vrot.slane %v770, 5
  %v773 = vsel %vm159, %v768, %v772
  %v774 = vshrl.u32 %v111, 16
  %v776 = vrot.slane %v774, 4
  %v777 = vor.u32 %v776, %v772
  %v778 = vrot.slane %v777, 4
  %v780 = vshll.u32 %v150, 16
  %v782 = vrot.slane %v780, 5
  %v783 = vsel %vm159, %v778, %v782
  %v785 = vshrl.u32 %v112, 16
  %v787 = vrot.slane %v785, 4
  %v788 = vshll.u32 %v112, 16
  %v790 = vrot.slane %v788, 5
  %v791 = vor.u32 %v787, %v790
  %v792 = vrot.slane %v791, 4
  %v794 = vshll.u32 %v113, 16
  %v796 = vrot.slane %v794, 5
  %v797 = vsel %vm159, %v792, %v796
  %v798 = vshrl.u32 %v113, 16
  %v800 = vrot.slane %v798, 4
  %v801 = vor.u32 %v800, %v796
  %v802 = vrot.slane %v801, 4
  %v804 = vshll.u32 %v151, 16
  %v806 = vrot.slane %v804, 5
  %v807 = vsel %vm159, %v802, %v806
  %v809 = vshrl.u32 %v114, 16
  %v811 = vrot.slane %v809, 4
  %v812 = vshll.u32 %v114, 16
  %v814 = vrot.slane %v812, 5
  %v815 = vor.u32 %v811, %v814
  %v816 = vrot.slane %v815, 4
  %v818 = vshll.u32 %v115, 16
  %v820 = vrot.slane %v818, 5
  %v821 = vsel %vm159, %v816, %v820
  %v822 = vshrl.u32 %v115, 16
  %v824 = vrot.slane %v822, 4
  %v825 = vor.u32 %v824, %v820
  %v826 = vrot.slane %v825, 4
  %v828 = vshll.u32 %v152, 16
  %v830 = vrot.slane %v828, 5
  %v831 = vsel %vm159, %v826, %v830
  %v833 = vshrl.u32 %v116, 16
  %v835 = vrot.slane %v833, 4
  %v836 = vshll.u32 %v116, 16
  %v838 = vrot.slane %v836, 5
  %v839 = vor.u32 %v835, %v838
  %v840 = vrot.slane %v839, 4
  %v842 = vshll.u32 %v117, 16
  %v844 = vrot.slane %v842, 5
  %v845 = vsel %vm159, %v840, %v844
  %v846 = vshrl.u32 %v117, 16
  %v848 = vrot.slane %v846, 4
  %v849 = vor.u32 %v848, %v844
  %v850 = vrot.slane %v849, 4
  %v852 = vshll.u32 %v153, 16
  %v854 = vrot.slane %v852, 5
  %v855 = vsel %vm159, %v850, %v854
  %v857 = vshrl.u32 %v118, 16
  %v859 = vrot.slane %v857, 4
  %v860 = vshll.u32 %v118, 16
  %v862 = vrot.slane %v860, 5
  %v863 = vor.u32 %v859, %v862
  %v864 = vrot.slane %v863, 4
  %v866 = vshll.u32 %v119, 16
  %v868 = vrot.slane %v866, 5
  %v869 = vsel %vm159, %v864, %v868
  %v870 = vshrl.u32 %v119, 16
  %v872 = vrot.slane %v870, 4
  %v873 = vor.u32 %v872, %v868
  %v874 = vrot.slane %v873, 4
  %v876 = vshll.u32 %v154, 16
  %v878 = vrot.slane %v876, 5
  %v879 = vsel %vm159, %v874, %v878
  %v881 = vshrl.u32 %v120, 16
  %v883 = vrot.slane %v881, 4
  %v884 = vshll.u32 %v120, 16
  %v886 = vrot.slane %v884, 5
  %v887 = vor.u32 %v883, %v886
  %v888 = vrot.slane %v887, 4
  %v890 = vshll.u32 %v121, 16
  %v892 = vrot.slane %v890, 5
  %v893 = vsel %vm159, %v888, %v892
  %v894 = vshrl.u32 %v121, 16
  %v896 = vrot.slane %v894, 4
  %v897 = vor.u32 %v896, %v892
  %v898 = vrot.slane %v897, 4
  %v900 = vshll.u32 %v155, 16
  %v902 = vrot.slane %v900, 5
  %v903 = vsel %vm159, %v898, %v902
  %v905 = vshrl.u32 %v122, 16
  %v907 = vrot.slane %v905, 4
  %v908 = vshll.u32 %v122, 16
  %v910 = vrot.slane %v908, 5
  %v911 = vor.u32 %v907, %v910
  %v912 = vrot.slane %v911, 4
  %v914 = vshll.u32 %v123, 16
  %v916 = vrot.slane %v914, 5
  %v917 = vsel %vm159, %v912, %v916
  %v918 = vshrl.u32 %v123, 16
  %v920 = vrot.slane %v918, 4
  %v921 = vor.u32 %v920, %v916
  %v922 = vrot.slane %v921, 4
  %v924 = vshll.u32 %v156, 16
  %v926 = vrot.slane %v924, 5
  %v927 = vsel %vm159, %v922, %v926
  %s928 = scalar_lea.vmem %s1, 2
  %v929 = vld [vmem:[%s928] sm:$0x3]
  %v930 = vunpack.c.l.b16 %v173
  %v931 = vunpack.c.l.b16 %v183
  %v932 = vunpack.c.l.b16 %v197
  %v933 = vunpack.c.l.b16 %v207
  %v934 = vunpack.c.l.b16 %v221
  %v935 = vunpack.c.l.b16 %v231
  %v936 = vunpack.c.l.b16 %v245
  %v937 = vunpack.c.l.b16 %v255
  %v938 = vunpack.c.l.b16 %v269
  %v939 = vunpack.c.l.b16 %v279
  %v940 = vunpack.c.l.b16 %v293
  %v941 = vunpack.c.l.b16 %v303
  %v942 = vunpack.c.l.b16 %v317
  %v943 = vunpack.c.l.b16 %v327
  %v944 = vunpack.c.l.b16 %v341
  %v945 = vunpack.c.l.b16 %v351
  %v946 = vunpack.c.l.b16 %v365
  %v947 = vunpack.c.l.b16 %v375
  %v948 = vunpack.c.l.b16 %v389
  %v949 = vunpack.c.l.b16 %v399
  %v950 = vunpack.c.l.b16 %v413
  %v951 = vunpack.c.l.b16 %v423
  %v952 = vunpack.c.l.b16 %v437
  %v953 = vunpack.c.l.b16 %v447
  %v954 = vunpack.c.l.b16 %v461
  %v955 = vunpack.c.l.b16 %v471
  %v956 = vunpack.c.l.b16 %v485
  %v957 = vunpack.c.l.b16 %v495
  %v958 = vunpack.c.l.b16 %v509
  %v959 = vunpack.c.l.b16 %v519
  %v960 = vunpack.c.l.b16 %v533
  %v961 = vunpack.c.l.b16 %v543
  %v962 = vunpack.c.l.b16 %v557
  %v963 = vunpack.c.l.b16 %v567
  %v964 = vunpack.c.l.b16 %v581
  %v965 = vunpack.c.l.b16 %v591
  %v966 = vunpack.c.l.b16 %v605
  %v967 = vunpack.c.l.b16 %v615
  %v968 = vunpack.c.l.b16 %v629
  %v969 = vunpack.c.l.b16 %v639
  %v970 = vunpack.c.l.b16 %v653
  %v971 = vunpack.c.l.b16 %v663
  %v972 = vunpack.c.l.b16 %v677
  %v973 = vunpack.c.l.b16 %v687
  %v974 = vunpack.c.l.b16 %v701
  %v975 = vunpack.c.l.b16 %v711
  %v976 = vunpack.c.l.b16 %v725
  %v977 = vunpack.c.l.b16 %v735
  %v978 = vunpack.c.l.b16 %v749
  %v979 = vunpack.c.l.b16 %v759
  %v980 = vunpack.c.l.b16 %v773
  %v981 = vunpack.c.l.b16 %v783
  %v982 = vunpack.c.l.b16 %v797
  %v983 = vunpack.c.l.b16 %v807
  %v984 = vunpack.c.l.b16 %v821
  %v985 = vunpack.c.l.b16 %v831
  %v986 = vunpack.c.l.b16 %v845
  %v987 = vunpack.c.l.b16 %v855
  %v988 = vunpack.c.l.b16 %v869
  %v989 = vunpack.c.l.b16 %v879
  %v990 = vunpack.c.l.b16 %v893
  %v991 = vunpack.c.l.b16 %v903
  %v992 = vunpack.c.l.b16 %v917
  %v993 = vunpack.c.l.b16 %v927
  %v994 = vpack.c.b16 %v931, %v930
  %v995 = vpack.c.b16 %v933, %v932
  %v996 = vpack.c.b16 %v935, %v934
  %v997 = vpack.c.b16 %v937, %v936
  %v998 = vpack.c.b16 %v939, %v938
  %v999 = vpack.c.b16 %v941, %v940
  %v1000 = vpack.c.b16 %v943, %v942
  %v1001 = vpack.c.b16 %v945, %v944
  %v1002 = vpack.c.b16 %v947, %v946
  %v1003 = vpack.c.b16 %v949, %v948
  %v1004 = vpack.c.b16 %v951, %v950
  %v1005 = vpack.c.b16 %v953, %v952
  %v1006 = vpack.c.b16 %v955, %v954
  %v1007 = vpack.c.b16 %v957, %v956
  %v1008 = vpack.c.b16 %v959, %v958
  %v1009 = vpack.c.b16 %v961, %v960
  %v1010 = vpack.c.b16 %v963, %v962
  %v1011 = vpack.c.b16 %v965, %v964
  %v1012 = vpack.c.b16 %v967, %v966
  %v1013 = vpack.c.b16 %v969, %v968
  %v1014 = vpack.c.b16 %v971, %v970
  %v1015 = vpack.c.b16 %v973, %v972
  %v1016 = vpack.c.b16 %v975, %v974
  %v1017 = vpack.c.b16 %v977, %v976
  %v1018 = vpack.c.b16 %v979, %v978
  %v1019 = vpack.c.b16 %v981, %v980
  %v1020 = vpack.c.b16 %v983, %v982
  %v1021 = vpack.c.b16 %v985, %v984
  %v1022 = vpack.c.b16 %v987, %v986
  %v1023 = vpack.c.b16 %v989, %v988
  %v1024 = vpack.c.b16 %v991, %v990
  %v1025 = vpack.c.b16 %v993, %v992
  %vm1026 = vcmask 31744
  %v1028 = vsel %vm1026, %v994, 0
  %v1031 = vsel %vm1026, %v995, 0
  %v1034 = vsel %vm1026, %v996, 0
  %v1037 = vsel %vm1026, %v997, 0
  %v1040 = vsel %vm1026, %v998, 0
  %v1043 = vsel %vm1026, %v999, 0
  %v1046 = vsel %vm1026, %v1000, 0
  %v1049 = vsel %vm1026, %v1001, 0
  %v1052 = vsel %vm1026, %v1002, 0
  %v1055 = vsel %vm1026, %v1003, 0
  %v1058 = vsel %vm1026, %v1004, 0
  %v1061 = vsel %vm1026, %v1005, 0
  %v1064 = vsel %vm1026, %v1006, 0
  %v1067 = vsel %vm1026, %v1007, 0
  %v1070 = vsel %vm1026, %v1008, 0
  %v1073 = vsel %vm1026, %v1009, 0
  %v1076 = vsel %vm1026, %v1010, 0
  %v1079 = vsel %vm1026, %v1011, 0
  %v1082 = vsel %vm1026, %v1012, 0
  %v1085 = vsel %vm1026, %v1013, 0
  %v1088 = vsel %vm1026, %v1014, 0
  %v1091 = vsel %vm1026, %v1015, 0
  %v1094 = vsel %vm1026, %v1016, 0
  %v1097 = vsel %vm1026, %v1017, 0
  %v1100 = vsel %vm1026, %v1018, 0
  %v1103 = vsel %vm1026, %v1019, 0
  %v1106 = vsel %vm1026, %v1020, 0
  %v1109 = vsel %vm1026, %v1021, 0
  %v1112 = vsel %vm1026, %v1022, 0
  %v1115 = vsel %vm1026, %v1023, 0
  %v1118 = vsel %vm1026, %v1024, 0
  %v1121 = vsel %vm1026, %v1025, 0
  %vm1123 = vcmask 1041408
  %v1125 = vsel %vm1123, %v929, 0
  %1127 = vmatprep.subr.bf16.mxu0 0
  %1128 = vmatpush1.bf16.msra.mxu0 %v1125
  %1129 = vmatprep.subr.bf16.mxu0 0
  %1130 = vmatpush1.bf16.msra.mxu0 0
  %1131 = vmatprep.subr.bf16.mxu0 0
  %1132 = vmatpush1.bf16.msra.mxu0 0
  %1133 = vmatprep.subr.bf16.mxu0 0
  %1134 = vmatpush1.bf16.msra.mxu0 0
  %1135 = vmatprep.subr.bf16.mxu0 0
  %1136 = vmatpush1.bf16.msra.mxu0 0
  %1137 = vmatprep.subr.bf16.mxu0 0
  %1138 = vmatpush1.bf16.msra.mxu0 0
  %1139 = vmatprep.subr.bf16.mxu0 0
  %1140 = vmatpush1.bf16.msra.mxu0 0
  %1141 = vmatprep.subr.bf16.mxu0 0
  %1142 = vmatpush1.bf16.msra.mxu0 0
  %1143 = vmatprep.subr.bf16.mxu0 0
  %1144 = vmatpush1.bf16.msra.mxu0 0
  %1145 = vmatprep.subr.bf16.mxu0 0
  %1146 = vmatpush1.bf16.msra.mxu0 0
  %1147 = vmatprep.subr.bf16.mxu0 0
  %1148 = vmatpush1.bf16.msra.mxu0 0
  %1149 = vmatprep.subr.bf16.mxu0 0
  %1150 = vmatpush1.bf16.msra.mxu0 0
  %1151 = vmatprep.subr.bf16.mxu0 0
  %1152 = vmatpush1.bf16.msra.mxu0 0
  %1153 = vmatprep.subr.bf16.mxu0 0
  %1154 = vmatpush1.bf16.msra.mxu0 0
  %1155 = vmatprep.subr.bf16.mxu0 0
  %1156 = vmatpush1.bf16.msra.mxu0 0
  %1157 = vmatprep.subr.bf16.mxu0 0
  %1158 = vmatpush1.bf16.msra.mxu0 0
  %1159 = vmatprep.mubr.bf16.mxu0 0
  %1160 = vmatmul.mubr.bf16.gmra.mrb[0].mxu0 %v1028
  %v1161 = vpop.f32.mrb[0].mxu0
  %v1162 = vadd.f32 0.0, %v1161
  %v1163 = vpop.f32.mrb[0].mxu0
  %v1164 = vpop.f32.mrb[0].mxu0
  %v1165 = vadd.f32 0.0, %v1164
  %v1166 = vpop.f32.mrb[0].mxu0
  %1167 = vmatprep.mubr.bf16.mxu0 0
  %1168 = vmatmul.mubr.bf16.gmra.mrb[0].mxu0 %v1031
  %v1169 = vpop.f32.mrb[0].mxu0
  %v1170 = vadd.f32 0.0, %v1169
  %v1171 = vpop.f32.mrb[0].mxu0
  %v1172 = vpop.f32.mrb[0].mxu0
  %v1173 = vadd.f32 0.0, %v1172
  %v1174 = vpop.f32.mrb[0].mxu0
  %1175 = vmatprep.mubr.bf16.mxu0 0
  %1176 = vmatmul.mubr.bf16.gmra.mrb[0].mxu0 %v1034
  %v1177 = vpop.f32.mrb[0].mxu0
  %v1178 = vadd.f32 0.0, %v1177
  %v1179 = vpop.f32.mrb[0].mxu0
  %v1180 = vpop.f32.mrb[0].mxu0
  %v1181 = vadd.f32 0.0, %v1180
  %v1182 = vpop.f32.mrb[0].mxu0
  %1183 = vmatprep.mubr.bf16.mxu0 0
  %1184 = vmatmul.mubr.bf16.gmra.mrb[0].mxu0 %v1037
  %v1185 = vpop.f32.mrb[0].mxu0
  %v1186 = vadd.f32 0.0, %v1185
  %v1187 = vpop.f32.mrb[0].mxu0
  %v1188 = vpop.f32.mrb[0].mxu0
  %v1189 = vadd.f32 0.0, %v1188
  %v1190 = vpop.f32.mrb[0].mxu0
  %1191 = vmatprep.mubr.bf16.mxu0 0
  %1192 = vmatmul.mubr.bf16.gmra.mrb[0].mxu0 %v1040
  %v1193 = vpop.f32.mrb[0].mxu0
  %v1194 = vadd.f32 0.0, %v1193
  %v1195 = vpop.f32.mrb[0].mxu0
  %v1196 = vpop.f32.mrb[0].mxu0
  %v1197 = vadd.f32 0.0, %v1196
  %v1198 = vpop.f32.mrb[0].mxu0
  %1199 = vmatprep.mubr.bf16.mxu0 0
  %1200 = vmatmul.mubr.bf16.gmra.mrb[0].mxu0 %v1043
  %v1201 = vpop.f32.mrb[0].mxu0
  %v1202 = vadd.f32 0.0, %v1201
  %v1203 = vpop.f32.mrb[0].mxu0
  %v1204 = vpop.f32.mrb[0].mxu0
  %v1205 = vadd.f32 0.0, %v1204
  %v1206 = vpop.f32.mrb[0].mxu0
  %1207 = vmatprep.mubr.bf16.mxu0 0
  %1208 = vmatmul.mubr.bf16.gmra.mrb[0].mxu0 %v1046
  %v1209 = vpop.f32.mrb[0].mxu0
  %v1210 = vadd.f32 0.0, %v1209
  %v1211 = vpop.f32.mrb[0].mxu0
  %v1212 = vpop.f32.mrb[0].mxu0
  %v1213 = vadd.f32 0.0, %v1212
  %v1214 = vpop.f32.mrb[0].mxu0
  %1215 = vmatprep.mubr.bf16.mxu0 0
  %1216 = vmatmul.mubr.bf16.gmra.mrb[0].mxu0 %v1049
  %v1217 = vpop.f32.mrb[0].mxu0
  %v1218 = vadd.f32 0.0, %v1217
  %v1219 = vpop.f32.mrb[0].mxu0
  %v1220 = vpop.f32.mrb[0].mxu0
  %v1221 = vadd.f32 0.0, %v1220
  %v1222 = vpop.f32.mrb[0].mxu0
  %1223 = vmatprep.mubr.bf16.mxu0 0
  %1224 = vmatmul.mubr.bf16.gmra.mrb[0].mxu0 %v1052
  %v1225 = vpop.f32.mrb[0].mxu0
  %v1226 = vadd.f32 0.0, %v1225
  %v1227 = vpop.f32.mrb[0].mxu0
  %v1228 = vpop.f32.mrb[0].mxu0
  %v1229 = vadd.f32 0.0, %v1228
  %v1230 = vpop.f32.mrb[0].mxu0
  %1231 = vmatprep.mubr.bf16.mxu0 0
  %1232 = vmatmul.mubr.bf16.gmra.mrb[0].mxu0 %v1055
  %v1233 = vpop.f32.mrb[0].mxu0
  %v1234 = vadd.f32 0.0, %v1233
  %v1235 = vpop.f32.mrb[0].mxu0
  %v1236 = vpop.f32.mrb[0].mxu0
  %v1237 = vadd.f32 0.0, %v1236
  %v1238 = vpop.f32.mrb[0].mxu0
  %1239 = vmatprep.mubr.bf16.mxu0 0
  %1240 = vmatmul.mubr.bf16.gmra.mrb[0].mxu0 %v1058
  %v1241 = vpop.f32.mrb[0].mxu0
  %v1242 = vadd.f32 0.0, %v1241
  %v1243 = vpop.f32.mrb[0].mxu0
  %v1244 = vpop.f32.mrb[0].mxu0
  %v1245 = vadd.f32 0.0, %v1244
  %v1246 = vpop.f32.mrb[0].mxu0
  %1247 = vmatprep.mubr.bf16.mxu0 0
  %1248 = vmatmul.mubr.bf16.gmra.mrb[0].mxu0 %v1061
  %v1249 = vpop.f32.mrb[0].mxu0
  %v1250 = vadd.f32 0.0, %v1249
  %v1251 = vpop.f32.mrb[0].mxu0
  %v1252 = vpop.f32.mrb[0].mxu0
  %v1253 = vadd.f32 0.0, %v1252
  %v1254 = vpop.f32.mrb[0].mxu0
  %1255 = vmatprep.mubr.bf16.mxu0 0
  %1256 = vmatmul.mubr.bf16.gmra.mrb[0].mxu0 %v1064
  %v1257 = vpop.f32.mrb[0].mxu0
  %v1258 = vadd.f32 0.0, %v1257
  %v1259 = vpop.f32.mrb[0].mxu0
  %v1260 = vpop.f32.mrb[0].mxu0
  %v1261 = vadd.f32 0.0, %v1260
  %v1262 = vpop.f32.mrb[0].mxu0
  %1263 = vmatprep.mubr.bf16.mxu0 0
  %1264 = vmatmul.mubr.bf16.gmra.mrb[0].mxu0 %v1067
  %v1265 = vpop.f32.mrb[0].mxu0
  %v1266 = vadd.f32 0.0, %v1265
  %v1267 = vpop.f32.mrb[0].mxu0
  %v1268 = vpop.f32.mrb[0].mxu0
  %v1269 = vadd.f32 0.0, %v1268
  %v1270 = vpop.f32.mrb[0].mxu0
  %1271 = vmatprep.mubr.bf16.mxu0 0
  %1272 = vmatmul.mubr.bf16.gmra.mrb[0].mxu0 %v1070
  %v1273 = vpop.f32.mrb[0].mxu0
  %v1274 = vadd.f32 0.0, %v1273
  %v1275 = vpop.f32.mrb[0].mxu0
  %v1276 = vpop.f32.mrb[0].mxu0
  %v1277 = vadd.f32 0.0, %v1276
  %v1278 = vpop.f32.mrb[0].mxu0
  %1279 = vmatprep.mubr.bf16.mxu0 0
  %1280 = vmatmul.mubr.bf16.gmra.mrb[0].mxu0 %v1073
  %v1281 = vpop.f32.mrb[0].mxu0
  %v1282 = vadd.f32 0.0, %v1281
  %v1283 = vpop.f32.mrb[0].mxu0
  %v1284 = vpop.f32.mrb[0].mxu0
  %v1285 = vadd.f32 0.0, %v1284
  %v1286 = vpop.f32.mrb[0].mxu0
  %1287 = vmatprep.mubr.bf16.mxu0 0
  %1288 = vmatmul.mubr.bf16.gmra.mrb[0].mxu0 %v1076
  %v1289 = vpop.f32.mrb[0].mxu0
  %v1290 = vadd.f32 0.0, %v1289
  %v1291 = vpop.f32.mrb[0].mxu0
  %v1292 = vpop.f32.mrb[0].mxu0
  %v1293 = vadd.f32 0.0, %v1292
  %v1294 = vpop.f32.mrb[0].mxu0
  %1295 = vmatprep.mubr.bf16.mxu0 0
  %1296 = vmatmul.mubr.bf16.gmra.mrb[0].mxu0 %v1079
  %v1297 = vpop.f32.mrb[0].mxu0
  %v1298 = vadd.f32 0.0, %v1297
  %v1299 = vpop.f32.mrb[0].mxu0
  %v1300 = vpop.f32.mrb[0].mxu0
  %v1301 = vadd.f32 0.0, %v1300
  %v1302 = vpop.f32.mrb[0].mxu0
  %1303 = vmatprep.mubr.bf16.mxu0 0
  %1304 = vmatmul.mubr.bf16.gmra.mrb[0].mxu0 %v1082
  %v1305 = vpop.f32.mrb[0].mxu0
  %v1306 = vadd.f32 0.0, %v1305
  %v1307 = vpop.f32.mrb[0].mxu0
  %v1308 = vpop.f32.mrb[0].mxu0
  %v1309 = vadd.f32 0.0, %v1308
  %v1310 = vpop.f32.mrb[0].mxu0
  %1311 = vmatprep.mubr.bf16.mxu0 0
  %1312 = vmatmul.mubr.bf16.gmra.mrb[0].mxu0 %v1085
  %v1313 = vpop.f32.mrb[0].mxu0
  %v1314 = vadd.f32 0.0, %v1313
  %v1315 = vpop.f32.mrb[0].mxu0
  %v1316 = vpop.f32.mrb[0].mxu0
  %v1317 = vadd.f32 0.0, %v1316
  %v1318 = vpop.f32.mrb[0].mxu0
  %1319 = vmatprep.mubr.bf16.mxu0 0
  %1320 = vmatmul.mubr.bf16.gmra.mrb[0].mxu0 %v1088
  %v1321 = vpop.f32.mrb[0].mxu0
  %v1322 = vadd.f32 0.0, %v1321
  %v1323 = vpop.f32.mrb[0].mxu0
  %v1324 = vpop.f32.mrb[0].mxu0
  %v1325 = vadd.f32 0.0, %v1324
  %v1326 = vpop.f32.mrb[0].mxu0
  %1327 = vmatprep.mubr.bf16.mxu0 0
  %1328 = vmatmul.mubr.bf16.gmra.mrb[0].mxu0 %v1091
  %v1329 = vpop.f32.mrb[0].mxu0
  %v1330 = vadd.f32 0.0, %v1329
  %v1331 = vpop.f32.mrb[0].mxu0
  %v1332 = vpop.f32.mrb[0].mxu0
  %v1333 = vadd.f32 0.0, %v1332
  %v1334 = vpop.f32.mrb[0].mxu0
  %1335 = vmatprep.mubr.bf16.mxu0 0
  %1336 = vmatmul.mubr.bf16.gmra.mrb[0].mxu0 %v1094
  %v1337 = vpop.f32.mrb[0].mxu0
  %v1338 = vadd.f32 0.0, %v1337
  %v1339 = vpop.f32.mrb[0].mxu0
  %v1340 = vpop.f32.mrb[0].mxu0
  %v1341 = vadd.f32 0.0, %v1340
  %v1342 = vpop.f32.mrb[0].mxu0
  %1343 = vmatprep.mubr.bf16.mxu0 0
  %1344 = vmatmul.mubr.bf16.gmra.mrb[0].mxu0 %v1097
  %v1345 = vpop.f32.mrb[0].mxu0
  %v1346 = vadd.f32 0.0, %v1345
  %v1347 = vpop.f32.mrb[0].mxu0
  %v1348 = vpop.f32.mrb[0].mxu0
  %v1349 = vadd.f32 0.0, %v1348
  %v1350 = vpop.f32.mrb[0].mxu0
  %1351 = vmatprep.mubr.bf16.mxu0 0
  %1352 = vmatmul.mubr.bf16.gmra.mrb[0].mxu0 %v1100
  %v1353 = vpop.f32.mrb[0].mxu0
  %v1354 = vadd.f32 0.0, %v1353
  %v1355 = vpop.f32.mrb[0].mxu0
  %v1356 = vpop.f32.mrb[0].mxu0
  %v1357 = vadd.f32 0.0, %v1356
  %v1358 = vpop.f32.mrb[0].mxu0
  %1359 = vmatprep.mubr.bf16.mxu0 0
  %1360 = vmatmul.mubr.bf16.gmra.mrb[0].mxu0 %v1103
  %v1361 = vpop.f32.mrb[0].mxu0
  %v1362 = vadd.f32 0.0, %v1361
  %v1363 = vpop.f32.mrb[0].mxu0
  %v1364 = vpop.f32.mrb[0].mxu0
  %v1365 = vadd.f32 0.0, %v1364
  %v1366 = vpop.f32.mrb[0].mxu0
  %1367 = vmatprep.mubr.bf16.mxu0 0
  %1368 = vmatmul.mubr.bf16.gmra.mrb[0].mxu0 %v1106
  %v1369 = vpop.f32.mrb[0].mxu0
  %v1370 = vadd.f32 0.0, %v1369
  %v1371 = vpop.f32.mrb[0].mxu0
  %v1372 = vpop.f32.mrb[0].mxu0
  %v1373 = vadd.f32 0.0, %v1372
  %v1374 = vpop.f32.mrb[0].mxu0
  %1375 = vmatprep.mubr.bf16.mxu0 0
  %1376 = vmatmul.mubr.bf16.gmra.mrb[0].mxu0 %v1109
  %v1377 = vpop.f32.mrb[0].mxu0
  %v1378 = vadd.f32 0.0, %v1377
  %v1379 = vpop.f32.mrb[0].mxu0
  %v1380 = vpop.f32.mrb[0].mxu0
  %v1381 = vadd.f32 0.0, %v1380
  %v1382 = vpop.f32.mrb[0].mxu0
  %1383 = vmatprep.mubr.bf16.mxu0 0
  %1384 = vmatmul.mubr.bf16.gmra.mrb[0].mxu0 %v1112
  %v1385 = vpop.f32.mrb[0].mxu0
  %v1386 = vadd.f32 0.0, %v1385
  %v1387 = vpop.f32.mrb[0].mxu0
  %v1388 = vpop.f32.mrb[0].mxu0
  %v1389 = vadd.f32 0.0, %v1388
  %v1390 = vpop.f32.mrb[0].mxu0
  %1391 = vmatprep.mubr.bf16.mxu0 0
  %1392 = vmatmul.mubr.bf16.gmra.mrb[0].mxu0 %v1115
  %v1393 = vpop.f32.mrb[0].mxu0
  %v1394 = vadd.f32 0.0, %v1393
  %v1395 = vpop.f32.mrb[0].mxu0
  %v1396 = vpop.f32.mrb[0].mxu0
  %v1397 = vadd.f32 0.0, %v1396
  %v1398 = vpop.f32.mrb[0].mxu0
  %1399 = vmatprep.mubr.bf16.mxu0 0
  %1400 = vmatmul.mubr.bf16.gmra.mrb[0].mxu0 %v1118
  %v1401 = vpop.f32.mrb[0].mxu0
  %v1402 = vadd.f32 0.0, %v1401
  %v1403 = vpop.f32.mrb[0].mxu0
  %v1404 = vpop.f32.mrb[0].mxu0
  %v1405 = vadd.f32 0.0, %v1404
  %v1406 = vpop.f32.mrb[0].mxu0
  %1407 = vmatprep.mubr.bf16.mxu0 0
  %1408 = vmatmul.mubr.bf16.gmra.mrb[0].mxu0 %v1121
  %v1409 = vpop.f32.mrb[0].mxu0
  %v1410 = vadd.f32 0.0, %v1409
  %v1411 = vpop.f32.mrb[0].mxu0
  %v1412 = vpop.f32.mrb[0].mxu0
  %v1413 = vadd.f32 0.0, %v1412
  %v1414 = vpop.f32.mrb[0].mxu0
  %1415 = vdwg.mxu0
  %v1480 = vunpack.c.l.b16 %v60
  %v1481 = vunpack.c.l.b16 %v61
  %v1482 = vunpack.c.l.b16 %v62
  %v1483 = vunpack.c.l.b16 %v63
  %v1484 = vunpack.c.l.b16 %v64
  %v1485 = vunpack.c.l.b16 %v65
  %v1486 = vunpack.c.l.b16 %v66
  %v1487 = vunpack.c.l.b16 %v67
  %v1488 = vunpack.c.l.b16 %v68
  %v1489 = vunpack.c.l.b16 %v69
  %v1490 = vunpack.c.l.b16 %v70
  %v1491 = vunpack.c.l.b16 %v71
  %v1492 = vunpack.c.l.b16 %v72
  %v1493 = vunpack.c.l.b16 %v73
  %v1494 = vunpack.c.l.b16 %v74
  %v1495 = vunpack.c.l.b16 %v75
  %v1496 = vunpack.c.l.b16 %v76
  %v1497 = vunpack.c.l.b16 %v77
  %v1498 = vunpack.c.l.b16 %v78
  %v1499 = vunpack.c.l.b16 %v79
  %v1500 = vunpack.c.l.b16 %v80
  %v1501 = vunpack.c.l.b16 %v81
  %v1502 = vunpack.c.l.b16 %v82
  %v1503 = vunpack.c.l.b16 %v83
  %v1504 = vunpack.c.l.b16 %v84
  %v1505 = vunpack.c.l.b16 %v85
  %v1506 = vunpack.c.l.b16 %v86
  %v1507 = vunpack.c.l.b16 %v87
  %v1508 = vunpack.c.l.b16 %v88
  %v1509 = vunpack.c.l.b16 %v89
  %v1510 = vunpack.c.l.b16 %v90
  %v1511 = vunpack.c.l.b16 %v91
  %v1512 = vunpack.c.l.b16 %v92
  %v1513 = vunpack.c.l.b16 %v93
  %v1514 = vunpack.c.l.b16 %v94
  %v1515 = vunpack.c.l.b16 %v95
  %v1516 = vunpack.c.l.b16 %v96
  %v1517 = vunpack.c.l.b16 %v97
  %v1518 = vunpack.c.l.b16 %v98
  %v1519 = vunpack.c.l.b16 %v99
  %v1520 = vunpack.c.l.b16 %v100
  %v1521 = vunpack.c.l.b16 %v101
  %v1522 = vunpack.c.l.b16 %v102
  %v1523 = vunpack.c.l.b16 %v103
  %v1524 = vunpack.c.l.b16 %v104
  %v1525 = vunpack.c.l.b16 %v105
  %v1526 = vunpack.c.l.b16 %v106
  %v1527 = vunpack.c.l.b16 %v107
  %v1528 = vunpack.c.l.b16 %v108
  %v1529 = vunpack.c.l.b16 %v109
  %v1530 = vunpack.c.l.b16 %v110
  %v1531 = vunpack.c.l.b16 %v111
  %v1532 = vunpack.c.l.b16 %v112
  %v1533 = vunpack.c.l.b16 %v113
  %v1534 = vunpack.c.l.b16 %v114
  %v1535 = vunpack.c.l.b16 %v115
  %v1536 = vunpack.c.l.b16 %v116
  %v1537 = vunpack.c.l.b16 %v117
  %v1538 = vunpack.c.l.b16 %v118
  %v1539 = vunpack.c.l.b16 %v119
  %v1540 = vunpack.c.l.b16 %v120
  %v1541 = vunpack.c.l.b16 %v121
  %v1542 = vunpack.c.l.b16 %v122
  %v1543 = vunpack.c.l.b16 %v123
  %v1544 = vpack.c.b16 %v1481, %v1480
  %v1545 = vpack.c.b16 %v1483, %v1482
  %v1546 = vpack.c.b16 %v1485, %v1484
  %v1547 = vpack.c.b16 %v1487, %v1486
  %v1548 = vpack.c.b16 %v1489, %v1488
  %v1549 = vpack.c.b16 %v1491, %v1490
  %v1550 = vpack.c.b16 %v1493, %v1492
  %v1551 = vpack.c.b16 %v1495, %v1494
  %v1552 = vpack.c.b16 %v1497, %v1496
  %v1553 = vpack.c.b16 %v1499, %v1498
  %v1554 = vpack.c.b16 %v1501, %v1500
  %v1555 = vpack.c.b16 %v1503, %v1502
  %v1556 = vpack.c.b16 %v1505, %v1504
  %v1557 = vpack.c.b16 %v1507, %v1506
  %v1558 = vpack.c.b16 %v1509, %v1508
  %v1559 = vpack.c.b16 %v1511, %v1510
  %v1560 = vpack.c.b16 %v1513, %v1512
  %v1561 = vpack.c.b16 %v1515, %v1514
  %v1562 = vpack.c.b16 %v1517, %v1516
  %v1563 = vpack.c.b16 %v1519, %v1518
  %v1564 = vpack.c.b16 %v1521, %v1520
  %v1565 = vpack.c.b16 %v1523, %v1522
  %v1566 = vpack.c.b16 %v1525, %v1524
  %v1567 = vpack.c.b16 %v1527, %v1526
  %v1568 = vpack.c.b16 %v1529, %v1528
  %v1569 = vpack.c.b16 %v1531, %v1530
  %v1570 = vpack.c.b16 %v1533, %v1532
  %v1571 = vpack.c.b16 %v1535, %v1534
  %v1572 = vpack.c.b16 %v1537, %v1536
  %v1573 = vpack.c.b16 %v1539, %v1538
  %v1574 = vpack.c.b16 %v1541, %v1540
  %v1575 = vpack.c.b16 %v1543, %v1542
  %v1577 = vsel %vm1026, %v1544, 0
  %v1580 = vsel %vm1026, %v1545, 0
  %v1583 = vsel %vm1026, %v1546, 0
  %v1586 = vsel %vm1026, %v1547, 0
  %v1589 = vsel %vm1026, %v1548, 0
  %v1592 = vsel %vm1026, %v1549, 0
  %v1595 = vsel %vm1026, %v1550, 0
  %v1598 = vsel %vm1026, %v1551, 0
  %v1601 = vsel %vm1026, %v1552, 0
  %v1604 = vsel %vm1026, %v1553, 0
  %v1607 = vsel %vm1026, %v1554, 0
  %v1610 = vsel %vm1026, %v1555, 0
  %v1613 = vsel %vm1026, %v1556, 0
  %v1616 = vsel %vm1026, %v1557, 0
  %v1619 = vsel %vm1026, %v1558, 0
  %v1622 = vsel %vm1026, %v1559, 0
  %v1625 = vsel %vm1026, %v1560, 0
  %v1628 = vsel %vm1026, %v1561, 0
  %v1631 = vsel %vm1026, %v1562, 0
  %v1634 = vsel %vm1026, %v1563, 0
  %v1637 = vsel %vm1026, %v1564, 0
  %v1640 = vsel %vm1026, %v1565, 0
  %v1643 = vsel %vm1026, %v1566, 0
  %v1646 = vsel %vm1026, %v1567, 0
  %v1649 = vsel %vm1026, %v1568, 0
  %v1652 = vsel %vm1026, %v1569, 0
  %v1655 = vsel %vm1026, %v1570, 0
  %v1658 = vsel %vm1026, %v1571, 0
  %v1661 = vsel %vm1026, %v1572, 0
  %v1664 = vsel %vm1026, %v1573, 0
  %v1667 = vsel %vm1026, %v1574, 0
  %v1670 = vsel %vm1026, %v1575, 0
  %v1673 = vsel %vm1123, %v124, 0
  %1675 = vmatprep.subr.bf16.mxu0 0
  %1676 = vmatpush1.bf16.msra.mxu0 %v1673
  %1677 = vmatprep.subr.bf16.mxu0 0
  %1678 = vmatpush1.bf16.msra.mxu0 0
  %1679 = vmatprep.subr.bf16.mxu0 0
  %1680 = vmatpush1.bf16.msra.mxu0 0
  %1681 = vmatprep.subr.bf16.mxu0 0
  %1682 = vmatpush1.bf16.msra.mxu0 0
  %1683 = vmatprep.subr.bf16.mxu0 0
  %1684 = vmatpush1.bf16.msra.mxu0 0
  %1685 = vmatprep.subr.bf16.mxu0 0
  %1686 = vmatpush1.bf16.msra.mxu0 0
  %1687 = vmatprep.subr.bf16.mxu0 0
  %1688 = vmatpush1.bf16.msra.mxu0 0
  %1689 = vmatprep.subr.bf16.mxu0 0
  %1690 = vmatpush1.bf16.msra.mxu0 0
  %1691 = vmatprep.subr.bf16.mxu0 0
  %1692 = vmatpush1.bf16.msra.mxu0 0
  %1693 = vmatprep.subr.bf16.mxu0 0
  %1694 = vmatpush1.bf16.msra.mxu0 0
  %1695 = vmatprep.subr.bf16.mxu0 0
  %1696 = vmatpush1.bf16.msra.mxu0 0
  %1697 = vmatprep.subr.bf16.mxu0 0
  %1698 = vmatpush1.bf16.msra.mxu0 0
  %1699 = vmatprep.subr.bf16.mxu0 0
  %1700 = vmatpush1.bf16.msra.mxu0 0
  %1701 = vmatprep.subr.bf16.mxu0 0
  %1702 = vmatpush1.bf16.msra.mxu0 0
  %1703 = vmatprep.subr.bf16.mxu0 0
  %1704 = vmatpush1.bf16.msra.mxu0 0
  %1705 = vmatprep.subr.bf16.mxu0 0
  %1706 = vmatpush1.bf16.msra.mxu0 0
  %1707 = vmatprep.mubr.bf16.mxu0 0
  %1708 = vmatmul.mubr.bf16.gmra.mrb[0].mxu0 %v1577
  %v1709 = vpop.f32.mrb[0].mxu0
  %v1710 = vadd.f32 %v1162, %v1709
  %v1711 = vpop.f32.mrb[0].mxu0
  %v1712 = vpop.f32.mrb[0].mxu0
  %v1713 = vadd.f32 %v1165, %v1712
  %v1714 = vpop.f32.mrb[0].mxu0
  %1715 = vmatprep.mubr.bf16.mxu0 0
  %1716 = vmatmul.mubr.bf16.gmra.mrb[0].mxu0 %v1580
  %v1717 = vpop.f32.mrb[0].mxu0
  %v1718 = vadd.f32 %v1170, %v1717
  %v1719 = vpop.f32.mrb[0].mxu0
  %v1720 = vpop.f32.mrb[0].mxu0
  %v1721 = vadd.f32 %v1173, %v1720
  %v1722 = vpop.f32.mrb[0].mxu0
  %1723 = vmatprep.mubr.bf16.mxu0 0
  %1724 = vmatmul.mubr.bf16.gmra.mrb[0].mxu0 %v1583
  %v1725 = vpop.f32.mrb[0].mxu0
  %v1726 = vadd.f32 %v1178, %v1725
  %v1727 = vpop.f32.mrb[0].mxu0
  %v1728 = vpop.f32.mrb[0].mxu0
  %v1729 = vadd.f32 %v1181, %v1728
  %v1730 = vpop.f32.mrb[0].mxu0
  %1731 = vmatprep.mubr.bf16.mxu0 0
  %1732 = vmatmul.mubr.bf16.gmra.mrb[0].mxu0 %v1586
  %v1733 = vpop.f32.mrb[0].mxu0
  %v1734 = vadd.f32 %v1186, %v1733
  %v1735 = vpop.f32.mrb[0].mxu0
  %v1736 = vpop.f32.mrb[0].mxu0
  %v1737 = vadd.f32 %v1189, %v1736
  %v1738 = vpop.f32.mrb[0].mxu0
  %1739 = vmatprep.mubr.bf16.mxu0 0
  %1740 = vmatmul.mubr.bf16.gmra.mrb[0].mxu0 %v1589
  %v1741 = vpop.f32.mrb[0].mxu0
  %v1742 = vadd.f32 %v1194, %v1741
  %v1743 = vpop.f32.mrb[0].mxu0
  %v1744 = vpop.f32.mrb[0].mxu0
  %v1745 = vadd.f32 %v1197, %v1744
  %v1746 = vpop.f32.mrb[0].mxu0
  %1747 = vmatprep.mubr.bf16.mxu0 0
  %1748 = vmatmul.mubr.bf16.gmra.mrb[0].mxu0 %v1592
  %v1749 = vpop.f32.mrb[0].mxu0
  %v1750 = vadd.f32 %v1202, %v1749
  %v1751 = vpop.f32.mrb[0].mxu0
  %v1752 = vpop.f32.mrb[0].mxu0
  %v1753 = vadd.f32 %v1205, %v1752
  %v1754 = vpop.f32.mrb[0].mxu0
  %1755 = vmatprep.mubr.bf16.mxu0 0
  %1756 = vmatmul.mubr.bf16.gmra.mrb[0].mxu0 %v1595
  %v1757 = vpop.f32.mrb[0].mxu0
  %v1758 = vadd.f32 %v1210, %v1757
  %v1759 = vpop.f32.mrb[0].mxu0
  %v1760 = vpop.f32.mrb[0].mxu0
  %v1761 = vadd.f32 %v1213, %v1760
  %v1762 = vpop.f32.mrb[0].mxu0
  %1763 = vmatprep.mubr.bf16.mxu0 0
  %1764 = vmatmul.mubr.bf16.gmra.mrb[0].mxu0 %v1598
  %v1765 = vpop.f32.mrb[0].mxu0
  %v1766 = vadd.f32 %v1218, %v1765
  %v1767 = vpop.f32.mrb[0].mxu0
  %v1768 = vpop.f32.mrb[0].mxu0
  %v1769 = vadd.f32 %v1221, %v1768
  %v1770 = vpop.f32.mrb[0].mxu0
  %1771 = vmatprep.mubr.bf16.mxu0 0
  %1772 = vmatmul.mubr.bf16.gmra.mrb[0].mxu0 %v1601
  %v1773 = vpop.f32.mrb[0].mxu0
  %v1774 = vadd.f32 %v1226, %v1773
  %v1775 = vpop.f32.mrb[0].mxu0
  %v1776 = vpop.f32.mrb[0].mxu0
  %v1777 = vadd.f32 %v1229, %v1776
  %v1778 = vpop.f32.mrb[0].mxu0
  %1779 = vmatprep.mubr.bf16.mxu0 0
  %1780 = vmatmul.mubr.bf16.gmra.mrb[0].mxu0 %v1604
  %v1781 = vpop.f32.mrb[0].mxu0
  %v1782 = vadd.f32 %v1234, %v1781
  %v1783 = vpop.f32.mrb[0].mxu0
  %v1784 = vpop.f32.mrb[0].mxu0
  %v1785 = vadd.f32 %v1237, %v1784
  %v1786 = vpop.f32.mrb[0].mxu0
  %1787 = vmatprep.mubr.bf16.mxu0 0
  %1788 = vmatmul.mubr.bf16.gmra.mrb[0].mxu0 %v1607
  %v1789 = vpop.f32.mrb[0].mxu0
  %v1790 = vadd.f32 %v1242, %v1789
  %v1791 = vpop.f32.mrb[0].mxu0
  %v1792 = vpop.f32.mrb[0].mxu0
  %v1793 = vadd.f32 %v1245, %v1792
  %v1794 = vpop.f32.mrb[0].mxu0
  %1795 = vmatprep.mubr.bf16.mxu0 0
  %1796 = vmatmul.mubr.bf16.gmra.mrb[0].mxu0 %v1610
  %v1797 = vpop.f32.mrb[0].mxu0
  %v1798 = vadd.f32 %v1250, %v1797
  %v1799 = vpop.f32.mrb[0].mxu0
  %v1800 = vpop.f32.mrb[0].mxu0
  %v1801 = vadd.f32 %v1253, %v1800
  %v1802 = vpop.f32.mrb[0].mxu0
  %1803 = vmatprep.mubr.bf16.mxu0 0
  %1804 = vmatmul.mubr.bf16.gmra.mrb[0].mxu0 %v1613
  %v1805 = vpop.f32.mrb[0].mxu0
  %v1806 = vadd.f32 %v1258, %v1805
  %v1807 = vpop.f32.mrb[0].mxu0
  %v1808 = vpop.f32.mrb[0].mxu0
  %v1809 = vadd.f32 %v1261, %v1808
  %v1810 = vpop.f32.mrb[0].mxu0
  %1811 = vmatprep.mubr.bf16.mxu0 0
  %1812 = vmatmul.mubr.bf16.gmra.mrb[0].mxu0 %v1616
  %v1813 = vpop.f32.mrb[0].mxu0
  %v1814 = vadd.f32 %v1266, %v1813
  %v1815 = vpop.f32.mrb[0].mxu0
  %v1816 = vpop.f32.mrb[0].mxu0
  %v1817 = vadd.f32 %v1269, %v1816
  %v1818 = vpop.f32.mrb[0].mxu0
  %1819 = vmatprep.mubr.bf16.mxu0 0
  %1820 = vmatmul.mubr.bf16.gmra.mrb[0].mxu0 %v1619
  %v1821 = vpop.f32.mrb[0].mxu0
  %v1822 = vadd.f32 %v1274, %v1821
  %v1823 = vpop.f32.mrb[0].mxu0
  %v1824 = vpop.f32.mrb[0].mxu0
  %v1825 = vadd.f32 %v1277, %v1824
  %v1826 = vpop.f32.mrb[0].mxu0
  %1827 = vmatprep.mubr.bf16.mxu0 0
  %1828 = vmatmul.mubr.bf16.gmra.mrb[0].mxu0 %v1622
  %v1829 = vpop.f32.mrb[0].mxu0
  %v1830 = vadd.f32 %v1282, %v1829
  %v1831 = vpop.f32.mrb[0].mxu0
  %v1832 = vpop.f32.mrb[0].mxu0
  %v1833 = vadd.f32 %v1285, %v1832
  %v1834 = vpop.f32.mrb[0].mxu0
  %1835 = vmatprep.mubr.bf16.mxu0 0
  %1836 = vmatmul.mubr.bf16.gmra.mrb[0].mxu0 %v1625
  %v1837 = vpop.f32.mrb[0].mxu0
  %v1838 = vadd.f32 %v1290, %v1837
  %v1839 = vpop.f32.mrb[0].mxu0
  %v1840 = vpop.f32.mrb[0].mxu0
  %v1841 = vadd.f32 %v1293, %v1840
  %v1842 = vpop.f32.mrb[0].mxu0
  %1843 = vmatprep.mubr.bf16.mxu0 0
  %1844 = vmatmul.mubr.bf16.gmra.mrb[0].mxu0 %v1628
  %v1845 = vpop.f32.mrb[0].mxu0
  %v1846 = vadd.f32 %v1298, %v1845
  %v1847 = vpop.f32.mrb[0].mxu0
  %v1848 = vpop.f32.mrb[0].mxu0
  %v1849 = vadd.f32 %v1301, %v1848
  %v1850 = vpop.f32.mrb[0].mxu0
  %1851 = vmatprep.mubr.bf16.mxu0 0
  %1852 = vmatmul.mubr.bf16.gmra.mrb[0].mxu0 %v1631
  %v1853 = vpop.f32.mrb[0].mxu0
  %v1854 = vadd.f32 %v1306, %v1853
  %v1855 = vpop.f32.mrb[0].mxu0
  %v1856 = vpop.f32.mrb[0].mxu0
  %v1857 = vadd.f32 %v1309, %v1856
  %v1858 = vpop.f32.mrb[0].mxu0
  %1859 = vmatprep.mubr.bf16.mxu0 0
  %1860 = vmatmul.mubr.bf16.gmra.mrb[0].mxu0 %v1634
  %v1861 = vpop.f32.mrb[0].mxu0
  %v1862 = vadd.f32 %v1314, %v1861
  %v1863 = vpop.f32.mrb[0].mxu0
  %v1864 = vpop.f32.mrb[0].mxu0
  %v1865 = vadd.f32 %v1317, %v1864
  %v1866 = vpop.f32.mrb[0].mxu0
  %1867 = vmatprep.mubr.bf16.mxu0 0
  %1868 = vmatmul.mubr.bf16.gmra.mrb[0].mxu0 %v1637
  %v1869 = vpop.f32.mrb[0].mxu0
  %v1870 = vadd.f32 %v1322, %v1869
  %v1871 = vpop.f32.mrb[0].mxu0
  %v1872 = vpop.f32.mrb[0].mxu0
  %v1873 = vadd.f32 %v1325, %v1872
  %v1874 = vpop.f32.mrb[0].mxu0
  %1875 = vmatprep.mubr.bf16.mxu0 0
  %1876 = vmatmul.mubr.bf16.gmra.mrb[0].mxu0 %v1640
  %v1877 = vpop.f32.mrb[0].mxu0
  %v1878 = vadd.f32 %v1330, %v1877
  %v1879 = vpop.f32.mrb[0].mxu0
  %v1880 = vpop.f32.mrb[0].mxu0
  %v1881 = vadd.f32 %v1333, %v1880
  %v1882 = vpop.f32.mrb[0].mxu0
  %1883 = vmatprep.mubr.bf16.mxu0 0
  %1884 = vmatmul.mubr.bf16.gmra.mrb[0].mxu0 %v1643
  %v1885 = vpop.f32.mrb[0].mxu0
  %v1886 = vadd.f32 %v1338, %v1885
  %v1887 = vpop.f32.mrb[0].mxu0
  %v1888 = vpop.f32.mrb[0].mxu0
  %v1889 = vadd.f32 %v1341, %v1888
  %v1890 = vpop.f32.mrb[0].mxu0
  %1891 = vmatprep.mubr.bf16.mxu0 0
  %1892 = vmatmul.mubr.bf16.gmra.mrb[0].mxu0 %v1646
  %v1893 = vpop.f32.mrb[0].mxu0
  %v1894 = vadd.f32 %v1346, %v1893
  %v1895 = vpop.f32.mrb[0].mxu0
  %v1896 = vpop.f32.mrb[0].mxu0
  %v1897 = vadd.f32 %v1349, %v1896
  %v1898 = vpop.f32.mrb[0].mxu0
  %1899 = vmatprep.mubr.bf16.mxu0 0
  %1900 = vmatmul.mubr.bf16.gmra.mrb[0].mxu0 %v1649
  %v1901 = vpop.f32.mrb[0].mxu0
  %v1902 = vadd.f32 %v1354, %v1901
  %v1903 = vpop.f32.mrb[0].mxu0
  %v1904 = vpop.f32.mrb[0].mxu0
  %v1905 = vadd.f32 %v1357, %v1904
  %v1906 = vpop.f32.mrb[0].mxu0
  %1907 = vmatprep.mubr.bf16.mxu0 0
  %1908 = vmatmul.mubr.bf16.gmra.mrb[0].mxu0 %v1652
  %v1909 = vpop.f32.mrb[0].mxu0
  %v1910 = vadd.f32 %v1362, %v1909
  %v1911 = vpop.f32.mrb[0].mxu0
  %v1912 = vpop.f32.mrb[0].mxu0
  %v1913 = vadd.f32 %v1365, %v1912
  %v1914 = vpop.f32.mrb[0].mxu0
  %1915 = vmatprep.mubr.bf16.mxu0 0
  %1916 = vmatmul.mubr.bf16.gmra.mrb[0].mxu0 %v1655
  %v1917 = vpop.f32.mrb[0].mxu0
  %v1918 = vadd.f32 %v1370, %v1917
  %v1919 = vpop.f32.mrb[0].mxu0
  %v1920 = vpop.f32.mrb[0].mxu0
  %v1921 = vadd.f32 %v1373, %v1920
  %v1922 = vpop.f32.mrb[0].mxu0
  %1923 = vmatprep.mubr.bf16.mxu0 0
  %1924 = vmatmul.mubr.bf16.gmra.mrb[0].mxu0 %v1658
  %v1925 = vpop.f32.mrb[0].mxu0
  %v1926 = vadd.f32 %v1378, %v1925
  %v1927 = vpop.f32.mrb[0].mxu0
  %v1928 = vpop.f32.mrb[0].mxu0
  %v1929 = vadd.f32 %v1381, %v1928
  %v1930 = vpop.f32.mrb[0].mxu0
  %1931 = vmatprep.mubr.bf16.mxu0 0
  %1932 = vmatmul.mubr.bf16.gmra.mrb[0].mxu0 %v1661
  %v1933 = vpop.f32.mrb[0].mxu0
  %v1934 = vadd.f32 %v1386, %v1933
  %v1935 = vpop.f32.mrb[0].mxu0
  %v1936 = vpop.f32.mrb[0].mxu0
  %v1937 = vadd.f32 %v1389, %v1936
  %v1938 = vpop.f32.mrb[0].mxu0
  %1939 = vmatprep.mubr.bf16.mxu0 0
  %1940 = vmatmul.mubr.bf16.gmra.mrb[0].mxu0 %v1664
  %v1941 = vpop.f32.mrb[0].mxu0
  %v1942 = vadd.f32 %v1394, %v1941
  %v1943 = vpop.f32.mrb[0].mxu0
  %v1944 = vpop.f32.mrb[0].mxu0
  %v1945 = vadd.f32 %v1397, %v1944
  %v1946 = vpop.f32.mrb[0].mxu0
  %1947 = vmatprep.mubr.bf16.mxu0 0
  %1948 = vmatmul.mubr.bf16.gmra.mrb[0].mxu0 %v1667
  %v1949 = vpop.f32.mrb[0].mxu0
  %v1950 = vadd.f32 %v1402, %v1949
  %v1951 = vpop.f32.mrb[0].mxu0
  %v1952 = vpop.f32.mrb[0].mxu0
  %v1953 = vadd.f32 %v1405, %v1952
  %v1954 = vpop.f32.mrb[0].mxu0
  %1955 = vmatprep.mubr.bf16.mxu0 0
  %1956 = vmatmul.mubr.bf16.gmra.mrb[0].mxu0 %v1670
  %v1957 = vpop.f32.mrb[0].mxu0
  %v1958 = vadd.f32 %v1410, %v1957
  %v1959 = vpop.f32.mrb[0].mxu0
  %v1960 = vpop.f32.mrb[0].mxu0
  %v1961 = vadd.f32 %v1413, %v1960
  %v1962 = vpop.f32.mrb[0].mxu0
  %1963 = vdwg.mxu0
  %v1964 = vld [vmem:[%s42] sm:$0xe]
  %v1965 = vld [vmem:[%s42 + $0xc] sm:$0xe]
  %v1966 = vld [vmem:[%s42 + $0x18] sm:$0xe]
  %v1967 = vld [vmem:[%s42 + $0x24] sm:$0xe]
  %v1968 = vld [vmem:[%s42 + $0x30] sm:$0xe]
  %v1969 = vld [vmem:[%s42 + $0x3c] sm:$0xe]
  %v1970 = vld [vmem:[%s42 + $0x48] sm:$0xe]
  %v1971 = vld [vmem:[%s42 + $0x54] sm:$0xe]
  %v1972 = vld [vmem:[%s42 + $0x60] sm:$0xe]
  %v1973 = vld [vmem:[%s42 + $0x6c] sm:$0xe]
  %v1974 = vld [vmem:[%s42 + $0x78] sm:$0xe]
  %v1975 = vld [vmem:[%s42 + $0x84] sm:$0xe]
  %v1976 = vld [vmem:[%s42 + $0x90] sm:$0xe]
  %v1977 = vld [vmem:[%s42 + $0x9c] sm:$0xe]
  %v1978 = vld [vmem:[%s42 + $0xa8] sm:$0xe]
  %v1979 = vld [vmem:[%s42 + $0xb4] sm:$0xe]
  %v1980 = vld [vmem:[%s42 + $0xd8] sm:$0xe]
  %v1981 = vld [vmem:[%s42 + $0xe4] sm:$0xe]
  %v1982 = vld [vmem:[%s42 + $0xf0] sm:$0xe]
  %v1983 = vld [vmem:[%s42 + $0xfc] sm:$0xe]
  %v1984 = vld [vmem:[%s42 + $0x108] sm:$0xe]
  %v1985 = vld [vmem:[%s42 + $0x114] sm:$0xe]
  %v1986 = vld [vmem:[%s42 + $0x120] sm:$0xe]
  %v1987 = vld [vmem:[%s42 + $0x12c] sm:$0xe]
  %v1988 = vld [vmem:[%s42 + $0x138] sm:$0xe]
  %v1989 = vld [vmem:[%s42 + $0x144] sm:$0xe]
  %v1990 = vld [vmem:[%s42 + $0x150] sm:$0xe]
  %v1991 = vld [vmem:[%s42 + $0x15c] sm:$0xe]
  %v1992 = vld [vmem:[%s42 + $0x168] sm:$0xe]
  %v1993 = vld [vmem:[%s42 + $0x174] sm:$0xe]
  %v1994 = vld [vmem:[%s42 + $0x180] sm:$0xe]
  %v1995 = vld [vmem:[%s42 + $0x18c] sm:$0xe]
  %vm2060 = vcmask 1042432
  %vm2061 = vcmask 1046532
  %vm2062 = vmor %vm2060, %vm2061
  %v2063 = vrot.slane %v1964, 5
  %v2064 = vrot.slane %v2063, 4
  %v2065 = vrot.slane %v61, 5
  %v2066 = vsel %vm2062, %v2064, %v2065
  %v2067 = vrot.slane %v2065, 4
  %v2068 = vrot.slane %v125, 5
  %v2069 = vsel %vm2062, %v2067, %v2068
  %v2070 = vrot.slane %v1965, 5
  %v2071 = vrot.slane %v2070, 4
  %v2072 = vrot.slane %v63, 5
  %v2073 = vsel %vm2062, %v2071, %v2072
  %v2074 = vrot.slane %v2072, 4
  %v2075 = vrot.slane %v126, 5
  %v2076 = vsel %vm2062, %v2074, %v2075
  %v2077 = vrot.slane %v1966, 5
  %v2078 = vrot.slane %v2077, 4
  %v2079 = vrot.slane %v65, 5
  %v2080 = vsel %vm2062, %v2078, %v2079
  %v2081 = vrot.slane %v2079, 4
  %v2082 = vrot.slane %v127, 5
  %v2083 = vsel %vm2062, %v2081, %v2082
  %v2084 = vrot.slane %v1967, 5
  %v2085 = vrot.slane %v2084, 4
  %v2086 = vrot.slane %v67, 5
  %v2087 = vsel %vm2062, %v2085, %v2086
  %v2088 = vrot.slane %v2086, 4
  %v2089 = vrot.slane %v128, 5
  %v2090 = vsel %vm2062, %v2088, %v2089
  %v2091 = vrot.slane %v1968, 5
  %v2092 = vrot.slane %v2091, 4
  %v2093 = vrot.slane %v69, 5
  %v2094 = vsel %vm2062, %v2092, %v2093
  %v2095 = vrot.slane %v2093, 4
  %v2096 = vrot.slane %v129, 5
  %v2097 = vsel %vm2062, %v2095, %v2096
  %v2098 = vrot.slane %v1969, 5
  %v2099 = vrot.slane %v2098, 4
  %v2100 = vrot.slane %v71, 5
  %v2101 = vsel %vm2062, %v2099, %v2100
  %v2102 = vrot.slane %v2100, 4
  %v2103 = vrot.slane %v130, 5
  %v2104 = vsel %vm2062, %v2102, %v2103
  %v2105 = vrot.slane %v1970, 5
  %v2106 = vrot.slane %v2105, 4
  %v2107 = vrot.slane %v73, 5
  %v2108 = vsel %vm2062, %v2106, %v2107
  %v2109 = vrot.slane %v2107, 4
  %v2110 = vrot.slane %v131, 5
  %v2111 = vsel %vm2062, %v2109, %v2110
  %v2112 = vrot.slane %v1971, 5
  %v2113 = vrot.slane %v2112, 4
  %v2114 = vrot.slane %v75, 5
  %v2115 = vsel %vm2062, %v2113, %v2114
  %v2116 = vrot.slane %v2114, 4
  %v2117 = vrot.slane %v132, 5
  %v2118 = vsel %vm2062, %v2116, %v2117
  %v2119 = vrot.slane %v1972, 5
  %v2120 = vrot.slane %v2119, 4
  %v2121 = vrot.slane %v77, 5
  %v2122 = vsel %vm2062, %v2120, %v2121
  %v2123 = vrot.slane %v2121, 4
  %v2124 = vrot.slane %v133, 5
  %v2125 = vsel %vm2062, %v2123, %v2124
  %v2126 = vrot.slane %v1973, 5
  %v2127 = vrot.slane %v2126, 4
  %v2128 = vrot.slane %v79, 5
  %v2129 = vsel %vm2062, %v2127, %v2128
  %v2130 = vrot.slane %v2128, 4
  %v2131 = vrot.slane %v134, 5
  %v2132 = vsel %vm2062, %v2130, %v2131
  %v2133 = vrot.slane %v1974, 5
  %v2134 = vrot.slane %v2133, 4
  %v2135 = vrot.slane %v81, 5
  %v2136 = vsel %vm2062, %v2134, %v2135
  %v2137 = vrot.slane %v2135, 4
  %v2138 = vrot.slane %v135, 5
  %v2139 = vsel %vm2062, %v2137, %v2138
  %v2140 = vrot.slane %v1975, 5
  %v2141 = vrot.slane %v2140, 4
  %v2142 = vrot.slane %v83, 5
  %v2143 = vsel %vm2062, %v2141, %v2142
  %v2144 = vrot.slane %v2142, 4
  %v2145 = vrot.slane %v136, 5
  %v2146 = vsel %vm2062, %v2144, %v2145
  %v2147 = vrot.slane %v1976, 5
  %v2148 = vrot.slane %v2147, 4
  %v2149 = vrot.slane %v85, 5
  %v2150 = vsel %vm2062, %v2148, %v2149
  %v2151 = vrot.slane %v2149, 4
  %v2152 = vrot.slane %v137, 5
  %v2153 = vsel %vm2062, %v2151, %v2152
  %v2154 = vrot.slane %v1977, 5
  %v2155 = vrot.slane %v2154, 4
  %v2156 = vrot.slane %v87, 5
  %v2157 = vsel %vm2062, %v2155, %v2156
  %v2158 = vrot.slane %v2156, 4
  %v2159 = vrot.slane %v138, 5
  %v2160 = vsel %vm2062, %v2158, %v2159
  %v2161 = vrot.slane %v1978, 5
  %v2162 = vrot.slane %v2161, 4
  %v2163 = vrot.slane %v89, 5
  %v2164 = vsel %vm2062, %v2162, %v2163
  %v2165 = vrot.slane %v2163, 4
  %v2166 = vrot.slane %v139, 5
  %v2167 = vsel %vm2062, %v2165, %v2166
  %v2168 = vrot.slane %v1979, 5
  %v2169 = vrot.slane %v2168, 4
  %v2170 = vrot.slane %v91, 5
  %v2171 = vsel %vm2062, %v2169, %v2170
  %v2172 = vrot.slane %v2170, 4
  %v2173 = vrot.slane %v140, 5
  %v2174 = vsel %vm2062, %v2172, %v2173
  %v2175 = vrot.slane %v1980, 5
  %v2176 = vrot.slane %v2175, 4
  %v2177 = vrot.slane %v93, 5
  %v2178 = vsel %vm2062, %v2176, %v2177
  %v2179 = vrot.slane %v2177, 4
  %v2180 = vrot.slane %v141, 5
  %v2181 = vsel %vm2062, %v2179, %v2180
  %v2182 = vrot.slane %v1981, 5
  %v2183 = vrot.slane %v2182, 4
  %v2184 = vrot.slane %v95, 5
  %v2185 = vsel %vm2062, %v2183, %v2184
  %v2186 = vrot.slane %v2184, 4
  %v2187 = vrot.slane %v142, 5
  %v2188 = vsel %vm2062, %v2186, %v2187
  %v2189 = vrot.slane %v1982, 5
  %v2190 = vrot.slane %v2189, 4
  %v2191 = vrot.slane %v97, 5
  %v2192 = vsel %vm2062, %v2190, %v2191
  %v2193 = vrot.slane %v2191, 4
  %v2194 = vrot.slane %v143, 5
  %v2195 = vsel %vm2062, %v2193, %v2194
  %v2196 = vrot.slane %v1983, 5
  %v2197 = vrot.slane %v2196, 4
  %v2198 = vrot.slane %v99, 5
  %v2199 = vsel %vm2062, %v2197, %v2198
  %v2200 = vrot.slane %v2198, 4
  %v2201 = vrot.slane %v144, 5
  %v2202 = vsel %vm2062, %v2200, %v2201
  %v2203 = vrot.slane %v1984, 5
  %v2204 = vrot.slane %v2203, 4
  %v2205 = vrot.slane %v101, 5
  %v2206 = vsel %vm2062, %v2204, %v2205
  %v2207 = vrot.slane %v2205, 4
  %v2208 = vrot.slane %v145, 5
  %v2209 = vsel %vm2062, %v2207, %v2208
  %v2210 = vrot.slane %v1985, 5
  %v2211 = vrot.slane %v2210, 4
  %v2212 = vrot.slane %v103, 5
  %v2213 = vsel %vm2062, %v2211, %v2212
  %v2214 = vrot.slane %v2212, 4
  %v2215 = vrot.slane %v146, 5
  %v2216 = vsel %vm2062, %v2214, %v2215
  %v2217 = vrot.slane %v1986, 5
  %v2218 = vrot.slane %v2217, 4
  %v2219 = vrot.slane %v105, 5
  %v2220 = vsel %vm2062, %v2218, %v2219
  %v2221 = vrot.slane %v2219, 4
  %v2222 = vrot.slane %v147, 5
  %v2223 = vsel %vm2062, %v2221, %v2222
  %v2224 = vrot.slane %v1987, 5
  %v2225 = vrot.slane %v2224, 4
  %v2226 = vrot.slane %v107, 5
  %v2227 = vsel %vm2062, %v2225, %v2226
  %v2228 = vrot.slane %v2226, 4
  %v2229 = vrot.slane %v148, 5
  %v2230 = vsel %vm2062, %v2228, %v2229
  %v2231 = vrot.slane %v1988, 5
  %v2232 = vrot.slane %v2231, 4
  %v2233 = vrot.slane %v109, 5
  %v2234 = vsel %vm2062, %v2232, %v2233
  %v2235 = vrot.slane %v2233, 4
  %v2236 = vrot.slane %v149, 5
  %v2237 = vsel %vm2062, %v2235, %v2236
  %v2238 = vrot.slane %v1989, 5
  %v2239 = vrot.slane %v2238, 4
  %v2240 = vrot.slane %v111, 5
  %v2241 = vsel %vm2062, %v2239, %v2240
  %v2242 = vrot.slane %v2240, 4
  %v2243 = vrot.slane %v150, 5
  %v2244 = vsel %vm2062, %v2242, %v2243
  %v2245 = vrot.slane %v1990, 5
  %v2246 = vrot.slane %v2245, 4
  %v2247 = vrot.slane %v113, 5
  %v2248 = vsel %vm2062, %v2246, %v2247
  %v2249 = vrot.slane %v2247, 4
  %v2250 = vrot.slane %v151, 5
  %v2251 = vsel %vm2062, %v2249, %v2250
  %v2252 = vrot.slane %v1991, 5
  %v2253 = vrot.slane %v2252, 4
  %v2254 = vrot.slane %v115, 5
  %v2255 = vsel %vm2062, %v2253, %v2254
  %v2256 = vrot.slane %v2254, 4
  %v2257 = vrot.slane %v152, 5
  %v2258 = vsel %vm2062, %v2256, %v2257
  %v2259 = vrot.slane %v1992, 5
  %v2260 = vrot.slane %v2259, 4
  %v2261 = vrot.slane %v117, 5
  %v2262 = vsel %vm2062, %v2260, %v2261
  %v2263 = vrot.slane %v2261, 4
  %v2264 = vrot.slane %v153, 5
  %v2265 = vsel %vm2062, %v2263, %v2264
  %v2266 = vrot.slane %v1993, 5
  %v2267 = vrot.slane %v2266, 4
  %v2268 = vrot.slane %v119, 5
  %v2269 = vsel %vm2062, %v2267, %v2268
  %v2270 = vrot.slane %v2268, 4
  %v2271 = vrot.slane %v154, 5
  %v2272 = vsel %vm2062, %v2270, %v2271
  %v2273 = vrot.slane %v1994, 5
  %v2274 = vrot.slane %v2273, 4
  %v2275 = vrot.slane %v121, 5
  %v2276 = vsel %vm2062, %v2274, %v2275
  %v2277 = vrot.slane %v2275, 4
  %v2278 = vrot.slane %v155, 5
  %v2279 = vsel %vm2062, %v2277, %v2278
  %v2280 = vrot.slane %v1995, 5
  %v2281 = vrot.slane %v2280, 4
  %v2282 = vrot.slane %v123, 5
  %v2283 = vsel %vm2062, %v2281, %v2282
  %v2284 = vrot.slane %v2282, 4
  %v2285 = vrot.slane %v156, 5
  %v2286 = vsel %vm2062, %v2284, %v2285
  %s2287 = scalar_lea.vmem %s1, 4
  %v2288 = vld [vmem:[%s2287] sm:$0x3]
  %v2289 = vunpack.c.l.b16 %v2066
  %v2290 = vunpack.c.l.b16 %v2069
  %v2291 = vunpack.c.l.b16 %v2073
  %v2292 = vunpack.c.l.b16 %v2076
  %v2293 = vunpack.c.l.b16 %v2080
  %v2294 = vunpack.c.l.b16 %v2083
  %v2295 = vunpack.c.l.b16 %v2087
  %v2296 = vunpack.c.l.b16 %v2090
  %v2297 = vunpack.c.l.b16 %v2094
  %v2298 = vunpack.c.l.b16 %v2097
  %v2299 = vunpack.c.l.b16 %v2101
  %v2300 = vunpack.c.l.b16 %v2104
  %v2301 = vunpack.c.l.b16 %v2108
  %v2302 = vunpack.c.l.b16 %v2111
  %v2303 = vunpack.c.l.b16 %v2115
  %v2304 = vunpack.c.l.b16 %v2118
  %v2305 = vunpack.c.l.b16 %v2122
  %v2306 = vunpack.c.l.b16 %v2125
  %v2307 = vunpack.c.l.b16 %v2129
  %v2308 = vunpack.c.l.b16 %v2132
  %v2309 = vunpack.c.l.b16 %v2136
  %v2310 = vunpack.c.l.b16 %v2139
  %v2311 = vunpack.c.l.b16 %v2143
  %v2312 = vunpack.c.l.b16 %v2146
  %v2313 = vunpack.c.l.b16 %v2150
  %v2314 = vunpack.c.l.b16 %v2153
  %v2315 = vunpack.c.l.b16 %v2157
  %v2316 = vunpack.c.l.b16 %v2160
  %v2317 = vunpack.c.l.b16 %v2164
  %v2318 = vunpack.c.l.b16 %v2167
  %v2319 = vunpack.c.l.b16 %v2171
  %v2320 = vunpack.c.l.b16 %v2174
  %v2321 = vunpack.c.l.b16 %v2178
  %v2322 = vunpack.c.l.b16 %v2181
  %v2323 = vunpack.c.l.b16 %v2185
  %v2324 = vunpack.c.l.b16 %v2188
  %v2325 = vunpack.c.l.b16 %v2192
  %v2326 = vunpack.c.l.b16 %v2195
  %v2327 = vunpack.c.l.b16 %v2199
  %v2328 = vunpack.c.l.b16 %v2202
  %v2329 = vunpack.c.l.b16 %v2206
  %v2330 = vunpack.c.l.b16 %v2209
  %v2331 = vunpack.c.l.b16 %v2213
  %v2332 = vunpack.c.l.b16 %v2216
  %v2333 = vunpack.c.l.b16 %v2220
  %v2334 = vunpack.c.l.b16 %v2223
  %v2335 = vunpack.c.l.b16 %v2227
  %v2336 = vunpack.c.l.b16 %v2230
  %v2337 = vunpack.c.l.b16 %v2234
  %v2338 = vunpack.c.l.b16 %v2237
  %v2339 = vunpack.c.l.b16 %v2241
  %v2340 = vunpack.c.l.b16 %v2244
  %v2341 = vunpack.c.l.b16 %v2248
  %v2342 = vunpack.c.l.b16 %v2251
  %v2343 = vunpack.c.l.b16 %v2255
  %v2344 = vunpack.c.l.b16 %v2258
  %v2345 = vunpack.c.l.b16 %v2262
  %v2346 = vunpack.c.l.b16 %v2265
  %v2347 = vunpack.c.l.b16 %v2269
  %v2348 = vunpack.c.l.b16 %v2272
  %v2349 = vunpack.c.l.b16 %v2276
  %v2350 = vunpack.c.l.b16 %v2279
  %v2351 = vunpack.c.l.b16 %v2283
  %v2352 = vunpack.c.l.b16 %v2286
  %v2353 = vpack.c.b16 %v2290, %v2289
  %v2354 = vpack.c.b16 %v2292, %v2291
  %v2355 = vpack.c.b16 %v2294, %v2293
  %v2356 = vpack.c.b16 %v2296, %v2295
  %v2357 = vpack.c.b16 %v2298, %v2297
  %v2358 = vpack.c.b16 %v2300, %v2299
  %v2359 = vpack.c.b16 %v2302, %v2301
  %v2360 = vpack.c.b16 %v2304, %v2303
  %v2361 = vpack.c.b16 %v2306, %v2305
  %v2362 = vpack.c.b16 %v2308, %v2307
  %v2363 = vpack.c.b16 %v2310, %v2309
  %v2364 = vpack.c.b16 %v2312, %v2311
  %v2365 = vpack.c.b16 %v2314, %v2313
  %v2366 = vpack.c.b16 %v2316, %v2315
  %v2367 = vpack.c.b16 %v2318, %v2317
  %v2368 = vpack.c.b16 %v2320, %v2319
  %v2369 = vpack.c.b16 %v2322, %v2321
  %v2370 = vpack.c.b16 %v2324, %v2323
  %v2371 = vpack.c.b16 %v2326, %v2325
  %v2372 = vpack.c.b16 %v2328, %v2327
  %v2373 = vpack.c.b16 %v2330, %v2329
  %v2374 = vpack.c.b16 %v2332, %v2331
  %v2375 = vpack.c.b16 %v2334, %v2333
  %v2376 = vpack.c.b16 %v2336, %v2335
  %v2377 = vpack.c.b16 %v2338, %v2337
  %v2378 = vpack.c.b16 %v2340, %v2339
  %v2379 = vpack.c.b16 %v2342, %v2341
  %v2380 = vpack.c.b16 %v2344, %v2343
  %v2381 = vpack.c.b16 %v2346, %v2345
  %v2382 = vpack.c.b16 %v2348, %v2347
  %v2383 = vpack.c.b16 %v2350, %v2349
  %v2384 = vpack.c.b16 %v2352, %v2351
  %v2386 = vsel %vm1026, %v2353, 0
  %v2389 = vsel %vm1026, %v2354, 0
  %v2392 = vsel %vm1026, %v2355, 0
  %v2395 = vsel %vm1026, %v2356, 0
  %v2398 = vsel %vm1026, %v2357, 0
  %v2401 = vsel %vm1026, %v2358, 0
  %v2404 = vsel %vm1026, %v2359, 0
  %v2407 = vsel %vm1026, %v2360, 0
  %v2410 = vsel %vm1026, %v2361, 0
  %v2413 = vsel %vm1026, %v2362, 0
  %v2416 = vsel %vm1026, %v2363, 0
  %v2419 = vsel %vm1026, %v2364, 0
  %v2422 = vsel %vm1026, %v2365, 0
  %v2425 = vsel %vm1026, %v2366, 0
  %v2428 = vsel %vm1026, %v2367, 0
  %v2431 = vsel %vm1026, %v2368, 0
  %v2434 = vsel %vm1026, %v2369, 0
  %v2437 = vsel %vm1026, %v2370, 0
  %v2440 = vsel %vm1026, %v2371, 0
  %v2443 = vsel %vm1026, %v2372, 0
  %v2446 = vsel %vm1026, %v2373, 0
  %v2449 = vsel %vm1026, %v2374, 0
  %v2452 = vsel %vm1026, %v2375, 0
  %v2455 = vsel %vm1026, %v2376, 0
  %v2458 = vsel %vm1026, %v2377, 0
  %v2461 = vsel %vm1026, %v2378, 0
  %v2464 = vsel %vm1026, %v2379, 0
  %v2467 = vsel %vm1026, %v2380, 0
  %v2470 = vsel %vm1026, %v2381, 0
  %v2473 = vsel %vm1026, %v2382, 0
  %v2476 = vsel %vm1026, %v2383, 0
  %v2479 = vsel %vm1026, %v2384, 0
  %v2482 = vsel %vm1123, %v2288, 0
  %2484 = vmatprep.subr.bf16.mxu0 0
  %2485 = vmatpush1.bf16.msra.mxu0 %v2482
  %2486 = vmatprep.subr.bf16.mxu0 0
  %2487 = vmatpush1.bf16.msra.mxu0 0
  %2488 = vmatprep.subr.bf16.mxu0 0
  %2489 = vmatpush1.bf16.msra.mxu0 0
  %2490 = vmatprep.subr.bf16.mxu0 0
  %2491 = vmatpush1.bf16.msra.mxu0 0
  %2492 = vmatprep.subr.bf16.mxu0 0
  %2493 = vmatpush1.bf16.msra.mxu0 0
  %2494 = vmatprep.subr.bf16.mxu0 0
  %2495 = vmatpush1.bf16.msra.mxu0 0
  %2496 = vmatprep.subr.bf16.mxu0 0
  %2497 = vmatpush1.bf16.msra.mxu0 0
  %2498 = vmatprep.subr.bf16.mxu0 0
  %2499 = vmatpush1.bf16.msra.mxu0 0
  %2500 = vmatprep.subr.bf16.mxu0 0
  %2501 = vmatpush1.bf16.msra.mxu0 0
  %2502 = vmatprep.subr.bf16.mxu0 0
  %2503 = vmatpush1.bf16.msra.mxu0 0
  %2504 = vmatprep.subr.bf16.mxu0 0
  %2505 = vmatpush1.bf16.msra.mxu0 0
  %2506 = vmatprep.subr.bf16.mxu0 0
  %2507 = vmatpush1.bf16.msra.mxu0 0
  %2508 = vmatprep.subr.bf16.mxu0 0
  %2509 = vmatpush1.bf16.msra.mxu0 0
  %2510 = vmatprep.subr.bf16.mxu0 0
  %2511 = vmatpush1.bf16.msra.mxu0 0
  %2512 = vmatprep.subr.bf16.mxu0 0
  %2513 = vmatpush1.bf16.msra.mxu0 0
  %2514 = vmatprep.subr.bf16.mxu0 0
  %2515 = vmatpush1.bf16.msra.mxu0 0
  %2516 = vmatprep.mubr.bf16.mxu0 0
  %2517 = vmatmul.mubr.bf16.gmra.mrb[0].mxu0 %v2386
  %v2518 = vpop.f32.mrb[0].mxu0
  %v2519 = vadd.f32 0.0, %v2518
  %v2520 = vpop.f32.mrb[0].mxu0
  %v2521 = vpop.f32.mrb[0].mxu0
  %v2522 = vadd.f32 0.0, %v2521
  %v2523 = vpop.f32.mrb[0].mxu0
  %2524 = vmatprep.mubr.bf16.mxu0 0
  %2525 = vmatmul.mubr.bf16.gmra.mrb[0].mxu0 %v2389
  %v2526 = vpop.f32.mrb[0].mxu0
  %v2527 = vadd.f32 0.0, %v2526
  %v2528 = vpop.f32.mrb[0].mxu0
  %v2529 = vpop.f32.mrb[0].mxu0
  %v2530 = vadd.f32 0.0, %v2529
  %v2531 = vpop.f32.mrb[0].mxu0
  %2532 = vmatprep.mubr.bf16.mxu0 0
  %2533 = vmatmul.mubr.bf16.gmra.mrb[0].mxu0 %v2392
  %v2534 = vpop.f32.mrb[0].mxu0
  %v2535 = vadd.f32 0.0, %v2534
  %v2536 = vpop.f32.mrb[0].mxu0
  %v2537 = vpop.f32.mrb[0].mxu0
  %v2538 = vadd.f32 0.0, %v2537
  %v2539 = vpop.f32.mrb[0].mxu0
  %2540 = vmatprep.mubr.bf16.mxu0 0
  %2541 = vmatmul.mubr.bf16.gmra.mrb[0].mxu0 %v2395
  %v2542 = vpop.f32.mrb[0].mxu0
  %v2543 = vadd.f32 0.0, %v2542
  %v2544 = vpop.f32.mrb[0].mxu0
  %v2545 = vpop.f32.mrb[0].mxu0
  %v2546 = vadd.f32 0.0, %v2545
  %v2547 = vpop.f32.mrb[0].mxu0
  %2548 = vmatprep.mubr.bf16.mxu0 0
  %2549 = vmatmul.mubr.bf16.gmra.mrb[0].mxu0 %v2398
  %v2550 = vpop.f32.mrb[0].mxu0
  %v2551 = vadd.f32 0.0, %v2550
  %v2552 = vpop.f32.mrb[0].mxu0
  %v2553 = vpop.f32.mrb[0].mxu0
  %v2554 = vadd.f32 0.0, %v2553
  %v2555 = vpop.f32.mrb[0].mxu0
  %2556 = vmatprep.mubr.bf16.mxu0 0
  %2557 = vmatmul.mubr.bf16.gmra.mrb[0].mxu0 %v2401
  %v2558 = vpop.f32.mrb[0].mxu0
  %v2559 = vadd.f32 0.0, %v2558
  %v2560 = vpop.f32.mrb[0].mxu0
  %v2561 = vpop.f32.mrb[0].mxu0
  %v2562 = vadd.f32 0.0, %v2561
  %v2563 = vpop.f32.mrb[0].mxu0
  %2564 = vmatprep.mubr.bf16.mxu0 0
  %2565 = vmatmul.mubr.bf16.gmra.mrb[0].mxu0 %v2404
  %v2566 = vpop.f32.mrb[0].mxu0
  %v2567 = vadd.f32 0.0, %v2566
  %v2568 = vpop.f32.mrb[0].mxu0
  %v2569 = vpop.f32.mrb[0].mxu0
  %v2570 = vadd.f32 0.0, %v2569
  %v2571 = vpop.f32.mrb[0].mxu0
  %2572 = vmatprep.mubr.bf16.mxu0 0
  %2573 = vmatmul.mubr.bf16.gmra.mrb[0].mxu0 %v2407
  %v2574 = vpop.f32.mrb[0].mxu0
  %v2575 = vadd.f32 0.0, %v2574
  %v2576 = vpop.f32.mrb[0].mxu0
  %v2577 = vpop.f32.mrb[0].mxu0
  %v2578 = vadd.f32 0.0, %v2577
  %v2579 = vpop.f32.mrb[0].mxu0
  %2580 = vmatprep.mubr.bf16.mxu0 0
  %2581 = vmatmul.mubr.bf16.gmra.mrb[0].mxu0 %v2410
  %v2582 = vpop.f32.mrb[0].mxu0
  %v2583 = vadd.f32 0.0, %v2582
  %v2584 = vpop.f32.mrb[0].mxu0
  %v2585 = vpop.f32.mrb[0].mxu0
  %v2586 = vadd.f32 0.0, %v2585
  %v2587 = vpop.f32.mrb[0].mxu0
  %2588 = vmatprep.mubr.bf16.mxu0 0
  %2589 = vmatmul.mubr.bf16.gmra.mrb[0].mxu0 %v2413
  %v2590 = vpop.f32.mrb[0].mxu0
  %v2591 = vadd.f32 0.0, %v2590
  %v2592 = vpop.f32.mrb[0].mxu0
  %v2593 = vpop.f32.mrb[0].mxu0
  %v2594 = vadd.f32 0.0, %v2593
  %v2595 = vpop.f32.mrb[0].mxu0
  %2596 = vmatprep.mubr.bf16.mxu0 0
  %2597 = vmatmul.mubr.bf16.gmra.mrb[0].mxu0 %v2416
  %v2598 = vpop.f32.mrb[0].mxu0
  %v2599 = vadd.f32 0.0, %v2598
  %v2600 = vpop.f32.mrb[0].mxu0
  %v2601 = vpop.f32.mrb[0].mxu0
  %v2602 = vadd.f32 0.0, %v2601
  %v2603 = vpop.f32.mrb[0].mxu0
  %2604 = vmatprep.mubr.bf16.mxu0 0
  %2605 = vmatmul.mubr.bf16.gmra.mrb[0].mxu0 %v2419
  %v2606 = vpop.f32.mrb[0].mxu0
  %v2607 = vadd.f32 0.0, %v2606
  %v2608 = vpop.f32.mrb[0].mxu0
  %v2609 = vpop.f32.mrb[0].mxu0
  %v2610 = vadd.f32 0.0, %v2609
  %v2611 = vpop.f32.mrb[0].mxu0
  %2612 = vmatprep.mubr.bf16.mxu0 0
  %2613 = vmatmul.mubr.bf16.gmra.mrb[0].mxu0 %v2422
  %v2614 = vpop.f32.mrb[0].mxu0
  %v2615 = vadd.f32 0.0, %v2614
  %v2616 = vpop.f32.mrb[0].mxu0
  %v2617 = vpop.f32.mrb[0].mxu0
  %v2618 = vadd.f32 0.0, %v2617
  %v2619 = vpop.f32.mrb[0].mxu0
  %2620 = vmatprep.mubr.bf16.mxu0 0
  %2621 = vmatmul.mubr.bf16.gmra.mrb[0].mxu0 %v2425
  %v2622 = vpop.f32.mrb[0].mxu0
  %v2623 = vadd.f32 0.0, %v2622
  %v2624 = vpop.f32.mrb[0].mxu0
  %v2625 = vpop.f32.mrb[0].mxu0
  %v2626 = vadd.f32 0.0, %v2625
  %v2627 = vpop.f32.mrb[0].mxu0
  %2628 = vmatprep.mubr.bf16.mxu0 0
  %2629 = vmatmul.mubr.bf16.gmra.mrb[0].mxu0 %v2428
  %v2630 = vpop.f32.mrb[0].mxu0
  %v2631 = vadd.f32 0.0, %v2630
  %v2632 = vpop.f32.mrb[0].mxu0
  %v2633 = vpop.f32.mrb[0].mxu0
  %v2634 = vadd.f32 0.0, %v2633
  %v2635 = vpop.f32.mrb[0].mxu0
  %2636 = vmatprep.mubr.bf16.mxu0 0
  %2637 = vmatmul.mubr.bf16.gmra.mrb[0].mxu0 %v2431
  %v2638 = vpop.f32.mrb[0].mxu0
  %v2639 = vadd.f32 0.0, %v2638
  %v2640 = vpop.f32.mrb[0].mxu0
  %v2641 = vpop.f32.mrb[0].mxu0
  %v2642 = vadd.f32 0.0, %v2641
  %v2643 = vpop.f32.mrb[0].mxu0
  %2644 = vmatprep.mubr.bf16.mxu0 0
  %2645 = vmatmul.mubr.bf16.gmra.mrb[0].mxu0 %v2434
  %v2646 = vpop.f32.mrb[0].mxu0
  %v2647 = vadd.f32 0.0, %v2646
  %v2648 = vpop.f32.mrb[0].mxu0
  %v2649 = vpop.f32.mrb[0].mxu0
  %v2650 = vadd.f32 0.0, %v2649
  %v2651 = vpop.f32.mrb[0].mxu0
  %2652 = vmatprep.mubr.bf16.mxu0 0
  %2653 = vmatmul.mubr.bf16.gmra.mrb[0].mxu0 %v2437
  %v2654 = vpop.f32.mrb[0].mxu0
  %v2655 = vadd.f32 0.0, %v2654
  %v2656 = vpop.f32.mrb[0].mxu0
  %v2657 = vpop.f32.mrb[0].mxu0
  %v2658 = vadd.f32 0.0, %v2657
  %v2659 = vpop.f32.mrb[0].mxu0
  %2660 = vmatprep.mubr.bf16.mxu0 0
  %2661 = vmatmul.mubr.bf16.gmra.mrb[0].mxu0 %v2440
  %v2662 = vpop.f32.mrb[0].mxu0
  %v2663 = vadd.f32 0.0, %v2662
  %v2664 = vpop.f32.mrb[0].mxu0
  %v2665 = vpop.f32.mrb[0].mxu0
  %v2666 = vadd.f32 0.0, %v2665
  %v2667 = vpop.f32.mrb[0].mxu0
  %2668 = vmatprep.mubr.bf16.mxu0 0
  %2669 = vmatmul.mubr.bf16.gmra.mrb[0].mxu0 %v2443
  %v2670 = vpop.f32.mrb[0].mxu0
  %v2671 = vadd.f32 0.0, %v2670
  %v2672 = vpop.f32.mrb[0].mxu0
  %v2673 = vpop.f32.mrb[0].mxu0
  %v2674 = vadd.f32 0.0, %v2673
  %v2675 = vpop.f32.mrb[0].mxu0
  %2676 = vmatprep.mubr.bf16.mxu0 0
  %2677 = vmatmul.mubr.bf16.gmra.mrb[0].mxu0 %v2446
  %v2678 = vpop.f32.mrb[0].mxu0
  %v2679 = vadd.f32 0.0, %v2678
  %v2680 = vpop.f32.mrb[0].mxu0
  %v2681 = vpop.f32.mrb[0].mxu0
  %v2682 = vadd.f32 0.0, %v2681
  %v2683 = vpop.f32.mrb[0].mxu0
  %2684 = vmatprep.mubr.bf16.mxu0 0
  %2685 = vmatmul.mubr.bf16.gmra.mrb[0].mxu0 %v2449
  %v2686 = vpop.f32.mrb[0].mxu0
  %v2687 = vadd.f32 0.0, %v2686
  %v2688 = vpop.f32.mrb[0].mxu0
  %v2689 = vpop.f32.mrb[0].mxu0
  %v2690 = vadd.f32 0.0, %v2689
  %v2691 = vpop.f32.mrb[0].mxu0
  %2692 = vmatprep.mubr.bf16.mxu0 0
  %2693 = vmatmul.mubr.bf16.gmra.mrb[0].mxu0 %v2452
  %v2694 = vpop.f32.mrb[0].mxu0
  %v2695 = vadd.f32 0.0, %v2694
  %v2696 = vpop.f32.mrb[0].mxu0
  %v2697 = vpop.f32.mrb[0].mxu0
  %v2698 = vadd.f32 0.0, %v2697
  %v2699 = vpop.f32.mrb[0].mxu0
  %2700 = vmatprep.mubr.bf16.mxu0 0
  %2701 = vmatmul.mubr.bf16.gmra.mrb[0].mxu0 %v2455
  %v2702 = vpop.f32.mrb[0].mxu0
  %v2703 = vadd.f32 0.0, %v2702
  %v2704 = vpop.f32.mrb[0].mxu0
  %v2705 = vpop.f32.mrb[0].mxu0
  %v2706 = vadd.f32 0.0, %v2705
  %v2707 = vpop.f32.mrb[0].mxu0
  %2708 = vmatprep.mubr.bf16.mxu0 0
  %2709 = vmatmul.mubr.bf16.gmra.mrb[0].mxu0 %v2458
  %v2710 = vpop.f32.mrb[0].mxu0
  %v2711 = vadd.f32 0.0, %v2710
  %v2712 = vpop.f32.mrb[0].mxu0
  %v2713 = vpop.f32.mrb[0].mxu0
  %v2714 = vadd.f32 0.0, %v2713
  %v2715 = vpop.f32.mrb[0].mxu0
  %2716 = vmatprep.mubr.bf16.mxu0 0
  %2717 = vmatmul.mubr.bf16.gmra.mrb[0].mxu0 %v2461
  %v2718 = vpop.f32.mrb[0].mxu0
  %v2719 = vadd.f32 0.0, %v2718
  %v2720 = vpop.f32.mrb[0].mxu0
  %v2721 = vpop.f32.mrb[0].mxu0
  %v2722 = vadd.f32 0.0, %v2721
  %v2723 = vpop.f32.mrb[0].mxu0
  %2724 = vmatprep.mubr.bf16.mxu0 0
  %2725 = vmatmul.mubr.bf16.gmra.mrb[0].mxu0 %v2464
  %v2726 = vpop.f32.mrb[0].mxu0
  %v2727 = vadd.f32 0.0, %v2726
  %v2728 = vpop.f32.mrb[0].mxu0
  %v2729 = vpop.f32.mrb[0].mxu0
  %v2730 = vadd.f32 0.0, %v2729
  %v2731 = vpop.f32.mrb[0].mxu0
  %2732 = vmatprep.mubr.bf16.mxu0 0
  %2733 = vmatmul.mubr.bf16.gmra.mrb[0].mxu0 %v2467
  %v2734 = vpop.f32.mrb[0].mxu0
  %v2735 = vadd.f32 0.0, %v2734
  %v2736 = vpop.f32.mrb[0].mxu0
  %v2737 = vpop.f32.mrb[0].mxu0
  %v2738 = vadd.f32 0.0, %v2737
  %v2739 = vpop.f32.mrb[0].mxu0
  %2740 = vmatprep.mubr.bf16.mxu0 0
  %2741 = vmatmul.mubr.bf16.gmra.mrb[0].mxu0 %v2470
  %v2742 = vpop.f32.mrb[0].mxu0
  %v2743 = vadd.f32 0.0, %v2742
  %v2744 = vpop.f32.mrb[0].mxu0
  %v2745 = vpop.f32.mrb[0].mxu0
  %v2746 = vadd.f32 0.0, %v2745
  %v2747 = vpop.f32.mrb[0].mxu0
  %2748 = vmatprep.mubr.bf16.mxu0 0
  %2749 = vmatmul.mubr.bf16.gmra.mrb[0].mxu0 %v2473
  %v2750 = vpop.f32.mrb[0].mxu0
  %v2751 = vadd.f32 0.0, %v2750
  %v2752 = vpop.f32.mrb[0].mxu0
  %v2753 = vpop.f32.mrb[0].mxu0
  %v2754 = vadd.f32 0.0, %v2753
  %v2755 = vpop.f32.mrb[0].mxu0
  %2756 = vmatprep.mubr.bf16.mxu0 0
  %2757 = vmatmul.mubr.bf16.gmra.mrb[0].mxu0 %v2476
  %v2758 = vpop.f32.mrb[0].mxu0
  %v2759 = vadd.f32 0.0, %v2758
  %v2760 = vpop.f32.mrb[0].mxu0
  %v2761 = vpop.f32.mrb[0].mxu0
  %v2762 = vadd.f32 0.0, %v2761
  %v2763 = vpop.f32.mrb[0].mxu0
  %2764 = vmatprep.mubr.bf16.mxu0 0
  %2765 = vmatmul.mubr.bf16.gmra.mrb[0].mxu0 %v2479
  %v2766 = vpop.f32.mrb[0].mxu0
  %v2767 = vadd.f32 0.0, %v2766
  %v2768 = vpop.f32.mrb[0].mxu0
  %v2769 = vpop.f32.mrb[0].mxu0
  %v2770 = vadd.f32 0.0, %v2769
  %v2771 = vpop.f32.mrb[0].mxu0
  %2772 = vdwg.mxu0
  %v2773 = vadd.f32 %v1710, %v2519
  %v2774 = vadd.f32 %v1713, %v2522
  %v2775 = vadd.f32 %v1718, %v2527
  %v2776 = vadd.f32 %v1721, %v2530
  %v2777 = vadd.f32 %v1726, %v2535
  %v2778 = vadd.f32 %v1729, %v2538
  %v2779 = vadd.f32 %v1734, %v2543
  %v2780 = vadd.f32 %v1737, %v2546
  %v2781 = vadd.f32 %v1742, %v2551
  %v2782 = vadd.f32 %v1745, %v2554
  %v2783 = vadd.f32 %v1750, %v2559
  %v2784 = vadd.f32 %v1753, %v2562
  %v2785 = vadd.f32 %v1758, %v2567
  %v2786 = vadd.f32 %v1761, %v2570
  %v2787 = vadd.f32 %v1766, %v2575
  %v2788 = vadd.f32 %v1769, %v2578
  %v2789 = vadd.f32 %v1774, %v2583
  %v2790 = vadd.f32 %v1777, %v2586
  %v2791 = vadd.f32 %v1782, %v2591
  %v2792 = vadd.f32 %v1785, %v2594
  %v2793 = vadd.f32 %v1790, %v2599
  %v2794 = vadd.f32 %v1793, %v2602
  %v2795 = vadd.f32 %v1798, %v2607
  %v2796 = vadd.f32 %v1801, %v2610
  %v2797 = vadd.f32 %v1806, %v2615
  %v2798 = vadd.f32 %v1809, %v2618
  %v2799 = vadd.f32 %v1814, %v2623
  %v2800 = vadd.f32 %v1817, %v2626
  %v2801 = vadd.f32 %v1822, %v2631
  %v2802 = vadd.f32 %v1825, %v2634
  %v2803 = vadd.f32 %v1830, %v2639
  %v2804 = vadd.f32 %v1833, %v2642
  %v2805 = vadd.f32 %v1838, %v2647
  %v2806 = vadd.f32 %v1841, %v2650
  %v2807 = vadd.f32 %v1846, %v2655
  %v2808 = vadd.f32 %v1849, %v2658
  %v2809 = vadd.f32 %v1854, %v2663
  %v2810 = vadd.f32 %v1857, %v2666
  %v2811 = vadd.f32 %v1862, %v2671
  %v2812 = vadd.f32 %v1865, %v2674
  %v2813 = vadd.f32 %v1870, %v2679
  %v2814 = vadd.f32 %v1873, %v2682
  %v2815 = vadd.f32 %v1878, %v2687
  %v2816 = vadd.f32 %v1881, %v2690
  %v2817 = vadd.f32 %v1886, %v2695
  %v2818 = vadd.f32 %v1889, %v2698
  %v2819 = vadd.f32 %v1894, %v2703
  %v2820 = vadd.f32 %v1897, %v2706
  %v2821 = vadd.f32 %v1902, %v2711
  %v2822 = vadd.f32 %v1905, %v2714
  %v2823 = vadd.f32 %v1910, %v2719
  %v2824 = vadd.f32 %v1913, %v2722
  %v2825 = vadd.f32 %v1918, %v2727
  %v2826 = vadd.f32 %v1921, %v2730
  %v2827 = vadd.f32 %v1926, %v2735
  %v2828 = vadd.f32 %v1929, %v2738
  %v2829 = vadd.f32 %v1934, %v2743
  %v2830 = vadd.f32 %v1937, %v2746
  %v2831 = vadd.f32 %v1942, %v2751
  %v2832 = vadd.f32 %v1945, %v2754
  %v2833 = vadd.f32 %v1950, %v2759
  %v2834 = vadd.f32 %v1953, %v2762
  %v2835 = vadd.f32 %v1958, %v2767
  %v2836 = vadd.f32 %v1961, %v2770
  %s2837 = scalar_lea.vmem %s42, 12
  %v2838 = vld [vmem:[%s2837] sm:$0xf]
  %v2839 = vld [vmem:[%s2837 + $0x4] sm:$0xf]
  %v2840 = vld [vmem:[%s2837 + $0xc] sm:$0xf]
  %v2841 = vld [vmem:[%s2837 + $0x10] sm:$0xf]
  %v2842 = vld [vmem:[%s2837 + $0x18] sm:$0xf]
  %v2843 = vld [vmem:[%s2837 + $0x1c] sm:$0xf]
  %v2844 = vld [vmem:[%s2837 + $0x24] sm:$0xf]
  %v2845 = vld [vmem:[%s2837 + $0x28] sm:$0xf]
  %v2846 = vld [vmem:[%s2837 + $0x30] sm:$0xf]
  %v2847 = vld [vmem:[%s2837 + $0x34] sm:$0xf]
  %v2848 = vld [vmem:[%s2837 + $0x3c] sm:$0xf]
  %v2849 = vld [vmem:[%s2837 + $0x40] sm:$0xf]
  %v2850 = vld [vmem:[%s2837 + $0x48] sm:$0xf]
  %v2851 = vld [vmem:[%s2837 + $0x4c] sm:$0xf]
  %v2852 = vld [vmem:[%s2837 + $0x54] sm:$0xf]
  %v2853 = vld [vmem:[%s2837 + $0x58] sm:$0xf]
  %v2854 = vld [vmem:[%s2837 + $0x60] sm:$0xf]
  %v2855 = vld [vmem:[%s2837 + $0x64] sm:$0xf]
  %v2856 = vld [vmem:[%s2837 + $0x6c] sm:$0xf]
  %v2857 = vld [vmem:[%s2837 + $0x70] sm:$0xf]
  %v2858 = vld [vmem:[%s2837 + $0x78] sm:$0xf]
  %v2859 = vld [vmem:[%s2837 + $0x7c] sm:$0xf]
  %v2860 = vld [vmem:[%s2837 + $0x84] sm:$0xf]
  %v2861 = vld [vmem:[%s2837 + $0x88] sm:$0xf]
  %v2862 = vld [vmem:[%s2837 + $0x90] sm:$0xf]
  %v2863 = vld [vmem:[%s2837 + $0x94] sm:$0xf]
  %v2864 = vld [vmem:[%s2837 + $0x9c] sm:$0xf]
  %v2865 = vld [vmem:[%s2837 + $0xa0] sm:$0xf]
  %v2866 = vld [vmem:[%s2837 + $0xa8] sm:$0xf]
  %v2867 = vld [vmem:[%s2837 + $0xac] sm:$0xf]
  %v2868 = vld [vmem:[%s2837 + $0xb4] sm:$0xf]
  %v2869 = vld [vmem:[%s2837 + $0xb8] sm:$0xf]
  %v2870 = vld [vmem:[%s2837 + $0xd8] sm:$0xf]
  %v2871 = vld [vmem:[%s2837 + $0xdc] sm:$0xf]
  %v2872 = vld [vmem:[%s2837 + $0xe4] sm:$0xf]
  %v2873 = vld [vmem:[%s2837 + $0xe8] sm:$0xf]
  %v2874 = vld [vmem:[%s2837 + $0xf0] sm:$0xf]
  %v2875 = vld [vmem:[%s2837 + $0xf4] sm:$0xf]
  %v2876 = vld [vmem:[%s2837 + $0xfc] sm:$0xf]
  %v2877 = vld [vmem:[%s2837 + $0x100] sm:$0xf]
  %v2878 = vld [vmem:[%s2837 + $0x108] sm:$0xf]
  %v2879 = vld [vmem:[%s2837 + $0x10c] sm:$0xf]
  %v2880 = vld [vmem:[%s2837 + $0x114] sm:$0xf]
  %v2881 = vld [vmem:[%s2837 + $0x118] sm:$0xf]
  %v2882 = vld [vmem:[%s2837 + $0x120] sm:$0xf]
  %v2883 = vld [vmem:[%s2837 + $0x124] sm:$0xf]
  %v2884 = vld [vmem:[%s2837 + $0x12c] sm:$0xf]
  %v2885 = vld [vmem:[%s2837 + $0x130] sm:$0xf]
  %v2886 = vld [vmem:[%s2837 + $0x138] sm:$0xf]
  %v2887 = vld [vmem:[%s2837 + $0x13c] sm:$0xf]
  %v2888 = vld [vmem:[%s2837 + $0x144] sm:$0xf]
  %v2889 = vld [vmem:[%s2837 + $0x148] sm:$0xf]
  %v2890 = vld [vmem:[%s2837 + $0x150] sm:$0xf]
  %v2891 = vld [vmem:[%s2837 + $0x154] sm:$0xf]
  %v2892 = vld [vmem:[%s2837 + $0x15c] sm:$0xf]
  %v2893 = vld [vmem:[%s2837 + $0x160] sm:$0xf]
  %v2894 = vld [vmem:[%s2837 + $0x168] sm:$0xf]
  %v2895 = vld [vmem:[%s2837 + $0x16c] sm:$0xf]
  %v2896 = vld [vmem:[%s2837 + $0x174] sm:$0xf]
  %v2897 = vld [vmem:[%s2837 + $0x178] sm:$0xf]
  %v2898 = vld [vmem:[%s2837 + $0x180] sm:$0xf]
  %v2899 = vld [vmem:[%s2837 + $0x184] sm:$0xf]
  %v2900 = vld [vmem:[%s2837 + $0x18c] sm:$0xf]
  %v2901 = vld [vmem:[%s2837 + $0x190] sm:$0xf]
  %s2902 = scalar_lea.vmem %s1, 6
  %v2903 = vld [vmem:[%s2902] sm:$0x3]
  %v2968 = vunpack.c.l.b16 %v2838
  %v2969 = vunpack.c.l.b16 %v2839
  %v2970 = vunpack.c.l.b16 %v2840
  %v2971 = vunpack.c.l.b16 %v2841
  %v2972 = vunpack.c.l.b16 %v2842
  %v2973 = vunpack.c.l.b16 %v2843
  %v2974 = vunpack.c.l.b16 %v2844
  %v2975 = vunpack.c.l.b16 %v2845
  %v2976 = vunpack.c.l.b16 %v2846
  %v2977 = vunpack.c.l.b16 %v2847
  %v2978 = vunpack.c.l.b16 %v2848
  %v2979 = vunpack.c.l.b16 %v2849
  %v2980 = vunpack.c.l.b16 %v2850
  %v2981 = vunpack.c.l.b16 %v2851
  %v2982 = vunpack.c.l.b16 %v2852
  %v2983 = vunpack.c.l.b16 %v2853
  %v2984 = vunpack.c.l.b16 %v2854
  %v2985 = vunpack.c.l.b16 %v2855
  %v2986 = vunpack.c.l.b16 %v2856
  %v2987 = vunpack.c.l.b16 %v2857
  %v2988 = vunpack.c.l.b16 %v2858
  %v2989 = vunpack.c.l.b16 %v2859
  %v2990 = vunpack.c.l.b16 %v2860
  %v2991 = vunpack.c.l.b16 %v2861
  %v2992 = vunpack.c.l.b16 %v2862
  %v2993 = vunpack.c.l.b16 %v2863
  %v2994 = vunpack.c.l.b16 %v2864
  %v2995 = vunpack.c.l.b16 %v2865
  %v2996 = vunpack.c.l.b16 %v2866
  %v2997 = vunpack.c.l.b16 %v2867
  %v2998 = vunpack.c.l.b16 %v2868
  %v2999 = vunpack.c.l.b16 %v2869
  %v3000 = vunpack.c.l.b16 %v2870
  %v3001 = vunpack.c.l.b16 %v2871
  %v3002 = vunpack.c.l.b16 %v2872
  %v3003 = vunpack.c.l.b16 %v2873
  %v3004 = vunpack.c.l.b16 %v2874
  %v3005 = vunpack.c.l.b16 %v2875
  %v3006 = vunpack.c.l.b16 %v2876
  %v3007 = vunpack.c.l.b16 %v2877
  %v3008 = vunpack.c.l.b16 %v2878
  %v3009 = vunpack.c.l.b16 %v2879
  %v3010 = vunpack.c.l.b16 %v2880
  %v3011 = vunpack.c.l.b16 %v2881
  %v3012 = vunpack.c.l.b16 %v2882
  %v3013 = vunpack.c.l.b16 %v2883
  %v3014 = vunpack.c.l.b16 %v2884
  %v3015 = vunpack.c.l.b16 %v2885
  %v3016 = vunpack.c.l.b16 %v2886
  %v3017 = vunpack.c.l.b16 %v2887
  %v3018 = vunpack.c.l.b16 %v2888
  %v3019 = vunpack.c.l.b16 %v2889
  %v3020 = vunpack.c.l.b16 %v2890
  %v3021 = vunpack.c.l.b16 %v2891
  %v3022 = vunpack.c.l.b16 %v2892
  %v3023 = vunpack.c.l.b16 %v2893
  %v3024 = vunpack.c.l.b16 %v2894
  %v3025 = vunpack.c.l.b16 %v2895
  %v3026 = vunpack.c.l.b16 %v2896
  %v3027 = vunpack.c.l.b16 %v2897
  %v3028 = vunpack.c.l.b16 %v2898
  %v3029 = vunpack.c.l.b16 %v2899
  %v3030 = vunpack.c.l.b16 %v2900
  %v3031 = vunpack.c.l.b16 %v2901
  %v3032 = vpack.c.b16 %v2969, %v2968
  %v3033 = vpack.c.b16 %v2971, %v2970
  %v3034 = vpack.c.b16 %v2973, %v2972
  %v3035 = vpack.c.b16 %v2975, %v2974
  %v3036 = vpack.c.b16 %v2977, %v2976
  %v3037 = vpack.c.b16 %v2979, %v2978
  %v3038 = vpack.c.b16 %v2981, %v2980
  %v3039 = vpack.c.b16 %v2983, %v2982
  %v3040 = vpack.c.b16 %v2985, %v2984
  %v3041 = vpack.c.b16 %v2987, %v2986
  %v3042 = vpack.c.b16 %v2989, %v2988
  %v3043 = vpack.c.b16 %v2991, %v2990
  %v3044 = vpack.c.b16 %v2993, %v2992
  %v3045 = vpack.c.b16 %v2995, %v2994
  %v3046 = vpack.c.b16 %v2997, %v2996
  %v3047 = vpack.c.b16 %v2999, %v2998
  %v3048 = vpack.c.b16 %v3001, %v3000
  %v3049 = vpack.c.b16 %v3003, %v3002
  %v3050 = vpack.c.b16 %v3005, %v3004
  %v3051 = vpack.c.b16 %v3007, %v3006
  %v3052 = vpack.c.b16 %v3009, %v3008
  %v3053 = vpack.c.b16 %v3011, %v3010
  %v3054 = vpack.c.b16 %v3013, %v3012
  %v3055 = vpack.c.b16 %v3015, %v3014
  %v3056 = vpack.c.b16 %v3017, %v3016
  %v3057 = vpack.c.b16 %v3019, %v3018
  %v3058 = vpack.c.b16 %v3021, %v3020
  %v3059 = vpack.c.b16 %v3023, %v3022
  %v3060 = vpack.c.b16 %v3025, %v3024
  %v3061 = vpack.c.b16 %v3027, %v3026
  %v3062 = vpack.c.b16 %v3029, %v3028
  %v3063 = vpack.c.b16 %v3031, %v3030
  %v3065 = vsel %vm1026, %v3032, 0
  %v3068 = vsel %vm1026, %v3033, 0
  %v3071 = vsel %vm1026, %v3034, 0
  %v3074 = vsel %vm1026, %v3035, 0
  %v3077 = vsel %vm1026, %v3036, 0
  %v3080 = vsel %vm1026, %v3037, 0
  %v3083 = vsel %vm1026, %v3038, 0
  %v3086 = vsel %vm1026, %v3039, 0
  %v3089 = vsel %vm1026, %v3040, 0
  %v3092 = vsel %vm1026, %v3041, 0
  %v3095 = vsel %vm1026, %v3042, 0
  %v3098 = vsel %vm1026, %v3043, 0
  %v3101 = vsel %vm1026, %v3044, 0
  %v3104 = vsel %vm1026, %v3045, 0
  %v3107 = vsel %vm1026, %v3046, 0
  %v3110 = vsel %vm1026, %v3047, 0
  %v3113 = vsel %vm1026, %v3048, 0
  %v3116 = vsel %vm1026, %v3049, 0
  %v3119 = vsel %vm1026, %v3050, 0
  %v3122 = vsel %vm1026, %v3051, 0
  %v3125 = vsel %vm1026, %v3052, 0
  %v3128 = vsel %vm1026, %v3053, 0
  %v3131 = vsel %vm1026, %v3054, 0
  %v3134 = vsel %vm1026, %v3055, 0
  %v3137 = vsel %vm1026, %v3056, 0
  %v3140 = vsel %vm1026, %v3057, 0
  %v3143 = vsel %vm1026, %v3058, 0
  %v3146 = vsel %vm1026, %v3059, 0
  %v3149 = vsel %vm1026, %v3060, 0
  %v3152 = vsel %vm1026, %v3061, 0
  %v3155 = vsel %vm1026, %v3062, 0
  %v3158 = vsel %vm1026, %v3063, 0
  %v3161 = vsel %vm1123, %v2903, 0
  %3163 = vmatprep.subr.bf16.mxu0 0
  %3164 = vmatpush1.bf16.msra.mxu0 %v3161
  %3165 = vmatprep.subr.bf16.mxu0 0
  %3166 = vmatpush1.bf16.msra.mxu0 0
  %3167 = vmatprep.subr.bf16.mxu0 0
  %3168 = vmatpush1.bf16.msra.mxu0 0
  %3169 = vmatprep.subr.bf16.mxu0 0
  %3170 = vmatpush1.bf16.msra.mxu0 0
  %3171 = vmatprep.subr.bf16.mxu0 0
  %3172 = vmatpush1.bf16.msra.mxu0 0
  %3173 = vmatprep.subr.bf16.mxu0 0
  %3174 = vmatpush1.bf16.msra.mxu0 0
  %3175 = vmatprep.subr.bf16.mxu0 0
  %3176 = vmatpush1.bf16.msra.mxu0 0
  %3177 = vmatprep.subr.bf16.mxu0 0
  %3178 = vmatpush1.bf16.msra.mxu0 0
  %3179 = vmatprep.subr.bf16.mxu0 0
  %3180 = vmatpush1.bf16.msra.mxu0 0
  %3181 = vmatprep.subr.bf16.mxu0 0
  %3182 = vmatpush1.bf16.msra.mxu0 0
  %3183 = vmatprep.subr.bf16.mxu0 0
  %3184 = vmatpush1.bf16.msra.mxu0 0
  %3185 = vmatprep.subr.bf16.mxu0 0
  %3186 = vmatpush1.bf16.msra.mxu0 0
  %3187 = vmatprep.subr.bf16.mxu0 0
  %3188 = vmatpush1.bf16.msra.mxu0 0
  %3189 = vmatprep.subr.bf16.mxu0 0
  %3190 = vmatpush1.bf16.msra.mxu0 0
  %3191 = vmatprep.subr.bf16.mxu0 0
  %3192 = vmatpush1.bf16.msra.mxu0 0
  %3193 = vmatprep.subr.bf16.mxu0 0
  %3194 = vmatpush1.bf16.msra.mxu0 0
  %3195 = vmatprep.mubr.bf16.mxu0 0
  %3196 = vmatmul.mubr.bf16.gmra.mrb[0].mxu0 %v3065
  %v3197 = vpop.f32.mrb[0].mxu0
  %v3198 = vadd.f32 0.0, %v3197
  %v3199 = vpop.f32.mrb[0].mxu0
  %v3200 = vpop.f32.mrb[0].mxu0
  %v3201 = vadd.f32 0.0, %v3200
  %v3202 = vpop.f32.mrb[0].mxu0
  %3203 = vmatprep.mubr.bf16.mxu0 0
  %3204 = vmatmul.mubr.bf16.gmra.mrb[0].mxu0 %v3068
  %v3205 = vpop.f32.mrb[0].mxu0
  %v3206 = vadd.f32 0.0, %v3205
  %v3207 = vpop.f32.mrb[0].mxu0
  %v3208 = vpop.f32.mrb[0].mxu0
  %v3209 = vadd.f32 0.0, %v3208
  %v3210 = vpop.f32.mrb[0].mxu0
  %3211 = vmatprep.mubr.bf16.mxu0 0
  %3212 = vmatmul.mubr.bf16.gmra.mrb[0].mxu0 %v3071
  %v3213 = vpop.f32.mrb[0].mxu0
  %v3214 = vadd.f32 0.0, %v3213
  %v3215 = vpop.f32.mrb[0].mxu0
  %v3216 = vpop.f32.mrb[0].mxu0
  %v3217 = vadd.f32 0.0, %v3216
  %v3218 = vpop.f32.mrb[0].mxu0
  %3219 = vmatprep.mubr.bf16.mxu0 0
  %3220 = vmatmul.mubr.bf16.gmra.mrb[0].mxu0 %v3074
  %v3221 = vpop.f32.mrb[0].mxu0
  %v3222 = vadd.f32 0.0, %v3221
  %v3223 = vpop.f32.mrb[0].mxu0
  %v3224 = vpop.f32.mrb[0].mxu0
  %v3225 = vadd.f32 0.0, %v3224
  %v3226 = vpop.f32.mrb[0].mxu0
  %3227 = vmatprep.mubr.bf16.mxu0 0
  %3228 = vmatmul.mubr.bf16.gmra.mrb[0].mxu0 %v3077
  %v3229 = vpop.f32.mrb[0].mxu0
  %v3230 = vadd.f32 0.0, %v3229
  %v3231 = vpop.f32.mrb[0].mxu0
  %v3232 = vpop.f32.mrb[0].mxu0
  %v3233 = vadd.f32 0.0, %v3232
  %v3234 = vpop.f32.mrb[0].mxu0
  %3235 = vmatprep.mubr.bf16.mxu0 0
  %3236 = vmatmul.mubr.bf16.gmra.mrb[0].mxu0 %v3080
  %v3237 = vpop.f32.mrb[0].mxu0
  %v3238 = vadd.f32 0.0, %v3237
  %v3239 = vpop.f32.mrb[0].mxu0
  %v3240 = vpop.f32.mrb[0].mxu0
  %v3241 = vadd.f32 0.0, %v3240
  %v3242 = vpop.f32.mrb[0].mxu0
  %3243 = vmatprep.mubr.bf16.mxu0 0
  %3244 = vmatmul.mubr.bf16.gmra.mrb[0].mxu0 %v3083
  %v3245 = vpop.f32.mrb[0].mxu0
  %v3246 = vadd.f32 0.0, %v3245
  %v3247 = vpop.f32.mrb[0].mxu0
  %v3248 = vpop.f32.mrb[0].mxu0
  %v3249 = vadd.f32 0.0, %v3248
  %v3250 = vpop.f32.mrb[0].mxu0
  %3251 = vmatprep.mubr.bf16.mxu0 0
  %3252 = vmatmul.mubr.bf16.gmra.mrb[0].mxu0 %v3086
  %v3253 = vpop.f32.mrb[0].mxu0
  %v3254 = vadd.f32 0.0, %v3253
  %v3255 = vpop.f32.mrb[0].mxu0
  %v3256 = vpop.f32.mrb[0].mxu0
  %v3257 = vadd.f32 0.0, %v3256
  %v3258 = vpop.f32.mrb[0].mxu0
  %3259 = vmatprep.mubr.bf16.mxu0 0
  %3260 = vmatmul.mubr.bf16.gmra.mrb[0].mxu0 %v3089
  %v3261 = vpop.f32.mrb[0].mxu0
  %v3262 = vadd.f32 0.0, %v3261
  %v3263 = vpop.f32.mrb[0].mxu0
  %v3264 = vpop.f32.mrb[0].mxu0
  %v3265 = vadd.f32 0.0, %v3264
  %v3266 = vpop.f32.mrb[0].mxu0
  %3267 = vmatprep.mubr.bf16.mxu0 0
  %3268 = vmatmul.mubr.bf16.gmra.mrb[0].mxu0 %v3092
  %v3269 = vpop.f32.mrb[0].mxu0
  %v3270 = vadd.f32 0.0, %v3269
  %v3271 = vpop.f32.mrb[0].mxu0
  %v3272 = vpop.f32.mrb[0].mxu0
  %v3273 = vadd.f32 0.0, %v3272
  %v3274 = vpop.f32.mrb[0].mxu0
  %3275 = vmatprep.mubr.bf16.mxu0 0
  %3276 = vmatmul.mubr.bf16.gmra.mrb[0].mxu0 %v3095
  %v3277 = vpop.f32.mrb[0].mxu0
  %v3278 = vadd.f32 0.0, %v3277
  %v3279 = vpop.f32.mrb[0].mxu0
  %v3280 = vpop.f32.mrb[0].mxu0
  %v3281 = vadd.f32 0.0, %v3280
  %v3282 = vpop.f32.mrb[0].mxu0
  %3283 = vmatprep.mubr.bf16.mxu0 0
  %3284 = vmatmul.mubr.bf16.gmra.mrb[0].mxu0 %v3098
  %v3285 = vpop.f32.mrb[0].mxu0
  %v3286 = vadd.f32 0.0, %v3285
  %v3287 = vpop.f32.mrb[0].mxu0
  %v3288 = vpop.f32.mrb[0].mxu0
  %v3289 = vadd.f32 0.0, %v3288
  %v3290 = vpop.f32.mrb[0].mxu0
  %3291 = vmatprep.mubr.bf16.mxu0 0
  %3292 = vmatmul.mubr.bf16.gmra.mrb[0].mxu0 %v3101
  %v3293 = vpop.f32.mrb[0].mxu0
  %v3294 = vadd.f32 0.0, %v3293
  %v3295 = vpop.f32.mrb[0].mxu0
  %v3296 = vpop.f32.mrb[0].mxu0
  %v3297 = vadd.f32 0.0, %v3296
  %v3298 = vpop.f32.mrb[0].mxu0
  %3299 = vmatprep.mubr.bf16.mxu0 0
  %3300 = vmatmul.mubr.bf16.gmra.mrb[0].mxu0 %v3104
  %v3301 = vpop.f32.mrb[0].mxu0
  %v3302 = vadd.f32 0.0, %v3301
  %v3303 = vpop.f32.mrb[0].mxu0
  %v3304 = vpop.f32.mrb[0].mxu0
  %v3305 = vadd.f32 0.0, %v3304
  %v3306 = vpop.f32.mrb[0].mxu0
  %3307 = vmatprep.mubr.bf16.mxu0 0
  %3308 = vmatmul.mubr.bf16.gmra.mrb[0].mxu0 %v3107
  %v3309 = vpop.f32.mrb[0].mxu0
  %v3310 = vadd.f32 0.0, %v3309
  %v3311 = vpop.f32.mrb[0].mxu0
  %v3312 = vpop.f32.mrb[0].mxu0
  %v3313 = vadd.f32 0.0, %v3312
  %v3314 = vpop.f32.mrb[0].mxu0
  %3315 = vmatprep.mubr.bf16.mxu0 0
  %3316 = vmatmul.mubr.bf16.gmra.mrb[0].mxu0 %v3110
  %v3317 = vpop.f32.mrb[0].mxu0
  %v3318 = vadd.f32 0.0, %v3317
  %v3319 = vpop.f32.mrb[0].mxu0
  %v3320 = vpop.f32.mrb[0].mxu0
  %v3321 = vadd.f32 0.0, %v3320
  %v3322 = vpop.f32.mrb[0].mxu0
  %3323 = vmatprep.mubr.bf16.mxu0 0
  %3324 = vmatmul.mubr.bf16.gmra.mrb[0].mxu0 %v3113
  %v3325 = vpop.f32.mrb[0].mxu0
  %v3326 = vadd.f32 0.0, %v3325
  %v3327 = vpop.f32.mrb[0].mxu0
  %v3328 = vpop.f32.mrb[0].mxu0
  %v3329 = vadd.f32 0.0, %v3328
  %v3330 = vpop.f32.mrb[0].mxu0
  %3331 = vmatprep.mubr.bf16.mxu0 0
  %3332 = vmatmul.mubr.bf16.gmra.mrb[0].mxu0 %v3116
  %v3333 = vpop.f32.mrb[0].mxu0
  %v3334 = vadd.f32 0.0, %v3333
  %v3335 = vpop.f32.mrb[0].mxu0
  %v3336 = vpop.f32.mrb[0].mxu0
  %v3337 = vadd.f32 0.0, %v3336
  %v3338 = vpop.f32.mrb[0].mxu0
  %3339 = vmatprep.mubr.bf16.mxu0 0
  %3340 = vmatmul.mubr.bf16.gmra.mrb[0].mxu0 %v3119
  %v3341 = vpop.f32.mrb[0].mxu0
  %v3342 = vadd.f32 0.0, %v3341
  %v3343 = vpop.f32.mrb[0].mxu0
  %v3344 = vpop.f32.mrb[0].mxu0
  %v3345 = vadd.f32 0.0, %v3344
  %v3346 = vpop.f32.mrb[0].mxu0
  %3347 = vmatprep.mubr.bf16.mxu0 0
  %3348 = vmatmul.mubr.bf16.gmra.mrb[0].mxu0 %v3122
  %v3349 = vpop.f32.mrb[0].mxu0
  %v3350 = vadd.f32 0.0, %v3349
  %v3351 = vpop.f32.mrb[0].mxu0
  %v3352 = vpop.f32.mrb[0].mxu0
  %v3353 = vadd.f32 0.0, %v3352
  %v3354 = vpop.f32.mrb[0].mxu0
  %3355 = vmatprep.mubr.bf16.mxu0 0
  %3356 = vmatmul.mubr.bf16.gmra.mrb[0].mxu0 %v3125
  %v3357 = vpop.f32.mrb[0].mxu0
  %v3358 = vadd.f32 0.0, %v3357
  %v3359 = vpop.f32.mrb[0].mxu0
  %v3360 = vpop.f32.mrb[0].mxu0
  %v3361 = vadd.f32 0.0, %v3360
  %v3362 = vpop.f32.mrb[0].mxu0
  %3363 = vmatprep.mubr.bf16.mxu0 0
  %3364 = vmatmul.mubr.bf16.gmra.mrb[0].mxu0 %v3128
  %v3365 = vpop.f32.mrb[0].mxu0
  %v3366 = vadd.f32 0.0, %v3365
  %v3367 = vpop.f32.mrb[0].mxu0
  %v3368 = vpop.f32.mrb[0].mxu0
  %v3369 = vadd.f32 0.0, %v3368
  %v3370 = vpop.f32.mrb[0].mxu0
  %3371 = vmatprep.mubr.bf16.mxu0 0
  %3372 = vmatmul.mubr.bf16.gmra.mrb[0].mxu0 %v3131
  %v3373 = vpop.f32.mrb[0].mxu0
  %v3374 = vadd.f32 0.0, %v3373
  %v3375 = vpop.f32.mrb[0].mxu0
  %v3376 = vpop.f32.mrb[0].mxu0
  %v3377 = vadd.f32 0.0, %v3376
  %v3378 = vpop.f32.mrb[0].mxu0
  %3379 = vmatprep.mubr.bf16.mxu0 0
  %3380 = vmatmul.mubr.bf16.gmra.mrb[0].mxu0 %v3134
  %v3381 = vpop.f32.mrb[0].mxu0
  %v3382 = vadd.f32 0.0, %v3381
  %v3383 = vpop.f32.mrb[0].mxu0
  %v3384 = vpop.f32.mrb[0].mxu0
  %v3385 = vadd.f32 0.0, %v3384
  %v3386 = vpop.f32.mrb[0].mxu0
  %3387 = vmatprep.mubr.bf16.mxu0 0
  %3388 = vmatmul.mubr.bf16.gmra.mrb[0].mxu0 %v3137
  %v3389 = vpop.f32.mrb[0].mxu0
  %v3390 = vadd.f32 0.0, %v3389
  %v3391 = vpop.f32.mrb[0].mxu0
  %v3392 = vpop.f32.mrb[0].mxu0
  %v3393 = vadd.f32 0.0, %v3392
  %v3394 = vpop.f32.mrb[0].mxu0
  %3395 = vmatprep.mubr.bf16.mxu0 0
  %3396 = vmatmul.mubr.bf16.gmra.mrb[0].mxu0 %v3140
  %v3397 = vpop.f32.mrb[0].mxu0
  %v3398 = vadd.f32 0.0, %v3397
  %v3399 = vpop.f32.mrb[0].mxu0
  %v3400 = vpop.f32.mrb[0].mxu0
  %v3401 = vadd.f32 0.0, %v3400
  %v3402 = vpop.f32.mrb[0].mxu0
  %3403 = vmatprep.mubr.bf16.mxu0 0
  %3404 = vmatmul.mubr.bf16.gmra.mrb[0].mxu0 %v3143
  %v3405 = vpop.f32.mrb[0].mxu0
  %v3406 = vadd.f32 0.0, %v3405
  %v3407 = vpop.f32.mrb[0].mxu0
  %v3408 = vpop.f32.mrb[0].mxu0
  %v3409 = vadd.f32 0.0, %v3408
  %v3410 = vpop.f32.mrb[0].mxu0
  %3411 = vmatprep.mubr.bf16.mxu0 0
  %3412 = vmatmul.mubr.bf16.gmra.mrb[0].mxu0 %v3146
  %v3413 = vpop.f32.mrb[0].mxu0
  %v3414 = vadd.f32 0.0, %v3413
  %v3415 = vpop.f32.mrb[0].mxu0
  %v3416 = vpop.f32.mrb[0].mxu0
  %v3417 = vadd.f32 0.0, %v3416
  %v3418 = vpop.f32.mrb[0].mxu0
  %3419 = vmatprep.mubr.bf16.mxu0 0
  %3420 = vmatmul.mubr.bf16.gmra.mrb[0].mxu0 %v3149
  %v3421 = vpop.f32.mrb[0].mxu0
  %v3422 = vadd.f32 0.0, %v3421
  %v3423 = vpop.f32.mrb[0].mxu0
  %v3424 = vpop.f32.mrb[0].mxu0
  %v3425 = vadd.f32 0.0, %v3424
  %v3426 = vpop.f32.mrb[0].mxu0
  %3427 = vmatprep.mubr.bf16.mxu0 0
  %3428 = vmatmul.mubr.bf16.gmra.mrb[0].mxu0 %v3152
  %v3429 = vpop.f32.mrb[0].mxu0
  %v3430 = vadd.f32 0.0, %v3429
  %v3431 = vpop.f32.mrb[0].mxu0
  %v3432 = vpop.f32.mrb[0].mxu0
  %v3433 = vadd.f32 0.0, %v3432
  %v3434 = vpop.f32.mrb[0].mxu0
  %3435 = vmatprep.mubr.bf16.mxu0 0
  %3436 = vmatmul.mubr.bf16.gmra.mrb[0].mxu0 %v3155
  %v3437 = vpop.f32.mrb[0].mxu0
  %v3438 = vadd.f32 0.0, %v3437
  %v3439 = vpop.f32.mrb[0].mxu0
  %v3440 = vpop.f32.mrb[0].mxu0
  %v3441 = vadd.f32 0.0, %v3440
  %v3442 = vpop.f32.mrb[0].mxu0
  %3443 = vmatprep.mubr.bf16.mxu0 0
  %3444 = vmatmul.mubr.bf16.gmra.mrb[0].mxu0 %v3158
  %v3445 = vpop.f32.mrb[0].mxu0
  %v3446 = vadd.f32 0.0, %v3445
  %v3447 = vpop.f32.mrb[0].mxu0
  %v3448 = vpop.f32.mrb[0].mxu0
  %v3449 = vadd.f32 0.0, %v3448
  %v3450 = vpop.f32.mrb[0].mxu0
  %3451 = vdwg.mxu0
  %v3452 = vadd.f32 %v2773, %v3198
  %v3453 = vadd.f32 %v2774, %v3201
  %v3454 = vadd.f32 %v2775, %v3206
  %v3455 = vadd.f32 %v2776, %v3209
  %v3456 = vadd.f32 %v2777, %v3214
  %v3457 = vadd.f32 %v2778, %v3217
  %v3458 = vadd.f32 %v2779, %v3222
  %v3459 = vadd.f32 %v2780, %v3225
  %v3460 = vadd.f32 %v2781, %v3230
  %v3461 = vadd.f32 %v2782, %v3233
  %v3462 = vadd.f32 %v2783, %v3238
  %v3463 = vadd.f32 %v2784, %v3241
  %v3464 = vadd.f32 %v2785, %v3246
  %v3465 = vadd.f32 %v2786, %v3249
  %v3466 = vadd.f32 %v2787, %v3254
  %v3467 = vadd.f32 %v2788, %v3257
  %v3468 = vadd.f32 %v2789, %v3262
  %v3469 = vadd.f32 %v2790, %v3265
  %v3470 = vadd.f32 %v2791, %v3270
  %v3471 = vadd.f32 %v2792, %v3273
  %v3472 = vadd.f32 %v2793, %v3278
  %v3473 = vadd.f32 %v2794, %v3281
  %v3474 = vadd.f32 %v2795, %v3286
  %v3475 = vadd.f32 %v2796, %v3289
  %v3476 = vadd.f32 %v2797, %v3294
  %v3477 = vadd.f32 %v2798, %v3297
  %v3478 = vadd.f32 %v2799, %v3302
  %v3479 = vadd.f32 %v2800, %v3305
  %v3480 = vadd.f32 %v2801, %v3310
  %v3481 = vadd.f32 %v2802, %v3313
  %v3482 = vadd.f32 %v2803, %v3318
  %v3483 = vadd.f32 %v2804, %v3321
  %v3484 = vadd.f32 %v2805, %v3326
  %v3485 = vadd.f32 %v2806, %v3329
  %v3486 = vadd.f32 %v2807, %v3334
  %v3487 = vadd.f32 %v2808, %v3337
  %v3488 = vadd.f32 %v2809, %v3342
  %v3489 = vadd.f32 %v2810, %v3345
  %v3490 = vadd.f32 %v2811, %v3350
  %v3491 = vadd.f32 %v2812, %v3353
  %v3492 = vadd.f32 %v2813, %v3358
  %v3493 = vadd.f32 %v2814, %v3361
  %v3494 = vadd.f32 %v2815, %v3366
  %v3495 = vadd.f32 %v2816, %v3369
  %v3496 = vadd.f32 %v2817, %v3374
  %v3497 = vadd.f32 %v2818, %v3377
  %v3498 = vadd.f32 %v2819, %v3382
  %v3499 = vadd.f32 %v2820, %v3385
  %v3500 = vadd.f32 %v2821, %v3390
  %v3501 = vadd.f32 %v2822, %v3393
  %v3502 = vadd.f32 %v2823, %v3398
  %v3503 = vadd.f32 %v2824, %v3401
  %v3504 = vadd.f32 %v2825, %v3406
  %v3505 = vadd.f32 %v2826, %v3409
  %v3506 = vadd.f32 %v2827, %v3414
  %v3507 = vadd.f32 %v2828, %v3417
  %v3508 = vadd.f32 %v2829, %v3422
  %v3509 = vadd.f32 %v2830, %v3425
  %v3510 = vadd.f32 %v2831, %v3430
  %v3511 = vadd.f32 %v2832, %v3433
  %v3512 = vadd.f32 %v2833, %v3438
  %v3513 = vadd.f32 %v2834, %v3441
  %v3514 = vadd.f32 %v2835, %v3446
  %v3515 = vadd.f32 %v2836, %v3449
  %v3516 = vld [vmem:[%s2837] sm:$0xf]
  %v3517 = vld [vmem:[%s2837 + $0x4] sm:$0xf]
  %v3518 = vld [vmem:[%s2837 + $0x8] sm:$0x1]
  %v3519 = vld [vmem:[%s2837 + $0xc] sm:$0xf]
  %v3520 = vld [vmem:[%s2837 + $0x10] sm:$0xf]
  %v3521 = vld [vmem:[%s2837 + $0x14] sm:$0x1]
  %v3522 = vld [vmem:[%s2837 + $0x18] sm:$0xf]
  %v3523 = vld [vmem:[%s2837 + $0x1c] sm:$0xf]
  %v3524 = vld [vmem:[%s2837 + $0x20] sm:$0x1]
  %v3525 = vld [vmem:[%s2837 + $0x24] sm:$0xf]
  %v3526 = vld [vmem:[%s2837 + $0x28] sm:$0xf]
  %v3527 = vld [vmem:[%s2837 + $0x2c] sm:$0x1]
  %v3528 = vld [vmem:[%s2837 + $0x30] sm:$0xf]
  %v3529 = vld [vmem:[%s2837 + $0x34] sm:$0xf]
  %v3530 = vld [vmem:[%s2837 + $0x38] sm:$0x1]
  %v3531 = vld [vmem:[%s2837 + $0x3c] sm:$0xf]
  %v3532 = vld [vmem:[%s2837 + $0x40] sm:$0xf]
  %v3533 = vld [vmem:[%s2837 + $0x44] sm:$0x1]
  %v3534 = vld [vmem:[%s2837 + $0x48] sm:$0xf]
  %v3535 = vld [vmem:[%s2837 + $0x4c] sm:$0xf]
  %v3536 = vld [vmem:[%s2837 + $0x50] sm:$0x1]
  %v3537 = vld [vmem:[%s2837 + $0x54] sm:$0xf]
  %v3538 = vld [vmem:[%s2837 + $0x58] sm:$0xf]
  %v3539 = vld [vmem:[%s2837 + $0x5c] sm:$0x1]
  %v3540 = vld [vmem:[%s2837 + $0x60] sm:$0xf]
  %v3541 = vld [vmem:[%s2837 + $0x64] sm:$0xf]
  %v3542 = vld [vmem:[%s2837 + $0x68] sm:$0x1]
  %v3543 = vld [vmem:[%s2837 + $0x6c] sm:$0xf]
  %v3544 = vld [vmem:[%s2837 + $0x70] sm:$0xf]
  %v3545 = vld [vmem:[%s2837 + $0x74] sm:$0x1]
  %v3546 = vld [vmem:[%s2837 + $0x78] sm:$0xf]
  %v3547 = vld [vmem:[%s2837 + $0x7c] sm:$0xf]
  %v3548 = vld [vmem:[%s2837 + $0x80] sm:$0x1]
  %v3549 = vld [vmem:[%s2837 + $0x84] sm:$0xf]
  %v3550 = vld [vmem:[%s2837 + $0x88] sm:$0xf]
  %v3551 = vld [vmem:[%s2837 + $0x8c] sm:$0x1]
  %v3552 = vld [vmem:[%s2837 + $0x90] sm:$0xf]
  %v3553 = vld [vmem:[%s2837 + $0x94] sm:$0xf]
  %v3554 = vld [vmem:[%s2837 + $0x98] sm:$0x1]
  %v3555 = vld [vmem:[%s2837 + $0x9c] sm:$0xf]
  %v3556 = vld [vmem:[%s2837 + $0xa0] sm:$0xf]
  %v3557 = vld [vmem:[%s2837 + $0xa4] sm:$0x1]
  %v3558 = vld [vmem:[%s2837 + $0xa8] sm:$0xf]
  %v3559 = vld [vmem:[%s2837 + $0xac] sm:$0xf]
  %v3560 = vld [vmem:[%s2837 + $0xb0] sm:$0x1]
  %v3561 = vld [vmem:[%s2837 + $0xb4] sm:$0xf]
  %v3562 = vld [vmem:[%s2837 + $0xb8] sm:$0xf]
  %v3563 = vld [vmem:[%s2837 + $0xbc] sm:$0x1]
  %v3564 = vld [vmem:[%s2837 + $0xd8] sm:$0xf]
  %v3565 = vld [vmem:[%s2837 + $0xdc] sm:$0xf]
  %v3566 = vld [vmem:[%s2837 + $0xe0] sm:$0x1]
  %v3567 = vld [vmem:[%s2837 + $0xe4] sm:$0xf]
  %v3568 = vld [vmem:[%s2837 + $0xe8] sm:$0xf]
  %v3569 = vld [vmem:[%s2837 + $0xec] sm:$0x1]
  %v3570 = vld [vmem:[%s2837 + $0xf0] sm:$0xf]
  %v3571 = vld [vmem:[%s2837 + $0xf4] sm:$0xf]
  %v3572 = vld [vmem:[%s2837 + $0xf8] sm:$0x1]
  %v3573 = vld [vmem:[%s2837 + $0xfc] sm:$0xf]
  %v3574 = vld [vmem:[%s2837 + $0x100] sm:$0xf]
  %v3575 = vld [vmem:[%s2837 + $0x104] sm:$0x1]
  %v3576 = vld [vmem:[%s2837 + $0x108] sm:$0xf]
  %v3577 = vld [vmem:[%s2837 + $0x10c] sm:$0xf]
  %v3578 = vld [vmem:[%s2837 + $0x110] sm:$0x1]
  %v3579 = vld [vmem:[%s2837 + $0x114] sm:$0xf]
  %v3580 = vld [vmem:[%s2837 + $0x118] sm:$0xf]
  %v3581 = vld [vmem:[%s2837 + $0x11c] sm:$0x1]
  %v3582 = vld [vmem:[%s2837 + $0x120] sm:$0xf]
  %v3583 = vld [vmem:[%s2837 + $0x124] sm:$0xf]
  %v3584 = vld [vmem:[%s2837 + $0x128] sm:$0x1]
  %v3585 = vld [vmem:[%s2837 + $0x12c] sm:$0xf]
  %v3586 = vld [vmem:[%s2837 + $0x130] sm:$0xf]
  %v3587 = vld [vmem:[%s2837 + $0x134] sm:$0x1]
  %v3588 = vld [vmem:[%s2837 + $0x138] sm:$0xf]
  %v3589 = vld [vmem:[%s2837 + $0x13c] sm:$0xf]
  %v3590 = vld [vmem:[%s2837 + $0x140] sm:$0x1]
  %v3591 = vld [vmem:[%s2837 + $0x144] sm:$0xf]
  %v3592 = vld [vmem:[%s2837 + $0x148] sm:$0xf]
  %v3593 = vld [vmem:[%s2837 + $0x14c] sm:$0x1]
  %v3594 = vld [vmem:[%s2837 + $0x150] sm:$0xf]
  %v3595 = vld [vmem:[%s2837 + $0x154] sm:$0xf]
  %v3596 = vld [vmem:[%s2837 + $0x158] sm:$0x1]
  %v3597 = vld [vmem:[%s2837 + $0x15c] sm:$0xf]
  %v3598 = vld [vmem:[%s2837 + $0x160] sm:$0xf]
  %v3599 = vld [vmem:[%s2837 + $0x164] sm:$0x1]
  %v3600 = vld [vmem:[%s2837 + $0x168] sm:$0xf]
  %v3601 = vld [vmem:[%s2837 + $0x16c] sm:$0xf]
  %v3602 = vld [vmem:[%s2837 + $0x170] sm:$0x1]
  %v3603 = vld [vmem:[%s2837 + $0x174] sm:$0xf]
  %v3604 = vld [vmem:[%s2837 + $0x178] sm:$0xf]
  %v3605 = vld [vmem:[%s2837 + $0x17c] sm:$0x1]
  %v3606 = vld [vmem:[%s2837 + $0x180] sm:$0xf]
  %v3607 = vld [vmem:[%s2837 + $0x184] sm:$0xf]
  %v3608 = vld [vmem:[%s2837 + $0x188] sm:$0x1]
  %v3609 = vld [vmem:[%s2837 + $0x18c] sm:$0xf]
  %v3610 = vld [vmem:[%s2837 + $0x190] sm:$0xf]
  %v3611 = vld [vmem:[%s2837 + $0x194] sm:$0x1]
  %v3613 = vshrl.u32 %v3516, 16
  %v3615 = vrot.slane %v3613, 4
  %v3616 = vshll.u32 %v3516, 16
  %v3618 = vrot.slane %v3616, 5
  %v3619 = vor.u32 %v3615, %v3618
  %v3620 = vrot.slane %v3619, 4
  %v3622 = vshll.u32 %v3517, 16
  %v3624 = vrot.slane %v3622, 5
  %v3625 = vsel %vm159, %v3620, %v3624
  %v3626 = vshrl.u32 %v3517, 16
  %v3628 = vrot.slane %v3626, 4
  %v3629 = vor.u32 %v3628, %v3624
  %v3630 = vrot.slane %v3629, 4
  %v3632 = vshll.u32 %v3518, 16
  %v3634 = vrot.slane %v3632, 5
  %v3635 = vsel %vm159, %v3630, %v3634
  %v3637 = vshrl.u32 %v3519, 16
  %v3639 = vrot.slane %v3637, 4
  %v3640 = vshll.u32 %v3519, 16
  %v3642 = vrot.slane %v3640, 5
  %v3643 = vor.u32 %v3639, %v3642
  %v3644 = vrot.slane %v3643, 4
  %v3646 = vshll.u32 %v3520, 16
  %v3648 = vrot.slane %v3646, 5
  %v3649 = vsel %vm159, %v3644, %v3648
  %v3650 = vshrl.u32 %v3520, 16
  %v3652 = vrot.slane %v3650, 4
  %v3653 = vor.u32 %v3652, %v3648
  %v3654 = vrot.slane %v3653, 4
  %v3656 = vshll.u32 %v3521, 16
  %v3658 = vrot.slane %v3656, 5
  %v3659 = vsel %vm159, %v3654, %v3658
  %v3661 = vshrl.u32 %v3522, 16
  %v3663 = vrot.slane %v3661, 4
  %v3664 = vshll.u32 %v3522, 16
  %v3666 = vrot.slane %v3664, 5
  %v3667 = vor.u32 %v3663, %v3666
  %v3668 = vrot.slane %v3667, 4
  %v3670 = vshll.u32 %v3523, 16
  %v3672 = vrot.slane %v3670, 5
  %v3673 = vsel %vm159, %v3668, %v3672
  %v3674 = vshrl.u32 %v3523, 16
  %v3676 = vrot.slane %v3674, 4
  %v3677 = vor.u32 %v3676, %v3672
  %v3678 = vrot.slane %v3677, 4
  %v3680 = vshll.u32 %v3524, 16
  %v3682 = vrot.slane %v3680, 5
  %v3683 = vsel %vm159, %v3678, %v3682
  %v3685 = vshrl.u32 %v3525, 16
  %v3687 = vrot.slane %v3685, 4
  %v3688 = vshll.u32 %v3525, 16
  %v3690 = vrot.slane %v3688, 5
  %v3691 = vor.u32 %v3687, %v3690
  %v3692 = vrot.slane %v3691, 4
  %v3694 = vshll.u32 %v3526, 16
  %v3696 = vrot.slane %v3694, 5
  %v3697 = vsel %vm159, %v3692, %v3696
  %v3698 = vshrl.u32 %v3526, 16
  %v3700 = vrot.slane %v3698, 4
  %v3701 = vor.u32 %v3700, %v3696
  %v3702 = vrot.slane %v3701, 4
  %v3704 = vshll.u32 %v3527, 16
  %v3706 = vrot.slane %v3704, 5
  %v3707 = vsel %vm159, %v3702, %v3706
  %v3709 = vshrl.u32 %v3528, 16
  %v3711 = vrot.slane %v3709, 4
  %v3712 = vshll.u32 %v3528, 16
  %v3714 = vrot.slane %v3712, 5
  %v3715 = vor.u32 %v3711, %v3714
  %v3716 = vrot.slane %v3715, 4
  %v3718 = vshll.u32 %v3529, 16
  %v3720 = vrot.slane %v3718, 5
  %v3721 = vsel %vm159, %v3716, %v3720
  %v3722 = vshrl.u32 %v3529, 16
  %v3724 = vrot.slane %v3722, 4
  %v3725 = vor.u32 %v3724, %v3720
  %v3726 = vrot.slane %v3725, 4
  %v3728 = vshll.u32 %v3530, 16
  %v3730 = vrot.slane %v3728, 5
  %v3731 = vsel %vm159, %v3726, %v3730
  %v3733 = vshrl.u32 %v3531, 16
  %v3735 = vrot.slane %v3733, 4
  %v3736 = vshll.u32 %v3531, 16
  %v3738 = vrot.slane %v3736, 5
  %v3739 = vor.u32 %v3735, %v3738
  %v3740 = vrot.slane %v3739, 4
  %v3742 = vshll.u32 %v3532, 16
  %v3744 = vrot.slane %v3742, 5
  %v3745 = vsel %vm159, %v3740, %v3744
  %v3746 = vshrl.u32 %v3532, 16
  %v3748 = vrot.slane %v3746, 4
  %v3749 = vor.u32 %v3748, %v3744
  %v3750 = vrot.slane %v3749, 4
  %v3752 = vshll.u32 %v3533, 16
  %v3754 = vrot.slane %v3752, 5
  %v3755 = vsel %vm159, %v3750, %v3754
  %v3757 = vshrl.u32 %v3534, 16
  %v3759 = vrot.slane %v3757, 4
  %v3760 = vshll.u32 %v3534, 16
  %v3762 = vrot.slane %v3760, 5
  %v3763 = vor.u32 %v3759, %v3762
  %v3764 = vrot.slane %v3763, 4
  %v3766 = vshll.u32 %v3535, 16
  %v3768 = vrot.slane %v3766, 5
  %v3769 = vsel %vm159, %v3764, %v3768
  %v3770 = vshrl.u32 %v3535, 16
  %v3772 = vrot.slane %v3770, 4
  %v3773 = vor.u32 %v3772, %v3768
  %v3774 = vrot.slane %v3773, 4
  %v3776 = vshll.u32 %v3536, 16
  %v3778 = vrot.slane %v3776, 5
  %v3779 = vsel %vm159, %v3774, %v3778
  %v3781 = vshrl.u32 %v3537, 16
  %v3783 = vrot.slane %v3781, 4
  %v3784 = vshll.u32 %v3537, 16
  %v3786 = vrot.slane %v3784, 5
  %v3787 = vor.u32 %v3783, %v3786
  %v3788 = vrot.slane %v3787, 4
  %v3790 = vshll.u32 %v3538, 16
  %v3792 = vrot.slane %v3790, 5
  %v3793 = vsel %vm159, %v3788, %v3792
  %v3794 = vshrl.u32 %v3538, 16
  %v3796 = vrot.slane %v3794, 4
  %v3797 = vor.u32 %v3796, %v3792
  %v3798 = vrot.slane %v3797, 4
  %v3800 = vshll.u32 %v3539, 16
  %v3802 = vrot.slane %v3800, 5
  %v3803 = vsel %vm159, %v3798, %v3802
  %v3805 = vshrl.u32 %v3540, 16
  %v3807 = vrot.slane %v3805, 4
  %v3808 = vshll.u32 %v3540, 16
  %v3810 = vrot.slane %v3808, 5
  %v3811 = vor.u32 %v3807, %v3810
  %v3812 = vrot.slane %v3811, 4
  %v3814 = vshll.u32 %v3541, 16
  %v3816 = vrot.slane %v3814, 5
  %v3817 = vsel %vm159, %v3812, %v3816
  %v3818 = vshrl.u32 %v3541, 16
  %v3820 = vrot.slane %v3818, 4
  %v3821 = vor.u32 %v3820, %v3816
  %v3822 = vrot.slane %v3821, 4
  %v3824 = vshll.u32 %v3542, 16
  %v3826 = vrot.slane %v3824, 5
  %v3827 = vsel %vm159, %v3822, %v3826
  %v3829 = vshrl.u32 %v3543, 16
  %v3831 = vrot.slane %v3829, 4
  %v3832 = vshll.u32 %v3543, 16
  %v3834 = vrot.slane %v3832, 5
  %v3835 = vor.u32 %v3831, %v3834
  %v3836 = vrot.slane %v3835, 4
  %v3838 = vshll.u32 %v3544, 16
  %v3840 = vrot.slane %v3838, 5
  %v3841 = vsel %vm159, %v3836, %v3840
  %v3842 = vshrl.u32 %v3544, 16
  %v3844 = vrot.slane %v3842, 4
  %v3845 = vor.u32 %v3844, %v3840
  %v3846 = vrot.slane %v3845, 4
  %v3848 = vshll.u32 %v3545, 16
  %v3850 = vrot.slane %v3848, 5
  %v3851 = vsel %vm159, %v3846, %v3850
  %v3853 = vshrl.u32 %v3546, 16
  %v3855 = vrot.slane %v3853, 4
  %v3856 = vshll.u32 %v3546, 16
  %v3858 = vrot.slane %v3856, 5
  %v3859 = vor.u32 %v3855, %v3858
  %v3860 = vrot.slane %v3859, 4
  %v3862 = vshll.u32 %v3547, 16
  %v3864 = vrot.slane %v3862, 5
  %v3865 = vsel %vm159, %v3860, %v3864
  %v3866 = vshrl.u32 %v3547, 16
  %v3868 = vrot.slane %v3866, 4
  %v3869 = vor.u32 %v3868, %v3864
  %v3870 = vrot.slane %v3869, 4
  %v3872 = vshll.u32 %v3548, 16
  %v3874 = vrot.slane %v3872, 5
  %v3875 = vsel %vm159, %v3870, %v3874
  %v3877 = vshrl.u32 %v3549, 16
  %v3879 = vrot.slane %v3877, 4
  %v3880 = vshll.u32 %v3549, 16
  %v3882 = vrot.slane %v3880, 5
  %v3883 = vor.u32 %v3879, %v3882
  %v3884 = vrot.slane %v3883, 4
  %v3886 = vshll.u32 %v3550, 16
  %v3888 = vrot.slane %v3886, 5
  %v3889 = vsel %vm159, %v3884, %v3888
  %v3890 = vshrl.u32 %v3550, 16
  %v3892 = vrot.slane %v3890, 4
  %v3893 = vor.u32 %v3892, %v3888
  %v3894 = vrot.slane %v3893, 4
  %v3896 = vshll.u32 %v3551, 16
  %v3898 = vrot.slane %v3896, 5
  %v3899 = vsel %vm159, %v3894, %v3898
  %v3901 = vshrl.u32 %v3552, 16
  %v3903 = vrot.slane %v3901, 4
  %v3904 = vshll.u32 %v3552, 16
  %v3906 = vrot.slane %v3904, 5
  %v3907 = vor.u32 %v3903, %v3906
  %v3908 = vrot.slane %v3907, 4
  %v3910 = vshll.u32 %v3553, 16
  %v3912 = vrot.slane %v3910, 5
  %v3913 = vsel %vm159, %v3908, %v3912
  %v3914 = vshrl.u32 %v3553, 16
  %v3916 = vrot.slane %v3914, 4
  %v3917 = vor.u32 %v3916, %v3912
  %v3918 = vrot.slane %v3917, 4
  %v3920 = vshll.u32 %v3554, 16
  %v3922 = vrot.slane %v3920, 5
  %v3923 = vsel %vm159, %v3918, %v3922
  %v3925 = vshrl.u32 %v3555, 16
  %v3927 = vrot.slane %v3925, 4
  %v3928 = vshll.u32 %v3555, 16
  %v3930 = vrot.slane %v3928, 5
  %v3931 = vor.u32 %v3927, %v3930
  %v3932 = vrot.slane %v3931, 4
  %v3934 = vshll.u32 %v3556, 16
  %v3936 = vrot.slane %v3934, 5
  %v3937 = vsel %vm159, %v3932, %v3936
  %v3938 = vshrl.u32 %v3556, 16
  %v3940 = vrot.slane %v3938, 4
  %v3941 = vor.u32 %v3940, %v3936
  %v3942 = vrot.slane %v3941, 4
  %v3944 = vshll.u32 %v3557, 16
  %v3946 = vrot.slane %v3944, 5
  %v3947 = vsel %vm159, %v3942, %v3946
  %v3949 = vshrl.u32 %v3558, 16
  %v3951 = vrot.slane %v3949, 4
  %v3952 = vshll.u32 %v3558, 16
  %v3954 = vrot.slane %v3952, 5
  %v3955 = vor.u32 %v3951, %v3954
  %v3956 = vrot.slane %v3955, 4
  %v3958 = vshll.u32 %v3559, 16
  %v3960 = vrot.slane %v3958, 5
  %v3961 = vsel %vm159, %v3956, %v3960
  %v3962 = vshrl.u32 %v3559, 16
  %v3964 = vrot.slane %v3962, 4
  %v3965 = vor.u32 %v3964, %v3960
  %v3966 = vrot.slane %v3965, 4
  %v3968 = vshll.u32 %v3560, 16
  %v3970 = vrot.slane %v3968, 5
  %v3971 = vsel %vm159, %v3966, %v3970
  %v3973 = vshrl.u32 %v3561, 16
  %v3975 = vrot.slane %v3973, 4
  %v3976 = vshll.u32 %v3561, 16
  %v3978 = vrot.slane %v3976, 5
  %v3979 = vor.u32 %v3975, %v3978
  %v3980 = vrot.slane %v3979, 4
  %v3982 = vshll.u32 %v3562, 16
  %v3984 = vrot.slane %v3982, 5
  %v3985 = vsel %vm159, %v3980, %v3984
  %v3986 = vshrl.u32 %v3562, 16
  %v3988 = vrot.slane %v3986, 4
  %v3989 = vor.u32 %v3988, %v3984
  %v3990 = vrot.slane %v3989, 4
  %v3992 = vshll.u32 %v3563, 16
  %v3994 = vrot.slane %v3992, 5
  %v3995 = vsel %vm159, %v3990, %v3994
  %v3997 = vshrl.u32 %v3564, 16
  %v3999 = vrot.slane %v3997, 4
  %v4000 = vshll.u32 %v3564, 16
  %v4002 = vrot.slane %v4000, 5
  %v4003 = vor.u32 %v3999, %v4002
  %v4004 = vrot.slane %v4003, 4
  %v4006 = vshll.u32 %v3565, 16
  %v4008 = vrot.slane %v4006, 5
  %v4009 = vsel %vm159, %v4004, %v4008
  %v4010 = vshrl.u32 %v3565, 16
  %v4012 = vrot.slane %v4010, 4
  %v4013 = vor.u32 %v4012, %v4008
  %v4014 = vrot.slane %v4013, 4
  %v4016 = vshll.u32 %v3566, 16
  %v4018 = vrot.slane %v4016, 5
  %v4019 = vsel %vm159, %v4014, %v4018
  %v4021 = vshrl.u32 %v3567, 16
  %v4023 = vrot.slane %v4021, 4
  %v4024 = vshll.u32 %v3567, 16
  %v4026 = vrot.slane %v4024, 5
  %v4027 = vor.u32 %v4023, %v4026
  %v4028 = vrot.slane %v4027, 4
  %v4030 = vshll.u32 %v3568, 16
  %v4032 = vrot.slane %v4030, 5
  %v4033 = vsel %vm159, %v4028, %v4032
  %v4034 = vshrl.u32 %v3568, 16
  %v4036 = vrot.slane %v4034, 4
  %v4037 = vor.u32 %v4036, %v4032
  %v4038 = vrot.slane %v4037, 4
  %v4040 = vshll.u32 %v3569, 16
  %v4042 = vrot.slane %v4040, 5
  %v4043 = vsel %vm159, %v4038, %v4042
  %v4045 = vshrl.u32 %v3570, 16
  %v4047 = vrot.slane %v4045, 4
  %v4048 = vshll.u32 %v3570, 16
  %v4050 = vrot.slane %v4048, 5
  %v4051 = vor.u32 %v4047, %v4050
  %v4052 = vrot.slane %v4051, 4
  %v4054 = vshll.u32 %v3571, 16
  %v4056 = vrot.slane %v4054, 5
  %v4057 = vsel %vm159, %v4052, %v4056
  %v4058 = vshrl.u32 %v3571, 16
  %v4060 = vrot.slane %v4058, 4
  %v4061 = vor.u32 %v4060, %v4056
  %v4062 = vrot.slane %v4061, 4
  %v4064 = vshll.u32 %v3572, 16
  %v4066 = vrot.slane %v4064, 5
  %v4067 = vsel %vm159, %v4062, %v4066
  %v4069 = vshrl.u32 %v3573, 16
  %v4071 = vrot.slane %v4069, 4
  %v4072 = vshll.u32 %v3573, 16
  %v4074 = vrot.slane %v4072, 5
  %v4075 = vor.u32 %v4071, %v4074
  %v4076 = vrot.slane %v4075, 4
  %v4078 = vshll.u32 %v3574, 16
  %v4080 = vrot.slane %v4078, 5
  %v4081 = vsel %vm159, %v4076, %v4080
  %v4082 = vshrl.u32 %v3574, 16
  %v4084 = vrot.slane %v4082, 4
  %v4085 = vor.u32 %v4084, %v4080
  %v4086 = vrot.slane %v4085, 4
  %v4088 = vshll.u32 %v3575, 16
  %v4090 = vrot.slane %v4088, 5
  %v4091 = vsel %vm159, %v4086, %v4090
  %v4093 = vshrl.u32 %v3576, 16
  %v4095 = vrot.slane %v4093, 4
  %v4096 = vshll.u32 %v3576, 16
  %v4098 = vrot.slane %v4096, 5
  %v4099 = vor.u32 %v4095, %v4098
  %v4100 = vrot.slane %v4099, 4
  %v4102 = vshll.u32 %v3577, 16
  %v4104 = vrot.slane %v4102, 5
  %v4105 = vsel %vm159, %v4100, %v4104
  %v4106 = vshrl.u32 %v3577, 16
  %v4108 = vrot.slane %v4106, 4
  %v4109 = vor.u32 %v4108, %v4104
  %v4110 = vrot.slane %v4109, 4
  %v4112 = vshll.u32 %v3578, 16
  %v4114 = vrot.slane %v4112, 5
  %v4115 = vsel %vm159, %v4110, %v4114
  %v4117 = vshrl.u32 %v3579, 16
  %v4119 = vrot.slane %v4117, 4
  %v4120 = vshll.u32 %v3579, 16
  %v4122 = vrot.slane %v4120, 5
  %v4123 = vor.u32 %v4119, %v4122
  %v4124 = vrot.slane %v4123, 4
  %v4126 = vshll.u32 %v3580, 16
  %v4128 = vrot.slane %v4126, 5
  %v4129 = vsel %vm159, %v4124, %v4128
  %v4130 = vshrl.u32 %v3580, 16
  %v4132 = vrot.slane %v4130, 4
  %v4133 = vor.u32 %v4132, %v4128
  %v4134 = vrot.slane %v4133, 4
  %v4136 = vshll.u32 %v3581, 16
  %v4138 = vrot.slane %v4136, 5
  %v4139 = vsel %vm159, %v4134, %v4138
  %v4141 = vshrl.u32 %v3582, 16
  %v4143 = vrot.slane %v4141, 4
  %v4144 = vshll.u32 %v3582, 16
  %v4146 = vrot.slane %v4144, 5
  %v4147 = vor.u32 %v4143, %v4146
  %v4148 = vrot.slane %v4147, 4
  %v4150 = vshll.u32 %v3583, 16
  %v4152 = vrot.slane %v4150, 5
  %v4153 = vsel %vm159, %v4148, %v4152
  %v4154 = vshrl.u32 %v3583, 16
  %v4156 = vrot.slane %v4154, 4
  %v4157 = vor.u32 %v4156, %v4152
  %v4158 = vrot.slane %v4157, 4
  %v4160 = vshll.u32 %v3584, 16
  %v4162 = vrot.slane %v4160, 5
  %v4163 = vsel %vm159, %v4158, %v4162
  %v4165 = vshrl.u32 %v3585, 16
  %v4167 = vrot.slane %v4165, 4
  %v4168 = vshll.u32 %v3585, 16
  %v4170 = vrot.slane %v4168, 5
  %v4171 = vor.u32 %v4167, %v4170
  %v4172 = vrot.slane %v4171, 4
  %v4174 = vshll.u32 %v3586, 16
  %v4176 = vrot.slane %v4174, 5
  %v4177 = vsel %vm159, %v4172, %v4176
  %v4178 = vshrl.u32 %v3586, 16
  %v4180 = vrot.slane %v4178, 4
  %v4181 = vor.u32 %v4180, %v4176
  %v4182 = vrot.slane %v4181, 4
  %v4184 = vshll.u32 %v3587, 16
  %v4186 = vrot.slane %v4184, 5
  %v4187 = vsel %vm159, %v4182, %v4186
  %v4189 = vshrl.u32 %v3588, 16
  %v4191 = vrot.slane %v4189, 4
  %v4192 = vshll.u32 %v3588, 16
  %v4194 = vrot.slane %v4192, 5
  %v4195 = vor.u32 %v4191, %v4194
  %v4196 = vrot.slane %v4195, 4
  %v4198 = vshll.u32 %v3589, 16
  %v4200 = vrot.slane %v4198, 5
  %v4201 = vsel %vm159, %v4196, %v4200
  %v4202 = vshrl.u32 %v3589, 16
  %v4204 = vrot.slane %v4202, 4
  %v4205 = vor.u32 %v4204, %v4200
  %v4206 = vrot.slane %v4205, 4
  %v4208 = vshll.u32 %v3590, 16
  %v4210 = vrot.slane %v4208, 5
  %v4211 = vsel %vm159, %v4206, %v4210
  %v4213 = vshrl.u32 %v3591, 16
  %v4215 = vrot.slane %v4213, 4
  %v4216 = vshll.u32 %v3591, 16
  %v4218 = vrot.slane %v4216, 5
  %v4219 = vor.u32 %v4215, %v4218
  %v4220 = vrot.slane %v4219, 4
  %v4222 = vshll.u32 %v3592, 16
  %v4224 = vrot.slane %v4222, 5
  %v4225 = vsel %vm159, %v4220, %v4224
  %v4226 = vshrl.u32 %v3592, 16
  %v4228 = vrot.slane %v4226, 4
  %v4229 = vor.u32 %v4228, %v4224
  %v4230 = vrot.slane %v4229, 4
  %v4232 = vshll.u32 %v3593, 16
  %v4234 = vrot.slane %v4232, 5
  %v4235 = vsel %vm159, %v4230, %v4234
  %v4237 = vshrl.u32 %v3594, 16
  %v4239 = vrot.slane %v4237, 4
  %v4240 = vshll.u32 %v3594, 16
  %v4242 = vrot.slane %v4240, 5
  %v4243 = vor.u32 %v4239, %v4242
  %v4244 = vrot.slane %v4243, 4
  %v4246 = vshll.u32 %v3595, 16
  %v4248 = vrot.slane %v4246, 5
  %v4249 = vsel %vm159, %v4244, %v4248
  %v4250 = vshrl.u32 %v3595, 16
  %v4252 = vrot.slane %v4250, 4
  %v4253 = vor.u32 %v4252, %v4248
  %v4254 = vrot.slane %v4253, 4
  %v4256 = vshll.u32 %v3596, 16
  %v4258 = vrot.slane %v4256, 5
  %v4259 = vsel %vm159, %v4254, %v4258
  %v4261 = vshrl.u32 %v3597, 16
  %v4263 = vrot.slane %v4261, 4
  %v4264 = vshll.u32 %v3597, 16
  %v4266 = vrot.slane %v4264, 5
  %v4267 = vor.u32 %v4263, %v4266
  %v4268 = vrot.slane %v4267, 4
  %v4270 = vshll.u32 %v3598, 16
  %v4272 = vrot.slane %v4270, 5
  %v4273 = vsel %vm159, %v4268, %v4272
  %v4274 = vshrl.u32 %v3598, 16
  %v4276 = vrot.slane %v4274, 4
  %v4277 = vor.u32 %v4276, %v4272
  %v4278 = vrot.slane %v4277, 4
  %v4280 = vshll.u32 %v3599, 16
  %v4282 = vrot.slane %v4280, 5
  %v4283 = vsel %vm159, %v4278, %v4282
  %v4285 = vshrl.u32 %v3600, 16
  %v4287 = vrot.slane %v4285, 4
  %v4288 = vshll.u32 %v3600, 16
  %v4290 = vrot.slane %v4288, 5
  %v4291 = vor.u32 %v4287, %v4290
  %v4292 = vrot.slane %v4291, 4
  %v4294 = vshll.u32 %v3601, 16
  %v4296 = vrot.slane %v4294, 5
  %v4297 = vsel %vm159, %v4292, %v4296
  %v4298 = vshrl.u32 %v3601, 16
  %v4300 = vrot.slane %v4298, 4
  %v4301 = vor.u32 %v4300, %v4296
  %v4302 = vrot.slane %v4301, 4
  %v4304 = vshll.u32 %v3602, 16
  %v4306 = vrot.slane %v4304, 5
  %v4307 = vsel %vm159, %v4302, %v4306
  %v4309 = vshrl.u32 %v3603, 16
  %v4311 = vrot.slane %v4309, 4
  %v4312 = vshll.u32 %v3603, 16
  %v4314 = vrot.slane %v4312, 5
  %v4315 = vor.u32 %v4311, %v4314
  %v4316 = vrot.slane %v4315, 4
  %v4318 = vshll.u32 %v3604, 16
  %v4320 = vrot.slane %v4318, 5
  %v4321 = vsel %vm159, %v4316, %v4320
  %v4322 = vshrl.u32 %v3604, 16
  %v4324 = vrot.slane %v4322, 4
  %v4325 = vor.u32 %v4324, %v4320
  %v4326 = vrot.slane %v4325, 4
  %v4328 = vshll.u32 %v3605, 16
  %v4330 = vrot.slane %v4328, 5
  %v4331 = vsel %vm159, %v4326, %v4330
  %v4333 = vshrl.u32 %v3606, 16
  %v4335 = vrot.slane %v4333, 4
  %v4336 = vshll.u32 %v3606, 16
  %v4338 = vrot.slane %v4336, 5
  %v4339 = vor.u32 %v4335, %v4338
  %v4340 = vrot.slane %v4339, 4
  %v4342 = vshll.u32 %v3607, 16
  %v4344 = vrot.slane %v4342, 5
  %v4345 = vsel %vm159, %v4340, %v4344
  %v4346 = vshrl.u32 %v3607, 16
  %v4348 = vrot.slane %v4346, 4
  %v4349 = vor.u32 %v4348, %v4344
  %v4350 = vrot.slane %v4349, 4
  %v4352 = vshll.u32 %v3608, 16
  %v4354 = vrot.slane %v4352, 5
  %v4355 = vsel %vm159, %v4350, %v4354
  %v4357 = vshrl.u32 %v3609, 16
  %v4359 = vrot.slane %v4357, 4
  %v4360 = vshll.u32 %v3609, 16
  %v4362 = vrot.slane %v4360, 5
  %v4363 = vor.u32 %v4359, %v4362
  %v4364 = vrot.slane %v4363, 4
  %v4366 = vshll.u32 %v3610, 16
  %v4368 = vrot.slane %v4366, 5
  %v4369 = vsel %vm159, %v4364, %v4368
  %v4370 = vshrl.u32 %v3610, 16
  %v4372 = vrot.slane %v4370, 4
  %v4373 = vor.u32 %v4372, %v4368
  %v4374 = vrot.slane %v4373, 4
  %v4376 = vshll.u32 %v3611, 16
  %v4378 = vrot.slane %v4376, 5
  %v4379 = vsel %vm159, %v4374, %v4378
  %s4380 = scalar_lea.vmem %s1, 8
  %v4381 = vld [vmem:[%s4380] sm:$0x3]
  %v4382 = vunpack.c.l.b16 %v3625
  %v4383 = vunpack.c.l.b16 %v3635
  %v4384 = vunpack.c.l.b16 %v3649
  %v4385 = vunpack.c.l.b16 %v3659
  %v4386 = vunpack.c.l.b16 %v3673
  %v4387 = vunpack.c.l.b16 %v3683
  %v4388 = vunpack.c.l.b16 %v3697
  %v4389 = vunpack.c.l.b16 %v3707
  %v4390 = vunpack.c.l.b16 %v3721
  %v4391 = vunpack.c.l.b16 %v3731
  %v4392 = vunpack.c.l.b16 %v3745
  %v4393 = vunpack.c.l.b16 %v3755
  %v4394 = vunpack.c.l.b16 %v3769
  %v4395 = vunpack.c.l.b16 %v3779
  %v4396 = vunpack.c.l.b16 %v3793
  %v4397 = vunpack.c.l.b16 %v3803
  %v4398 = vunpack.c.l.b16 %v3817
  %v4399 = vunpack.c.l.b16 %v3827
  %v4400 = vunpack.c.l.b16 %v3841
  %v4401 = vunpack.c.l.b16 %v3851
  %v4402 = vunpack.c.l.b16 %v3865
  %v4403 = vunpack.c.l.b16 %v3875
  %v4404 = vunpack.c.l.b16 %v3889
  %v4405 = vunpack.c.l.b16 %v3899
  %v4406 = vunpack.c.l.b16 %v3913
  %v4407 = vunpack.c.l.b16 %v3923
  %v4408 = vunpack.c.l.b16 %v3937
  %v4409 = vunpack.c.l.b16 %v3947
  %v4410 = vunpack.c.l.b16 %v3961
  %v4411 = vunpack.c.l.b16 %v3971
  %v4412 = vunpack.c.l.b16 %v3985
  %v4413 = vunpack.c.l.b16 %v3995
  %v4414 = vunpack.c.l.b16 %v4009
  %v4415 = vunpack.c.l.b16 %v4019
  %v4416 = vunpack.c.l.b16 %v4033
  %v4417 = vunpack.c.l.b16 %v4043
  %v4418 = vunpack.c.l.b16 %v4057
  %v4419 = vunpack.c.l.b16 %v4067
  %v4420 = vunpack.c.l.b16 %v4081
  %v4421 = vunpack.c.l.b16 %v4091
  %v4422 = vunpack.c.l.b16 %v4105
  %v4423 = vunpack.c.l.b16 %v4115
  %v4424 = vunpack.c.l.b16 %v4129
  %v4425 = vunpack.c.l.b16 %v4139
  %v4426 = vunpack.c.l.b16 %v4153
  %v4427 = vunpack.c.l.b16 %v4163
  %v4428 = vunpack.c.l.b16 %v4177
  %v4429 = vunpack.c.l.b16 %v4187
  %v4430 = vunpack.c.l.b16 %v4201
  %v4431 = vunpack.c.l.b16 %v4211
  %v4432 = vunpack.c.l.b16 %v4225
  %v4433 = vunpack.c.l.b16 %v4235
  %v4434 = vunpack.c.l.b16 %v4249
  %v4435 = vunpack.c.l.b16 %v4259
  %v4436 = vunpack.c.l.b16 %v4273
  %v4437 = vunpack.c.l.b16 %v4283
  %v4438 = vunpack.c.l.b16 %v4297
  %v4439 = vunpack.c.l.b16 %v4307
  %v4440 = vunpack.c.l.b16 %v4321
  %v4441 = vunpack.c.l.b16 %v4331
  %v4442 = vunpack.c.l.b16 %v4345
  %v4443 = vunpack.c.l.b16 %v4355
  %v4444 = vunpack.c.l.b16 %v4369
  %v4445 = vunpack.c.l.b16 %v4379
  %v4446 = vpack.c.b16 %v4383, %v4382
  %v4447 = vpack.c.b16 %v4385, %v4384
  %v4448 = vpack.c.b16 %v4387, %v4386
  %v4449 = vpack.c.b16 %v4389, %v4388
  %v4450 = vpack.c.b16 %v4391, %v4390
  %v4451 = vpack.c.b16 %v4393, %v4392
  %v4452 = vpack.c.b16 %v4395, %v4394
  %v4453 = vpack.c.b16 %v4397, %v4396
  %v4454 = vpack.c.b16 %v4399, %v4398
  %v4455 = vpack.c.b16 %v4401, %v4400
  %v4456 = vpack.c.b16 %v4403, %v4402
  %v4457 = vpack.c.b16 %v4405, %v4404
  %v4458 = vpack.c.b16 %v4407, %v4406
  %v4459 = vpack.c.b16 %v4409, %v4408
  %v4460 = vpack.c.b16 %v4411, %v4410
  %v4461 = vpack.c.b16 %v4413, %v4412
  %v4462 = vpack.c.b16 %v4415, %v4414
  %v4463 = vpack.c.b16 %v4417, %v4416
  %v4464 = vpack.c.b16 %v4419, %v4418
  %v4465 = vpack.c.b16 %v4421, %v4420
  %v4466 = vpack.c.b16 %v4423, %v4422
  %v4467 = vpack.c.b16 %v4425, %v4424
  %v4468 = vpack.c.b16 %v4427, %v4426
  %v4469 = vpack.c.b16 %v4429, %v4428
  %v4470 = vpack.c.b16 %v4431, %v4430
  %v4471 = vpack.c.b16 %v4433, %v4432
  %v4472 = vpack.c.b16 %v4435, %v4434
  %v4473 = vpack.c.b16 %v4437, %v4436
  %v4474 = vpack.c.b16 %v4439, %v4438
  %v4475 = vpack.c.b16 %v4441, %v4440
  %v4476 = vpack.c.b16 %v4443, %v4442
  %v4477 = vpack.c.b16 %v4445, %v4444
  %v4479 = vsel %vm1026, %v4446, 0
  %v4482 = vsel %vm1026, %v4447, 0
  %v4485 = vsel %vm1026, %v4448, 0
  %v4488 = vsel %vm1026, %v4449, 0
  %v4491 = vsel %vm1026, %v4450, 0
  %v4494 = vsel %vm1026, %v4451, 0
  %v4497 = vsel %vm1026, %v4452, 0
  %v4500 = vsel %vm1026, %v4453, 0
  %v4503 = vsel %vm1026, %v4454, 0
  %v4506 = vsel %vm1026, %v4455, 0
  %v4509 = vsel %vm1026, %v4456, 0
  %v4512 = vsel %vm1026, %v4457, 0
  %v4515 = vsel %vm1026, %v4458, 0
  %v4518 = vsel %vm1026, %v4459, 0
  %v4521 = vsel %vm1026, %v4460, 0
  %v4524 = vsel %vm1026, %v4461, 0
  %v4527 = vsel %vm1026, %v4462, 0
  %v4530 = vsel %vm1026, %v4463, 0
  %v4533 = vsel %vm1026, %v4464, 0
  %v4536 = vsel %vm1026, %v4465, 0
  %v4539 = vsel %vm1026, %v4466, 0
  %v4542 = vsel %vm1026, %v4467, 0
  %v4545 = vsel %vm1026, %v4468, 0
  %v4548 = vsel %vm1026, %v4469, 0
  %v4551 = vsel %vm1026, %v4470, 0
  %v4554 = vsel %vm1026, %v4471, 0
  %v4557 = vsel %vm1026, %v4472, 0
  %v4560 = vsel %vm1026, %v4473, 0
  %v4563 = vsel %vm1026, %v4474, 0
  %v4566 = vsel %vm1026, %v4475, 0
  %v4569 = vsel %vm1026, %v4476, 0
  %v4572 = vsel %vm1026, %v4477, 0
  %v4575 = vsel %vm1123, %v4381, 0
  %4577 = vmatprep.subr.bf16.mxu0 0
  %4578 = vmatpush1.bf16.msra.mxu0 %v4575
  %4579 = vmatprep.subr.bf16.mxu0 0
  %4580 = vmatpush1.bf16.msra.mxu0 0
  %4581 = vmatprep.subr.bf16.mxu0 0
  %4582 = vmatpush1.bf16.msra.mxu0 0
  %4583 = vmatprep.subr.bf16.mxu0 0
  %4584 = vmatpush1.bf16.msra.mxu0 0
  %4585 = vmatprep.subr.bf16.mxu0 0
  %4586 = vmatpush1.bf16.msra.mxu0 0
  %4587 = vmatprep.subr.bf16.mxu0 0
  %4588 = vmatpush1.bf16.msra.mxu0 0
  %4589 = vmatprep.subr.bf16.mxu0 0
  %4590 = vmatpush1.bf16.msra.mxu0 0
  %4591 = vmatprep.subr.bf16.mxu0 0
  %4592 = vmatpush1.bf16.msra.mxu0 0
  %4593 = vmatprep.subr.bf16.mxu0 0
  %4594 = vmatpush1.bf16.msra.mxu0 0
  %4595 = vmatprep.subr.bf16.mxu0 0
  %4596 = vmatpush1.bf16.msra.mxu0 0
  %4597 = vmatprep.subr.bf16.mxu0 0
  %4598 = vmatpush1.bf16.msra.mxu0 0
  %4599 = vmatprep.subr.bf16.mxu0 0
  %4600 = vmatpush1.bf16.msra.mxu0 0
  %4601 = vmatprep.subr.bf16.mxu0 0
  %4602 = vmatpush1.bf16.msra.mxu0 0
  %4603 = vmatprep.subr.bf16.mxu0 0
  %4604 = vmatpush1.bf16.msra.mxu0 0
  %4605 = vmatprep.subr.bf16.mxu0 0
  %4606 = vmatpush1.bf16.msra.mxu0 0
  %4607 = vmatprep.subr.bf16.mxu0 0
  %4608 = vmatpush1.bf16.msra.mxu0 0
  %4609 = vmatprep.mubr.bf16.mxu0 0
  %4610 = vmatmul.mubr.bf16.gmra.mrb[0].mxu0 %v4479
  %v4611 = vpop.f32.mrb[0].mxu0
  %v4612 = vadd.f32 0.0, %v4611
  %v4613 = vpop.f32.mrb[0].mxu0
  %v4614 = vpop.f32.mrb[0].mxu0
  %v4615 = vadd.f32 0.0, %v4614
  %v4616 = vpop.f32.mrb[0].mxu0
  %4617 = vmatprep.mubr.bf16.mxu0 0
  %4618 = vmatmul.mubr.bf16.gmra.mrb[0].mxu0 %v4482
  %v4619 = vpop.f32.mrb[0].mxu0
  %v4620 = vadd.f32 0.0, %v4619
  %v4621 = vpop.f32.mrb[0].mxu0
  %v4622 = vpop.f32.mrb[0].mxu0
  %v4623 = vadd.f32 0.0, %v4622
  %v4624 = vpop.f32.mrb[0].mxu0
  %4625 = vmatprep.mubr.bf16.mxu0 0
  %4626 = vmatmul.mubr.bf16.gmra.mrb[0].mxu0 %v4485
  %v4627 = vpop.f32.mrb[0].mxu0
  %v4628 = vadd.f32 0.0, %v4627
  %v4629 = vpop.f32.mrb[0].mxu0
  %v4630 = vpop.f32.mrb[0].mxu0
  %v4631 = vadd.f32 0.0, %v4630
  %v4632 = vpop.f32.mrb[0].mxu0
  %4633 = vmatprep.mubr.bf16.mxu0 0
  %4634 = vmatmul.mubr.bf16.gmra.mrb[0].mxu0 %v4488
  %v4635 = vpop.f32.mrb[0].mxu0
  %v4636 = vadd.f32 0.0, %v4635
  %v4637 = vpop.f32.mrb[0].mxu0
  %v4638 = vpop.f32.mrb[0].mxu0
  %v4639 = vadd.f32 0.0, %v4638
  %v4640 = vpop.f32.mrb[0].mxu0
  %4641 = vmatprep.mubr.bf16.mxu0 0
  %4642 = vmatmul.mubr.bf16.gmra.mrb[0].mxu0 %v4491
  %v4643 = vpop.f32.mrb[0].mxu0
  %v4644 = vadd.f32 0.0, %v4643
  %v4645 = vpop.f32.mrb[0].mxu0
  %v4646 = vpop.f32.mrb[0].mxu0
  %v4647 = vadd.f32 0.0, %v4646
  %v4648 = vpop.f32.mrb[0].mxu0
  %4649 = vmatprep.mubr.bf16.mxu0 0
  %4650 = vmatmul.mubr.bf16.gmra.mrb[0].mxu0 %v4494
  %v4651 = vpop.f32.mrb[0].mxu0
  %v4652 = vadd.f32 0.0, %v4651
  %v4653 = vpop.f32.mrb[0].mxu0
  %v4654 = vpop.f32.mrb[0].mxu0
  %v4655 = vadd.f32 0.0, %v4654
  %v4656 = vpop.f32.mrb[0].mxu0
  %4657 = vmatprep.mubr.bf16.mxu0 0
  %4658 = vmatmul.mubr.bf16.gmra.mrb[0].mxu0 %v4497
  %v4659 = vpop.f32.mrb[0].mxu0
  %v4660 = vadd.f32 0.0, %v4659
  %v4661 = vpop.f32.mrb[0].mxu0
  %v4662 = vpop.f32.mrb[0].mxu0
  %v4663 = vadd.f32 0.0, %v4662
  %v4664 = vpop.f32.mrb[0].mxu0
  %4665 = vmatprep.mubr.bf16.mxu0 0
  %4666 = vmatmul.mubr.bf16.gmra.mrb[0].mxu0 %v4500
  %v4667 = vpop.f32.mrb[0].mxu0
  %v4668 = vadd.f32 0.0, %v4667
  %v4669 = vpop.f32.mrb[0].mxu0
  %v4670 = vpop.f32.mrb[0].mxu0
  %v4671 = vadd.f32 0.0, %v4670
  %v4672 = vpop.f32.mrb[0].mxu0
  %4673 = vmatprep.mubr.bf16.mxu0 0
  %4674 = vmatmul.mubr.bf16.gmra.mrb[0].mxu0 %v4503
  %v4675 = vpop.f32.mrb[0].mxu0
  %v4676 = vadd.f32 0.0, %v4675
  %v4677 = vpop.f32.mrb[0].mxu0
  %v4678 = vpop.f32.mrb[0].mxu0
  %v4679 = vadd.f32 0.0, %v4678
  %v4680 = vpop.f32.mrb[0].mxu0
  %4681 = vmatprep.mubr.bf16.mxu0 0
  %4682 = vmatmul.mubr.bf16.gmra.mrb[0].mxu0 %v4506
  %v4683 = vpop.f32.mrb[0].mxu0
  %v4684 = vadd.f32 0.0, %v4683
  %v4685 = vpop.f32.mrb[0].mxu0
  %v4686 = vpop.f32.mrb[0].mxu0
  %v4687 = vadd.f32 0.0, %v4686
  %v4688 = vpop.f32.mrb[0].mxu0
  %4689 = vmatprep.mubr.bf16.mxu0 0
  %4690 = vmatmul.mubr.bf16.gmra.mrb[0].mxu0 %v4509
  %v4691 = vpop.f32.mrb[0].mxu0
  %v4692 = vadd.f32 0.0, %v4691
  %v4693 = vpop.f32.mrb[0].mxu0
  %v4694 = vpop.f32.mrb[0].mxu0
  %v4695 = vadd.f32 0.0, %v4694
  %v4696 = vpop.f32.mrb[0].mxu0
  %4697 = vmatprep.mubr.bf16.mxu0 0
  %4698 = vmatmul.mubr.bf16.gmra.mrb[0].mxu0 %v4512
  %v4699 = vpop.f32.mrb[0].mxu0
  %v4700 = vadd.f32 0.0, %v4699
  %v4701 = vpop.f32.mrb[0].mxu0
  %v4702 = vpop.f32.mrb[0].mxu0
  %v4703 = vadd.f32 0.0, %v4702
  %v4704 = vpop.f32.mrb[0].mxu0
  %4705 = vmatprep.mubr.bf16.mxu0 0
  %4706 = vmatmul.mubr.bf16.gmra.mrb[0].mxu0 %v4515
  %v4707 = vpop.f32.mrb[0].mxu0
  %v4708 = vadd.f32 0.0, %v4707
  %v4709 = vpop.f32.mrb[0].mxu0
  %v4710 = vpop.f32.mrb[0].mxu0
  %v4711 = vadd.f32 0.0, %v4710
  %v4712 = vpop.f32.mrb[0].mxu0
  %4713 = vmatprep.mubr.bf16.mxu0 0
  %4714 = vmatmul.mubr.bf16.gmra.mrb[0].mxu0 %v4518
  %v4715 = vpop.f32.mrb[0].mxu0
  %v4716 = vadd.f32 0.0, %v4715
  %v4717 = vpop.f32.mrb[0].mxu0
  %v4718 = vpop.f32.mrb[0].mxu0
  %v4719 = vadd.f32 0.0, %v4718
  %v4720 = vpop.f32.mrb[0].mxu0
  %4721 = vmatprep.mubr.bf16.mxu0 0
  %4722 = vmatmul.mubr.bf16.gmra.mrb[0].mxu0 %v4521
  %v4723 = vpop.f32.mrb[0].mxu0
  %v4724 = vadd.f32 0.0, %v4723
  %v4725 = vpop.f32.mrb[0].mxu0
  %v4726 = vpop.f32.mrb[0].mxu0
  %v4727 = vadd.f32 0.0, %v4726
  %v4728 = vpop.f32.mrb[0].mxu0
  %4729 = vmatprep.mubr.bf16.mxu0 0
  %4730 = vmatmul.mubr.bf16.gmra.mrb[0].mxu0 %v4524
  %v4731 = vpop.f32.mrb[0].mxu0
  %v4732 = vadd.f32 0.0, %v4731
  %v4733 = vpop.f32.mrb[0].mxu0
  %v4734 = vpop.f32.mrb[0].mxu0
  %v4735 = vadd.f32 0.0, %v4734
  %v4736 = vpop.f32.mrb[0].mxu0
  %4737 = vmatprep.mubr.bf16.mxu0 0
  %4738 = vmatmul.mubr.bf16.gmra.mrb[0].mxu0 %v4527
  %v4739 = vpop.f32.mrb[0].mxu0
  %v4740 = vadd.f32 0.0, %v4739
  %v4741 = vpop.f32.mrb[0].mxu0
  %v4742 = vpop.f32.mrb[0].mxu0
  %v4743 = vadd.f32 0.0, %v4742
  %v4744 = vpop.f32.mrb[0].mxu0
  %4745 = vmatprep.mubr.bf16.mxu0 0
  %4746 = vmatmul.mubr.bf16.gmra.mrb[0].mxu0 %v4530
  %v4747 = vpop.f32.mrb[0].mxu0
  %v4748 = vadd.f32 0.0, %v4747
  %v4749 = vpop.f32.mrb[0].mxu0
  %v4750 = vpop.f32.mrb[0].mxu0
  %v4751 = vadd.f32 0.0, %v4750
  %v4752 = vpop.f32.mrb[0].mxu0
  %4753 = vmatprep.mubr.bf16.mxu0 0
  %4754 = vmatmul.mubr.bf16.gmra.mrb[0].mxu0 %v4533
  %v4755 = vpop.f32.mrb[0].mxu0
  %v4756 = vadd.f32 0.0, %v4755
  %v4757 = vpop.f32.mrb[0].mxu0
  %v4758 = vpop.f32.mrb[0].mxu0
  %v4759 = vadd.f32 0.0, %v4758
  %v4760 = vpop.f32.mrb[0].mxu0
  %4761 = vmatprep.mubr.bf16.mxu0 0
  %4762 = vmatmul.mubr.bf16.gmra.mrb[0].mxu0 %v4536
  %v4763 = vpop.f32.mrb[0].mxu0
  %v4764 = vadd.f32 0.0, %v4763
  %v4765 = vpop.f32.mrb[0].mxu0
  %v4766 = vpop.f32.mrb[0].mxu0
  %v4767 = vadd.f32 0.0, %v4766
  %v4768 = vpop.f32.mrb[0].mxu0
  %4769 = vmatprep.mubr.bf16.mxu0 0
  %4770 = vmatmul.mubr.bf16.gmra.mrb[0].mxu0 %v4539
  %v4771 = vpop.f32.mrb[0].mxu0
  %v4772 = vadd.f32 0.0, %v4771
  %v4773 = vpop.f32.mrb[0].mxu0
  %v4774 = vpop.f32.mrb[0].mxu0
  %v4775 = vadd.f32 0.0, %v4774
  %v4776 = vpop.f32.mrb[0].mxu0
  %4777 = vmatprep.mubr.bf16.mxu0 0
  %4778 = vmatmul.mubr.bf16.gmra.mrb[0].mxu0 %v4542
  %v4779 = vpop.f32.mrb[0].mxu0
  %v4780 = vadd.f32 0.0, %v4779
  %v4781 = vpop.f32.mrb[0].mxu0
  %v4782 = vpop.f32.mrb[0].mxu0
  %v4783 = vadd.f32 0.0, %v4782
  %v4784 = vpop.f32.mrb[0].mxu0
  %4785 = vmatprep.mubr.bf16.mxu0 0
  %4786 = vmatmul.mubr.bf16.gmra.mrb[0].mxu0 %v4545
  %v4787 = vpop.f32.mrb[0].mxu0
  %v4788 = vadd.f32 0.0, %v4787
  %v4789 = vpop.f32.mrb[0].mxu0
  %v4790 = vpop.f32.mrb[0].mxu0
  %v4791 = vadd.f32 0.0, %v4790
  %v4792 = vpop.f32.mrb[0].mxu0
  %4793 = vmatprep.mubr.bf16.mxu0 0
  %4794 = vmatmul.mubr.bf16.gmra.mrb[0].mxu0 %v4548
  %v4795 = vpop.f32.mrb[0].mxu0
  %v4796 = vadd.f32 0.0, %v4795
  %v4797 = vpop.f32.mrb[0].mxu0
  %v4798 = vpop.f32.mrb[0].mxu0
  %v4799 = vadd.f32 0.0, %v4798
  %v4800 = vpop.f32.mrb[0].mxu0
  %4801 = vmatprep.mubr.bf16.mxu0 0
  %4802 = vmatmul.mubr.bf16.gmra.mrb[0].mxu0 %v4551
  %v4803 = vpop.f32.mrb[0].mxu0
  %v4804 = vadd.f32 0.0, %v4803
  %v4805 = vpop.f32.mrb[0].mxu0
  %v4806 = vpop.f32.mrb[0].mxu0
  %v4807 = vadd.f32 0.0, %v4806
  %v4808 = vpop.f32.mrb[0].mxu0
  %4809 = vmatprep.mubr.bf16.mxu0 0
  %4810 = vmatmul.mubr.bf16.gmra.mrb[0].mxu0 %v4554
  %v4811 = vpop.f32.mrb[0].mxu0
  %v4812 = vadd.f32 0.0, %v4811
  %v4813 = vpop.f32.mrb[0].mxu0
  %v4814 = vpop.f32.mrb[0].mxu0
  %v4815 = vadd.f32 0.0, %v4814
  %v4816 = vpop.f32.mrb[0].mxu0
  %4817 = vmatprep.mubr.bf16.mxu0 0
  %4818 = vmatmul.mubr.bf16.gmra.mrb[0].mxu0 %v4557
  %v4819 = vpop.f32.mrb[0].mxu0
  %v4820 = vadd.f32 0.0, %v4819
  %v4821 = vpop.f32.mrb[0].mxu0
  %v4822 = vpop.f32.mrb[0].mxu0
  %v4823 = vadd.f32 0.0, %v4822
  %v4824 = vpop.f32.mrb[0].mxu0
  %4825 = vmatprep.mubr.bf16.mxu0 0
  %4826 = vmatmul.mubr.bf16.gmra.mrb[0].mxu0 %v4560
  %v4827 = vpop.f32.mrb[0].mxu0
  %v4828 = vadd.f32 0.0, %v4827
  %v4829 = vpop.f32.mrb[0].mxu0
  %v4830 = vpop.f32.mrb[0].mxu0
  %v4831 = vadd.f32 0.0, %v4830
  %v4832 = vpop.f32.mrb[0].mxu0
  %4833 = vmatprep.mubr.bf16.mxu0 0
  %4834 = vmatmul.mubr.bf16.gmra.mrb[0].mxu0 %v4563
  %v4835 = vpop.f32.mrb[0].mxu0
  %v4836 = vadd.f32 0.0, %v4835
  %v4837 = vpop.f32.mrb[0].mxu0
  %v4838 = vpop.f32.mrb[0].mxu0
  %v4839 = vadd.f32 0.0, %v4838
  %v4840 = vpop.f32.mrb[0].mxu0
  %4841 = vmatprep.mubr.bf16.mxu0 0
  %4842 = vmatmul.mubr.bf16.gmra.mrb[0].mxu0 %v4566
  %v4843 = vpop.f32.mrb[0].mxu0
  %v4844 = vadd.f32 0.0, %v4843
  %v4845 = vpop.f32.mrb[0].mxu0
  %v4846 = vpop.f32.mrb[0].mxu0
  %v4847 = vadd.f32 0.0, %v4846
  %v4848 = vpop.f32.mrb[0].mxu0
  %4849 = vmatprep.mubr.bf16.mxu0 0
  %4850 = vmatmul.mubr.bf16.gmra.mrb[0].mxu0 %v4569
  %v4851 = vpop.f32.mrb[0].mxu0
  %v4852 = vadd.f32 0.0, %v4851
  %v4853 = vpop.f32.mrb[0].mxu0
  %v4854 = vpop.f32.mrb[0].mxu0
  %v4855 = vadd.f32 0.0, %v4854
  %v4856 = vpop.f32.mrb[0].mxu0
  %4857 = vmatprep.mubr.bf16.mxu0 0
  %4858 = vmatmul.mubr.bf16.gmra.mrb[0].mxu0 %v4572
  %v4859 = vpop.f32.mrb[0].mxu0
  %v4860 = vadd.f32 0.0, %v4859
  %v4861 = vpop.f32.mrb[0].mxu0
  %v4862 = vpop.f32.mrb[0].mxu0
  %v4863 = vadd.f32 0.0, %v4862
  %v4864 = vpop.f32.mrb[0].mxu0
  %4865 = vdwg.mxu0
  %v4866 = vadd.f32 %v3452, %v4612
  %v4867 = vadd.f32 %v3453, %v4615
  %v4868 = vadd.f32 %v3454, %v4620
  %v4869 = vadd.f32 %v3455, %v4623
  %v4870 = vadd.f32 %v3456, %v4628
  %v4871 = vadd.f32 %v3457, %v4631
  %v4872 = vadd.f32 %v3458, %v4636
  %v4873 = vadd.f32 %v3459, %v4639
  %v4874 = vadd.f32 %v3460, %v4644
  %v4875 = vadd.f32 %v3461, %v4647
  %v4876 = vadd.f32 %v3462, %v4652
  %v4877 = vadd.f32 %v3463, %v4655
  %v4878 = vadd.f32 %v3464, %v4660
  %v4879 = vadd.f32 %v3465, %v4663
  %v4880 = vadd.f32 %v3466, %v4668
  %v4881 = vadd.f32 %v3467, %v4671
  %v4882 = vadd.f32 %v3468, %v4676
  %v4883 = vadd.f32 %v3469, %v4679
  %v4884 = vadd.f32 %v3470, %v4684
  %v4885 = vadd.f32 %v3471, %v4687
  %v4886 = vadd.f32 %v3472, %v4692
  %v4887 = vadd.f32 %v3473, %v4695
  %v4888 = vadd.f32 %v3474, %v4700
  %v4889 = vadd.f32 %v3475, %v4703
  %v4890 = vadd.f32 %v3476, %v4708
  %v4891 = vadd.f32 %v3477, %v4711
  %v4892 = vadd.f32 %v3478, %v4716
  %v4893 = vadd.f32 %v3479, %v4719
  %v4894 = vadd.f32 %v3480, %v4724
  %v4895 = vadd.f32 %v3481, %v4727
  %v4896 = vadd.f32 %v3482, %v4732
  %v4897 = vadd.f32 %v3483, %v4735
  %v4898 = vadd.f32 %v3484, %v4740
  %v4899 = vadd.f32 %v3485, %v4743
  %v4900 = vadd.f32 %v3486, %v4748
  %v4901 = vadd.f32 %v3487, %v4751
  %v4902 = vadd.f32 %v3488, %v4756
  %v4903 = vadd.f32 %v3489, %v4759
  %v4904 = vadd.f32 %v3490, %v4764
  %v4905 = vadd.f32 %v3491, %v4767
  %v4906 = vadd.f32 %v3492, %v4772
  %v4907 = vadd.f32 %v3493, %v4775
  %v4908 = vadd.f32 %v3494, %v4780
  %v4909 = vadd.f32 %v3495, %v4783
  %v4910 = vadd.f32 %v3496, %v4788
  %v4911 = vadd.f32 %v3497, %v4791
  %v4912 = vadd.f32 %v3498, %v4796
  %v4913 = vadd.f32 %v3499, %v4799
  %v4914 = vadd.f32 %v3500, %v4804
  %v4915 = vadd.f32 %v3501, %v4807
  %v4916 = vadd.f32 %v3502, %v4812
  %v4917 = vadd.f32 %v3503, %v4815
  %v4918 = vadd.f32 %v3504, %v4820
  %v4919 = vadd.f32 %v3505, %v4823
  %v4920 = vadd.f32 %v3506, %v4828
  %v4921 = vadd.f32 %v3507, %v4831
  %v4922 = vadd.f32 %v3508, %v4836
  %v4923 = vadd.f32 %v3509, %v4839
  %v4924 = vadd.f32 %v3510, %v4844
  %v4925 = vadd.f32 %v3511, %v4847
  %v4926 = vadd.f32 %v3512, %v4852
  %v4927 = vadd.f32 %v3513, %v4855
  %v4928 = vadd.f32 %v3514, %v4860
  %v4929 = vadd.f32 %v3515, %v4863
  %v4930 = vld [vmem:[%s2837] sm:$0xe]
  %v4931 = vld [vmem:[%s2837 + $0xc] sm:$0xe]
  %v4932 = vld [vmem:[%s2837 + $0x18] sm:$0xe]
  %v4933 = vld [vmem:[%s2837 + $0x24] sm:$0xe]
  %v4934 = vld [vmem:[%s2837 + $0x30] sm:$0xe]
  %v4935 = vld [vmem:[%s2837 + $0x3c] sm:$0xe]
  %v4936 = vld [vmem:[%s2837 + $0x48] sm:$0xe]
  %v4937 = vld [vmem:[%s2837 + $0x54] sm:$0xe]
  %v4938 = vld [vmem:[%s2837 + $0x60] sm:$0xe]
  %v4939 = vld [vmem:[%s2837 + $0x6c] sm:$0xe]
  %v4940 = vld [vmem:[%s2837 + $0x78] sm:$0xe]
  %v4941 = vld [vmem:[%s2837 + $0x84] sm:$0xe]
  %v4942 = vld [vmem:[%s2837 + $0x90] sm:$0xe]
  %v4943 = vld [vmem:[%s2837 + $0x9c] sm:$0xe]
  %v4944 = vld [vmem:[%s2837 + $0xa8] sm:$0xe]
  %v4945 = vld [vmem:[%s2837 + $0xb4] sm:$0xe]
  %v4946 = vld [vmem:[%s2837 + $0xd8] sm:$0xe]
  %v4947 = vld [vmem:[%s2837 + $0xe4] sm:$0xe]
  %v4948 = vld [vmem:[%s2837 + $0xf0] sm:$0xe]
  %v4949 = vld [vmem:[%s2837 + $0xfc] sm:$0xe]
  %v4950 = vld [vmem:[%s2837 + $0x108] sm:$0xe]
  %v4951 = vld [vmem:[%s2837 + $0x114] sm:$0xe]
  %v4952 = vld [vmem:[%s2837 + $0x120] sm:$0xe]
  %v4953 = vld [vmem:[%s2837 + $0x12c] sm:$0xe]
  %v4954 = vld [vmem:[%s2837 + $0x138] sm:$0xe]
  %v4955 = vld [vmem:[%s2837 + $0x144] sm:$0xe]
  %v4956 = vld [vmem:[%s2837 + $0x150] sm:$0xe]
  %v4957 = vld [vmem:[%s2837 + $0x15c] sm:$0xe]
  %v4958 = vld [vmem:[%s2837 + $0x168] sm:$0xe]
  %v4959 = vld [vmem:[%s2837 + $0x174] sm:$0xe]
  %v4960 = vld [vmem:[%s2837 + $0x180] sm:$0xe]
  %v4961 = vld [vmem:[%s2837 + $0x18c] sm:$0xe]
  %v5058 = vrot.slane %v4930, 5
  %v5059 = vrot.slane %v5058, 4
  %v5060 = vrot.slane %v3517, 5
  %v5061 = vsel %vm2062, %v5059, %v5060
  %v5062 = vrot.slane %v5060, 4
  %v5063 = vrot.slane %v3518, 5
  %v5064 = vsel %vm2062, %v5062, %v5063
  %v5065 = vrot.slane %v4931, 5
  %v5066 = vrot.slane %v5065, 4
  %v5067 = vrot.slane %v3520, 5
  %v5068 = vsel %vm2062, %v5066, %v5067
  %v5069 = vrot.slane %v5067, 4
  %v5070 = vrot.slane %v3521, 5
  %v5071 = vsel %vm2062, %v5069, %v5070
  %v5072 = vrot.slane %v4932, 5
  %v5073 = vrot.slane %v5072, 4
  %v5074 = vrot.slane %v3523, 5
  %v5075 = vsel %vm2062, %v5073, %v5074
  %v5076 = vrot.slane %v5074, 4
  %v5077 = vrot.slane %v3524, 5
  %v5078 = vsel %vm2062, %v5076, %v5077
  %v5079 = vrot.slane %v4933, 5
  %v5080 = vrot.slane %v5079, 4
  %v5081 = vrot.slane %v3526, 5
  %v5082 = vsel %vm2062, %v5080, %v5081
  %v5083 = vrot.slane %v5081, 4
  %v5084 = vrot.slane %v3527, 5
  %v5085 = vsel %vm2062, %v5083, %v5084
  %v5086 = vrot.slane %v4934, 5
  %v5087 = vrot.slane %v5086, 4
  %v5088 = vrot.slane %v3529, 5
  %v5089 = vsel %vm2062, %v5087, %v5088
  %v5090 = vrot.slane %v5088, 4
  %v5091 = vrot.slane %v3530, 5
  %v5092 = vsel %vm2062, %v5090, %v5091
  %v5093 = vrot.slane %v4935, 5
  %v5094 = vrot.slane %v5093, 4
  %v5095 = vrot.slane %v3532, 5
  %v5096 = vsel %vm2062, %v5094, %v5095
  %v5097 = vrot.slane %v5095, 4
  %v5098 = vrot.slane %v3533, 5
  %v5099 = vsel %vm2062, %v5097, %v5098
  %v5100 = vrot.slane %v4936, 5
  %v5101 = vrot.slane %v5100, 4
  %v5102 = vrot.slane %v3535, 5
  %v5103 = vsel %vm2062, %v5101, %v5102
  %v5104 = vrot.slane %v5102, 4
  %v5105 = vrot.slane %v3536, 5
  %v5106 = vsel %vm2062, %v5104, %v5105
  %v5107 = vrot.slane %v4937, 5
  %v5108 = vrot.slane %v5107, 4
  %v5109 = vrot.slane %v3538, 5
  %v5110 = vsel %vm2062, %v5108, %v5109
  %v5111 = vrot.slane %v5109, 4
  %v5112 = vrot.slane %v3539, 5
  %v5113 = vsel %vm2062, %v5111, %v5112
  %v5114 = vrot.slane %v4938, 5
  %v5115 = vrot.slane %v5114, 4
  %v5116 = vrot.slane %v3541, 5
  %v5117 = vsel %vm2062, %v5115, %v5116
  %v5118 = vrot.slane %v5116, 4
  %v5119 = vrot.slane %v3542, 5
  %v5120 = vsel %vm2062, %v5118, %v5119
  %v5121 = vrot.slane %v4939, 5
  %v5122 = vrot.slane %v5121, 4
  %v5123 = vrot.slane %v3544, 5
  %v5124 = vsel %vm2062, %v5122, %v5123
  %v5125 = vrot.slane %v5123, 4
  %v5126 = vrot.slane %v3545, 5
  %v5127 = vsel %vm2062, %v5125, %v5126
  %v5128 = vrot.slane %v4940, 5
  %v5129 = vrot.slane %v5128, 4
  %v5130 = vrot.slane %v3547, 5
  %v5131 = vsel %vm2062, %v5129, %v5130
  %v5132 = vrot.slane %v5130, 4
  %v5133 = vrot.slane %v3548, 5
  %v5134 = vsel %vm2062, %v5132, %v5133
  %v5135 = vrot.slane %v4941, 5
  %v5136 = vrot.slane %v5135, 4
  %v5137 = vrot.slane %v3550, 5
  %v5138 = vsel %vm2062, %v5136, %v5137
  %v5139 = vrot.slane %v5137, 4
  %v5140 = vrot.slane %v3551, 5
  %v5141 = vsel %vm2062, %v5139, %v5140
  %v5142 = vrot.slane %v4942, 5
  %v5143 = vrot.slane %v5142, 4
  %v5144 = vrot.slane %v3553, 5
  %v5145 = vsel %vm2062, %v5143, %v5144
  %v5146 = vrot.slane %v5144, 4
  %v5147 = vrot.slane %v3554, 5
  %v5148 = vsel %vm2062, %v5146, %v5147
  %v5149 = vrot.slane %v4943, 5
  %v5150 = vrot.slane %v5149, 4
  %v5151 = vrot.slane %v3556, 5
  %v5152 = vsel %vm2062, %v5150, %v5151
  %v5153 = vrot.slane %v5151, 4
  %v5154 = vrot.slane %v3557, 5
  %v5155 = vsel %vm2062, %v5153, %v5154
  %v5156 = vrot.slane %v4944, 5
  %v5157 = vrot.slane %v5156, 4
  %v5158 = vrot.slane %v3559, 5
  %v5159 = vsel %vm2062, %v5157, %v5158
  %v5160 = vrot.slane %v5158, 4
  %v5161 = vrot.slane %v3560, 5
  %v5162 = vsel %vm2062, %v5160, %v5161
  %v5163 = vrot.slane %v4945, 5
  %v5164 = vrot.slane %v5163, 4
  %v5165 = vrot.slane %v3562, 5
  %v5166 = vsel %vm2062, %v5164, %v5165
  %v5167 = vrot.slane %v5165, 4
  %v5168 = vrot.slane %v3563, 5
  %v5169 = vsel %vm2062, %v5167, %v5168
  %v5170 = vrot.slane %v4946, 5
  %v5171 = vrot.slane %v5170, 4
  %v5172 = vrot.slane %v3565, 5
  %v5173 = vsel %vm2062, %v5171, %v5172
  %v5174 = vrot.slane %v5172, 4
  %v5175 = vrot.slane %v3566, 5
  %v5176 = vsel %vm2062, %v5174, %v5175
  %v5177 = vrot.slane %v4947, 5
  %v5178 = vrot.slane %v5177, 4
  %v5179 = vrot.slane %v3568, 5
  %v5180 = vsel %vm2062, %v5178, %v5179
  %v5181 = vrot.slane %v5179, 4
  %v5182 = vrot.slane %v3569, 5
  %v5183 = vsel %vm2062, %v5181, %v5182
  %v5184 = vrot.slane %v4948, 5
  %v5185 = vrot.slane %v5184, 4
  %v5186 = vrot.slane %v3571, 5
  %v5187 = vsel %vm2062, %v5185, %v5186
  %v5188 = vrot.slane %v5186, 4
  %v5189 = vrot.slane %v3572, 5
  %v5190 = vsel %vm2062, %v5188, %v5189
  %v5191 = vrot.slane %v4949, 5
  %v5192 = vrot.slane %v5191, 4
  %v5193 = vrot.slane %v3574, 5
  %v5194 = vsel %vm2062, %v5192, %v5193
  %v5195 = vrot.slane %v5193, 4
  %v5196 = vrot.slane %v3575, 5
  %v5197 = vsel %vm2062, %v5195, %v5196
  %v5198 = vrot.slane %v4950, 5
  %v5199 = vrot.slane %v5198, 4
  %v5200 = vrot.slane %v3577, 5
  %v5201 = vsel %vm2062, %v5199, %v5200
  %v5202 = vrot.slane %v5200, 4
  %v5203 = vrot.slane %v3578, 5
  %v5204 = vsel %vm2062, %v5202, %v5203
  %v5205 = vrot.slane %v4951, 5
  %v5206 = vrot.slane %v5205, 4
  %v5207 = vrot.slane %v3580, 5
  %v5208 = vsel %vm2062, %v5206, %v5207
  %v5209 = vrot.slane %v5207, 4
  %v5210 = vrot.slane %v3581, 5
  %v5211 = vsel %vm2062, %v5209, %v5210
  %v5212 = vrot.slane %v4952, 5
  %v5213 = vrot.slane %v5212, 4
  %v5214 = vrot.slane %v3583, 5
  %v5215 = vsel %vm2062, %v5213, %v5214
  %v5216 = vrot.slane %v5214, 4
  %v5217 = vrot.slane %v3584, 5
  %v5218 = vsel %vm2062, %v5216, %v5217
  %v5219 = vrot.slane %v4953, 5
  %v5220 = vrot.slane %v5219, 4
  %v5221 = vrot.slane %v3586, 5
  %v5222 = vsel %vm2062, %v5220, %v5221
  %v5223 = vrot.slane %v5221, 4
  %v5224 = vrot.slane %v3587, 5
  %v5225 = vsel %vm2062, %v5223, %v5224
  %v5226 = vrot.slane %v4954, 5
  %v5227 = vrot.slane %v5226, 4
  %v5228 = vrot.slane %v3589, 5
  %v5229 = vsel %vm2062, %v5227, %v5228
  %v5230 = vrot.slane %v5228, 4
  %v5231 = vrot.slane %v3590, 5
  %v5232 = vsel %vm2062, %v5230, %v5231
  %v5233 = vrot.slane %v4955, 5
  %v5234 = vrot.slane %v5233, 4
  %v5235 = vrot.slane %v3592, 5
  %v5236 = vsel %vm2062, %v5234, %v5235
  %v5237 = vrot.slane %v5235, 4
  %v5238 = vrot.slane %v3593, 5
  %v5239 = vsel %vm2062, %v5237, %v5238
  %v5240 = vrot.slane %v4956, 5
  %v5241 = vrot.slane %v5240, 4
  %v5242 = vrot.slane %v3595, 5
  %v5243 = vsel %vm2062, %v5241, %v5242
  %v5244 = vrot.slane %v5242, 4
  %v5245 = vrot.slane %v3596, 5
  %v5246 = vsel %vm2062, %v5244, %v5245
  %v5247 = vrot.slane %v4957, 5
  %v5248 = vrot.slane %v5247, 4
  %v5249 = vrot.slane %v3598, 5
  %v5250 = vsel %vm2062, %v5248, %v5249
  %v5251 = vrot.slane %v5249, 4
  %v5252 = vrot.slane %v3599, 5
  %v5253 = vsel %vm2062, %v5251, %v5252
  %v5254 = vrot.slane %v4958, 5
  %v5255 = vrot.slane %v5254, 4
  %v5256 = vrot.slane %v3601, 5
  %v5257 = vsel %vm2062, %v5255, %v5256
  %v5258 = vrot.slane %v5256, 4
  %v5259 = vrot.slane %v3602, 5
  %v5260 = vsel %vm2062, %v5258, %v5259
  %v5261 = vrot.slane %v4959, 5
  %v5262 = vrot.slane %v5261, 4
  %v5263 = vrot.slane %v3604, 5
  %v5264 = vsel %vm2062, %v5262, %v5263
  %v5265 = vrot.slane %v5263, 4
  %v5266 = vrot.slane %v3605, 5
  %v5267 = vsel %vm2062, %v5265, %v5266
  %v5268 = vrot.slane %v4960, 5
  %v5269 = vrot.slane %v5268, 4
  %v5270 = vrot.slane %v3607, 5
  %v5271 = vsel %vm2062, %v5269, %v5270
  %v5272 = vrot.slane %v5270, 4
  %v5273 = vrot.slane %v3608, 5
  %v5274 = vsel %vm2062, %v5272, %v5273
  %v5275 = vrot.slane %v4961, 5
  %v5276 = vrot.slane %v5275, 4
  %v5277 = vrot.slane %v3610, 5
  %v5278 = vsel %vm2062, %v5276, %v5277
  %v5279 = vrot.slane %v5277, 4
  %v5280 = vrot.slane %v3611, 5
  %v5281 = vsel %vm2062, %v5279, %v5280
  %s5282 = scalar_lea.vmem %s1, 10
  %v5283 = vld [vmem:[%s5282] sm:$0x3]
  %v5284 = vunpack.c.l.b16 %v5061
  %v5285 = vunpack.c.l.b16 %v5064
  %v5286 = vunpack.c.l.b16 %v5068
  %v5287 = vunpack.c.l.b16 %v5071
  %v5288 = vunpack.c.l.b16 %v5075
  %v5289 = vunpack.c.l.b16 %v5078
  %v5290 = vunpack.c.l.b16 %v5082
  %v5291 = vunpack.c.l.b16 %v5085
  %v5292 = vunpack.c.l.b16 %v5089
  %v5293 = vunpack.c.l.b16 %v5092
  %v5294 = vunpack.c.l.b16 %v5096
  %v5295 = vunpack.c.l.b16 %v5099
  %v5296 = vunpack.c.l.b16 %v5103
  %v5297 = vunpack.c.l.b16 %v5106
  %v5298 = vunpack.c.l.b16 %v5110
  %v5299 = vunpack.c.l.b16 %v5113
  %v5300 = vunpack.c.l.b16 %v5117
  %v5301 = vunpack.c.l.b16 %v5120
  %v5302 = vunpack.c.l.b16 %v5124
  %v5303 = vunpack.c.l.b16 %v5127
  %v5304 = vunpack.c.l.b16 %v5131
  %v5305 = vunpack.c.l.b16 %v5134
  %v5306 = vunpack.c.l.b16 %v5138
  %v5307 = vunpack.c.l.b16 %v5141
  %v5308 = vunpack.c.l.b16 %v5145
  %v5309 = vunpack.c.l.b16 %v5148
  %v5310 = vunpack.c.l.b16 %v5152
  %v5311 = vunpack.c.l.b16 %v5155
  %v5312 = vunpack.c.l.b16 %v5159
  %v5313 = vunpack.c.l.b16 %v5162
  %v5314 = vunpack.c.l.b16 %v5166
  %v5315 = vunpack.c.l.b16 %v5169
  %v5316 = vunpack.c.l.b16 %v5173
  %v5317 = vunpack.c.l.b16 %v5176
  %v5318 = vunpack.c.l.b16 %v5180
  %v5319 = vunpack.c.l.b16 %v5183
  %v5320 = vunpack.c.l.b16 %v5187
  %v5321 = vunpack.c.l.b16 %v5190
  %v5322 = vunpack.c.l.b16 %v5194
  %v5323 = vunpack.c.l.b16 %v5197
  %v5324 = vunpack.c.l.b16 %v5201
  %v5325 = vunpack.c.l.b16 %v5204
  %v5326 = vunpack.c.l.b16 %v5208
  %v5327 = vunpack.c.l.b16 %v5211
  %v5328 = vunpack.c.l.b16 %v5215
  %v5329 = vunpack.c.l.b16 %v5218
  %v5330 = vunpack.c.l.b16 %v5222
  %v5331 = vunpack.c.l.b16 %v5225
  %v5332 = vunpack.c.l.b16 %v5229
  %v5333 = vunpack.c.l.b16 %v5232
  %v5334 = vunpack.c.l.b16 %v5236
  %v5335 = vunpack.c.l.b16 %v5239
  %v5336 = vunpack.c.l.b16 %v5243
  %v5337 = vunpack.c.l.b16 %v5246
  %v5338 = vunpack.c.l.b16 %v5250
  %v5339 = vunpack.c.l.b16 %v5253
  %v5340 = vunpack.c.l.b16 %v5257
  %v5341 = vunpack.c.l.b16 %v5260
  %v5342 = vunpack.c.l.b16 %v5264
  %v5343 = vunpack.c.l.b16 %v5267
  %v5344 = vunpack.c.l.b16 %v5271
  %v5345 = vunpack.c.l.b16 %v5274
  %v5346 = vunpack.c.l.b16 %v5278
  %v5347 = vunpack.c.l.b16 %v5281
  %v5348 = vpack.c.b16 %v5285, %v5284
  %v5349 = vpack.c.b16 %v5287, %v5286
  %v5350 = vpack.c.b16 %v5289, %v5288
  %v5351 = vpack.c.b16 %v5291, %v5290
  %v5352 = vpack.c.b16 %v5293, %v5292
  %v5353 = vpack.c.b16 %v5295, %v5294
  %v5354 = vpack.c.b16 %v5297, %v5296
  %v5355 = vpack.c.b16 %v5299, %v5298
  %v5356 = vpack.c.b16 %v5301, %v5300
  %v5357 = vpack.c.b16 %v5303, %v5302
  %v5358 = vpack.c.b16 %v5305, %v5304
  %v5359 = vpack.c.b16 %v5307, %v5306
  %v5360 = vpack.c.b16 %v5309, %v5308
  %v5361 = vpack.c.b16 %v5311, %v5310
  %v5362 = vpack.c.b16 %v5313, %v5312
  %v5363 = vpack.c.b16 %v5315, %v5314
  %v5364 = vpack.c.b16 %v5317, %v5316
  %v5365 = vpack.c.b16 %v5319, %v5318
  %v5366 = vpack.c.b16 %v5321, %v5320
  %v5367 = vpack.c.b16 %v5323, %v5322
  %v5368 = vpack.c.b16 %v5325, %v5324
  %v5369 = vpack.c.b16 %v5327, %v5326
  %v5370 = vpack.c.b16 %v5329, %v5328
  %v5371 = vpack.c.b16 %v5331, %v5330
  %v5372 = vpack.c.b16 %v5333, %v5332
  %v5373 = vpack.c.b16 %v5335, %v5334
  %v5374 = vpack.c.b16 %v5337, %v5336
  %v5375 = vpack.c.b16 %v5339, %v5338
  %v5376 = vpack.c.b16 %v5341, %v5340
  %v5377 = vpack.c.b16 %v5343, %v5342
  %v5378 = vpack.c.b16 %v5345, %v5344
  %v5379 = vpack.c.b16 %v5347, %v5346
  %v5381 = vsel %vm1026, %v5348, 0
  %v5384 = vsel %vm1026, %v5349, 0
  %v5387 = vsel %vm1026, %v5350, 0
  %v5390 = vsel %vm1026, %v5351, 0
  %v5393 = vsel %vm1026, %v5352, 0
  %v5396 = vsel %vm1026, %v5353, 0
  %v5399 = vsel %vm1026, %v5354, 0
  %v5402 = vsel %vm1026, %v5355, 0
  %v5405 = vsel %vm1026, %v5356, 0
  %v5408 = vsel %vm1026, %v5357, 0
  %v5411 = vsel %vm1026, %v5358, 0
  %v5414 = vsel %vm1026, %v5359, 0
  %v5417 = vsel %vm1026, %v5360, 0
  %v5420 = vsel %vm1026, %v5361, 0
  %v5423 = vsel %vm1026, %v5362, 0
  %v5426 = vsel %vm1026, %v5363, 0
  %v5429 = vsel %vm1026, %v5364, 0
  %v5432 = vsel %vm1026, %v5365, 0
  %v5435 = vsel %vm1026, %v5366, 0
  %v5438 = vsel %vm1026, %v5367, 0
  %v5441 = vsel %vm1026, %v5368, 0
  %v5444 = vsel %vm1026, %v5369, 0
  %v5447 = vsel %vm1026, %v5370, 0
  %v5450 = vsel %vm1026, %v5371, 0
  %v5453 = vsel %vm1026, %v5372, 0
  %v5456 = vsel %vm1026, %v5373, 0
  %v5459 = vsel %vm1026, %v5374, 0
  %v5462 = vsel %vm1026, %v5375, 0
  %v5465 = vsel %vm1026, %v5376, 0
  %v5468 = vsel %vm1026, %v5377, 0
  %v5471 = vsel %vm1026, %v5378, 0
  %v5474 = vsel %vm1026, %v5379, 0
  %v5477 = vsel %vm1123, %v5283, 0
  %5479 = vmatprep.subr.bf16.mxu0 0
  %5480 = vmatpush1.bf16.msra.mxu0 %v5477
  %5481 = vmatprep.subr.bf16.mxu0 0
  %5482 = vmatpush1.bf16.msra.mxu0 0
  %5483 = vmatprep.subr.bf16.mxu0 0
  %5484 = vmatpush1.bf16.msra.mxu0 0
  %5485 = vmatprep.subr.bf16.mxu0 0
  %5486 = vmatpush1.bf16.msra.mxu0 0
  %5487 = vmatprep.subr.bf16.mxu0 0
  %5488 = vmatpush1.bf16.msra.mxu0 0
  %5489 = vmatprep.subr.bf16.mxu0 0
  %5490 = vmatpush1.bf16.msra.mxu0 0
  %5491 = vmatprep.subr.bf16.mxu0 0
  %5492 = vmatpush1.bf16.msra.mxu0 0
  %5493 = vmatprep.subr.bf16.mxu0 0
  %5494 = vmatpush1.bf16.msra.mxu0 0
  %5495 = vmatprep.subr.bf16.mxu0 0
  %5496 = vmatpush1.bf16.msra.mxu0 0
  %5497 = vmatprep.subr.bf16.mxu0 0
  %5498 = vmatpush1.bf16.msra.mxu0 0
  %5499 = vmatprep.subr.bf16.mxu0 0
  %5500 = vmatpush1.bf16.msra.mxu0 0
  %5501 = vmatprep.subr.bf16.mxu0 0
  %5502 = vmatpush1.bf16.msra.mxu0 0
  %5503 = vmatprep.subr.bf16.mxu0 0
  %5504 = vmatpush1.bf16.msra.mxu0 0
  %5505 = vmatprep.subr.bf16.mxu0 0
  %5506 = vmatpush1.bf16.msra.mxu0 0
  %5507 = vmatprep.subr.bf16.mxu0 0
  %5508 = vmatpush1.bf16.msra.mxu0 0
  %5509 = vmatprep.subr.bf16.mxu0 0
  %5510 = vmatpush1.bf16.msra.mxu0 0
  %5511 = vmatprep.mubr.bf16.mxu0 0
  %5512 = vmatmul.mubr.bf16.gmra.mrb[0].mxu0 %v5381
  %v5513 = vpop.f32.mrb[0].mxu0
  %v5514 = vadd.f32 0.0, %v5513
  %v5515 = vpop.f32.mrb[0].mxu0
  %v5516 = vpop.f32.mrb[0].mxu0
  %v5517 = vadd.f32 0.0, %v5516
  %v5518 = vpop.f32.mrb[0].mxu0
  %5519 = vmatprep.mubr.bf16.mxu0 0
  %5520 = vmatmul.mubr.bf16.gmra.mrb[0].mxu0 %v5384
  %v5521 = vpop.f32.mrb[0].mxu0
  %v5522 = vadd.f32 0.0, %v5521
  %v5523 = vpop.f32.mrb[0].mxu0
  %v5524 = vpop.f32.mrb[0].mxu0
  %v5525 = vadd.f32 0.0, %v5524
  %v5526 = vpop.f32.mrb[0].mxu0
  %5527 = vmatprep.mubr.bf16.mxu0 0
  %5528 = vmatmul.mubr.bf16.gmra.mrb[0].mxu0 %v5387
  %v5529 = vpop.f32.mrb[0].mxu0
  %v5530 = vadd.f32 0.0, %v5529
  %v5531 = vpop.f32.mrb[0].mxu0
  %v5532 = vpop.f32.mrb[0].mxu0
  %v5533 = vadd.f32 0.0, %v5532
  %v5534 = vpop.f32.mrb[0].mxu0
  %5535 = vmatprep.mubr.bf16.mxu0 0
  %5536 = vmatmul.mubr.bf16.gmra.mrb[0].mxu0 %v5390
  %v5537 = vpop.f32.mrb[0].mxu0
  %v5538 = vadd.f32 0.0, %v5537
  %v5539 = vpop.f32.mrb[0].mxu0
  %v5540 = vpop.f32.mrb[0].mxu0
  %v5541 = vadd.f32 0.0, %v5540
  %v5542 = vpop.f32.mrb[0].mxu0
  %5543 = vmatprep.mubr.bf16.mxu0 0
  %5544 = vmatmul.mubr.bf16.gmra.mrb[0].mxu0 %v5393
  %v5545 = vpop.f32.mrb[0].mxu0
  %v5546 = vadd.f32 0.0, %v5545
  %v5547 = vpop.f32.mrb[0].mxu0
  %v5548 = vpop.f32.mrb[0].mxu0
  %v5549 = vadd.f32 0.0, %v5548
  %v5550 = vpop.f32.mrb[0].mxu0
  %5551 = vmatprep.mubr.bf16.mxu0 0
  %5552 = vmatmul.mubr.bf16.gmra.mrb[0].mxu0 %v5396
  %v5553 = vpop.f32.mrb[0].mxu0
  %v5554 = vadd.f32 0.0, %v5553
  %v5555 = vpop.f32.mrb[0].mxu0
  %v5556 = vpop.f32.mrb[0].mxu0
  %v5557 = vadd.f32 0.0, %v5556
  %v5558 = vpop.f32.mrb[0].mxu0
  %5559 = vmatprep.mubr.bf16.mxu0 0
  %5560 = vmatmul.mubr.bf16.gmra.mrb[0].mxu0 %v5399
  %v5561 = vpop.f32.mrb[0].mxu0
  %v5562 = vadd.f32 0.0, %v5561
  %v5563 = vpop.f32.mrb[0].mxu0
  %v5564 = vpop.f32.mrb[0].mxu0
  %v5565 = vadd.f32 0.0, %v5564
  %v5566 = vpop.f32.mrb[0].mxu0
  %5567 = vmatprep.mubr.bf16.mxu0 0
  %5568 = vmatmul.mubr.bf16.gmra.mrb[0].mxu0 %v5402
  %v5569 = vpop.f32.mrb[0].mxu0
  %v5570 = vadd.f32 0.0, %v5569
  %v5571 = vpop.f32.mrb[0].mxu0
  %v5572 = vpop.f32.mrb[0].mxu0
  %v5573 = vadd.f32 0.0, %v5572
  %v5574 = vpop.f32.mrb[0].mxu0
  %5575 = vmatprep.mubr.bf16.mxu0 0
  %5576 = vmatmul.mubr.bf16.gmra.mrb[0].mxu0 %v5405
  %v5577 = vpop.f32.mrb[0].mxu0
  %v5578 = vadd.f32 0.0, %v5577
  %v5579 = vpop.f32.mrb[0].mxu0
  %v5580 = vpop.f32.mrb[0].mxu0
  %v5581 = vadd.f32 0.0, %v5580
  %v5582 = vpop.f32.mrb[0].mxu0
  %5583 = vmatprep.mubr.bf16.mxu0 0
  %5584 = vmatmul.mubr.bf16.gmra.mrb[0].mxu0 %v5408
  %v5585 = vpop.f32.mrb[0].mxu0
  %v5586 = vadd.f32 0.0, %v5585
  %v5587 = vpop.f32.mrb[0].mxu0
  %v5588 = vpop.f32.mrb[0].mxu0
  %v5589 = vadd.f32 0.0, %v5588
  %v5590 = vpop.f32.mrb[0].mxu0
  %5591 = vmatprep.mubr.bf16.mxu0 0
  %5592 = vmatmul.mubr.bf16.gmra.mrb[0].mxu0 %v5411
  %v5593 = vpop.f32.mrb[0].mxu0
  %v5594 = vadd.f32 0.0, %v5593
  %v5595 = vpop.f32.mrb[0].mxu0
  %v5596 = vpop.f32.mrb[0].mxu0
  %v5597 = vadd.f32 0.0, %v5596
  %v5598 = vpop.f32.mrb[0].mxu0
  %5599 = vmatprep.mubr.bf16.mxu0 0
  %5600 = vmatmul.mubr.bf16.gmra.mrb[0].mxu0 %v5414
  %v5601 = vpop.f32.mrb[0].mxu0
  %v5602 = vadd.f32 0.0, %v5601
  %v5603 = vpop.f32.mrb[0].mxu0
  %v5604 = vpop.f32.mrb[0].mxu0
  %v5605 = vadd.f32 0.0, %v5604
  %v5606 = vpop.f32.mrb[0].mxu0
  %5607 = vmatprep.mubr.bf16.mxu0 0
  %5608 = vmatmul.mubr.bf16.gmra.mrb[0].mxu0 %v5417
  %v5609 = vpop.f32.mrb[0].mxu0
  %v5610 = vadd.f32 0.0, %v5609
  %v5611 = vpop.f32.mrb[0].mxu0
  %v5612 = vpop.f32.mrb[0].mxu0
  %v5613 = vadd.f32 0.0, %v5612
  %v5614 = vpop.f32.mrb[0].mxu0
  %5615 = vmatprep.mubr.bf16.mxu0 0
  %5616 = vmatmul.mubr.bf16.gmra.mrb[0].mxu0 %v5420
  %v5617 = vpop.f32.mrb[0].mxu0
  %v5618 = vadd.f32 0.0, %v5617
  %v5619 = vpop.f32.mrb[0].mxu0
  %v5620 = vpop.f32.mrb[0].mxu0
  %v5621 = vadd.f32 0.0, %v5620
  %v5622 = vpop.f32.mrb[0].mxu0
  %5623 = vmatprep.mubr.bf16.mxu0 0
  %5624 = vmatmul.mubr.bf16.gmra.mrb[0].mxu0 %v5423
  %v5625 = vpop.f32.mrb[0].mxu0
  %v5626 = vadd.f32 0.0, %v5625
  %v5627 = vpop.f32.mrb[0].mxu0
  %v5628 = vpop.f32.mrb[0].mxu0
  %v5629 = vadd.f32 0.0, %v5628
  %v5630 = vpop.f32.mrb[0].mxu0
  %5631 = vmatprep.mubr.bf16.mxu0 0
  %5632 = vmatmul.mubr.bf16.gmra.mrb[0].mxu0 %v5426
  %v5633 = vpop.f32.mrb[0].mxu0
  %v5634 = vadd.f32 0.0, %v5633
  %v5635 = vpop.f32.mrb[0].mxu0
  %v5636 = vpop.f32.mrb[0].mxu0
  %v5637 = vadd.f32 0.0, %v5636
  %v5638 = vpop.f32.mrb[0].mxu0
  %5639 = vmatprep.mubr.bf16.mxu0 0
  %5640 = vmatmul.mubr.bf16.gmra.mrb[0].mxu0 %v5429
  %v5641 = vpop.f32.mrb[0].mxu0
  %v5642 = vadd.f32 0.0, %v5641
  %v5643 = vpop.f32.mrb[0].mxu0
  %v5644 = vpop.f32.mrb[0].mxu0
  %v5645 = vadd.f32 0.0, %v5644
  %v5646 = vpop.f32.mrb[0].mxu0
  %5647 = vmatprep.mubr.bf16.mxu0 0
  %5648 = vmatmul.mubr.bf16.gmra.mrb[0].mxu0 %v5432
  %v5649 = vpop.f32.mrb[0].mxu0
  %v5650 = vadd.f32 0.0, %v5649
  %v5651 = vpop.f32.mrb[0].mxu0
  %v5652 = vpop.f32.mrb[0].mxu0
  %v5653 = vadd.f32 0.0, %v5652
  %v5654 = vpop.f32.mrb[0].mxu0
  %5655 = vmatprep.mubr.bf16.mxu0 0
  %5656 = vmatmul.mubr.bf16.gmra.mrb[0].mxu0 %v5435
  %v5657 = vpop.f32.mrb[0].mxu0
  %v5658 = vadd.f32 0.0, %v5657
  %v5659 = vpop.f32.mrb[0].mxu0
  %v5660 = vpop.f32.mrb[0].mxu0
  %v5661 = vadd.f32 0.0, %v5660
  %v5662 = vpop.f32.mrb[0].mxu0
  %5663 = vmatprep.mubr.bf16.mxu0 0
  %5664 = vmatmul.mubr.bf16.gmra.mrb[0].mxu0 %v5438
  %v5665 = vpop.f32.mrb[0].mxu0
  %v5666 = vadd.f32 0.0, %v5665
  %v5667 = vpop.f32.mrb[0].mxu0
  %v5668 = vpop.f32.mrb[0].mxu0
  %v5669 = vadd.f32 0.0, %v5668
  %v5670 = vpop.f32.mrb[0].mxu0
  %5671 = vmatprep.mubr.bf16.mxu0 0
  %5672 = vmatmul.mubr.bf16.gmra.mrb[0].mxu0 %v5441
  %v5673 = vpop.f32.mrb[0].mxu0
  %v5674 = vadd.f32 0.0, %v5673
  %v5675 = vpop.f32.mrb[0].mxu0
  %v5676 = vpop.f32.mrb[0].mxu0
  %v5677 = vadd.f32 0.0, %v5676
  %v5678 = vpop.f32.mrb[0].mxu0
  %5679 = vmatprep.mubr.bf16.mxu0 0
  %5680 = vmatmul.mubr.bf16.gmra.mrb[0].mxu0 %v5444
  %v5681 = vpop.f32.mrb[0].mxu0
  %v5682 = vadd.f32 0.0, %v5681
  %v5683 = vpop.f32.mrb[0].mxu0
  %v5684 = vpop.f32.mrb[0].mxu0
  %v5685 = vadd.f32 0.0, %v5684
  %v5686 = vpop.f32.mrb[0].mxu0
  %5687 = vmatprep.mubr.bf16.mxu0 0
  %5688 = vmatmul.mubr.bf16.gmra.mrb[0].mxu0 %v5447
  %v5689 = vpop.f32.mrb[0].mxu0
  %v5690 = vadd.f32 0.0, %v5689
  %v5691 = vpop.f32.mrb[0].mxu0
  %v5692 = vpop.f32.mrb[0].mxu0
  %v5693 = vadd.f32 0.0, %v5692
  %v5694 = vpop.f32.mrb[0].mxu0
  %5695 = vmatprep.mubr.bf16.mxu0 0
  %5696 = vmatmul.mubr.bf16.gmra.mrb[0].mxu0 %v5450
  %v5697 = vpop.f32.mrb[0].mxu0
  %v5698 = vadd.f32 0.0, %v5697
  %v5699 = vpop.f32.mrb[0].mxu0
  %v5700 = vpop.f32.mrb[0].mxu0
  %v5701 = vadd.f32 0.0, %v5700
  %v5702 = vpop.f32.mrb[0].mxu0
  %5703 = vmatprep.mubr.bf16.mxu0 0
  %5704 = vmatmul.mubr.bf16.gmra.mrb[0].mxu0 %v5453
  %v5705 = vpop.f32.mrb[0].mxu0
  %v5706 = vadd.f32 0.0, %v5705
  %v5707 = vpop.f32.mrb[0].mxu0
  %v5708 = vpop.f32.mrb[0].mxu0
  %v5709 = vadd.f32 0.0, %v5708
  %v5710 = vpop.f32.mrb[0].mxu0
  %5711 = vmatprep.mubr.bf16.mxu0 0
  %5712 = vmatmul.mubr.bf16.gmra.mrb[0].mxu0 %v5456
  %v5713 = vpop.f32.mrb[0].mxu0
  %v5714 = vadd.f32 0.0, %v5713
  %v5715 = vpop.f32.mrb[0].mxu0
  %v5716 = vpop.f32.mrb[0].mxu0
  %v5717 = vadd.f32 0.0, %v5716
  %v5718 = vpop.f32.mrb[0].mxu0
  %5719 = vmatprep.mubr.bf16.mxu0 0
  %5720 = vmatmul.mubr.bf16.gmra.mrb[0].mxu0 %v5459
  %v5721 = vpop.f32.mrb[0].mxu0
  %v5722 = vadd.f32 0.0, %v5721
  %v5723 = vpop.f32.mrb[0].mxu0
  %v5724 = vpop.f32.mrb[0].mxu0
  %v5725 = vadd.f32 0.0, %v5724
  %v5726 = vpop.f32.mrb[0].mxu0
  %5727 = vmatprep.mubr.bf16.mxu0 0
  %5728 = vmatmul.mubr.bf16.gmra.mrb[0].mxu0 %v5462
  %v5729 = vpop.f32.mrb[0].mxu0
  %v5730 = vadd.f32 0.0, %v5729
  %v5731 = vpop.f32.mrb[0].mxu0
  %v5732 = vpop.f32.mrb[0].mxu0
  %v5733 = vadd.f32 0.0, %v5732
  %v5734 = vpop.f32.mrb[0].mxu0
  %5735 = vmatprep.mubr.bf16.mxu0 0
  %5736 = vmatmul.mubr.bf16.gmra.mrb[0].mxu0 %v5465
  %v5737 = vpop.f32.mrb[0].mxu0
  %v5738 = vadd.f32 0.0, %v5737
  %v5739 = vpop.f32.mrb[0].mxu0
  %v5740 = vpop.f32.mrb[0].mxu0
  %v5741 = vadd.f32 0.0, %v5740
  %v5742 = vpop.f32.mrb[0].mxu0
  %5743 = vmatprep.mubr.bf16.mxu0 0
  %5744 = vmatmul.mubr.bf16.gmra.mrb[0].mxu0 %v5468
  %v5745 = vpop.f32.mrb[0].mxu0
  %v5746 = vadd.f32 0.0, %v5745
  %v5747 = vpop.f32.mrb[0].mxu0
  %v5748 = vpop.f32.mrb[0].mxu0
  %v5749 = vadd.f32 0.0, %v5748
  %v5750 = vpop.f32.mrb[0].mxu0
  %5751 = vmatprep.mubr.bf16.mxu0 0
  %5752 = vmatmul.mubr.bf16.gmra.mrb[0].mxu0 %v5471
  %v5753 = vpop.f32.mrb[0].mxu0
  %v5754 = vadd.f32 0.0, %v5753
  %v5755 = vpop.f32.mrb[0].mxu0
  %v5756 = vpop.f32.mrb[0].mxu0
  %v5757 = vadd.f32 0.0, %v5756
  %v5758 = vpop.f32.mrb[0].mxu0
  %5759 = vmatprep.mubr.bf16.mxu0 0
  %5760 = vmatmul.mubr.bf16.gmra.mrb[0].mxu0 %v5474
  %v5761 = vpop.f32.mrb[0].mxu0
  %v5762 = vadd.f32 0.0, %v5761
  %v5763 = vpop.f32.mrb[0].mxu0
  %v5764 = vpop.f32.mrb[0].mxu0
  %v5765 = vadd.f32 0.0, %v5764
  %v5766 = vpop.f32.mrb[0].mxu0
  %5767 = vdwg.mxu0
  %v5768 = vadd.f32 %v4866, %v5514
  %v5769 = vadd.f32 %v4867, %v5517
  %v5770 = vadd.f32 %v4868, %v5522
  %v5771 = vadd.f32 %v4869, %v5525
  %v5772 = vadd.f32 %v4870, %v5530
  %v5773 = vadd.f32 %v4871, %v5533
  %v5774 = vadd.f32 %v4872, %v5538
  %v5775 = vadd.f32 %v4873, %v5541
  %v5776 = vadd.f32 %v4874, %v5546
  %v5777 = vadd.f32 %v4875, %v5549
  %v5778 = vadd.f32 %v4876, %v5554
  %v5779 = vadd.f32 %v4877, %v5557
  %v5780 = vadd.f32 %v4878, %v5562
  %v5781 = vadd.f32 %v4879, %v5565
  %v5782 = vadd.f32 %v4880, %v5570
  %v5783 = vadd.f32 %v4881, %v5573
  %v5784 = vadd.f32 %v4882, %v5578
  %v5785 = vadd.f32 %v4883, %v5581
  %v5786 = vadd.f32 %v4884, %v5586
  %v5787 = vadd.f32 %v4885, %v5589
  %v5788 = vadd.f32 %v4886, %v5594
  %v5789 = vadd.f32 %v4887, %v5597
  %v5790 = vadd.f32 %v4888, %v5602
  %v5791 = vadd.f32 %v4889, %v5605
  %v5792 = vadd.f32 %v4890, %v5610
  %v5793 = vadd.f32 %v4891, %v5613
  %v5794 = vadd.f32 %v4892, %v5618
  %v5795 = vadd.f32 %v4893, %v5621
  %v5796 = vadd.f32 %v4894, %v5626
  %v5797 = vadd.f32 %v4895, %v5629
  %v5798 = vadd.f32 %v4896, %v5634
  %v5799 = vadd.f32 %v4897, %v5637
  %v5800 = vadd.f32 %v4898, %v5642
  %v5801 = vadd.f32 %v4899, %v5645
  %v5802 = vadd.f32 %v4900, %v5650
  %v5803 = vadd.f32 %v4901, %v5653
  %v5804 = vadd.f32 %v4902, %v5658
  %v5805 = vadd.f32 %v4903, %v5661
  %v5806 = vadd.f32 %v4904, %v5666
  %v5807 = vadd.f32 %v4905, %v5669
  %v5808 = vadd.f32 %v4906, %v5674
  %v5809 = vadd.f32 %v4907, %v5677
  %v5810 = vadd.f32 %v4908, %v5682
  %v5811 = vadd.f32 %v4909, %v5685
  %v5812 = vadd.f32 %v4910, %v5690
  %v5813 = vadd.f32 %v4911, %v5693
  %v5814 = vadd.f32 %v4912, %v5698
  %v5815 = vadd.f32 %v4913, %v5701
  %v5816 = vadd.f32 %v4914, %v5706
  %v5817 = vadd.f32 %v4915, %v5709
  %v5818 = vadd.f32 %v4916, %v5714
  %v5819 = vadd.f32 %v4917, %v5717
  %v5820 = vadd.f32 %v4918, %v5722
  %v5821 = vadd.f32 %v4919, %v5725
  %v5822 = vadd.f32 %v4920, %v5730
  %v5823 = vadd.f32 %v4921, %v5733
  %v5824 = vadd.f32 %v4922, %v5738
  %v5825 = vadd.f32 %v4923, %v5741
  %v5826 = vadd.f32 %v4924, %v5746
  %v5827 = vadd.f32 %v4925, %v5749
  %v5828 = vadd.f32 %v4926, %v5754
  %v5829 = vadd.f32 %v4927, %v5757
  %v5830 = vadd.f32 %v4928, %v5762
  %v5831 = vadd.f32 %v4929, %v5765
  %s5832 = scalar_lea.vmem %s42, 24
  %v5833 = vld [vmem:[%s5832] sm:$0xf]
  %v5834 = vld [vmem:[%s5832 + $0x4] sm:$0xf]
  %v5835 = vld [vmem:[%s5832 + $0xc] sm:$0xf]
  %v5836 = vld [vmem:[%s5832 + $0x10] sm:$0xf]
  %v5837 = vld [vmem:[%s5832 + $0x18] sm:$0xf]
  %v5838 = vld [vmem:[%s5832 + $0x1c] sm:$0xf]
  %v5839 = vld [vmem:[%s5832 + $0x24] sm:$0xf]
  %v5840 = vld [vmem:[%s5832 + $0x28] sm:$0xf]
  %v5841 = vld [vmem:[%s5832 + $0x30] sm:$0xf]
  %v5842 = vld [vmem:[%s5832 + $0x34] sm:$0xf]
  %v5843 = vld [vmem:[%s5832 + $0x3c] sm:$0xf]
  %v5844 = vld [vmem:[%s5832 + $0x40] sm:$0xf]
  %v5845 = vld [vmem:[%s5832 + $0x48] sm:$0xf]
  %v5846 = vld [vmem:[%s5832 + $0x4c] sm:$0xf]
  %v5847 = vld [vmem:[%s5832 + $0x54] sm:$0xf]
  %v5848 = vld [vmem:[%s5832 + $0x58] sm:$0xf]
  %v5849 = vld [vmem:[%s5832 + $0x60] sm:$0xf]
  %v5850 = vld [vmem:[%s5832 + $0x64] sm:$0xf]
  %v5851 = vld [vmem:[%s5832 + $0x6c] sm:$0xf]
  %v5852 = vld [vmem:[%s5832 + $0x70] sm:$0xf]
  %v5853 = vld [vmem:[%s5832 + $0x78] sm:$0xf]
  %v5854 = vld [vmem:[%s5832 + $0x7c] sm:$0xf]
  %v5855 = vld [vmem:[%s5832 + $0x84] sm:$0xf]
  %v5856 = vld [vmem:[%s5832 + $0x88] sm:$0xf]
  %v5857 = vld [vmem:[%s5832 + $0x90] sm:$0xf]
  %v5858 = vld [vmem:[%s5832 + $0x94] sm:$0xf]
  %v5859 = vld [vmem:[%s5832 + $0x9c] sm:$0xf]
  %v5860 = vld [vmem:[%s5832 + $0xa0] sm:$0xf]
  %v5861 = vld [vmem:[%s5832 + $0xa8] sm:$0xf]
  %v5862 = vld [vmem:[%s5832 + $0xac] sm:$0xf]
  %v5863 = vld [vmem:[%s5832 + $0xb4] sm:$0xf]
  %v5864 = vld [vmem:[%s5832 + $0xb8] sm:$0xf]
  %v5865 = vld [vmem:[%s5832 + $0xd8] sm:$0xf]
  %v5866 = vld [vmem:[%s5832 + $0xdc] sm:$0xf]
  %v5867 = vld [vmem:[%s5832 + $0xe4] sm:$0xf]
  %v5868 = vld [vmem:[%s5832 + $0xe8] sm:$0xf]
  %v5869 = vld [vmem:[%s5832 + $0xf0] sm:$0xf]
  %v5870 = vld [vmem:[%s5832 + $0xf4] sm:$0xf]
  %v5871 = vld [vmem:[%s5832 + $0xfc] sm:$0xf]
  %v5872 = vld [vmem:[%s5832 + $0x100] sm:$0xf]
  %v5873 = vld [vmem:[%s5832 + $0x108] sm:$0xf]
  %v5874 = vld [vmem:[%s5832 + $0x10c] sm:$0xf]
  %v5875 = vld [vmem:[%s5832 + $0x114] sm:$0xf]
  %v5876 = vld [vmem:[%s5832 + $0x118] sm:$0xf]
  %v5877 = vld [vmem:[%s5832 + $0x120] sm:$0xf]
  %v5878 = vld [vmem:[%s5832 + $0x124] sm:$0xf]
  %v5879 = vld [vmem:[%s5832 + $0x12c] sm:$0xf]
  %v5880 = vld [vmem:[%s5832 + $0x130] sm:$0xf]
  %v5881 = vld [vmem:[%s5832 + $0x138] sm:$0xf]
  %v5882 = vld [vmem:[%s5832 + $0x13c] sm:$0xf]
  %v5883 = vld [vmem:[%s5832 + $0x144] sm:$0xf]
  %v5884 = vld [vmem:[%s5832 + $0x148] sm:$0xf]
  %v5885 = vld [vmem:[%s5832 + $0x150] sm:$0xf]
  %v5886 = vld [vmem:[%s5832 + $0x154] sm:$0xf]
  %v5887 = vld [vmem:[%s5832 + $0x15c] sm:$0xf]
  %v5888 = vld [vmem:[%s5832 + $0x160] sm:$0xf]
  %v5889 = vld [vmem:[%s5832 + $0x168] sm:$0xf]
  %v5890 = vld [vmem:[%s5832 + $0x16c] sm:$0xf]
  %v5891 = vld [vmem:[%s5832 + $0x174] sm:$0xf]
  %v5892 = vld [vmem:[%s5832 + $0x178] sm:$0xf]
  %v5893 = vld [vmem:[%s5832 + $0x180] sm:$0xf]
  %v5894 = vld [vmem:[%s5832 + $0x184] sm:$0xf]
  %v5895 = vld [vmem:[%s5832 + $0x18c] sm:$0xf]
  %v5896 = vld [vmem:[%s5832 + $0x190] sm:$0xf]
  %s5897 = scalar_lea.vmem %s1, 12
  %v5898 = vld [vmem:[%s5897] sm:$0x3]
  %v5963 = vunpack.c.l.b16 %v5833
  %v5964 = vunpack.c.l.b16 %v5834
  %v5965 = vunpack.c.l.b16 %v5835
  %v5966 = vunpack.c.l.b16 %v5836
  %v5967 = vunpack.c.l.b16 %v5837
  %v5968 = vunpack.c.l.b16 %v5838
  %v5969 = vunpack.c.l.b16 %v5839
  %v5970 = vunpack.c.l.b16 %v5840
  %v5971 = vunpack.c.l.b16 %v5841
  %v5972 = vunpack.c.l.b16 %v5842
  %v5973 = vunpack.c.l.b16 %v5843
  %v5974 = vunpack.c.l.b16 %v5844
  %v5975 = vunpack.c.l.b16 %v5845
  %v5976 = vunpack.c.l.b16 %v5846
  %v5977 = vunpack.c.l.b16 %v5847
  %v5978 = vunpack.c.l.b16 %v5848
  %v5979 = vunpack.c.l.b16 %v5849
  %v5980 = vunpack.c.l.b16 %v5850
  %v5981 = vunpack.c.l.b16 %v5851
  %v5982 = vunpack.c.l.b16 %v5852
  %v5983 = vunpack.c.l.b16 %v5853
  %v5984 = vunpack.c.l.b16 %v5854
  %v5985 = vunpack.c.l.b16 %v5855
  %v5986 = vunpack.c.l.b16 %v5856
  %v5987 = vunpack.c.l.b16 %v5857
  %v5988 = vunpack.c.l.b16 %v5858
  %v5989 = vunpack.c.l.b16 %v5859
  %v5990 = vunpack.c.l.b16 %v5860
  %v5991 = vunpack.c.l.b16 %v5861
  %v5992 = vunpack.c.l.b16 %v5862
  %v5993 = vunpack.c.l.b16 %v5863
  %v5994 = vunpack.c.l.b16 %v5864
  %v5995 = vunpack.c.l.b16 %v5865
  %v5996 = vunpack.c.l.b16 %v5866
  %v5997 = vunpack.c.l.b16 %v5867
  %v5998 = vunpack.c.l.b16 %v5868
  %v5999 = vunpack.c.l.b16 %v5869
  %v6000 = vunpack.c.l.b16 %v5870
  %v6001 = vunpack.c.l.b16 %v5871
  %v6002 = vunpack.c.l.b16 %v5872
  %v6003 = vunpack.c.l.b16 %v5873
  %v6004 = vunpack.c.l.b16 %v5874
  %v6005 = vunpack.c.l.b16 %v5875
  %v6006 = vunpack.c.l.b16 %v5876
  %v6007 = vunpack.c.l.b16 %v5877
  %v6008 = vunpack.c.l.b16 %v5878
  %v6009 = vunpack.c.l.b16 %v5879
  %v6010 = vunpack.c.l.b16 %v5880
  %v6011 = vunpack.c.l.b16 %v5881
  %v6012 = vunpack.c.l.b16 %v5882
  %v6013 = vunpack.c.l.b16 %v5883
  %v6014 = vunpack.c.l.b16 %v5884
  %v6015 = vunpack.c.l.b16 %v5885
  %v6016 = vunpack.c.l.b16 %v5886
  %v6017 = vunpack.c.l.b16 %v5887
  %v6018 = vunpack.c.l.b16 %v5888
  %v6019 = vunpack.c.l.b16 %v5889
  %v6020 = vunpack.c.l.b16 %v5890
  %v6021 = vunpack.c.l.b16 %v5891
  %v6022 = vunpack.c.l.b16 %v5892
  %v6023 = vunpack.c.l.b16 %v5893
  %v6024 = vunpack.c.l.b16 %v5894
  %v6025 = vunpack.c.l.b16 %v5895
  %v6026 = vunpack.c.l.b16 %v5896
  %v6027 = vpack.c.b16 %v5964, %v5963
  %v6028 = vpack.c.b16 %v5966, %v5965
  %v6029 = vpack.c.b16 %v5968, %v5967
  %v6030 = vpack.c.b16 %v5970, %v5969
  %v6031 = vpack.c.b16 %v5972, %v5971
  %v6032 = vpack.c.b16 %v5974, %v5973
  %v6033 = vpack.c.b16 %v5976, %v5975
  %v6034 = vpack.c.b16 %v5978, %v5977
  %v6035 = vpack.c.b16 %v5980, %v5979
  %v6036 = vpack.c.b16 %v5982, %v5981
  %v6037 = vpack.c.b16 %v5984, %v5983
  %v6038 = vpack.c.b16 %v5986, %v5985
  %v6039 = vpack.c.b16 %v5988, %v5987
  %v6040 = vpack.c.b16 %v5990, %v5989
  %v6041 = vpack.c.b16 %v5992, %v5991
  %v6042 = vpack.c.b16 %v5994, %v5993
  %v6043 = vpack.c.b16 %v5996, %v5995
  %v6044 = vpack.c.b16 %v5998, %v5997
  %v6045 = vpack.c.b16 %v6000, %v5999
  %v6046 = vpack.c.b16 %v6002, %v6001
  %v6047 = vpack.c.b16 %v6004, %v6003
  %v6048 = vpack.c.b16 %v6006, %v6005
  %v6049 = vpack.c.b16 %v6008, %v6007
  %v6050 = vpack.c.b16 %v6010, %v6009
  %v6051 = vpack.c.b16 %v6012, %v6011
  %v6052 = vpack.c.b16 %v6014, %v6013
  %v6053 = vpack.c.b16 %v6016, %v6015
  %v6054 = vpack.c.b16 %v6018, %v6017
  %v6055 = vpack.c.b16 %v6020, %v6019
  %v6056 = vpack.c.b16 %v6022, %v6021
  %v6057 = vpack.c.b16 %v6024, %v6023
  %v6058 = vpack.c.b16 %v6026, %v6025
  %v6060 = vsel %vm1026, %v6027, 0
  %v6063 = vsel %vm1026, %v6028, 0
  %v6066 = vsel %vm1026, %v6029, 0
  %v6069 = vsel %vm1026, %v6030, 0
  %v6072 = vsel %vm1026, %v6031, 0
  %v6075 = vsel %vm1026, %v6032, 0
  %v6078 = vsel %vm1026, %v6033, 0
  %v6081 = vsel %vm1026, %v6034, 0
  %v6084 = vsel %vm1026, %v6035, 0
  %v6087 = vsel %vm1026, %v6036, 0
  %v6090 = vsel %vm1026, %v6037, 0
  %v6093 = vsel %vm1026, %v6038, 0
  %v6096 = vsel %vm1026, %v6039, 0
  %v6099 = vsel %vm1026, %v6040, 0
  %v6102 = vsel %vm1026, %v6041, 0
  %v6105 = vsel %vm1026, %v6042, 0
  %v6108 = vsel %vm1026, %v6043, 0
  %v6111 = vsel %vm1026, %v6044, 0
  %v6114 = vsel %vm1026, %v6045, 0
  %v6117 = vsel %vm1026, %v6046, 0
  %v6120 = vsel %vm1026, %v6047, 0
  %v6123 = vsel %vm1026, %v6048, 0
  %v6126 = vsel %vm1026, %v6049, 0
  %v6129 = vsel %vm1026, %v6050, 0
  %v6132 = vsel %vm1026, %v6051, 0
  %v6135 = vsel %vm1026, %v6052, 0
  %v6138 = vsel %vm1026, %v6053, 0
  %v6141 = vsel %vm1026, %v6054, 0
  %v6144 = vsel %vm1026, %v6055, 0
  %v6147 = vsel %vm1026, %v6056, 0
  %v6150 = vsel %vm1026, %v6057, 0
  %v6153 = vsel %vm1026, %v6058, 0
  %v6156 = vsel %vm1123, %v5898, 0
  %6158 = vmatprep.subr.bf16.mxu0 0
  %6159 = vmatpush1.bf16.msra.mxu0 %v6156
  %6160 = vmatprep.subr.bf16.mxu0 0
  %6161 = vmatpush1.bf16.msra.mxu0 0
  %6162 = vmatprep.subr.bf16.mxu0 0
  %6163 = vmatpush1.bf16.msra.mxu0 0
  %6164 = vmatprep.subr.bf16.mxu0 0
  %6165 = vmatpush1.bf16.msra.mxu0 0
  %6166 = vmatprep.subr.bf16.mxu0 0
  %6167 = vmatpush1.bf16.msra.mxu0 0
  %6168 = vmatprep.subr.bf16.mxu0 0
  %6169 = vmatpush1.bf16.msra.mxu0 0
  %6170 = vmatprep.subr.bf16.mxu0 0
  %6171 = vmatpush1.bf16.msra.mxu0 0
  %6172 = vmatprep.subr.bf16.mxu0 0
  %6173 = vmatpush1.bf16.msra.mxu0 0
  %6174 = vmatprep.subr.bf16.mxu0 0
  %6175 = vmatpush1.bf16.msra.mxu0 0
  %6176 = vmatprep.subr.bf16.mxu0 0
  %6177 = vmatpush1.bf16.msra.mxu0 0
  %6178 = vmatprep.subr.bf16.mxu0 0
  %6179 = vmatpush1.bf16.msra.mxu0 0
  %6180 = vmatprep.subr.bf16.mxu0 0
  %6181 = vmatpush1.bf16.msra.mxu0 0
  %6182 = vmatprep.subr.bf16.mxu0 0
  %6183 = vmatpush1.bf16.msra.mxu0 0
  %6184 = vmatprep.subr.bf16.mxu0 0
  %6185 = vmatpush1.bf16.msra.mxu0 0
  %6186 = vmatprep.subr.bf16.mxu0 0
  %6187 = vmatpush1.bf16.msra.mxu0 0
  %6188 = vmatprep.subr.bf16.mxu0 0
  %6189 = vmatpush1.bf16.msra.mxu0 0
  %6190 = vmatprep.mubr.bf16.mxu0 0
  %6191 = vmatmul.mubr.bf16.gmra.mrb[0].mxu0 %v6060
  %v6192 = vpop.f32.mrb[0].mxu0
  %v6193 = vadd.f32 0.0, %v6192
  %v6194 = vpop.f32.mrb[0].mxu0
  %v6195 = vpop.f32.mrb[0].mxu0
  %v6196 = vadd.f32 0.0, %v6195
  %v6197 = vpop.f32.mrb[0].mxu0
  %6198 = vmatprep.mubr.bf16.mxu0 0
  %6199 = vmatmul.mubr.bf16.gmra.mrb[0].mxu0 %v6063
  %v6200 = vpop.f32.mrb[0].mxu0
  %v6201 = vadd.f32 0.0, %v6200
  %v6202 = vpop.f32.mrb[0].mxu0
  %v6203 = vpop.f32.mrb[0].mxu0
  %v6204 = vadd.f32 0.0, %v6203
  %v6205 = vpop.f32.mrb[0].mxu0
  %6206 = vmatprep.mubr.bf16.mxu0 0
  %6207 = vmatmul.mubr.bf16.gmra.mrb[0].mxu0 %v6066
  %v6208 = vpop.f32.mrb[0].mxu0
  %v6209 = vadd.f32 0.0, %v6208
  %v6210 = vpop.f32.mrb[0].mxu0
  %v6211 = vpop.f32.mrb[0].mxu0
  %v6212 = vadd.f32 0.0, %v6211
  %v6213 = vpop.f32.mrb[0].mxu0
  %6214 = vmatprep.mubr.bf16.mxu0 0
  %6215 = vmatmul.mubr.bf16.gmra.mrb[0].mxu0 %v6069
  %v6216 = vpop.f32.mrb[0].mxu0
  %v6217 = vadd.f32 0.0, %v6216
  %v6218 = vpop.f32.mrb[0].mxu0
  %v6219 = vpop.f32.mrb[0].mxu0
  %v6220 = vadd.f32 0.0, %v6219
  %v6221 = vpop.f32.mrb[0].mxu0
  %6222 = vmatprep.mubr.bf16.mxu0 0
  %6223 = vmatmul.mubr.bf16.gmra.mrb[0].mxu0 %v6072
  %v6224 = vpop.f32.mrb[0].mxu0
  %v6225 = vadd.f32 0.0, %v6224
  %v6226 = vpop.f32.mrb[0].mxu0
  %v6227 = vpop.f32.mrb[0].mxu0
  %v6228 = vadd.f32 0.0, %v6227
  %v6229 = vpop.f32.mrb[0].mxu0
  %6230 = vmatprep.mubr.bf16.mxu0 0
  %6231 = vmatmul.mubr.bf16.gmra.mrb[0].mxu0 %v6075
  %v6232 = vpop.f32.mrb[0].mxu0
  %v6233 = vadd.f32 0.0, %v6232
  %v6234 = vpop.f32.mrb[0].mxu0
  %v6235 = vpop.f32.mrb[0].mxu0
  %v6236 = vadd.f32 0.0, %v6235
  %v6237 = vpop.f32.mrb[0].mxu0
  %6238 = vmatprep.mubr.bf16.mxu0 0
  %6239 = vmatmul.mubr.bf16.gmra.mrb[0].mxu0 %v6078
  %v6240 = vpop.f32.mrb[0].mxu0
  %v6241 = vadd.f32 0.0, %v6240
  %v6242 = vpop.f32.mrb[0].mxu0
  %v6243 = vpop.f32.mrb[0].mxu0
  %v6244 = vadd.f32 0.0, %v6243
  %v6245 = vpop.f32.mrb[0].mxu0
  %6246 = vmatprep.mubr.bf16.mxu0 0
  %6247 = vmatmul.mubr.bf16.gmra.mrb[0].mxu0 %v6081
  %v6248 = vpop.f32.mrb[0].mxu0
  %v6249 = vadd.f32 0.0, %v6248
  %v6250 = vpop.f32.mrb[0].mxu0
  %v6251 = vpop.f32.mrb[0].mxu0
  %v6252 = vadd.f32 0.0, %v6251
  %v6253 = vpop.f32.mrb[0].mxu0
  %6254 = vmatprep.mubr.bf16.mxu0 0
  %6255 = vmatmul.mubr.bf16.gmra.mrb[0].mxu0 %v6084
  %v6256 = vpop.f32.mrb[0].mxu0
  %v6257 = vadd.f32 0.0, %v6256
  %v6258 = vpop.f32.mrb[0].mxu0
  %v6259 = vpop.f32.mrb[0].mxu0
  %v6260 = vadd.f32 0.0, %v6259
  %v6261 = vpop.f32.mrb[0].mxu0
  %6262 = vmatprep.mubr.bf16.mxu0 0
  %6263 = vmatmul.mubr.bf16.gmra.mrb[0].mxu0 %v6087
  %v6264 = vpop.f32.mrb[0].mxu0
  %v6265 = vadd.f32 0.0, %v6264
  %v6266 = vpop.f32.mrb[0].mxu0
  %v6267 = vpop.f32.mrb[0].mxu0
  %v6268 = vadd.f32 0.0, %v6267
  %v6269 = vpop.f32.mrb[0].mxu0
  %6270 = vmatprep.mubr.bf16.mxu0 0
  %6271 = vmatmul.mubr.bf16.gmra.mrb[0].mxu0 %v6090
  %v6272 = vpop.f32.mrb[0].mxu0
  %v6273 = vadd.f32 0.0, %v6272
  %v6274 = vpop.f32.mrb[0].mxu0
  %v6275 = vpop.f32.mrb[0].mxu0
  %v6276 = vadd.f32 0.0, %v6275
  %v6277 = vpop.f32.mrb[0].mxu0
  %6278 = vmatprep.mubr.bf16.mxu0 0
  %6279 = vmatmul.mubr.bf16.gmra.mrb[0].mxu0 %v6093
  %v6280 = vpop.f32.mrb[0].mxu0
  %v6281 = vadd.f32 0.0, %v6280
  %v6282 = vpop.f32.mrb[0].mxu0
  %v6283 = vpop.f32.mrb[0].mxu0
  %v6284 = vadd.f32 0.0, %v6283
  %v6285 = vpop.f32.mrb[0].mxu0
  %6286 = vmatprep.mubr.bf16.mxu0 0
  %6287 = vmatmul.mubr.bf16.gmra.mrb[0].mxu0 %v6096
  %v6288 = vpop.f32.mrb[0].mxu0
  %v6289 = vadd.f32 0.0, %v6288
  %v6290 = vpop.f32.mrb[0].mxu0
  %v6291 = vpop.f32.mrb[0].mxu0
  %v6292 = vadd.f32 0.0, %v6291
  %v6293 = vpop.f32.mrb[0].mxu0
  %6294 = vmatprep.mubr.bf16.mxu0 0
  %6295 = vmatmul.mubr.bf16.gmra.mrb[0].mxu0 %v6099
  %v6296 = vpop.f32.mrb[0].mxu0
  %v6297 = vadd.f32 0.0, %v6296
  %v6298 = vpop.f32.mrb[0].mxu0
  %v6299 = vpop.f32.mrb[0].mxu0
  %v6300 = vadd.f32 0.0, %v6299
  %v6301 = vpop.f32.mrb[0].mxu0
  %6302 = vmatprep.mubr.bf16.mxu0 0
  %6303 = vmatmul.mubr.bf16.gmra.mrb[0].mxu0 %v6102
  %v6304 = vpop.f32.mrb[0].mxu0
  %v6305 = vadd.f32 0.0, %v6304
  %v6306 = vpop.f32.mrb[0].mxu0
  %v6307 = vpop.f32.mrb[0].mxu0
  %v6308 = vadd.f32 0.0, %v6307
  %v6309 = vpop.f32.mrb[0].mxu0
  %6310 = vmatprep.mubr.bf16.mxu0 0
  %6311 = vmatmul.mubr.bf16.gmra.mrb[0].mxu0 %v6105
  %v6312 = vpop.f32.mrb[0].mxu0
  %v6313 = vadd.f32 0.0, %v6312
  %v6314 = vpop.f32.mrb[0].mxu0
  %v6315 = vpop.f32.mrb[0].mxu0
  %v6316 = vadd.f32 0.0, %v6315
  %v6317 = vpop.f32.mrb[0].mxu0
  %6318 = vmatprep.mubr.bf16.mxu0 0
  %6319 = vmatmul.mubr.bf16.gmra.mrb[0].mxu0 %v6108
  %v6320 = vpop.f32.mrb[0].mxu0
  %v6321 = vadd.f32 0.0, %v6320
  %v6322 = vpop.f32.mrb[0].mxu0
  %v6323 = vpop.f32.mrb[0].mxu0
  %v6324 = vadd.f32 0.0, %v6323
  %v6325 = vpop.f32.mrb[0].mxu0
  %6326 = vmatprep.mubr.bf16.mxu0 0
  %6327 = vmatmul.mubr.bf16.gmra.mrb[0].mxu0 %v6111
  %v6328 = vpop.f32.mrb[0].mxu0
  %v6329 = vadd.f32 0.0, %v6328
  %v6330 = vpop.f32.mrb[0].mxu0
  %v6331 = vpop.f32.mrb[0].mxu0
  %v6332 = vadd.f32 0.0, %v6331
  %v6333 = vpop.f32.mrb[0].mxu0
  %6334 = vmatprep.mubr.bf16.mxu0 0
  %6335 = vmatmul.mubr.bf16.gmra.mrb[0].mxu0 %v6114
  %v6336 = vpop.f32.mrb[0].mxu0
  %v6337 = vadd.f32 0.0, %v6336
  %v6338 = vpop.f32.mrb[0].mxu0
  %v6339 = vpop.f32.mrb[0].mxu0
  %v6340 = vadd.f32 0.0, %v6339
  %v6341 = vpop.f32.mrb[0].mxu0
  %6342 = vmatprep.mubr.bf16.mxu0 0
  %6343 = vmatmul.mubr.bf16.gmra.mrb[0].mxu0 %v6117
  %v6344 = vpop.f32.mrb[0].mxu0
  %v6345 = vadd.f32 0.0, %v6344
  %v6346 = vpop.f32.mrb[0].mxu0
  %v6347 = vpop.f32.mrb[0].mxu0
  %v6348 = vadd.f32 0.0, %v6347
  %v6349 = vpop.f32.mrb[0].mxu0
  %6350 = vmatprep.mubr.bf16.mxu0 0
  %6351 = vmatmul.mubr.bf16.gmra.mrb[0].mxu0 %v6120
  %v6352 = vpop.f32.mrb[0].mxu0
  %v6353 = vadd.f32 0.0, %v6352
  %v6354 = vpop.f32.mrb[0].mxu0
  %v6355 = vpop.f32.mrb[0].mxu0
  %v6356 = vadd.f32 0.0, %v6355
  %v6357 = vpop.f32.mrb[0].mxu0
  %6358 = vmatprep.mubr.bf16.mxu0 0
  %6359 = vmatmul.mubr.bf16.gmra.mrb[0].mxu0 %v6123
  %v6360 = vpop.f32.mrb[0].mxu0
  %v6361 = vadd.f32 0.0, %v6360
  %v6362 = vpop.f32.mrb[0].mxu0
  %v6363 = vpop.f32.mrb[0].mxu0
  %v6364 = vadd.f32 0.0, %v6363
  %v6365 = vpop.f32.mrb[0].mxu0
  %6366 = vmatprep.mubr.bf16.mxu0 0
  %6367 = vmatmul.mubr.bf16.gmra.mrb[0].mxu0 %v6126
  %v6368 = vpop.f32.mrb[0].mxu0
  %v6369 = vadd.f32 0.0, %v6368
  %v6370 = vpop.f32.mrb[0].mxu0
  %v6371 = vpop.f32.mrb[0].mxu0
  %v6372 = vadd.f32 0.0, %v6371
  %v6373 = vpop.f32.mrb[0].mxu0
  %6374 = vmatprep.mubr.bf16.mxu0 0
  %6375 = vmatmul.mubr.bf16.gmra.mrb[0].mxu0 %v6129
  %v6376 = vpop.f32.mrb[0].mxu0
  %v6377 = vadd.f32 0.0, %v6376
  %v6378 = vpop.f32.mrb[0].mxu0
  %v6379 = vpop.f32.mrb[0].mxu0
  %v6380 = vadd.f32 0.0, %v6379
  %v6381 = vpop.f32.mrb[0].mxu0
  %6382 = vmatprep.mubr.bf16.mxu0 0
  %6383 = vmatmul.mubr.bf16.gmra.mrb[0].mxu0 %v6132
  %v6384 = vpop.f32.mrb[0].mxu0
  %v6385 = vadd.f32 0.0, %v6384
  %v6386 = vpop.f32.mrb[0].mxu0
  %v6387 = vpop.f32.mrb[0].mxu0
  %v6388 = vadd.f32 0.0, %v6387
  %v6389 = vpop.f32.mrb[0].mxu0
  %6390 = vmatprep.mubr.bf16.mxu0 0
  %6391 = vmatmul.mubr.bf16.gmra.mrb[0].mxu0 %v6135
  %v6392 = vpop.f32.mrb[0].mxu0
  %v6393 = vadd.f32 0.0, %v6392
  %v6394 = vpop.f32.mrb[0].mxu0
  %v6395 = vpop.f32.mrb[0].mxu0
  %v6396 = vadd.f32 0.0, %v6395
  %v6397 = vpop.f32.mrb[0].mxu0
  %6398 = vmatprep.mubr.bf16.mxu0 0
  %6399 = vmatmul.mubr.bf16.gmra.mrb[0].mxu0 %v6138
  %v6400 = vpop.f32.mrb[0].mxu0
  %v6401 = vadd.f32 0.0, %v6400
  %v6402 = vpop.f32.mrb[0].mxu0
  %v6403 = vpop.f32.mrb[0].mxu0
  %v6404 = vadd.f32 0.0, %v6403
  %v6405 = vpop.f32.mrb[0].mxu0
  %6406 = vmatprep.mubr.bf16.mxu0 0
  %6407 = vmatmul.mubr.bf16.gmra.mrb[0].mxu0 %v6141
  %v6408 = vpop.f32.mrb[0].mxu0
  %v6409 = vadd.f32 0.0, %v6408
  %v6410 = vpop.f32.mrb[0].mxu0
  %v6411 = vpop.f32.mrb[0].mxu0
  %v6412 = vadd.f32 0.0, %v6411
  %v6413 = vpop.f32.mrb[0].mxu0
  %6414 = vmatprep.mubr.bf16.mxu0 0
  %6415 = vmatmul.mubr.bf16.gmra.mrb[0].mxu0 %v6144
  %v6416 = vpop.f32.mrb[0].mxu0
  %v6417 = vadd.f32 0.0, %v6416
  %v6418 = vpop.f32.mrb[0].mxu0
  %v6419 = vpop.f32.mrb[0].mxu0
  %v6420 = vadd.f32 0.0, %v6419
  %v6421 = vpop.f32.mrb[0].mxu0
  %6422 = vmatprep.mubr.bf16.mxu0 0
  %6423 = vmatmul.mubr.bf16.gmra.mrb[0].mxu0 %v6147
  %v6424 = vpop.f32.mrb[0].mxu0
  %v6425 = vadd.f32 0.0, %v6424
  %v6426 = vpop.f32.mrb[0].mxu0
  %v6427 = vpop.f32.mrb[0].mxu0
  %v6428 = vadd.f32 0.0, %v6427
  %v6429 = vpop.f32.mrb[0].mxu0
  %6430 = vmatprep.mubr.bf16.mxu0 0
  %6431 = vmatmul.mubr.bf16.gmra.mrb[0].mxu0 %v6150
  %v6432 = vpop.f32.mrb[0].mxu0
  %v6433 = vadd.f32 0.0, %v6432
  %v6434 = vpop.f32.mrb[0].mxu0
  %v6435 = vpop.f32.mrb[0].mxu0
  %v6436 = vadd.f32 0.0, %v6435
  %v6437 = vpop.f32.mrb[0].mxu0
  %6438 = vmatprep.mubr.bf16.mxu0 0
  %6439 = vmatmul.mubr.bf16.gmra.mrb[0].mxu0 %v6153
  %v6440 = vpop.f32.mrb[0].mxu0
  %v6441 = vadd.f32 0.0, %v6440
  %v6442 = vpop.f32.mrb[0].mxu0
  %v6443 = vpop.f32.mrb[0].mxu0
  %v6444 = vadd.f32 0.0, %v6443
  %v6445 = vpop.f32.mrb[0].mxu0
  %6446 = vdwg.mxu0
  %v6447 = vadd.f32 %v5768, %v6193
  %v6448 = vadd.f32 %v5769, %v6196
  %v6449 = vadd.f32 %v5770, %v6201
  %v6450 = vadd.f32 %v5771, %v6204
  %v6451 = vadd.f32 %v5772, %v6209
  %v6452 = vadd.f32 %v5773, %v6212
  %v6453 = vadd.f32 %v5774, %v6217
  %v6454 = vadd.f32 %v5775, %v6220
  %v6455 = vadd.f32 %v5776, %v6225
  %v6456 = vadd.f32 %v5777, %v6228
  %v6457 = vadd.f32 %v5778, %v6233
  %v6458 = vadd.f32 %v5779, %v6236
  %v6459 = vadd.f32 %v5780, %v6241
  %v6460 = vadd.f32 %v5781, %v6244
  %v6461 = vadd.f32 %v5782, %v6249
  %v6462 = vadd.f32 %v5783, %v6252
  %v6463 = vadd.f32 %v5784, %v6257
  %v6464 = vadd.f32 %v5785, %v6260
  %v6465 = vadd.f32 %v5786, %v6265
  %v6466 = vadd.f32 %v5787, %v6268
  %v6467 = vadd.f32 %v5788, %v6273
  %v6468 = vadd.f32 %v5789, %v6276
  %v6469 = vadd.f32 %v5790, %v6281
  %v6470 = vadd.f32 %v5791, %v6284
  %v6471 = vadd.f32 %v5792, %v6289
  %v6472 = vadd.f32 %v5793, %v6292
  %v6473 = vadd.f32 %v5794, %v6297
  %v6474 = vadd.f32 %v5795, %v6300
  %v6475 = vadd.f32 %v5796, %v6305
  %v6476 = vadd.f32 %v5797, %v6308
  %v6477 = vadd.f32 %v5798, %v6313
  %v6478 = vadd.f32 %v5799, %v6316
  %v6479 = vadd.f32 %v5800, %v6321
  %v6480 = vadd.f32 %v5801, %v6324
  %v6481 = vadd.f32 %v5802, %v6329
  %v6482 = vadd.f32 %v5803, %v6332
  %v6483 = vadd.f32 %v5804, %v6337
  %v6484 = vadd.f32 %v5805, %v6340
  %v6485 = vadd.f32 %v5806, %v6345
  %v6486 = vadd.f32 %v5807, %v6348
  %v6487 = vadd.f32 %v5808, %v6353
  %v6488 = vadd.f32 %v5809, %v6356
  %v6489 = vadd.f32 %v5810, %v6361
  %v6490 = vadd.f32 %v5811, %v6364
  %v6491 = vadd.f32 %v5812, %v6369
  %v6492 = vadd.f32 %v5813, %v6372
  %v6493 = vadd.f32 %v5814, %v6377
  %v6494 = vadd.f32 %v5815, %v6380
  %v6495 = vadd.f32 %v5816, %v6385
  %v6496 = vadd.f32 %v5817, %v6388
  %v6497 = vadd.f32 %v5818, %v6393
  %v6498 = vadd.f32 %v5819, %v6396
  %v6499 = vadd.f32 %v5820, %v6401
  %v6500 = vadd.f32 %v5821, %v6404
  %v6501 = vadd.f32 %v5822, %v6409
  %v6502 = vadd.f32 %v5823, %v6412
  %v6503 = vadd.f32 %v5824, %v6417
  %v6504 = vadd.f32 %v5825, %v6420
  %v6505 = vadd.f32 %v5826, %v6425
  %v6506 = vadd.f32 %v5827, %v6428
  %v6507 = vadd.f32 %v5828, %v6433
  %v6508 = vadd.f32 %v5829, %v6436
  %v6509 = vadd.f32 %v5830, %v6441
  %v6510 = vadd.f32 %v5831, %v6444
  %v6511 = vld [vmem:[%s5832] sm:$0xf]
  %v6512 = vld [vmem:[%s5832 + $0x4] sm:$0xf]
  %v6513 = vld [vmem:[%s5832 + $0x8] sm:$0x1]
  %v6514 = vld [vmem:[%s5832 + $0xc] sm:$0xf]
  %v6515 = vld [vmem:[%s5832 + $0x10] sm:$0xf]
  %v6516 = vld [vmem:[%s5832 + $0x14] sm:$0x1]
  %v6517 = vld [vmem:[%s5832 + $0x18] sm:$0xf]
  %v6518 = vld [vmem:[%s5832 + $0x1c] sm:$0xf]
  %v6519 = vld [vmem:[%s5832 + $0x20] sm:$0x1]
  %v6520 = vld [vmem:[%s5832 + $0x24] sm:$0xf]
  %v6521 = vld [vmem:[%s5832 + $0x28] sm:$0xf]
  %v6522 = vld [vmem:[%s5832 + $0x2c] sm:$0x1]
  %v6523 = vld [vmem:[%s5832 + $0x30] sm:$0xf]
  %v6524 = vld [vmem:[%s5832 + $0x34] sm:$0xf]
  %v6525 = vld [vmem:[%s5832 + $0x38] sm:$0x1]
  %v6526 = vld [vmem:[%s5832 + $0x3c] sm:$0xf]
  %v6527 = vld [vmem:[%s5832 + $0x40] sm:$0xf]
  %v6528 = vld [vmem:[%s5832 + $0x44] sm:$0x1]
  %v6529 = vld [vmem:[%s5832 + $0x48] sm:$0xf]
  %v6530 = vld [vmem:[%s5832 + $0x4c] sm:$0xf]
  %v6531 = vld [vmem:[%s5832 + $0x50] sm:$0x1]
  %v6532 = vld [vmem:[%s5832 + $0x54] sm:$0xf]
  %v6533 = vld [vmem:[%s5832 + $0x58] sm:$0xf]
  %v6534 = vld [vmem:[%s5832 + $0x5c] sm:$0x1]
  %v6535 = vld [vmem:[%s5832 + $0x60] sm:$0xf]
  %v6536 = vld [vmem:[%s5832 + $0x64] sm:$0xf]
  %v6537 = vld [vmem:[%s5832 + $0x68] sm:$0x1]
  %v6538 = vld [vmem:[%s5832 + $0x6c] sm:$0xf]
  %v6539 = vld [vmem:[%s5832 + $0x70] sm:$0xf]
  %v6540 = vld [vmem:[%s5832 + $0x74] sm:$0x1]
  %v6541 = vld [vmem:[%s5832 + $0x78] sm:$0xf]
  %v6542 = vld [vmem:[%s5832 + $0x7c] sm:$0xf]
  %v6543 = vld [vmem:[%s5832 + $0x80] sm:$0x1]
  %v6544 = vld [vmem:[%s5832 + $0x84] sm:$0xf]
  %v6545 = vld [vmem:[%s5832 + $0x88] sm:$0xf]
  %v6546 = vld [vmem:[%s5832 + $0x8c] sm:$0x1]
  %v6547 = vld [vmem:[%s5832 + $0x90] sm:$0xf]
  %v6548 = vld [vmem:[%s5832 + $0x94] sm:$0xf]
  %v6549 = vld [vmem:[%s5832 + $0x98] sm:$0x1]
  %v6550 = vld [vmem:[%s5832 + $0x9c] sm:$0xf]
  %v6551 = vld [vmem:[%s5832 + $0xa0] sm:$0xf]
  %v6552 = vld [vmem:[%s5832 + $0xa4] sm:$0x1]
  %v6553 = vld [vmem:[%s5832 + $0xa8] sm:$0xf]
  %v6554 = vld [vmem:[%s5832 + $0xac] sm:$0xf]
  %v6555 = vld [vmem:[%s5832 + $0xb0] sm:$0x1]
  %v6556 = vld [vmem:[%s5832 + $0xb4] sm:$0xf]
  %v6557 = vld [vmem:[%s5832 + $0xb8] sm:$0xf]
  %v6558 = vld [vmem:[%s5832 + $0xbc] sm:$0x1]
  %v6559 = vld [vmem:[%s5832 + $0xd8] sm:$0xf]
  %v6560 = vld [vmem:[%s5832 + $0xdc] sm:$0xf]
  %v6561 = vld [vmem:[%s5832 + $0xe0] sm:$0x1]
  %v6562 = vld [vmem:[%s5832 + $0xe4] sm:$0xf]
  %v6563 = vld [vmem:[%s5832 + $0xe8] sm:$0xf]
  %v6564 = vld [vmem:[%s5832 + $0xec] sm:$0x1]
  %v6565 = vld [vmem:[%s5832 + $0xf0] sm:$0xf]
  %v6566 = vld [vmem:[%s5832 + $0xf4] sm:$0xf]
  %v6567 = vld [vmem:[%s5832 + $0xf8] sm:$0x1]
  %v6568 = vld [vmem:[%s5832 + $0xfc] sm:$0xf]
  %v6569 = vld [vmem:[%s5832 + $0x100] sm:$0xf]
  %v6570 = vld [vmem:[%s5832 + $0x104] sm:$0x1]
  %v6571 = vld [vmem:[%s5832 + $0x108] sm:$0xf]
  %v6572 = vld [vmem:[%s5832 + $0x10c] sm:$0xf]
  %v6573 = vld [vmem:[%s5832 + $0x110] sm:$0x1]
  %v6574 = vld [vmem:[%s5832 + $0x114] sm:$0xf]
  %v6575 = vld [vmem:[%s5832 + $0x118] sm:$0xf]
  %v6576 = vld [vmem:[%s5832 + $0x11c] sm:$0x1]
  %v6577 = vld [vmem:[%s5832 + $0x120] sm:$0xf]
  %v6578 = vld [vmem:[%s5832 + $0x124] sm:$0xf]
  %v6579 = vld [vmem:[%s5832 + $0x128] sm:$0x1]
  %v6580 = vld [vmem:[%s5832 + $0x12c] sm:$0xf]
  %v6581 = vld [vmem:[%s5832 + $0x130] sm:$0xf]
  %v6582 = vld [vmem:[%s5832 + $0x134] sm:$0x1]
  %v6583 = vld [vmem:[%s5832 + $0x138] sm:$0xf]
  %v6584 = vld [vmem:[%s5832 + $0x13c] sm:$0xf]
  %v6585 = vld [vmem:[%s5832 + $0x140] sm:$0x1]
  %v6586 = vld [vmem:[%s5832 + $0x144] sm:$0xf]
  %v6587 = vld [vmem:[%s5832 + $0x148] sm:$0xf]
  %v6588 = vld [vmem:[%s5832 + $0x14c] sm:$0x1]
  %v6589 = vld [vmem:[%s5832 + $0x150] sm:$0xf]
  %v6590 = vld [vmem:[%s5832 + $0x154] sm:$0xf]
  %v6591 = vld [vmem:[%s5832 + $0x158] sm:$0x1]
  %v6592 = vld [vmem:[%s5832 + $0x15c] sm:$0xf]
  %v6593 = vld [vmem:[%s5832 + $0x160] sm:$0xf]
  %v6594 = vld [vmem:[%s5832 + $0x164] sm:$0x1]
  %v6595 = vld [vmem:[%s5832 + $0x168] sm:$0xf]
  %v6596 = vld [vmem:[%s5832 + $0x16c] sm:$0xf]
  %v6597 = vld [vmem:[%s5832 + $0x170] sm:$0x1]
  %v6598 = vld [vmem:[%s5832 + $0x174] sm:$0xf]
  %v6599 = vld [vmem:[%s5832 + $0x178] sm:$0xf]
  %v6600 = vld [vmem:[%s5832 + $0x17c] sm:$0x1]
  %v6601 = vld [vmem:[%s5832 + $0x180] sm:$0xf]
  %v6602 = vld [vmem:[%s5832 + $0x184] sm:$0xf]
  %v6603 = vld [vmem:[%s5832 + $0x188] sm:$0x1]
  %v6604 = vld [vmem:[%s5832 + $0x18c] sm:$0xf]
  %v6605 = vld [vmem:[%s5832 + $0x190] sm:$0xf]
  %v6606 = vld [vmem:[%s5832 + $0x194] sm:$0x1]
  %v6608 = vshrl.u32 %v6511, 16
  %v6610 = vrot.slane %v6608, 4
  %v6611 = vshll.u32 %v6511, 16
  %v6613 = vrot.slane %v6611, 5
  %v6614 = vor.u32 %v6610, %v6613
  %v6615 = vrot.slane %v6614, 4
  %v6617 = vshll.u32 %v6512, 16
  %v6619 = vrot.slane %v6617, 5
  %v6620 = vsel %vm159, %v6615, %v6619
  %v6621 = vshrl.u32 %v6512, 16
  %v6623 = vrot.slane %v6621, 4
  %v6624 = vor.u32 %v6623, %v6619
  %v6625 = vrot.slane %v6624, 4
  %v6627 = vshll.u32 %v6513, 16
  %v6629 = vrot.slane %v6627, 5
  %v6630 = vsel %vm159, %v6625, %v6629
  %v6632 = vshrl.u32 %v6514, 16
  %v6634 = vrot.slane %v6632, 4
  %v6635 = vshll.u32 %v6514, 16
  %v6637 = vrot.slane %v6635, 5
  %v6638 = vor.u32 %v6634, %v6637
  %v6639 = vrot.slane %v6638, 4
  %v6641 = vshll.u32 %v6515, 16
  %v6643 = vrot.slane %v6641, 5
  %v6644 = vsel %vm159, %v6639, %v6643
  %v6645 = vshrl.u32 %v6515, 16
  %v6647 = vrot.slane %v6645, 4
  %v6648 = vor.u32 %v6647, %v6643
  %v6649 = vrot.slane %v6648, 4
  %v6651 = vshll.u32 %v6516, 16
  %v6653 = vrot.slane %v6651, 5
  %v6654 = vsel %vm159, %v6649, %v6653
  %v6656 = vshrl.u32 %v6517, 16
  %v6658 = vrot.slane %v6656, 4
  %v6659 = vshll.u32 %v6517, 16
  %v6661 = vrot.slane %v6659, 5
  %v6662 = vor.u32 %v6658, %v6661
  %v6663 = vrot.slane %v6662, 4
  %v6665 = vshll.u32 %v6518, 16
  %v6667 = vrot.slane %v6665, 5
  %v6668 = vsel %vm159, %v6663, %v6667
  %v6669 = vshrl.u32 %v6518, 16
  %v6671 = vrot.slane %v6669, 4
  %v6672 = vor.u32 %v6671, %v6667
  %v6673 = vrot.slane %v6672, 4
  %v6675 = vshll.u32 %v6519, 16
  %v6677 = vrot.slane %v6675, 5
  %v6678 = vsel %vm159, %v6673, %v6677
  %v6680 = vshrl.u32 %v6520, 16
  %v6682 = vrot.slane %v6680, 4
  %v6683 = vshll.u32 %v6520, 16
  %v6685 = vrot.slane %v6683, 5
  %v6686 = vor.u32 %v6682, %v6685
  %v6687 = vrot.slane %v6686, 4
  %v6689 = vshll.u32 %v6521, 16
  %v6691 = vrot.slane %v6689, 5
  %v6692 = vsel %vm159, %v6687, %v6691
  %v6693 = vshrl.u32 %v6521, 16
  %v6695 = vrot.slane %v6693, 4
  %v6696 = vor.u32 %v6695, %v6691
  %v6697 = vrot.slane %v6696, 4
  %v6699 = vshll.u32 %v6522, 16
  %v6701 = vrot.slane %v6699, 5
  %v6702 = vsel %vm159, %v6697, %v6701
  %v6704 = vshrl.u32 %v6523, 16
  %v6706 = vrot.slane %v6704, 4
  %v6707 = vshll.u32 %v6523, 16
  %v6709 = vrot.slane %v6707, 5
  %v6710 = vor.u32 %v6706, %v6709
  %v6711 = vrot.slane %v6710, 4
  %v6713 = vshll.u32 %v6524, 16
  %v6715 = vrot.slane %v6713, 5
  %v6716 = vsel %vm159, %v6711, %v6715
  %v6717 = vshrl.u32 %v6524, 16
  %v6719 = vrot.slane %v6717, 4
  %v6720 = vor.u32 %v6719, %v6715
  %v6721 = vrot.slane %v6720, 4
  %v6723 = vshll.u32 %v6525, 16
  %v6725 = vrot.slane %v6723, 5
  %v6726 = vsel %vm159, %v6721, %v6725
  %v6728 = vshrl.u32 %v6526, 16
  %v6730 = vrot.slane %v6728, 4
  %v6731 = vshll.u32 %v6526, 16
  %v6733 = vrot.slane %v6731, 5
  %v6734 = vor.u32 %v6730, %v6733
  %v6735 = vrot.slane %v6734, 4
  %v6737 = vshll.u32 %v6527, 16
  %v6739 = vrot.slane %v6737, 5
  %v6740 = vsel %vm159, %v6735, %v6739
  %v6741 = vshrl.u32 %v6527, 16
  %v6743 = vrot.slane %v6741, 4
  %v6744 = vor.u32 %v6743, %v6739
  %v6745 = vrot.slane %v6744, 4
  %v6747 = vshll.u32 %v6528, 16
  %v6749 = vrot.slane %v6747, 5
  %v6750 = vsel %vm159, %v6745, %v6749
  %v6752 = vshrl.u32 %v6529, 16
  %v6754 = vrot.slane %v6752, 4
  %v6755 = vshll.u32 %v6529, 16
  %v6757 = vrot.slane %v6755, 5
  %v6758 = vor.u32 %v6754, %v6757
  %v6759 = vrot.slane %v6758, 4
  %v6761 = vshll.u32 %v6530, 16
  %v6763 = vrot.slane %v6761, 5
  %v6764 = vsel %vm159, %v6759, %v6763
  %v6765 = vshrl.u32 %v6530, 16
  %v6767 = vrot.slane %v6765, 4
  %v6768 = vor.u32 %v6767, %v6763
  %v6769 = vrot.slane %v6768, 4
  %v6771 = vshll.u32 %v6531, 16
  %v6773 = vrot.slane %v6771, 5
  %v6774 = vsel %vm159, %v6769, %v6773
  %v6776 = vshrl.u32 %v6532, 16
  %v6778 = vrot.slane %v6776, 4
  %v6779 = vshll.u32 %v6532, 16
  %v6781 = vrot.slane %v6779, 5
  %v6782 = vor.u32 %v6778, %v6781
  %v6783 = vrot.slane %v6782, 4
  %v6785 = vshll.u32 %v6533, 16
  %v6787 = vrot.slane %v6785, 5
  %v6788 = vsel %vm159, %v6783, %v6787
  %v6789 = vshrl.u32 %v6533, 16
  %v6791 = vrot.slane %v6789, 4
  %v6792 = vor.u32 %v6791, %v6787
  %v6793 = vrot.slane %v6792, 4
  %v6795 = vshll.u32 %v6534, 16
  %v6797 = vrot.slane %v6795, 5
  %v6798 = vsel %vm159, %v6793, %v6797
  %v6800 = vshrl.u32 %v6535, 16
  %v6802 = vrot.slane %v6800, 4
  %v6803 = vshll.u32 %v6535, 16
  %v6805 = vrot.slane %v6803, 5
  %v6806 = vor.u32 %v6802, %v6805
  %v6807 = vrot.slane %v6806, 4
  %v6809 = vshll.u32 %v6536, 16
  %v6811 = vrot.slane %v6809, 5
  %v6812 = vsel %vm159, %v6807, %v6811
  %v6813 = vshrl.u32 %v6536, 16
  %v6815 = vrot.slane %v6813, 4
  %v6816 = vor.u32 %v6815, %v6811
  %v6817 = vrot.slane %v6816, 4
  %v6819 = vshll.u32 %v6537, 16
  %v6821 = vrot.slane %v6819, 5
  %v6822 = vsel %vm159, %v6817, %v6821
  %v6824 = vshrl.u32 %v6538, 16
  %v6826 = vrot.slane %v6824, 4
  %v6827 = vshll.u32 %v6538, 16
  %v6829 = vrot.slane %v6827, 5
  %v6830 = vor.u32 %v6826, %v6829
  %v6831 = vrot.slane %v6830, 4
  %v6833 = vshll.u32 %v6539, 16
  %v6835 = vrot.slane %v6833, 5
  %v6836 = vsel %vm159, %v6831, %v6835
  %v6837 = vshrl.u32 %v6539, 16
  %v6839 = vrot.slane %v6837, 4
  %v6840 = vor.u32 %v6839, %v6835
  %v6841 = vrot.slane %v6840, 4
  %v6843 = vshll.u32 %v6540, 16
  %v6845 = vrot.slane %v6843, 5
  %v6846 = vsel %vm159, %v6841, %v6845
  %v6848 = vshrl.u32 %v6541, 16
  %v6850 = vrot.slane %v6848, 4
  %v6851 = vshll.u32 %v6541, 16
  %v6853 = vrot.slane %v6851, 5
  %v6854 = vor.u32 %v6850, %v6853
  %v6855 = vrot.slane %v6854, 4
  %v6857 = vshll.u32 %v6542, 16
  %v6859 = vrot.slane %v6857, 5
  %v6860 = vsel %vm159, %v6855, %v6859
  %v6861 = vshrl.u32 %v6542, 16
  %v6863 = vrot.slane %v6861, 4
  %v6864 = vor.u32 %v6863, %v6859
  %v6865 = vrot.slane %v6864, 4
  %v6867 = vshll.u32 %v6543, 16
  %v6869 = vrot.slane %v6867, 5
  %v6870 = vsel %vm159, %v6865, %v6869
  %v6872 = vshrl.u32 %v6544, 16
  %v6874 = vrot.slane %v6872, 4
  %v6875 = vshll.u32 %v6544, 16
  %v6877 = vrot.slane %v6875, 5
  %v6878 = vor.u32 %v6874, %v6877
  %v6879 = vrot.slane %v6878, 4
  %v6881 = vshll.u32 %v6545, 16
  %v6883 = vrot.slane %v6881, 5
  %v6884 = vsel %vm159, %v6879, %v6883
  %v6885 = vshrl.u32 %v6545, 16
  %v6887 = vrot.slane %v6885, 4
  %v6888 = vor.u32 %v6887, %v6883
  %v6889 = vrot.slane %v6888, 4
  %v6891 = vshll.u32 %v6546, 16
  %v6893 = vrot.slane %v6891, 5
  %v6894 = vsel %vm159, %v6889, %v6893
  %v6896 = vshrl.u32 %v6547, 16
  %v6898 = vrot.slane %v6896, 4
  %v6899 = vshll.u32 %v6547, 16
  %v6901 = vrot.slane %v6899, 5
  %v6902 = vor.u32 %v6898, %v6901
  %v6903 = vrot.slane %v6902, 4
  %v6905 = vshll.u32 %v6548, 16
  %v6907 = vrot.slane %v6905, 5
  %v6908 = vsel %vm159, %v6903, %v6907
  %v6909 = vshrl.u32 %v6548, 16
  %v6911 = vrot.slane %v6909, 4
  %v6912 = vor.u32 %v6911, %v6907
  %v6913 = vrot.slane %v6912, 4
  %v6915 = vshll.u32 %v6549, 16
  %v6917 = vrot.slane %v6915, 5
  %v6918 = vsel %vm159, %v6913, %v6917
  %v6920 = vshrl.u32 %v6550, 16
  %v6922 = vrot.slane %v6920, 4
  %v6923 = vshll.u32 %v6550, 16
  %v6925 = vrot.slane %v6923, 5
  %v6926 = vor.u32 %v6922, %v6925
  %v6927 = vrot.slane %v6926, 4
  %v6929 = vshll.u32 %v6551, 16
  %v6931 = vrot.slane %v6929, 5
  %v6932 = vsel %vm159, %v6927, %v6931
  %v6933 = vshrl.u32 %v6551, 16
  %v6935 = vrot.slane %v6933, 4
  %v6936 = vor.u32 %v6935, %v6931
  %v6937 = vrot.slane %v6936, 4
  %v6939 = vshll.u32 %v6552, 16
  %v6941 = vrot.slane %v6939, 5
  %v6942 = vsel %vm159, %v6937, %v6941
  %v6944 = vshrl.u32 %v6553, 16
  %v6946 = vrot.slane %v6944, 4
  %v6947 = vshll.u32 %v6553, 16
  %v6949 = vrot.slane %v6947, 5
  %v6950 = vor.u32 %v6946, %v6949
  %v6951 = vrot.slane %v6950, 4
  %v6953 = vshll.u32 %v6554, 16
  %v6955 = vrot.slane %v6953, 5
  %v6956 = vsel %vm159, %v6951, %v6955
  %v6957 = vshrl.u32 %v6554, 16
  %v6959 = vrot.slane %v6957, 4
  %v6960 = vor.u32 %v6959, %v6955
  %v6961 = vrot.slane %v6960, 4
  %v6963 = vshll.u32 %v6555, 16
  %v6965 = vrot.slane %v6963, 5
  %v6966 = vsel %vm159, %v6961, %v6965
  %v6968 = vshrl.u32 %v6556, 16
  %v6970 = vrot.slane %v6968, 4
  %v6971 = vshll.u32 %v6556, 16
  %v6973 = vrot.slane %v6971, 5
  %v6974 = vor.u32 %v6970, %v6973
  %v6975 = vrot.slane %v6974, 4
  %v6977 = vshll.u32 %v6557, 16
  %v6979 = vrot.slane %v6977, 5
  %v6980 = vsel %vm159, %v6975, %v6979
  %v6981 = vshrl.u32 %v6557, 16
  %v6983 = vrot.slane %v6981, 4
  %v6984 = vor.u32 %v6983, %v6979
  %v6985 = vrot.slane %v6984, 4
  %v6987 = vshll.u32 %v6558, 16
  %v6989 = vrot.slane %v6987, 5
  %v6990 = vsel %vm159, %v6985, %v6989
  %v6992 = vshrl.u32 %v6559, 16
  %v6994 = vrot.slane %v6992, 4
  %v6995 = vshll.u32 %v6559, 16
  %v6997 = vrot.slane %v6995, 5
  %v6998 = vor.u32 %v6994, %v6997
  %v6999 = vrot.slane %v6998, 4
  %v7001 = vshll.u32 %v6560, 16
  %v7003 = vrot.slane %v7001, 5
  %v7004 = vsel %vm159, %v6999, %v7003
  %v7005 = vshrl.u32 %v6560, 16
  %v7007 = vrot.slane %v7005, 4
  %v7008 = vor.u32 %v7007, %v7003
  %v7009 = vrot.slane %v7008, 4
  %v7011 = vshll.u32 %v6561, 16
  %v7013 = vrot.slane %v7011, 5
  %v7014 = vsel %vm159, %v7009, %v7013
  %v7016 = vshrl.u32 %v6562, 16
  %v7018 = vrot.slane %v7016, 4
  %v7019 = vshll.u32 %v6562, 16
  %v7021 = vrot.slane %v7019, 5
  %v7022 = vor.u32 %v7018, %v7021
  %v7023 = vrot.slane %v7022, 4
  %v7025 = vshll.u32 %v6563, 16
  %v7027 = vrot.slane %v7025, 5
  %v7028 = vsel %vm159, %v7023, %v7027
  %v7029 = vshrl.u32 %v6563, 16
  %v7031 = vrot.slane %v7029, 4
  %v7032 = vor.u32 %v7031, %v7027
  %v7033 = vrot.slane %v7032, 4
  %v7035 = vshll.u32 %v6564, 16
  %v7037 = vrot.slane %v7035, 5
  %v7038 = vsel %vm159, %v7033, %v7037
  %v7040 = vshrl.u32 %v6565, 16
  %v7042 = vrot.slane %v7040, 4
  %v7043 = vshll.u32 %v6565, 16
  %v7045 = vrot.slane %v7043, 5
  %v7046 = vor.u32 %v7042, %v7045
  %v7047 = vrot.slane %v7046, 4
  %v7049 = vshll.u32 %v6566, 16
  %v7051 = vrot.slane %v7049, 5
  %v7052 = vsel %vm159, %v7047, %v7051
  %v7053 = vshrl.u32 %v6566, 16
  %v7055 = vrot.slane %v7053, 4
  %v7056 = vor.u32 %v7055, %v7051
  %v7057 = vrot.slane %v7056, 4
  %v7059 = vshll.u32 %v6567, 16
  %v7061 = vrot.slane %v7059, 5
  %v7062 = vsel %vm159, %v7057, %v7061
  %v7064 = vshrl.u32 %v6568, 16
  %v7066 = vrot.slane %v7064, 4
  %v7067 = vshll.u32 %v6568, 16
  %v7069 = vrot.slane %v7067, 5
  %v7070 = vor.u32 %v7066, %v7069
  %v7071 = vrot.slane %v7070, 4
  %v7073 = vshll.u32 %v6569, 16
  %v7075 = vrot.slane %v7073, 5
  %v7076 = vsel %vm159, %v7071, %v7075
  %v7077 = vshrl.u32 %v6569, 16
  %v7079 = vrot.slane %v7077, 4
  %v7080 = vor.u32 %v7079, %v7075
  %v7081 = vrot.slane %v7080, 4
  %v7083 = vshll.u32 %v6570, 16
  %v7085 = vrot.slane %v7083, 5
  %v7086 = vsel %vm159, %v7081, %v7085
  %v7088 = vshrl.u32 %v6571, 16
  %v7090 = vrot.slane %v7088, 4
  %v7091 = vshll.u32 %v6571, 16
  %v7093 = vrot.slane %v7091, 5
  %v7094 = vor.u32 %v7090, %v7093
  %v7095 = vrot.slane %v7094, 4
  %v7097 = vshll.u32 %v6572, 16
  %v7099 = vrot.slane %v7097, 5
  %v7100 = vsel %vm159, %v7095, %v7099
  %v7101 = vshrl.u32 %v6572, 16
  %v7103 = vrot.slane %v7101, 4
  %v7104 = vor.u32 %v7103, %v7099
  %v7105 = vrot.slane %v7104, 4
  %v7107 = vshll.u32 %v6573, 16
  %v7109 = vrot.slane %v7107, 5
  %v7110 = vsel %vm159, %v7105, %v7109
  %v7112 = vshrl.u32 %v6574, 16
  %v7114 = vrot.slane %v7112, 4
  %v7115 = vshll.u32 %v6574, 16
  %v7117 = vrot.slane %v7115, 5
  %v7118 = vor.u32 %v7114, %v7117
  %v7119 = vrot.slane %v7118, 4
  %v7121 = vshll.u32 %v6575, 16
  %v7123 = vrot.slane %v7121, 5
  %v7124 = vsel %vm159, %v7119, %v7123
  %v7125 = vshrl.u32 %v6575, 16
  %v7127 = vrot.slane %v7125, 4
  %v7128 = vor.u32 %v7127, %v7123
  %v7129 = vrot.slane %v7128, 4
  %v7131 = vshll.u32 %v6576, 16
  %v7133 = vrot.slane %v7131, 5
  %v7134 = vsel %vm159, %v7129, %v7133
  %v7136 = vshrl.u32 %v6577, 16
  %v7138 = vrot.slane %v7136, 4
  %v7139 = vshll.u32 %v6577, 16
  %v7141 = vrot.slane %v7139, 5
  %v7142 = vor.u32 %v7138, %v7141
  %v7143 = vrot.slane %v7142, 4
  %v7145 = vshll.u32 %v6578, 16
  %v7147 = vrot.slane %v7145, 5
  %v7148 = vsel %vm159, %v7143, %v7147
  %v7149 = vshrl.u32 %v6578, 16
  %v7151 = vrot.slane %v7149, 4
  %v7152 = vor.u32 %v7151, %v7147
  %v7153 = vrot.slane %v7152, 4
  %v7155 = vshll.u32 %v6579, 16
  %v7157 = vrot.slane %v7155, 5
  %v7158 = vsel %vm159, %v7153, %v7157
  %v7160 = vshrl.u32 %v6580, 16
  %v7162 = vrot.slane %v7160, 4
  %v7163 = vshll.u32 %v6580, 16
  %v7165 = vrot.slane %v7163, 5
  %v7166 = vor.u32 %v7162, %v7165
  %v7167 = vrot.slane %v7166, 4
  %v7169 = vshll.u32 %v6581, 16
  %v7171 = vrot.slane %v7169, 5
  %v7172 = vsel %vm159, %v7167, %v7171
  %v7173 = vshrl.u32 %v6581, 16
  %v7175 = vrot.slane %v7173, 4
  %v7176 = vor.u32 %v7175, %v7171
  %v7177 = vrot.slane %v7176, 4
  %v7179 = vshll.u32 %v6582, 16
  %v7181 = vrot.slane %v7179, 5
  %v7182 = vsel %vm159, %v7177, %v7181
  %v7184 = vshrl.u32 %v6583, 16
  %v7186 = vrot.slane %v7184, 4
  %v7187 = vshll.u32 %v6583, 16
  %v7189 = vrot.slane %v7187, 5
  %v7190 = vor.u32 %v7186, %v7189
  %v7191 = vrot.slane %v7190, 4
  %v7193 = vshll.u32 %v6584, 16
  %v7195 = vrot.slane %v7193, 5
  %v7196 = vsel %vm159, %v7191, %v7195
  %v7197 = vshrl.u32 %v6584, 16
  %v7199 = vrot.slane %v7197, 4
  %v7200 = vor.u32 %v7199, %v7195
  %v7201 = vrot.slane %v7200, 4
  %v7203 = vshll.u32 %v6585, 16
  %v7205 = vrot.slane %v7203, 5
  %v7206 = vsel %vm159, %v7201, %v7205
  %v7208 = vshrl.u32 %v6586, 16
  %v7210 = vrot.slane %v7208, 4
  %v7211 = vshll.u32 %v6586, 16
  %v7213 = vrot.slane %v7211, 5
  %v7214 = vor.u32 %v7210, %v7213
  %v7215 = vrot.slane %v7214, 4
  %v7217 = vshll.u32 %v6587, 16
  %v7219 = vrot.slane %v7217, 5
  %v7220 = vsel %vm159, %v7215, %v7219
  %v7221 = vshrl.u32 %v6587, 16
  %v7223 = vrot.slane %v7221, 4
  %v7224 = vor.u32 %v7223, %v7219
  %v7225 = vrot.slane %v7224, 4
  %v7227 = vshll.u32 %v6588, 16
  %v7229 = vrot.slane %v7227, 5
  %v7230 = vsel %vm159, %v7225, %v7229
  %v7232 = vshrl.u32 %v6589, 16
  %v7234 = vrot.slane %v7232, 4
  %v7235 = vshll.u32 %v6589, 16
  %v7237 = vrot.slane %v7235, 5
  %v7238 = vor.u32 %v7234, %v7237
  %v7239 = vrot.slane %v7238, 4
  %v7241 = vshll.u32 %v6590, 16
  %v7243 = vrot.slane %v7241, 5
  %v7244 = vsel %vm159, %v7239, %v7243
  %v7245 = vshrl.u32 %v6590, 16
  %v7247 = vrot.slane %v7245, 4
  %v7248 = vor.u32 %v7247, %v7243
  %v7249 = vrot.slane %v7248, 4
  %v7251 = vshll.u32 %v6591, 16
  %v7253 = vrot.slane %v7251, 5
  %v7254 = vsel %vm159, %v7249, %v7253
  %v7256 = vshrl.u32 %v6592, 16
  %v7258 = vrot.slane %v7256, 4
  %v7259 = vshll.u32 %v6592, 16
  %v7261 = vrot.slane %v7259, 5
  %v7262 = vor.u32 %v7258, %v7261
  %v7263 = vrot.slane %v7262, 4
  %v7265 = vshll.u32 %v6593, 16
  %v7267 = vrot.slane %v7265, 5
  %v7268 = vsel %vm159, %v7263, %v7267
  %v7269 = vshrl.u32 %v6593, 16
  %v7271 = vrot.slane %v7269, 4
  %v7272 = vor.u32 %v7271, %v7267
  %v7273 = vrot.slane %v7272, 4
  %v7275 = vshll.u32 %v6594, 16
  %v7277 = vrot.slane %v7275, 5
  %v7278 = vsel %vm159, %v7273, %v7277
  %v7280 = vshrl.u32 %v6595, 16
  %v7282 = vrot.slane %v7280, 4
  %v7283 = vshll.u32 %v6595, 16
  %v7285 = vrot.slane %v7283, 5
  %v7286 = vor.u32 %v7282, %v7285
  %v7287 = vrot.slane %v7286, 4
  %v7289 = vshll.u32 %v6596, 16
  %v7291 = vrot.slane %v7289, 5
  %v7292 = vsel %vm159, %v7287, %v7291
  %v7293 = vshrl.u32 %v6596, 16
  %v7295 = vrot.slane %v7293, 4
  %v7296 = vor.u32 %v7295, %v7291
  %v7297 = vrot.slane %v7296, 4
  %v7299 = vshll.u32 %v6597, 16
  %v7301 = vrot.slane %v7299, 5
  %v7302 = vsel %vm159, %v7297, %v7301
  %v7304 = vshrl.u32 %v6598, 16
  %v7306 = vrot.slane %v7304, 4
  %v7307 = vshll.u32 %v6598, 16
  %v7309 = vrot.slane %v7307, 5
  %v7310 = vor.u32 %v7306, %v7309
  %v7311 = vrot.slane %v7310, 4
  %v7313 = vshll.u32 %v6599, 16
  %v7315 = vrot.slane %v7313, 5
  %v7316 = vsel %vm159, %v7311, %v7315
  %v7317 = vshrl.u32 %v6599, 16
  %v7319 = vrot.slane %v7317, 4
  %v7320 = vor.u32 %v7319, %v7315
  %v7321 = vrot.slane %v7320, 4
  %v7323 = vshll.u32 %v6600, 16
  %v7325 = vrot.slane %v7323, 5
  %v7326 = vsel %vm159, %v7321, %v7325
  %v7328 = vshrl.u32 %v6601, 16
  %v7330 = vrot.slane %v7328, 4
  %v7331 = vshll.u32 %v6601, 16
  %v7333 = vrot.slane %v7331, 5
  %v7334 = vor.u32 %v7330, %v7333
  %v7335 = vrot.slane %v7334, 4
  %v7337 = vshll.u32 %v6602, 16
  %v7339 = vrot.slane %v7337, 5
  %v7340 = vsel %vm159, %v7335, %v7339
  %v7341 = vshrl.u32 %v6602, 16
  %v7343 = vrot.slane %v7341, 4
  %v7344 = vor.u32 %v7343, %v7339
  %v7345 = vrot.slane %v7344, 4
  %v7347 = vshll.u32 %v6603, 16
  %v7349 = vrot.slane %v7347, 5
  %v7350 = vsel %vm159, %v7345, %v7349
  %v7352 = vshrl.u32 %v6604, 16
  %v7354 = vrot.slane %v7352, 4
  %v7355 = vshll.u32 %v6604, 16
  %v7357 = vrot.slane %v7355, 5
  %v7358 = vor.u32 %v7354, %v7357
  %v7359 = vrot.slane %v7358, 4
  %v7361 = vshll.u32 %v6605, 16
  %v7363 = vrot.slane %v7361, 5
  %v7364 = vsel %vm159, %v7359, %v7363
  %v7365 = vshrl.u32 %v6605, 16
  %v7367 = vrot.slane %v7365, 4
  %v7368 = vor.u32 %v7367, %v7363
  %v7369 = vrot.slane %v7368, 4
  %v7371 = vshll.u32 %v6606, 16
  %v7373 = vrot.slane %v7371, 5
  %v7374 = vsel %vm159, %v7369, %v7373
  %s7375 = scalar_lea.vmem %s1, 14
  %v7376 = vld [vmem:[%s7375] sm:$0x3]
  %v7377 = vunpack.c.l.b16 %v6620
  %v7378 = vunpack.c.l.b16 %v6630
  %v7379 = vunpack.c.l.b16 %v6644
  %v7380 = vunpack.c.l.b16 %v6654
  %v7381 = vunpack.c.l.b16 %v6668
  %v7382 = vunpack.c.l.b16 %v6678
  %v7383 = vunpack.c.l.b16 %v6692
  %v7384 = vunpack.c.l.b16 %v6702
  %v7385 = vunpack.c.l.b16 %v6716
  %v7386 = vunpack.c.l.b16 %v6726
  %v7387 = vunpack.c.l.b16 %v6740
  %v7388 = vunpack.c.l.b16 %v6750
  %v7389 = vunpack.c.l.b16 %v6764
  %v7390 = vunpack.c.l.b16 %v6774
  %v7391 = vunpack.c.l.b16 %v6788
  %v7392 = vunpack.c.l.b16 %v6798
  %v7393 = vunpack.c.l.b16 %v6812
  %v7394 = vunpack.c.l.b16 %v6822
  %v7395 = vunpack.c.l.b16 %v6836
  %v7396 = vunpack.c.l.b16 %v6846
  %v7397 = vunpack.c.l.b16 %v6860
  %v7398 = vunpack.c.l.b16 %v6870
  %v7399 = vunpack.c.l.b16 %v6884
  %v7400 = vunpack.c.l.b16 %v6894
  %v7401 = vunpack.c.l.b16 %v6908
  %v7402 = vunpack.c.l.b16 %v6918
  %v7403 = vunpack.c.l.b16 %v6932
  %v7404 = vunpack.c.l.b16 %v6942
  %v7405 = vunpack.c.l.b16 %v6956
  %v7406 = vunpack.c.l.b16 %v6966
  %v7407 = vunpack.c.l.b16 %v6980
  %v7408 = vunpack.c.l.b16 %v6990
  %v7409 = vunpack.c.l.b16 %v7004
  %v7410 = vunpack.c.l.b16 %v7014
  %v7411 = vunpack.c.l.b16 %v7028
  %v7412 = vunpack.c.l.b16 %v7038
  %v7413 = vunpack.c.l.b16 %v7052
  %v7414 = vunpack.c.l.b16 %v7062
  %v7415 = vunpack.c.l.b16 %v7076
  %v7416 = vunpack.c.l.b16 %v7086
  %v7417 = vunpack.c.l.b16 %v7100
  %v7418 = vunpack.c.l.b16 %v7110
  %v7419 = vunpack.c.l.b16 %v7124
  %v7420 = vunpack.c.l.b16 %v7134
  %v7421 = vunpack.c.l.b16 %v7148
  %v7422 = vunpack.c.l.b16 %v7158
  %v7423 = vunpack.c.l.b16 %v7172
  %v7424 = vunpack.c.l.b16 %v7182
  %v7425 = vunpack.c.l.b16 %v7196
  %v7426 = vunpack.c.l.b16 %v7206
  %v7427 = vunpack.c.l.b16 %v7220
  %v7428 = vunpack.c.l.b16 %v7230
  %v7429 = vunpack.c.l.b16 %v7244
  %v7430 = vunpack.c.l.b16 %v7254
  %v7431 = vunpack.c.l.b16 %v7268
  %v7432 = vunpack.c.l.b16 %v7278
  %v7433 = vunpack.c.l.b16 %v7292
  %v7434 = vunpack.c.l.b16 %v7302
  %v7435 = vunpack.c.l.b16 %v7316
  %v7436 = vunpack.c.l.b16 %v7326
  %v7437 = vunpack.c.l.b16 %v7340
  %v7438 = vunpack.c.l.b16 %v7350
  %v7439 = vunpack.c.l.b16 %v7364
  %v7440 = vunpack.c.l.b16 %v7374
  %v7441 = vpack.c.b16 %v7378, %v7377
  %v7442 = vpack.c.b16 %v7380, %v7379
  %v7443 = vpack.c.b16 %v7382, %v7381
  %v7444 = vpack.c.b16 %v7384, %v7383
  %v7445 = vpack.c.b16 %v7386, %v7385
  %v7446 = vpack.c.b16 %v7388, %v7387
  %v7447 = vpack.c.b16 %v7390, %v7389
  %v7448 = vpack.c.b16 %v7392, %v7391
  %v7449 = vpack.c.b16 %v7394, %v7393
  %v7450 = vpack.c.b16 %v7396, %v7395
  %v7451 = vpack.c.b16 %v7398, %v7397
  %v7452 = vpack.c.b16 %v7400, %v7399
  %v7453 = vpack.c.b16 %v7402, %v7401
  %v7454 = vpack.c.b16 %v7404, %v7403
  %v7455 = vpack.c.b16 %v7406, %v7405
  %v7456 = vpack.c.b16 %v7408, %v7407
  %v7457 = vpack.c.b16 %v7410, %v7409
  %v7458 = vpack.c.b16 %v7412, %v7411
  %v7459 = vpack.c.b16 %v7414, %v7413
  %v7460 = vpack.c.b16 %v7416, %v7415
  %v7461 = vpack.c.b16 %v7418, %v7417
  %v7462 = vpack.c.b16 %v7420, %v7419
  %v7463 = vpack.c.b16 %v7422, %v7421
  %v7464 = vpack.c.b16 %v7424, %v7423
  %v7465 = vpack.c.b16 %v7426, %v7425
  %v7466 = vpack.c.b16 %v7428, %v7427
  %v7467 = vpack.c.b16 %v7430, %v7429
  %v7468 = vpack.c.b16 %v7432, %v7431
  %v7469 = vpack.c.b16 %v7434, %v7433
  %v7470 = vpack.c.b16 %v7436, %v7435
  %v7471 = vpack.c.b16 %v7438, %v7437
  %v7472 = vpack.c.b16 %v7440, %v7439
  %v7474 = vsel %vm1026, %v7441, 0
  %v7477 = vsel %vm1026, %v7442, 0
  %v7480 = vsel %vm1026, %v7443, 0
  %v7483 = vsel %vm1026, %v7444, 0
  %v7486 = vsel %vm1026, %v7445, 0
  %v7489 = vsel %vm1026, %v7446, 0
  %v7492 = vsel %vm1026, %v7447, 0
  %v7495 = vsel %vm1026, %v7448, 0
  %v7498 = vsel %vm1026, %v7449, 0
  %v7501 = vsel %vm1026, %v7450, 0
  %v7504 = vsel %vm1026, %v7451, 0
  %v7507 = vsel %vm1026, %v7452, 0
  %v7510 = vsel %vm1026, %v7453, 0
  %v7513 = vsel %vm1026, %v7454, 0
  %v7516 = vsel %vm1026, %v7455, 0
  %v7519 = vsel %vm1026, %v7456, 0
  %v7522 = vsel %vm1026, %v7457, 0
  %v7525 = vsel %vm1026, %v7458, 0
  %v7528 = vsel %vm1026, %v7459, 0
  %v7531 = vsel %vm1026, %v7460, 0
  %v7534 = vsel %vm1026, %v7461, 0
  %v7537 = vsel %vm1026, %v7462, 0
  %v7540 = vsel %vm1026, %v7463, 0
  %v7543 = vsel %vm1026, %v7464, 0
  %v7546 = vsel %vm1026, %v7465, 0
  %v7549 = vsel %vm1026, %v7466, 0
  %v7552 = vsel %vm1026, %v7467, 0
  %v7555 = vsel %vm1026, %v7468, 0
  %v7558 = vsel %vm1026, %v7469, 0
  %v7561 = vsel %vm1026, %v7470, 0
  %v7564 = vsel %vm1026, %v7471, 0
  %v7567 = vsel %vm1026, %v7472, 0
  %v7570 = vsel %vm1123, %v7376, 0
  %7572 = vmatprep.subr.bf16.mxu0 0
  %7573 = vmatpush1.bf16.msra.mxu0 %v7570
  %7574 = vmatprep.subr.bf16.mxu0 0
  %7575 = vmatpush1.bf16.msra.mxu0 0
  %7576 = vmatprep.subr.bf16.mxu0 0
  %7577 = vmatpush1.bf16.msra.mxu0 0
  %7578 = vmatprep.subr.bf16.mxu0 0
  %7579 = vmatpush1.bf16.msra.mxu0 0
  %7580 = vmatprep.subr.bf16.mxu0 0
  %7581 = vmatpush1.bf16.msra.mxu0 0
  %7582 = vmatprep.subr.bf16.mxu0 0
  %7583 = vmatpush1.bf16.msra.mxu0 0
  %7584 = vmatprep.subr.bf16.mxu0 0
  %7585 = vmatpush1.bf16.msra.mxu0 0
  %7586 = vmatprep.subr.bf16.mxu0 0
  %7587 = vmatpush1.bf16.msra.mxu0 0
  %7588 = vmatprep.subr.bf16.mxu0 0
  %7589 = vmatpush1.bf16.msra.mxu0 0
  %7590 = vmatprep.subr.bf16.mxu0 0
  %7591 = vmatpush1.bf16.msra.mxu0 0
  %7592 = vmatprep.subr.bf16.mxu0 0
  %7593 = vmatpush1.bf16.msra.mxu0 0
  %7594 = vmatprep.subr.bf16.mxu0 0
  %7595 = vmatpush1.bf16.msra.mxu0 0
  %7596 = vmatprep.subr.bf16.mxu0 0
  %7597 = vmatpush1.bf16.msra.mxu0 0
  %7598 = vmatprep.subr.bf16.mxu0 0
  %7599 = vmatpush1.bf16.msra.mxu0 0
  %7600 = vmatprep.subr.bf16.mxu0 0
  %7601 = vmatpush1.bf16.msra.mxu0 0
  %7602 = vmatprep.subr.bf16.mxu0 0
  %7603 = vmatpush1.bf16.msra.mxu0 0
  %7604 = vmatprep.mubr.bf16.mxu0 0
  %7605 = vmatmul.mubr.bf16.gmra.mrb[0].mxu0 %v7474
  %v7606 = vpop.f32.mrb[0].mxu0
  %v7607 = vadd.f32 0.0, %v7606
  %v7608 = vpop.f32.mrb[0].mxu0
  %v7609 = vpop.f32.mrb[0].mxu0
  %v7610 = vadd.f32 0.0, %v7609
  %v7611 = vpop.f32.mrb[0].mxu0
  %7612 = vmatprep.mubr.bf16.mxu0 0
  %7613 = vmatmul.mubr.bf16.gmra.mrb[0].mxu0 %v7477
  %v7614 = vpop.f32.mrb[0].mxu0
  %v7615 = vadd.f32 0.0, %v7614
  %v7616 = vpop.f32.mrb[0].mxu0
  %v7617 = vpop.f32.mrb[0].mxu0
  %v7618 = vadd.f32 0.0, %v7617
  %v7619 = vpop.f32.mrb[0].mxu0
  %7620 = vmatprep.mubr.bf16.mxu0 0
  %7621 = vmatmul.mubr.bf16.gmra.mrb[0].mxu0 %v7480
  %v7622 = vpop.f32.mrb[0].mxu0
  %v7623 = vadd.f32 0.0, %v7622
  %v7624 = vpop.f32.mrb[0].mxu0
  %v7625 = vpop.f32.mrb[0].mxu0
  %v7626 = vadd.f32 0.0, %v7625
  %v7627 = vpop.f32.mrb[0].mxu0
  %7628 = vmatprep.mubr.bf16.mxu0 0
  %7629 = vmatmul.mubr.bf16.gmra.mrb[0].mxu0 %v7483
  %v7630 = vpop.f32.mrb[0].mxu0
  %v7631 = vadd.f32 0.0, %v7630
  %v7632 = vpop.f32.mrb[0].mxu0
  %v7633 = vpop.f32.mrb[0].mxu0
  %v7634 = vadd.f32 0.0, %v7633
  %v7635 = vpop.f32.mrb[0].mxu0
  %7636 = vmatprep.mubr.bf16.mxu0 0
  %7637 = vmatmul.mubr.bf16.gmra.mrb[0].mxu0 %v7486
  %v7638 = vpop.f32.mrb[0].mxu0
  %v7639 = vadd.f32 0.0, %v7638
  %v7640 = vpop.f32.mrb[0].mxu0
  %v7641 = vpop.f32.mrb[0].mxu0
  %v7642 = vadd.f32 0.0, %v7641
  %v7643 = vpop.f32.mrb[0].mxu0
  %7644 = vmatprep.mubr.bf16.mxu0 0
  %7645 = vmatmul.mubr.bf16.gmra.mrb[0].mxu0 %v7489
  %v7646 = vpop.f32.mrb[0].mxu0
  %v7647 = vadd.f32 0.0, %v7646
  %v7648 = vpop.f32.mrb[0].mxu0
  %v7649 = vpop.f32.mrb[0].mxu0
  %v7650 = vadd.f32 0.0, %v7649
  %v7651 = vpop.f32.mrb[0].mxu0
  %7652 = vmatprep.mubr.bf16.mxu0 0
  %7653 = vmatmul.mubr.bf16.gmra.mrb[0].mxu0 %v7492
  %v7654 = vpop.f32.mrb[0].mxu0
  %v7655 = vadd.f32 0.0, %v7654
  %v7656 = vpop.f32.mrb[0].mxu0
  %v7657 = vpop.f32.mrb[0].mxu0
  %v7658 = vadd.f32 0.0, %v7657
  %v7659 = vpop.f32.mrb[0].mxu0
  %7660 = vmatprep.mubr.bf16.mxu0 0
  %7661 = vmatmul.mubr.bf16.gmra.mrb[0].mxu0 %v7495
  %v7662 = vpop.f32.mrb[0].mxu0
  %v7663 = vadd.f32 0.0, %v7662
  %v7664 = vpop.f32.mrb[0].mxu0
  %v7665 = vpop.f32.mrb[0].mxu0
  %v7666 = vadd.f32 0.0, %v7665
  %v7667 = vpop.f32.mrb[0].mxu0
  %7668 = vmatprep.mubr.bf16.mxu0 0
  %7669 = vmatmul.mubr.bf16.gmra.mrb[0].mxu0 %v7498
  %v7670 = vpop.f32.mrb[0].mxu0
  %v7671 = vadd.f32 0.0, %v7670
  %v7672 = vpop.f32.mrb[0].mxu0
  %v7673 = vpop.f32.mrb[0].mxu0
  %v7674 = vadd.f32 0.0, %v7673
  %v7675 = vpop.f32.mrb[0].mxu0
  %7676 = vmatprep.mubr.bf16.mxu0 0
  %7677 = vmatmul.mubr.bf16.gmra.mrb[0].mxu0 %v7501
  %v7678 = vpop.f32.mrb[0].mxu0
  %v7679 = vadd.f32 0.0, %v7678
  %v7680 = vpop.f32.mrb[0].mxu0
  %v7681 = vpop.f32.mrb[0].mxu0
  %v7682 = vadd.f32 0.0, %v7681
  %v7683 = vpop.f32.mrb[0].mxu0
  %7684 = vmatprep.mubr.bf16.mxu0 0
  %7685 = vmatmul.mubr.bf16.gmra.mrb[0].mxu0 %v7504
  %v7686 = vpop.f32.mrb[0].mxu0
  %v7687 = vadd.f32 0.0, %v7686
  %v7688 = vpop.f32.mrb[0].mxu0
  %v7689 = vpop.f32.mrb[0].mxu0
  %v7690 = vadd.f32 0.0, %v7689
  %v7691 = vpop.f32.mrb[0].mxu0
  %7692 = vmatprep.mubr.bf16.mxu0 0
  %7693 = vmatmul.mubr.bf16.gmra.mrb[0].mxu0 %v7507
  %v7694 = vpop.f32.mrb[0].mxu0
  %v7695 = vadd.f32 0.0, %v7694
  %v7696 = vpop.f32.mrb[0].mxu0
  %v7697 = vpop.f32.mrb[0].mxu0
  %v7698 = vadd.f32 0.0, %v7697
  %v7699 = vpop.f32.mrb[0].mxu0
  %7700 = vmatprep.mubr.bf16.mxu0 0
  %7701 = vmatmul.mubr.bf16.gmra.mrb[0].mxu0 %v7510
  %v7702 = vpop.f32.mrb[0].mxu0
  %v7703 = vadd.f32 0.0, %v7702
  %v7704 = vpop.f32.mrb[0].mxu0
  %v7705 = vpop.f32.mrb[0].mxu0
  %v7706 = vadd.f32 0.0, %v7705
  %v7707 = vpop.f32.mrb[0].mxu0
  %7708 = vmatprep.mubr.bf16.mxu0 0
  %7709 = vmatmul.mubr.bf16.gmra.mrb[0].mxu0 %v7513
  %v7710 = vpop.f32.mrb[0].mxu0
  %v7711 = vadd.f32 0.0, %v7710
  %v7712 = vpop.f32.mrb[0].mxu0
  %v7713 = vpop.f32.mrb[0].mxu0
  %v7714 = vadd.f32 0.0, %v7713
  %v7715 = vpop.f32.mrb[0].mxu0
  %7716 = vmatprep.mubr.bf16.mxu0 0
  %7717 = vmatmul.mubr.bf16.gmra.mrb[0].mxu0 %v7516
  %v7718 = vpop.f32.mrb[0].mxu0
  %v7719 = vadd.f32 0.0, %v7718
  %v7720 = vpop.f32.mrb[0].mxu0
  %v7721 = vpop.f32.mrb[0].mxu0
  %v7722 = vadd.f32 0.0, %v7721
  %v7723 = vpop.f32.mrb[0].mxu0
  %7724 = vmatprep.mubr.bf16.mxu0 0
  %7725 = vmatmul.mubr.bf16.gmra.mrb[0].mxu0 %v7519
  %v7726 = vpop.f32.mrb[0].mxu0
  %v7727 = vadd.f32 0.0, %v7726
  %v7728 = vpop.f32.mrb[0].mxu0
  %v7729 = vpop.f32.mrb[0].mxu0
  %v7730 = vadd.f32 0.0, %v7729
  %v7731 = vpop.f32.mrb[0].mxu0
  %7732 = vmatprep.mubr.bf16.mxu0 0
  %7733 = vmatmul.mubr.bf16.gmra.mrb[0].mxu0 %v7522
  %v7734 = vpop.f32.mrb[0].mxu0
  %v7735 = vadd.f32 0.0, %v7734
  %v7736 = vpop.f32.mrb[0].mxu0
  %v7737 = vpop.f32.mrb[0].mxu0
  %v7738 = vadd.f32 0.0, %v7737
  %v7739 = vpop.f32.mrb[0].mxu0
  %7740 = vmatprep.mubr.bf16.mxu0 0
  %7741 = vmatmul.mubr.bf16.gmra.mrb[0].mxu0 %v7525
  %v7742 = vpop.f32.mrb[0].mxu0
  %v7743 = vadd.f32 0.0, %v7742
  %v7744 = vpop.f32.mrb[0].mxu0
  %v7745 = vpop.f32.mrb[0].mxu0
  %v7746 = vadd.f32 0.0, %v7745
  %v7747 = vpop.f32.mrb[0].mxu0
  %7748 = vmatprep.mubr.bf16.mxu0 0
  %7749 = vmatmul.mubr.bf16.gmra.mrb[0].mxu0 %v7528
  %v7750 = vpop.f32.mrb[0].mxu0
  %v7751 = vadd.f32 0.0, %v7750
  %v7752 = vpop.f32.mrb[0].mxu0
  %v7753 = vpop.f32.mrb[0].mxu0
  %v7754 = vadd.f32 0.0, %v7753
  %v7755 = vpop.f32.mrb[0].mxu0
  %7756 = vmatprep.mubr.bf16.mxu0 0
  %7757 = vmatmul.mubr.bf16.gmra.mrb[0].mxu0 %v7531
  %v7758 = vpop.f32.mrb[0].mxu0
  %v7759 = vadd.f32 0.0, %v7758
  %v7760 = vpop.f32.mrb[0].mxu0
  %v7761 = vpop.f32.mrb[0].mxu0
  %v7762 = vadd.f32 0.0, %v7761
  %v7763 = vpop.f32.mrb[0].mxu0
  %7764 = vmatprep.mubr.bf16.mxu0 0
  %7765 = vmatmul.mubr.bf16.gmra.mrb[0].mxu0 %v7534
  %v7766 = vpop.f32.mrb[0].mxu0
  %v7767 = vadd.f32 0.0, %v7766
  %v7768 = vpop.f32.mrb[0].mxu0
  %v7769 = vpop.f32.mrb[0].mxu0
  %v7770 = vadd.f32 0.0, %v7769
  %v7771 = vpop.f32.mrb[0].mxu0
  %7772 = vmatprep.mubr.bf16.mxu0 0
  %7773 = vmatmul.mubr.bf16.gmra.mrb[0].mxu0 %v7537
  %v7774 = vpop.f32.mrb[0].mxu0
  %v7775 = vadd.f32 0.0, %v7774
  %v7776 = vpop.f32.mrb[0].mxu0
  %v7777 = vpop.f32.mrb[0].mxu0
  %v7778 = vadd.f32 0.0, %v7777
  %v7779 = vpop.f32.mrb[0].mxu0
  %7780 = vmatprep.mubr.bf16.mxu0 0
  %7781 = vmatmul.mubr.bf16.gmra.mrb[0].mxu0 %v7540
  %v7782 = vpop.f32.mrb[0].mxu0
  %v7783 = vadd.f32 0.0, %v7782
  %v7784 = vpop.f32.mrb[0].mxu0
  %v7785 = vpop.f32.mrb[0].mxu0
  %v7786 = vadd.f32 0.0, %v7785
  %v7787 = vpop.f32.mrb[0].mxu0
  %7788 = vmatprep.mubr.bf16.mxu0 0
  %7789 = vmatmul.mubr.bf16.gmra.mrb[0].mxu0 %v7543
  %v7790 = vpop.f32.mrb[0].mxu0
  %v7791 = vadd.f32 0.0, %v7790
  %v7792 = vpop.f32.mrb[0].mxu0
  %v7793 = vpop.f32.mrb[0].mxu0
  %v7794 = vadd.f32 0.0, %v7793
  %v7795 = vpop.f32.mrb[0].mxu0
  %7796 = vmatprep.mubr.bf16.mxu0 0
  %7797 = vmatmul.mubr.bf16.gmra.mrb[0].mxu0 %v7546
  %v7798 = vpop.f32.mrb[0].mxu0
  %v7799 = vadd.f32 0.0, %v7798
  %v7800 = vpop.f32.mrb[0].mxu0
  %v7801 = vpop.f32.mrb[0].mxu0
  %v7802 = vadd.f32 0.0, %v7801
  %v7803 = vpop.f32.mrb[0].mxu0
  %7804 = vmatprep.mubr.bf16.mxu0 0
  %7805 = vmatmul.mubr.bf16.gmra.mrb[0].mxu0 %v7549
  %v7806 = vpop.f32.mrb[0].mxu0
  %v7807 = vadd.f32 0.0, %v7806
  %v7808 = vpop.f32.mrb[0].mxu0
  %v7809 = vpop.f32.mrb[0].mxu0
  %v7810 = vadd.f32 0.0, %v7809
  %v7811 = vpop.f32.mrb[0].mxu0
  %7812 = vmatprep.mubr.bf16.mxu0 0
  %7813 = vmatmul.mubr.bf16.gmra.mrb[0].mxu0 %v7552
  %v7814 = vpop.f32.mrb[0].mxu0
  %v7815 = vadd.f32 0.0, %v7814
  %v7816 = vpop.f32.mrb[0].mxu0
  %v7817 = vpop.f32.mrb[0].mxu0
  %v7818 = vadd.f32 0.0, %v7817
  %v7819 = vpop.f32.mrb[0].mxu0
  %7820 = vmatprep.mubr.bf16.mxu0 0
  %7821 = vmatmul.mubr.bf16.gmra.mrb[0].mxu0 %v7555
  %v7822 = vpop.f32.mrb[0].mxu0
  %v7823 = vadd.f32 0.0, %v7822
  %v7824 = vpop.f32.mrb[0].mxu0
  %v7825 = vpop.f32.mrb[0].mxu0
  %v7826 = vadd.f32 0.0, %v7825
  %v7827 = vpop.f32.mrb[0].mxu0
  %7828 = vmatprep.mubr.bf16.mxu0 0
  %7829 = vmatmul.mubr.bf16.gmra.mrb[0].mxu0 %v7558
  %v7830 = vpop.f32.mrb[0].mxu0
  %v7831 = vadd.f32 0.0, %v7830
  %v7832 = vpop.f32.mrb[0].mxu0
  %v7833 = vpop.f32.mrb[0].mxu0
  %v7834 = vadd.f32 0.0, %v7833
  %v7835 = vpop.f32.mrb[0].mxu0
  %7836 = vmatprep.mubr.bf16.mxu0 0
  %7837 = vmatmul.mubr.bf16.gmra.mrb[0].mxu0 %v7561
  %v7838 = vpop.f32.mrb[0].mxu0
  %v7839 = vadd.f32 0.0, %v7838
  %v7840 = vpop.f32.mrb[0].mxu0
  %v7841 = vpop.f32.mrb[0].mxu0
  %v7842 = vadd.f32 0.0, %v7841
  %v7843 = vpop.f32.mrb[0].mxu0
  %7844 = vmatprep.mubr.bf16.mxu0 0
  %7845 = vmatmul.mubr.bf16.gmra.mrb[0].mxu0 %v7564
  %v7846 = vpop.f32.mrb[0].mxu0
  %v7847 = vadd.f32 0.0, %v7846
  %v7848 = vpop.f32.mrb[0].mxu0
  %v7849 = vpop.f32.mrb[0].mxu0
  %v7850 = vadd.f32 0.0, %v7849
  %v7851 = vpop.f32.mrb[0].mxu0
  %7852 = vmatprep.mubr.bf16.mxu0 0
  %7853 = vmatmul.mubr.bf16.gmra.mrb[0].mxu0 %v7567
  %v7854 = vpop.f32.mrb[0].mxu0
  %v7855 = vadd.f32 0.0, %v7854
  %v7856 = vpop.f32.mrb[0].mxu0
  %v7857 = vpop.f32.mrb[0].mxu0
  %v7858 = vadd.f32 0.0, %v7857
  %v7859 = vpop.f32.mrb[0].mxu0
  %7860 = vdwg.mxu0
  %v7861 = vadd.f32 %v6447, %v7607
  %v7862 = vadd.f32 %v6448, %v7610
  %v7863 = vadd.f32 %v6449, %v7615
  %v7864 = vadd.f32 %v6450, %v7618
  %v7865 = vadd.f32 %v6451, %v7623
  %v7866 = vadd.f32 %v6452, %v7626
  %v7867 = vadd.f32 %v6453, %v7631
  %v7868 = vadd.f32 %v6454, %v7634
  %v7869 = vadd.f32 %v6455, %v7639
  %v7870 = vadd.f32 %v6456, %v7642
  %v7871 = vadd.f32 %v6457, %v7647
  %v7872 = vadd.f32 %v6458, %v7650
  %v7873 = vadd.f32 %v6459, %v7655
  %v7874 = vadd.f32 %v6460, %v7658
  %v7875 = vadd.f32 %v6461, %v7663
  %v7876 = vadd.f32 %v6462, %v7666
  %v7877 = vadd.f32 %v6463, %v7671
  %v7878 = vadd.f32 %v6464, %v7674
  %v7879 = vadd.f32 %v6465, %v7679
  %v7880 = vadd.f32 %v6466, %v7682
  %v7881 = vadd.f32 %v6467, %v7687
  %v7882 = vadd.f32 %v6468, %v7690
  %v7883 = vadd.f32 %v6469, %v7695
  %v7884 = vadd.f32 %v6470, %v7698
  %v7885 = vadd.f32 %v6471, %v7703
  %v7886 = vadd.f32 %v6472, %v7706
  %v7887 = vadd.f32 %v6473, %v7711
  %v7888 = vadd.f32 %v6474, %v7714
  %v7889 = vadd.f32 %v6475, %v7719
  %v7890 = vadd.f32 %v6476, %v7722
  %v7891 = vadd.f32 %v6477, %v7727
  %v7892 = vadd.f32 %v6478, %v7730
  %v7893 = vadd.f32 %v6479, %v7735
  %v7894 = vadd.f32 %v6480, %v7738
  %v7895 = vadd.f32 %v6481, %v7743
  %v7896 = vadd.f32 %v6482, %v7746
  %v7897 = vadd.f32 %v6483, %v7751
  %v7898 = vadd.f32 %v6484, %v7754
  %v7899 = vadd.f32 %v6485, %v7759
  %v7900 = vadd.f32 %v6486, %v7762
  %v7901 = vadd.f32 %v6487, %v7767
  %v7902 = vadd.f32 %v6488, %v7770
  %v7903 = vadd.f32 %v6489, %v7775
  %v7904 = vadd.f32 %v6490, %v7778
  %v7905 = vadd.f32 %v6491, %v7783
  %v7906 = vadd.f32 %v6492, %v7786
  %v7907 = vadd.f32 %v6493, %v7791
  %v7908 = vadd.f32 %v6494, %v7794
  %v7909 = vadd.f32 %v6495, %v7799
  %v7910 = vadd.f32 %v6496, %v7802
  %v7911 = vadd.f32 %v6497, %v7807
  %v7912 = vadd.f32 %v6498, %v7810
  %v7913 = vadd.f32 %v6499, %v7815
  %v7914 = vadd.f32 %v6500, %v7818
  %v7915 = vadd.f32 %v6501, %v7823
  %v7916 = vadd.f32 %v6502, %v7826
  %v7917 = vadd.f32 %v6503, %v7831
  %v7918 = vadd.f32 %v6504, %v7834
  %v7919 = vadd.f32 %v6505, %v7839
  %v7920 = vadd.f32 %v6506, %v7842
  %v7921 = vadd.f32 %v6507, %v7847
  %v7922 = vadd.f32 %v6508, %v7850
  %v7923 = vadd.f32 %v6509, %v7855
  %v7924 = vadd.f32 %v6510, %v7858
  %v7925 = vld [vmem:[%s5832] sm:$0xe]
  %v7926 = vld [vmem:[%s5832 + $0xc] sm:$0xe]
  %v7927 = vld [vmem:[%s5832 + $0x18] sm:$0xe]
  %v7928 = vld [vmem:[%s5832 + $0x24] sm:$0xe]
  %v7929 = vld [vmem:[%s5832 + $0x30] sm:$0xe]
  %v7930 = vld [vmem:[%s5832 + $0x3c] sm:$0xe]
  %v7931 = vld [vmem:[%s5832 + $0x48] sm:$0xe]
  %v7932 = vld [vmem:[%s5832 + $0x54] sm:$0xe]
  %v7933 = vld [vmem:[%s5832 + $0x60] sm:$0xe]
  %v7934 = vld [vmem:[%s5832 + $0x6c] sm:$0xe]
  %v7935 = vld [vmem:[%s5832 + $0x78] sm:$0xe]
  %v7936 = vld [vmem:[%s5832 + $0x84] sm:$0xe]
  %v7937 = vld [vmem:[%s5832 + $0x90] sm:$0xe]
  %v7938 = vld [vmem:[%s5832 + $0x9c] sm:$0xe]
  %v7939 = vld [vmem:[%s5832 + $0xa8] sm:$0xe]
  %v7940 = vld [vmem:[%s5832 + $0xb4] sm:$0xe]
  %v7941 = vld [vmem:[%s5832 + $0xd8] sm:$0xe]
  %v7942 = vld [vmem:[%s5832 + $0xe4] sm:$0xe]
  %v7943 = vld [vmem:[%s5832 + $0xf0] sm:$0xe]
  %v7944 = vld [vmem:[%s5832 + $0xfc] sm:$0xe]
  %v7945 = vld [vmem:[%s5832 + $0x108] sm:$0xe]
  %v7946 = vld [vmem:[%s5832 + $0x114] sm:$0xe]
  %v7947 = vld [vmem:[%s5832 + $0x120] sm:$0xe]
  %v7948 = vld [vmem:[%s5832 + $0x12c] sm:$0xe]
  %v7949 = vld [vmem:[%s5832 + $0x138] sm:$0xe]
  %v7950 = vld [vmem:[%s5832 + $0x144] sm:$0xe]
  %v7951 = vld [vmem:[%s5832 + $0x150] sm:$0xe]
  %v7952 = vld [vmem:[%s5832 + $0x15c] sm:$0xe]
  %v7953 = vld [vmem:[%s5832 + $0x168] sm:$0xe]
  %v7954 = vld [vmem:[%s5832 + $0x174] sm:$0xe]
  %v7955 = vld [vmem:[%s5832 + $0x180] sm:$0xe]
  %v7956 = vld [vmem:[%s5832 + $0x18c] sm:$0xe]
  %v8053 = vrot.slane %v7925, 5
  %v8054 = vrot.slane %v8053, 4
  %v8055 = vrot.slane %v6512, 5
  %v8056 = vsel %vm2062, %v8054, %v8055
  %v8057 = vrot.slane %v8055, 4
  %v8058 = vrot.slane %v6513, 5
  %v8059 = vsel %vm2062, %v8057, %v8058
  %v8060 = vrot.slane %v7926, 5
  %v8061 = vrot.slane %v8060, 4
  %v8062 = vrot.slane %v6515, 5
  %v8063 = vsel %vm2062, %v8061, %v8062
  %v8064 = vrot.slane %v8062, 4
  %v8065 = vrot.slane %v6516, 5
  %v8066 = vsel %vm2062, %v8064, %v8065
  %v8067 = vrot.slane %v7927, 5
  %v8068 = vrot.slane %v8067, 4
  %v8069 = vrot.slane %v6518, 5
  %v8070 = vsel %vm2062, %v8068, %v8069
  %v8071 = vrot.slane %v8069, 4
  %v8072 = vrot.slane %v6519, 5
  %v8073 = vsel %vm2062, %v8071, %v8072
  %v8074 = vrot.slane %v7928, 5
  %v8075 = vrot.slane %v8074, 4
  %v8076 = vrot.slane %v6521, 5
  %v8077 = vsel %vm2062, %v8075, %v8076
  %v8078 = vrot.slane %v8076, 4
  %v8079 = vrot.slane %v6522, 5
  %v8080 = vsel %vm2062, %v8078, %v8079
  %v8081 = vrot.slane %v7929, 5
  %v8082 = vrot.slane %v8081, 4
  %v8083 = vrot.slane %v6524, 5
  %v8084 = vsel %vm2062, %v8082, %v8083
  %v8085 = vrot.slane %v8083, 4
  %v8086 = vrot.slane %v6525, 5
  %v8087 = vsel %vm2062, %v8085, %v8086
  %v8088 = vrot.slane %v7930, 5
  %v8089 = vrot.slane %v8088, 4
  %v8090 = vrot.slane %v6527, 5
  %v8091 = vsel %vm2062, %v8089, %v8090
  %v8092 = vrot.slane %v8090, 4
  %v8093 = vrot.slane %v6528, 5
  %v8094 = vsel %vm2062, %v8092, %v8093
  %v8095 = vrot.slane %v7931, 5
  %v8096 = vrot.slane %v8095, 4
  %v8097 = vrot.slane %v6530, 5
  %v8098 = vsel %vm2062, %v8096, %v8097
  %v8099 = vrot.slane %v8097, 4
  %v8100 = vrot.slane %v6531, 5
  %v8101 = vsel %vm2062, %v8099, %v8100
  %v8102 = vrot.slane %v7932, 5
  %v8103 = vrot.slane %v8102, 4
  %v8104 = vrot.slane %v6533, 5
  %v8105 = vsel %vm2062, %v8103, %v8104
  %v8106 = vrot.slane %v8104, 4
  %v8107 = vrot.slane %v6534, 5
  %v8108 = vsel %vm2062, %v8106, %v8107
  %v8109 = vrot.slane %v7933, 5
  %v8110 = vrot.slane %v8109, 4
  %v8111 = vrot.slane %v6536, 5
  %v8112 = vsel %vm2062, %v8110, %v8111
  %v8113 = vrot.slane %v8111, 4
  %v8114 = vrot.slane %v6537, 5
  %v8115 = vsel %vm2062, %v8113, %v8114
  %v8116 = vrot.slane %v7934, 5
  %v8117 = vrot.slane %v8116, 4
  %v8118 = vrot.slane %v6539, 5
  %v8119 = vsel %vm2062, %v8117, %v8118
  %v8120 = vrot.slane %v8118, 4
  %v8121 = vrot.slane %v6540, 5
  %v8122 = vsel %vm2062, %v8120, %v8121
  %v8123 = vrot.slane %v7935, 5
  %v8124 = vrot.slane %v8123, 4
  %v8125 = vrot.slane %v6542, 5
  %v8126 = vsel %vm2062, %v8124, %v8125
  %v8127 = vrot.slane %v8125, 4
  %v8128 = vrot.slane %v6543, 5
  %v8129 = vsel %vm2062, %v8127, %v8128
  %v8130 = vrot.slane %v7936, 5
  %v8131 = vrot.slane %v8130, 4
  %v8132 = vrot.slane %v6545, 5
  %v8133 = vsel %vm2062, %v8131, %v8132
  %v8134 = vrot.slane %v8132, 4
  %v8135 = vrot.slane %v6546, 5
  %v8136 = vsel %vm2062, %v8134, %v8135
  %v8137 = vrot.slane %v7937, 5
  %v8138 = vrot.slane %v8137, 4
  %v8139 = vrot.slane %v6548, 5
  %v8140 = vsel %vm2062, %v8138, %v8139
  %v8141 = vrot.slane %v8139, 4
  %v8142 = vrot.slane %v6549, 5
  %v8143 = vsel %vm2062, %v8141, %v8142
  %v8144 = vrot.slane %v7938, 5
  %v8145 = vrot.slane %v8144, 4
  %v8146 = vrot.slane %v6551, 5
  %v8147 = vsel %vm2062, %v8145, %v8146
  %v8148 = vrot.slane %v8146, 4
  %v8149 = vrot.slane %v6552, 5
  %v8150 = vsel %vm2062, %v8148, %v8149
  %v8151 = vrot.slane %v7939, 5
  %v8152 = vrot.slane %v8151, 4
  %v8153 = vrot.slane %v6554, 5
  %v8154 = vsel %vm2062, %v8152, %v8153
  %v8155 = vrot.slane %v8153, 4
  %v8156 = vrot.slane %v6555, 5
  %v8157 = vsel %vm2062, %v8155, %v8156
  %v8158 = vrot.slane %v7940, 5
  %v8159 = vrot.slane %v8158, 4
  %v8160 = vrot.slane %v6557, 5
  %v8161 = vsel %vm2062, %v8159, %v8160
  %v8162 = vrot.slane %v8160, 4
  %v8163 = vrot.slane %v6558, 5
  %v8164 = vsel %vm2062, %v8162, %v8163
  %v8165 = vrot.slane %v7941, 5
  %v8166 = vrot.slane %v8165, 4
  %v8167 = vrot.slane %v6560, 5
  %v8168 = vsel %vm2062, %v8166, %v8167
  %v8169 = vrot.slane %v8167, 4
  %v8170 = vrot.slane %v6561, 5
  %v8171 = vsel %vm2062, %v8169, %v8170
  %v8172 = vrot.slane %v7942, 5
  %v8173 = vrot.slane %v8172, 4
  %v8174 = vrot.slane %v6563, 5
  %v8175 = vsel %vm2062, %v8173, %v8174
  %v8176 = vrot.slane %v8174, 4
  %v8177 = vrot.slane %v6564, 5
  %v8178 = vsel %vm2062, %v8176, %v8177
  %v8179 = vrot.slane %v7943, 5
  %v8180 = vrot.slane %v8179, 4
  %v8181 = vrot.slane %v6566, 5
  %v8182 = vsel %vm2062, %v8180, %v8181
  %v8183 = vrot.slane %v8181, 4
  %v8184 = vrot.slane %v6567, 5
  %v8185 = vsel %vm2062, %v8183, %v8184
  %v8186 = vrot.slane %v7944, 5
  %v8187 = vrot.slane %v8186, 4
  %v8188 = vrot.slane %v6569, 5
  %v8189 = vsel %vm2062, %v8187, %v8188
  %v8190 = vrot.slane %v8188, 4
  %v8191 = vrot.slane %v6570, 5
  %v8192 = vsel %vm2062, %v8190, %v8191
  %v8193 = vrot.slane %v7945, 5
  %v8194 = vrot.slane %v8193, 4
  %v8195 = vrot.slane %v6572, 5
  %v8196 = vsel %vm2062, %v8194, %v8195
  %v8197 = vrot.slane %v8195, 4
  %v8198 = vrot.slane %v6573, 5
  %v8199 = vsel %vm2062, %v8197, %v8198
  %v8200 = vrot.slane %v7946, 5
  %v8201 = vrot.slane %v8200, 4
  %v8202 = vrot.slane %v6575, 5
  %v8203 = vsel %vm2062, %v8201, %v8202
  %v8204 = vrot.slane %v8202, 4
  %v8205 = vrot.slane %v6576, 5
  %v8206 = vsel %vm2062, %v8204, %v8205
  %v8207 = vrot.slane %v7947, 5
  %v8208 = vrot.slane %v8207, 4
  %v8209 = vrot.slane %v6578, 5
  %v8210 = vsel %vm2062, %v8208, %v8209
  %v8211 = vrot.slane %v8209, 4
  %v8212 = vrot.slane %v6579, 5
  %v8213 = vsel %vm2062, %v8211, %v8212
  %v8214 = vrot.slane %v7948, 5
  %v8215 = vrot.slane %v8214, 4
  %v8216 = vrot.slane %v6581, 5
  %v8217 = vsel %vm2062, %v8215, %v8216
  %v8218 = vrot.slane %v8216, 4
  %v8219 = vrot.slane %v6582, 5
  %v8220 = vsel %vm2062, %v8218, %v8219
  %v8221 = vrot.slane %v7949, 5
  %v8222 = vrot.slane %v8221, 4
  %v8223 = vrot.slane %v6584, 5
  %v8224 = vsel %vm2062, %v8222, %v8223
  %v8225 = vrot.slane %v8223, 4
  %v8226 = vrot.slane %v6585, 5
  %v8227 = vsel %vm2062, %v8225, %v8226
  %v8228 = vrot.slane %v7950, 5
  %v8229 = vrot.slane %v8228, 4
  %v8230 = vrot.slane %v6587, 5
  %v8231 = vsel %vm2062, %v8229, %v8230
  %v8232 = vrot.slane %v8230, 4
  %v8233 = vrot.slane %v6588, 5
  %v8234 = vsel %vm2062, %v8232, %v8233
  %v8235 = vrot.slane %v7951, 5
  %v8236 = vrot.slane %v8235, 4
  %v8237 = vrot.slane %v6590, 5
  %v8238 = vsel %vm2062, %v8236, %v8237
  %v8239 = vrot.slane %v8237, 4
  %v8240 = vrot.slane %v6591, 5
  %v8241 = vsel %vm2062, %v8239, %v8240
  %v8242 = vrot.slane %v7952, 5
  %v8243 = vrot.slane %v8242, 4
  %v8244 = vrot.slane %v6593, 5
  %v8245 = vsel %vm2062, %v8243, %v8244
  %v8246 = vrot.slane %v8244, 4
  %v8247 = vrot.slane %v6594, 5
  %v8248 = vsel %vm2062, %v8246, %v8247
  %v8249 = vrot.slane %v7953, 5
  %v8250 = vrot.slane %v8249, 4
  %v8251 = vrot.slane %v6596, 5
  %v8252 = vsel %vm2062, %v8250, %v8251
  %v8253 = vrot.slane %v8251, 4
  %v8254 = vrot.slane %v6597, 5
  %v8255 = vsel %vm2062, %v8253, %v8254
  %v8256 = vrot.slane %v7954, 5
  %v8257 = vrot.slane %v8256, 4
  %v8258 = vrot.slane %v6599, 5
  %v8259 = vsel %vm2062, %v8257, %v8258
  %v8260 = vrot.slane %v8258, 4
  %v8261 = vrot.slane %v6600, 5
  %v8262 = vsel %vm2062, %v8260, %v8261
  %v8263 = vrot.slane %v7955, 5
  %v8264 = vrot.slane %v8263, 4
  %v8265 = vrot.slane %v6602, 5
  %v8266 = vsel %vm2062, %v8264, %v8265
  %v8267 = vrot.slane %v8265, 4
  %v8268 = vrot.slane %v6603, 5
  %v8269 = vsel %vm2062, %v8267, %v8268
  %v8270 = vrot.slane %v7956, 5
  %v8271 = vrot.slane %v8270, 4
  %v8272 = vrot.slane %v6605, 5
  %v8273 = vsel %vm2062, %v8271, %v8272
  %v8274 = vrot.slane %v8272, 4
  %v8275 = vrot.slane %v6606, 5
  %v8276 = vsel %vm2062, %v8274, %v8275
  %s8277 = scalar_lea.vmem %s1, 16
  %v8278 = vld [vmem:[%s8277] sm:$0x3]
  %v8279 = vunpack.c.l.b16 %v8056
  %v8280 = vunpack.c.l.b16 %v8059
  %v8281 = vunpack.c.l.b16 %v8063
  %v8282 = vunpack.c.l.b16 %v8066
  %v8283 = vunpack.c.l.b16 %v8070
  %v8284 = vunpack.c.l.b16 %v8073
  %v8285 = vunpack.c.l.b16 %v8077
  %v8286 = vunpack.c.l.b16 %v8080
  %v8287 = vunpack.c.l.b16 %v8084
  %v8288 = vunpack.c.l.b16 %v8087
  %v8289 = vunpack.c.l.b16 %v8091
  %v8290 = vunpack.c.l.b16 %v8094
  %v8291 = vunpack.c.l.b16 %v8098
  %v8292 = vunpack.c.l.b16 %v8101
  %v8293 = vunpack.c.l.b16 %v8105
  %v8294 = vunpack.c.l.b16 %v8108
  %v8295 = vunpack.c.l.b16 %v8112
  %v8296 = vunpack.c.l.b16 %v8115
  %v8297 = vunpack.c.l.b16 %v8119
  %v8298 = vunpack.c.l.b16 %v8122
  %v8299 = vunpack.c.l.b16 %v8126
  %v8300 = vunpack.c.l.b16 %v8129
  %v8301 = vunpack.c.l.b16 %v8133
  %v8302 = vunpack.c.l.b16 %v8136
  %v8303 = vunpack.c.l.b16 %v8140
  %v8304 = vunpack.c.l.b16 %v8143
  %v8305 = vunpack.c.l.b16 %v8147
  %v8306 = vunpack.c.l.b16 %v8150
  %v8307 = vunpack.c.l.b16 %v8154
  %v8308 = vunpack.c.l.b16 %v8157
  %v8309 = vunpack.c.l.b16 %v8161
  %v8310 = vunpack.c.l.b16 %v8164
  %v8311 = vunpack.c.l.b16 %v8168
  %v8312 = vunpack.c.l.b16 %v8171
  %v8313 = vunpack.c.l.b16 %v8175
  %v8314 = vunpack.c.l.b16 %v8178
  %v8315 = vunpack.c.l.b16 %v8182
  %v8316 = vunpack.c.l.b16 %v8185
  %v8317 = vunpack.c.l.b16 %v8189
  %v8318 = vunpack.c.l.b16 %v8192
  %v8319 = vunpack.c.l.b16 %v8196
  %v8320 = vunpack.c.l.b16 %v8199
  %v8321 = vunpack.c.l.b16 %v8203
  %v8322 = vunpack.c.l.b16 %v8206
  %v8323 = vunpack.c.l.b16 %v8210
  %v8324 = vunpack.c.l.b16 %v8213
  %v8325 = vunpack.c.l.b16 %v8217
  %v8326 = vunpack.c.l.b16 %v8220
  %v8327 = vunpack.c.l.b16 %v8224
  %v8328 = vunpack.c.l.b16 %v8227
  %v8329 = vunpack.c.l.b16 %v8231
  %v8330 = vunpack.c.l.b16 %v8234
  %v8331 = vunpack.c.l.b16 %v8238
  %v8332 = vunpack.c.l.b16 %v8241
  %v8333 = vunpack.c.l.b16 %v8245
  %v8334 = vunpack.c.l.b16 %v8248
  %v8335 = vunpack.c.l.b16 %v8252
  %v8336 = vunpack.c.l.b16 %v8255
  %v8337 = vunpack.c.l.b16 %v8259
  %v8338 = vunpack.c.l.b16 %v8262
  %v8339 = vunpack.c.l.b16 %v8266
  %v8340 = vunpack.c.l.b16 %v8269
  %v8341 = vunpack.c.l.b16 %v8273
  %v8342 = vunpack.c.l.b16 %v8276
  %v8343 = vpack.c.b16 %v8280, %v8279
  %v8344 = vpack.c.b16 %v8282, %v8281
  %v8345 = vpack.c.b16 %v8284, %v8283
  %v8346 = vpack.c.b16 %v8286, %v8285
  %v8347 = vpack.c.b16 %v8288, %v8287
  %v8348 = vpack.c.b16 %v8290, %v8289
  %v8349 = vpack.c.b16 %v8292, %v8291
  %v8350 = vpack.c.b16 %v8294, %v8293
  %v8351 = vpack.c.b16 %v8296, %v8295
  %v8352 = vpack.c.b16 %v8298, %v8297
  %v8353 = vpack.c.b16 %v8300, %v8299
  %v8354 = vpack.c.b16 %v8302, %v8301
  %v8355 = vpack.c.b16 %v8304, %v8303
  %v8356 = vpack.c.b16 %v8306, %v8305
  %v8357 = vpack.c.b16 %v8308, %v8307
  %v8358 = vpack.c.b16 %v8310, %v8309
  %v8359 = vpack.c.b16 %v8312, %v8311
  %v8360 = vpack.c.b16 %v8314, %v8313
  %v8361 = vpack.c.b16 %v8316, %v8315
  %v8362 = vpack.c.b16 %v8318, %v8317
  %v8363 = vpack.c.b16 %v8320, %v8319
  %v8364 = vpack.c.b16 %v8322, %v8321
  %v8365 = vpack.c.b16 %v8324, %v8323
  %v8366 = vpack.c.b16 %v8326, %v8325
  %v8367 = vpack.c.b16 %v8328, %v8327
  %v8368 = vpack.c.b16 %v8330, %v8329
  %v8369 = vpack.c.b16 %v8332, %v8331
  %v8370 = vpack.c.b16 %v8334, %v8333
  %v8371 = vpack.c.b16 %v8336, %v8335
  %v8372 = vpack.c.b16 %v8338, %v8337
  %v8373 = vpack.c.b16 %v8340, %v8339
  %v8374 = vpack.c.b16 %v8342, %v8341
  %v8376 = vsel %vm1026, %v8343, 0
  %v8379 = vsel %vm1026, %v8344, 0
  %v8382 = vsel %vm1026, %v8345, 0
  %v8385 = vsel %vm1026, %v8346, 0
  %v8388 = vsel %vm1026, %v8347, 0
  %v8391 = vsel %vm1026, %v8348, 0
  %v8394 = vsel %vm1026, %v8349, 0
  %v8397 = vsel %vm1026, %v8350, 0
  %v8400 = vsel %vm1026, %v8351, 0
  %v8403 = vsel %vm1026, %v8352, 0
  %v8406 = vsel %vm1026, %v8353, 0
  %v8409 = vsel %vm1026, %v8354, 0
  %v8412 = vsel %vm1026, %v8355, 0
  %v8415 = vsel %vm1026, %v8356, 0
  %v8418 = vsel %vm1026, %v8357, 0
  %v8421 = vsel %vm1026, %v8358, 0
  %v8424 = vsel %vm1026, %v8359, 0
  %v8427 = vsel %vm1026, %v8360, 0
  %v8430 = vsel %vm1026, %v8361, 0
  %v8433 = vsel %vm1026, %v8362, 0
  %v8436 = vsel %vm1026, %v8363, 0
  %v8439 = vsel %vm1026, %v8364, 0
  %v8442 = vsel %vm1026, %v8365, 0
  %v8445 = vsel %vm1026, %v8366, 0
  %v8448 = vsel %vm1026, %v8367, 0
  %v8451 = vsel %vm1026, %v8368, 0
  %v8454 = vsel %vm1026, %v8369, 0
  %v8457 = vsel %vm1026, %v8370, 0
  %v8460 = vsel %vm1026, %v8371, 0
  %v8463 = vsel %vm1026, %v8372, 0
  %v8466 = vsel %vm1026, %v8373, 0
  %v8469 = vsel %vm1026, %v8374, 0
  %v8472 = vsel %vm1123, %v8278, 0
  %8474 = vmatprep.subr.bf16.mxu0 0
  %8475 = vmatpush1.bf16.msra.mxu0 %v8472
  %8476 = vmatprep.subr.bf16.mxu0 0
  %8477 = vmatpush1.bf16.msra.mxu0 0
  %8478 = vmatprep.subr.bf16.mxu0 0
  %8479 = vmatpush1.bf16.msra.mxu0 0
  %8480 = vmatprep.subr.bf16.mxu0 0
  %8481 = vmatpush1.bf16.msra.mxu0 0
  %8482 = vmatprep.subr.bf16.mxu0 0
  %8483 = vmatpush1.bf16.msra.mxu0 0
  %8484 = vmatprep.subr.bf16.mxu0 0
  %8485 = vmatpush1.bf16.msra.mxu0 0
  %8486 = vmatprep.subr.bf16.mxu0 0
  %8487 = vmatpush1.bf16.msra.mxu0 0
  %8488 = vmatprep.subr.bf16.mxu0 0
  %8489 = vmatpush1.bf16.msra.mxu0 0
  %8490 = vmatprep.subr.bf16.mxu0 0
  %8491 = vmatpush1.bf16.msra.mxu0 0
  %8492 = vmatprep.subr.bf16.mxu0 0
  %8493 = vmatpush1.bf16.msra.mxu0 0
  %8494 = vmatprep.subr.bf16.mxu0 0
  %8495 = vmatpush1.bf16.msra.mxu0 0
  %8496 = vmatprep.subr.bf16.mxu0 0
  %8497 = vmatpush1.bf16.msra.mxu0 0
  %8498 = vmatprep.subr.bf16.mxu0 0
  %8499 = vmatpush1.bf16.msra.mxu0 0
  %8500 = vmatprep.subr.bf16.mxu0 0
  %8501 = vmatpush1.bf16.msra.mxu0 0
  %8502 = vmatprep.subr.bf16.mxu0 0
  %8503 = vmatpush1.bf16.msra.mxu0 0
  %8504 = vmatprep.subr.bf16.mxu0 0
  %8505 = vmatpush1.bf16.msra.mxu0 0
  %8506 = vmatprep.mubr.bf16.mxu0 0
  %8507 = vmatmul.mubr.bf16.gmra.mrb[0].mxu0 %v8376
  %v8508 = vpop.f32.mrb[0].mxu0
  %v8509 = vadd.f32 0.0, %v8508
  %v8510 = vpop.f32.mrb[0].mxu0
  %v8511 = vpop.f32.mrb[0].mxu0
  %v8512 = vadd.f32 0.0, %v8511
  %v8513 = vpop.f32.mrb[0].mxu0
  %8514 = vmatprep.mubr.bf16.mxu0 0
  %8515 = vmatmul.mubr.bf16.gmra.mrb[0].mxu0 %v8379
  %v8516 = vpop.f32.mrb[0].mxu0
  %v8517 = vadd.f32 0.0, %v8516
  %v8518 = vpop.f32.mrb[0].mxu0
  %v8519 = vpop.f32.mrb[0].mxu0
  %v8520 = vadd.f32 0.0, %v8519
  %v8521 = vpop.f32.mrb[0].mxu0
  %8522 = vmatprep.mubr.bf16.mxu0 0
  %8523 = vmatmul.mubr.bf16.gmra.mrb[0].mxu0 %v8382
  %v8524 = vpop.f32.mrb[0].mxu0
  %v8525 = vadd.f32 0.0, %v8524
  %v8526 = vpop.f32.mrb[0].mxu0
  %v8527 = vpop.f32.mrb[0].mxu0
  %v8528 = vadd.f32 0.0, %v8527
  %v8529 = vpop.f32.mrb[0].mxu0
  %8530 = vmatprep.mubr.bf16.mxu0 0
  %8531 = vmatmul.mubr.bf16.gmra.mrb[0].mxu0 %v8385
  %v8532 = vpop.f32.mrb[0].mxu0
  %v8533 = vadd.f32 0.0, %v8532
  %v8534 = vpop.f32.mrb[0].mxu0
  %v8535 = vpop.f32.mrb[0].mxu0
  %v8536 = vadd.f32 0.0, %v8535
  %v8537 = vpop.f32.mrb[0].mxu0
  %8538 = vmatprep.mubr.bf16.mxu0 0
  %8539 = vmatmul.mubr.bf16.gmra.mrb[0].mxu0 %v8388
  %v8540 = vpop.f32.mrb[0].mxu0
  %v8541 = vadd.f32 0.0, %v8540
  %v8542 = vpop.f32.mrb[0].mxu0
  %v8543 = vpop.f32.mrb[0].mxu0
  %v8544 = vadd.f32 0.0, %v8543
  %v8545 = vpop.f32.mrb[0].mxu0
  %8546 = vmatprep.mubr.bf16.mxu0 0
  %8547 = vmatmul.mubr.bf16.gmra.mrb[0].mxu0 %v8391
  %v8548 = vpop.f32.mrb[0].mxu0
  %v8549 = vadd.f32 0.0, %v8548
  %v8550 = vpop.f32.mrb[0].mxu0
  %v8551 = vpop.f32.mrb[0].mxu0
  %v8552 = vadd.f32 0.0, %v8551
  %v8553 = vpop.f32.mrb[0].mxu0
  %8554 = vmatprep.mubr.bf16.mxu0 0
  %8555 = vmatmul.mubr.bf16.gmra.mrb[0].mxu0 %v8394
  %v8556 = vpop.f32.mrb[0].mxu0
  %v8557 = vadd.f32 0.0, %v8556
  %v8558 = vpop.f32.mrb[0].mxu0
  %v8559 = vpop.f32.mrb[0].mxu0
  %v8560 = vadd.f32 0.0, %v8559
  %v8561 = vpop.f32.mrb[0].mxu0
  %8562 = vmatprep.mubr.bf16.mxu0 0
  %8563 = vmatmul.mubr.bf16.gmra.mrb[0].mxu0 %v8397
  %v8564 = vpop.f32.mrb[0].mxu0
  %v8565 = vadd.f32 0.0, %v8564
  %v8566 = vpop.f32.mrb[0].mxu0
  %v8567 = vpop.f32.mrb[0].mxu0
  %v8568 = vadd.f32 0.0, %v8567
  %v8569 = vpop.f32.mrb[0].mxu0
  %8570 = vmatprep.mubr.bf16.mxu0 0
  %8571 = vmatmul.mubr.bf16.gmra.mrb[0].mxu0 %v8400
  %v8572 = vpop.f32.mrb[0].mxu0
  %v8573 = vadd.f32 0.0, %v8572
  %v8574 = vpop.f32.mrb[0].mxu0
  %v8575 = vpop.f32.mrb[0].mxu0
  %v8576 = vadd.f32 0.0, %v8575
  %v8577 = vpop.f32.mrb[0].mxu0
  %8578 = vmatprep.mubr.bf16.mxu0 0
  %8579 = vmatmul.mubr.bf16.gmra.mrb[0].mxu0 %v8403
  %v8580 = vpop.f32.mrb[0].mxu0
  %v8581 = vadd.f32 0.0, %v8580
  %v8582 = vpop.f32.mrb[0].mxu0
  %v8583 = vpop.f32.mrb[0].mxu0
  %v8584 = vadd.f32 0.0, %v8583
  %v8585 = vpop.f32.mrb[0].mxu0
  %8586 = vmatprep.mubr.bf16.mxu0 0
  %8587 = vmatmul.mubr.bf16.gmra.mrb[0].mxu0 %v8406
  %v8588 = vpop.f32.mrb[0].mxu0
  %v8589 = vadd.f32 0.0, %v8588
  %v8590 = vpop.f32.mrb[0].mxu0
  %v8591 = vpop.f32.mrb[0].mxu0
  %v8592 = vadd.f32 0.0, %v8591
  %v8593 = vpop.f32.mrb[0].mxu0
  %8594 = vmatprep.mubr.bf16.mxu0 0
  %8595 = vmatmul.mubr.bf16.gmra.mrb[0].mxu0 %v8409
  %v8596 = vpop.f32.mrb[0].mxu0
  %v8597 = vadd.f32 0.0, %v8596
  %v8598 = vpop.f32.mrb[0].mxu0
  %v8599 = vpop.f32.mrb[0].mxu0
  %v8600 = vadd.f32 0.0, %v8599
  %v8601 = vpop.f32.mrb[0].mxu0
  %8602 = vmatprep.mubr.bf16.mxu0 0
  %8603 = vmatmul.mubr.bf16.gmra.mrb[0].mxu0 %v8412
  %v8604 = vpop.f32.mrb[0].mxu0
  %v8605 = vadd.f32 0.0, %v8604
  %v8606 = vpop.f32.mrb[0].mxu0
  %v8607 = vpop.f32.mrb[0].mxu0
  %v8608 = vadd.f32 0.0, %v8607
  %v8609 = vpop.f32.mrb[0].mxu0
  %8610 = vmatprep.mubr.bf16.mxu0 0
  %8611 = vmatmul.mubr.bf16.gmra.mrb[0].mxu0 %v8415
  %v8612 = vpop.f32.mrb[0].mxu0
  %v8613 = vadd.f32 0.0, %v8612
  %v8614 = vpop.f32.mrb[0].mxu0
  %v8615 = vpop.f32.mrb[0].mxu0
  %v8616 = vadd.f32 0.0, %v8615
  %v8617 = vpop.f32.mrb[0].mxu0
  %8618 = vmatprep.mubr.bf16.mxu0 0
  %8619 = vmatmul.mubr.bf16.gmra.mrb[0].mxu0 %v8418
  %v8620 = vpop.f32.mrb[0].mxu0
  %v8621 = vadd.f32 0.0, %v8620
  %v8622 = vpop.f32.mrb[0].mxu0
  %v8623 = vpop.f32.mrb[0].mxu0
  %v8624 = vadd.f32 0.0, %v8623
  %v8625 = vpop.f32.mrb[0].mxu0
  %8626 = vmatprep.mubr.bf16.mxu0 0
  %8627 = vmatmul.mubr.bf16.gmra.mrb[0].mxu0 %v8421
  %v8628 = vpop.f32.mrb[0].mxu0
  %v8629 = vadd.f32 0.0, %v8628
  %v8630 = vpop.f32.mrb[0].mxu0
  %v8631 = vpop.f32.mrb[0].mxu0
  %v8632 = vadd.f32 0.0, %v8631
  %v8633 = vpop.f32.mrb[0].mxu0
  %8634 = vmatprep.mubr.bf16.mxu0 0
  %8635 = vmatmul.mubr.bf16.gmra.mrb[0].mxu0 %v8424
  %v8636 = vpop.f32.mrb[0].mxu0
  %v8637 = vadd.f32 0.0, %v8636
  %v8638 = vpop.f32.mrb[0].mxu0
  %v8639 = vpop.f32.mrb[0].mxu0
  %v8640 = vadd.f32 0.0, %v8639
  %v8641 = vpop.f32.mrb[0].mxu0
  %8642 = vmatprep.mubr.bf16.mxu0 0
  %8643 = vmatmul.mubr.bf16.gmra.mrb[0].mxu0 %v8427
  %v8644 = vpop.f32.mrb[0].mxu0
  %v8645 = vadd.f32 0.0, %v8644
  %v8646 = vpop.f32.mrb[0].mxu0
  %v8647 = vpop.f32.mrb[0].mxu0
  %v8648 = vadd.f32 0.0, %v8647
  %v8649 = vpop.f32.mrb[0].mxu0
  %8650 = vmatprep.mubr.bf16.mxu0 0
  %8651 = vmatmul.mubr.bf16.gmra.mrb[0].mxu0 %v8430
  %v8652 = vpop.f32.mrb[0].mxu0
  %v8653 = vadd.f32 0.0, %v8652
  %v8654 = vpop.f32.mrb[0].mxu0
  %v8655 = vpop.f32.mrb[0].mxu0
  %v8656 = vadd.f32 0.0, %v8655
  %v8657 = vpop.f32.mrb[0].mxu0
  %8658 = vmatprep.mubr.bf16.mxu0 0
  %8659 = vmatmul.mubr.bf16.gmra.mrb[0].mxu0 %v8433
  %v8660 = vpop.f32.mrb[0].mxu0
  %v8661 = vadd.f32 0.0, %v8660
  %v8662 = vpop.f32.mrb[0].mxu0
  %v8663 = vpop.f32.mrb[0].mxu0
  %v8664 = vadd.f32 0.0, %v8663
  %v8665 = vpop.f32.mrb[0].mxu0
  %8666 = vmatprep.mubr.bf16.mxu0 0
  %8667 = vmatmul.mubr.bf16.gmra.mrb[0].mxu0 %v8436
  %v8668 = vpop.f32.mrb[0].mxu0
  %v8669 = vadd.f32 0.0, %v8668
  %v8670 = vpop.f32.mrb[0].mxu0
  %v8671 = vpop.f32.mrb[0].mxu0
  %v8672 = vadd.f32 0.0, %v8671
  %v8673 = vpop.f32.mrb[0].mxu0
  %8674 = vmatprep.mubr.bf16.mxu0 0
  %8675 = vmatmul.mubr.bf16.gmra.mrb[0].mxu0 %v8439
  %v8676 = vpop.f32.mrb[0].mxu0
  %v8677 = vadd.f32 0.0, %v8676
  %v8678 = vpop.f32.mrb[0].mxu0
  %v8679 = vpop.f32.mrb[0].mxu0
  %v8680 = vadd.f32 0.0, %v8679
  %v8681 = vpop.f32.mrb[0].mxu0
  %8682 = vmatprep.mubr.bf16.mxu0 0
  %8683 = vmatmul.mubr.bf16.gmra.mrb[0].mxu0 %v8442
  %v8684 = vpop.f32.mrb[0].mxu0
  %v8685 = vadd.f32 0.0, %v8684
  %v8686 = vpop.f32.mrb[0].mxu0
  %v8687 = vpop.f32.mrb[0].mxu0
  %v8688 = vadd.f32 0.0, %v8687
  %v8689 = vpop.f32.mrb[0].mxu0
  %8690 = vmatprep.mubr.bf16.mxu0 0
  %8691 = vmatmul.mubr.bf16.gmra.mrb[0].mxu0 %v8445
  %v8692 = vpop.f32.mrb[0].mxu0
  %v8693 = vadd.f32 0.0, %v8692
  %v8694 = vpop.f32.mrb[0].mxu0
  %v8695 = vpop.f32.mrb[0].mxu0
  %v8696 = vadd.f32 0.0, %v8695
  %v8697 = vpop.f32.mrb[0].mxu0
  %8698 = vmatprep.mubr.bf16.mxu0 0
  %8699 = vmatmul.mubr.bf16.gmra.mrb[0].mxu0 %v8448
  %v8700 = vpop.f32.mrb[0].mxu0
  %v8701 = vadd.f32 0.0, %v8700
  %v8702 = vpop.f32.mrb[0].mxu0
  %v8703 = vpop.f32.mrb[0].mxu0
  %v8704 = vadd.f32 0.0, %v8703
  %v8705 = vpop.f32.mrb[0].mxu0
  %8706 = vmatprep.mubr.bf16.mxu0 0
  %8707 = vmatmul.mubr.bf16.gmra.mrb[0].mxu0 %v8451
  %v8708 = vpop.f32.mrb[0].mxu0
  %v8709 = vadd.f32 0.0, %v8708
  %v8710 = vpop.f32.mrb[0].mxu0
  %v8711 = vpop.f32.mrb[0].mxu0
  %v8712 = vadd.f32 0.0, %v8711
  %v8713 = vpop.f32.mrb[0].mxu0
  %8714 = vmatprep.mubr.bf16.mxu0 0
  %8715 = vmatmul.mubr.bf16.gmra.mrb[0].mxu0 %v8454
  %v8716 = vpop.f32.mrb[0].mxu0
  %v8717 = vadd.f32 0.0, %v8716
  %v8718 = vpop.f32.mrb[0].mxu0
  %v8719 = vpop.f32.mrb[0].mxu0
  %v8720 = vadd.f32 0.0, %v8719
  %v8721 = vpop.f32.mrb[0].mxu0
  %8722 = vmatprep.mubr.bf16.mxu0 0
  %8723 = vmatmul.mubr.bf16.gmra.mrb[0].mxu0 %v8457
  %v8724 = vpop.f32.mrb[0].mxu0
  %v8725 = vadd.f32 0.0, %v8724
  %v8726 = vpop.f32.mrb[0].mxu0
  %v8727 = vpop.f32.mrb[0].mxu0
  %v8728 = vadd.f32 0.0, %v8727
  %v8729 = vpop.f32.mrb[0].mxu0
  %8730 = vmatprep.mubr.bf16.mxu0 0
  %8731 = vmatmul.mubr.bf16.gmra.mrb[0].mxu0 %v8460
  %v8732 = vpop.f32.mrb[0].mxu0
  %v8733 = vadd.f32 0.0, %v8732
  %v8734 = vpop.f32.mrb[0].mxu0
  %v8735 = vpop.f32.mrb[0].mxu0
  %v8736 = vadd.f32 0.0, %v8735
  %v8737 = vpop.f32.mrb[0].mxu0
  %8738 = vmatprep.mubr.bf16.mxu0 0
  %8739 = vmatmul.mubr.bf16.gmra.mrb[0].mxu0 %v8463
  %v8740 = vpop.f32.mrb[0].mxu0
  %v8741 = vadd.f32 0.0, %v8740
  %v8742 = vpop.f32.mrb[0].mxu0
  %v8743 = vpop.f32.mrb[0].mxu0
  %v8744 = vadd.f32 0.0, %v8743
  %v8745 = vpop.f32.mrb[0].mxu0
  %8746 = vmatprep.mubr.bf16.mxu0 0
  %8747 = vmatmul.mubr.bf16.gmra.mrb[0].mxu0 %v8466
  %v8748 = vpop.f32.mrb[0].mxu0
  %v8749 = vadd.f32 0.0, %v8748
  %v8750 = vpop.f32.mrb[0].mxu0
  %v8751 = vpop.f32.mrb[0].mxu0
  %v8752 = vadd.f32 0.0, %v8751
  %v8753 = vpop.f32.mrb[0].mxu0
  %8754 = vmatprep.mubr.bf16.mxu0 0
  %8755 = vmatmul.mubr.bf16.gmra.mrb[0].mxu0 %v8469
  %v8756 = vpop.f32.mrb[0].mxu0
  %v8757 = vadd.f32 0.0, %v8756
  %v8758 = vpop.f32.mrb[0].mxu0
  %v8759 = vpop.f32.mrb[0].mxu0
  %v8760 = vadd.f32 0.0, %v8759
  %v8761 = vpop.f32.mrb[0].mxu0
  %8762 = vdwg.mxu0
  %v8763 = vadd.f32 %v7861, %v8509
  %v8764 = vadd.f32 %v7862, %v8512
  %v8765 = vadd.f32 %v7863, %v8517
  %v8766 = vadd.f32 %v7864, %v8520
  %v8767 = vadd.f32 %v7865, %v8525
  %v8768 = vadd.f32 %v7866, %v8528
  %v8769 = vadd.f32 %v7867, %v8533
  %v8770 = vadd.f32 %v7868, %v8536
  %v8771 = vadd.f32 %v7869, %v8541
  %v8772 = vadd.f32 %v7870, %v8544
  %v8773 = vadd.f32 %v7871, %v8549
  %v8774 = vadd.f32 %v7872, %v8552
  %v8775 = vadd.f32 %v7873, %v8557
  %v8776 = vadd.f32 %v7874, %v8560
  %v8777 = vadd.f32 %v7875, %v8565
  %v8778 = vadd.f32 %v7876, %v8568
  %v8779 = vadd.f32 %v7877, %v8573
  %v8780 = vadd.f32 %v7878, %v8576
  %v8781 = vadd.f32 %v7879, %v8581
  %v8782 = vadd.f32 %v7880, %v8584
  %v8783 = vadd.f32 %v7881, %v8589
  %v8784 = vadd.f32 %v7882, %v8592
  %v8785 = vadd.f32 %v7883, %v8597
  %v8786 = vadd.f32 %v7884, %v8600
  %v8787 = vadd.f32 %v7885, %v8605
  %v8788 = vadd.f32 %v7886, %v8608
  %v8789 = vadd.f32 %v7887, %v8613
  %v8790 = vadd.f32 %v7888, %v8616
  %v8791 = vadd.f32 %v7889, %v8621
  %v8792 = vadd.f32 %v7890, %v8624
  %v8793 = vadd.f32 %v7891, %v8629
  %v8794 = vadd.f32 %v7892, %v8632
  %v8795 = vadd.f32 %v7893, %v8637
  %v8796 = vadd.f32 %v7894, %v8640
  %v8797 = vadd.f32 %v7895, %v8645
  %v8798 = vadd.f32 %v7896, %v8648
  %v8799 = vadd.f32 %v7897, %v8653
  %v8800 = vadd.f32 %v7898, %v8656
  %v8801 = vadd.f32 %v7899, %v8661
  %v8802 = vadd.f32 %v7900, %v8664
  %v8803 = vadd.f32 %v7901, %v8669
  %v8804 = vadd.f32 %v7902, %v8672
  %v8805 = vadd.f32 %v7903, %v8677
  %v8806 = vadd.f32 %v7904, %v8680
  %v8807 = vadd.f32 %v7905, %v8685
  %v8808 = vadd.f32 %v7906, %v8688
  %v8809 = vadd.f32 %v7907, %v8693
  %v8810 = vadd.f32 %v7908, %v8696
  %v8811 = vadd.f32 %v7909, %v8701
  %v8812 = vadd.f32 %v7910, %v8704
  %v8813 = vadd.f32 %v7911, %v8709
  %v8814 = vadd.f32 %v7912, %v8712
  %v8815 = vadd.f32 %v7913, %v8717
  %v8816 = vadd.f32 %v7914, %v8720
  %v8817 = vadd.f32 %v7915, %v8725
  %v8818 = vadd.f32 %v7916, %v8728
  %v8819 = vadd.f32 %v7917, %v8733
  %v8820 = vadd.f32 %v7918, %v8736
  %v8821 = vadd.f32 %v7919, %v8741
  %v8822 = vadd.f32 %v7920, %v8744
  %v8823 = vadd.f32 %v7921, %v8749
  %v8824 = vadd.f32 %v7922, %v8752
  %v8825 = vadd.f32 %v7923, %v8757
  %v8826 = vadd.f32 %v7924, %v8760
  %v8827 = vpack.c.bf16 %v8764, %v8763
  %v8828 = vpack.c.bf16 %v8766, %v8765
  %v8829 = vpack.c.bf16 %v8768, %v8767
  %v8830 = vpack.c.bf16 %v8770, %v8769
  %v8831 = vpack.c.bf16 %v8772, %v8771
  %v8832 = vpack.c.bf16 %v8774, %v8773
  %v8833 = vpack.c.bf16 %v8776, %v8775
  %v8834 = vpack.c.bf16 %v8778, %v8777
  %v8835 = vpack.c.bf16 %v8780, %v8779
  %v8836 = vpack.c.bf16 %v8782, %v8781
  %v8837 = vpack.c.bf16 %v8784, %v8783
  %v8838 = vpack.c.bf16 %v8786, %v8785
  %v8839 = vpack.c.bf16 %v8788, %v8787
  %v8840 = vpack.c.bf16 %v8790, %v8789
  %v8841 = vpack.c.bf16 %v8792, %v8791
  %v8842 = vpack.c.bf16 %v8794, %v8793
  %v8843 = vpack.c.bf16 %v8796, %v8795
  %v8844 = vpack.c.bf16 %v8798, %v8797
  %v8845 = vpack.c.bf16 %v8800, %v8799
  %v8846 = vpack.c.bf16 %v8802, %v8801
  %v8847 = vpack.c.bf16 %v8804, %v8803
  %v8848 = vpack.c.bf16 %v8806, %v8805
  %v8849 = vpack.c.bf16 %v8808, %v8807
  %v8850 = vpack.c.bf16 %v8810, %v8809
  %v8851 = vpack.c.bf16 %v8812, %v8811
  %v8852 = vpack.c.bf16 %v8814, %v8813
  %v8853 = vpack.c.bf16 %v8816, %v8815
  %v8854 = vpack.c.bf16 %v8818, %v8817
  %v8855 = vpack.c.bf16 %v8820, %v8819
  %v8856 = vpack.c.bf16 %v8822, %v8821
  %v8857 = vpack.c.bf16 %v8824, %v8823
  %v8858 = vpack.c.bf16 %v8826, %v8825
  %v8891 = vunpack.c.l.b16 %v8827
  %v8892 = vunpack.c.h.b16 %v8827
  %v8893 = vunpack.c.l.b16 %v8828
  %v8894 = vunpack.c.h.b16 %v8828
  %v8895 = vunpack.c.l.b16 %v8829
  %v8896 = vunpack.c.h.b16 %v8829
  %v8897 = vunpack.c.l.b16 %v8830
  %v8898 = vunpack.c.h.b16 %v8830
  %v8899 = vunpack.c.l.b16 %v8831
  %v8900 = vunpack.c.h.b16 %v8831
  %v8901 = vunpack.c.l.b16 %v8832
  %v8902 = vunpack.c.h.b16 %v8832
  %v8903 = vunpack.c.l.b16 %v8833
  %v8904 = vunpack.c.h.b16 %v8833
  %v8905 = vunpack.c.l.b16 %v8834
  %v8906 = vunpack.c.h.b16 %v8834
  %v8907 = vunpack.c.l.b16 %v8835
  %v8908 = vunpack.c.h.b16 %v8835
  %v8909 = vunpack.c.l.b16 %v8836
  %v8910 = vunpack.c.h.b16 %v8836
  %v8911 = vunpack.c.l.b16 %v8837
  %v8912 = vunpack.c.h.b16 %v8837
  %v8913 = vunpack.c.l.b16 %v8838
  %v8914 = vunpack.c.h.b16 %v8838
  %v8915 = vunpack.c.l.b16 %v8839
  %v8916 = vunpack.c.h.b16 %v8839
  %v8917 = vunpack.c.l.b16 %v8840
  %v8918 = vunpack.c.h.b16 %v8840
  %v8919 = vunpack.c.l.b16 %v8841
  %v8920 = vunpack.c.h.b16 %v8841
  %v8921 = vunpack.c.l.b16 %v8842
  %v8922 = vunpack.c.h.b16 %v8842
  %v8923 = vunpack.c.l.b16 %v8843
  %v8924 = vunpack.c.h.b16 %v8843
  %v8925 = vunpack.c.l.b16 %v8844
  %v8926 = vunpack.c.h.b16 %v8844
  %v8927 = vunpack.c.l.b16 %v8845
  %v8928 = vunpack.c.h.b16 %v8845
  %v8929 = vunpack.c.l.b16 %v8846
  %v8930 = vunpack.c.h.b16 %v8846
  %v8931 = vunpack.c.l.b16 %v8847
  %v8932 = vunpack.c.h.b16 %v8847
  %v8933 = vunpack.c.l.b16 %v8848
  %v8934 = vunpack.c.h.b16 %v8848
  %v8935 = vunpack.c.l.b16 %v8849
  %v8936 = vunpack.c.h.b16 %v8849
  %v8937 = vunpack.c.l.b16 %v8850
  %v8938 = vunpack.c.h.b16 %v8850
  %v8939 = vunpack.c.l.b16 %v8851
  %v8940 = vunpack.c.h.b16 %v8851
  %v8941 = vunpack.c.l.b16 %v8852
  %v8942 = vunpack.c.h.b16 %v8852
  %v8943 = vunpack.c.l.b16 %v8853
  %v8944 = vunpack.c.h.b16 %v8853
  %v8945 = vunpack.c.l.b16 %v8854
  %v8946 = vunpack.c.h.b16 %v8854
  %v8947 = vunpack.c.l.b16 %v8855
  %v8948 = vunpack.c.h.b16 %v8855
  %v8949 = vunpack.c.l.b16 %v8856
  %v8950 = vunpack.c.h.b16 %v8856
  %v8951 = vunpack.c.l.b16 %v8857
  %v8952 = vunpack.c.h.b16 %v8857
  %v8953 = vunpack.c.l.b16 %v8858
  %v8954 = vunpack.c.h.b16 %v8858
  %v8955 = vpack.c.b16 %v8891, %v8891
  %v8956 = vpack.c.b16 %v8892, %v8892
  %v8957 = vpack.c.b16 %v8893, %v8893
  %v8958 = vpack.c.b16 %v8894, %v8894
  %v8959 = vpack.c.b16 %v8895, %v8895
  %v8960 = vpack.c.b16 %v8896, %v8896
  %v8961 = vpack.c.b16 %v8897, %v8897
  %v8962 = vpack.c.b16 %v8898, %v8898
  %v8963 = vpack.c.b16 %v8899, %v8899
  %v8964 = vpack.c.b16 %v8900, %v8900
  %v8965 = vpack.c.b16 %v8901, %v8901
  %v8966 = vpack.c.b16 %v8902, %v8902
  %v8967 = vpack.c.b16 %v8903, %v8903
  %v8968 = vpack.c.b16 %v8904, %v8904
  %v8969 = vpack.c.b16 %v8905, %v8905
  %v8970 = vpack.c.b16 %v8906, %v8906
  %v8971 = vpack.c.b16 %v8907, %v8907
  %v8972 = vpack.c.b16 %v8908, %v8908
  %v8973 = vpack.c.b16 %v8909, %v8909
  %v8974 = vpack.c.b16 %v8910, %v8910
  %v8975 = vpack.c.b16 %v8911, %v8911
  %v8976 = vpack.c.b16 %v8912, %v8912
  %v8977 = vpack.c.b16 %v8913, %v8913
  %v8978 = vpack.c.b16 %v8914, %v8914
  %v8979 = vpack.c.b16 %v8915, %v8915
  %v8980 = vpack.c.b16 %v8916, %v8916
  %v8981 = vpack.c.b16 %v8917, %v8917
  %v8982 = vpack.c.b16 %v8918, %v8918
  %v8983 = vpack.c.b16 %v8919, %v8919
  %v8984 = vpack.c.b16 %v8920, %v8920
  %v8985 = vpack.c.b16 %v8921, %v8921
  %v8986 = vpack.c.b16 %v8922, %v8922
  %v8987 = vpack.c.b16 %v8923, %v8923
  %v8988 = vpack.c.b16 %v8924, %v8924
  %v8989 = vpack.c.b16 %v8925, %v8925
  %v8990 = vpack.c.b16 %v8926, %v8926
  %v8991 = vpack.c.b16 %v8927, %v8927
  %v8992 = vpack.c.b16 %v8928, %v8928
  %v8993 = vpack.c.b16 %v8929, %v8929
  %v8994 = vpack.c.b16 %v8930, %v8930
  %v8995 = vpack.c.b16 %v8931, %v8931
  %v8996 = vpack.c.b16 %v8932, %v8932
  %v8997 = vpack.c.b16 %v8933, %v8933
  %v8998 = vpack.c.b16 %v8934, %v8934
  %v8999 = vpack.c.b16 %v8935, %v8935
  %v9000 = vpack.c.b16 %v8936, %v8936
  %v9001 = vpack.c.b16 %v8937, %v8937
  %v9002 = vpack.c.b16 %v8938, %v8938
  %v9003 = vpack.c.b16 %v8939, %v8939
  %v9004 = vpack.c.b16 %v8940, %v8940
  %v9005 = vpack.c.b16 %v8941, %v8941
  %v9006 = vpack.c.b16 %v8942, %v8942
  %v9007 = vpack.c.b16 %v8943, %v8943
  %v9008 = vpack.c.b16 %v8944, %v8944
  %v9009 = vpack.c.b16 %v8945, %v8945
  %v9010 = vpack.c.b16 %v8946, %v8946
  %v9011 = vpack.c.b16 %v8947, %v8947
  %v9012 = vpack.c.b16 %v8948, %v8948
  %v9013 = vpack.c.b16 %v8949, %v8949
  %v9014 = vpack.c.b16 %v8950, %v8950
  %v9015 = vpack.c.b16 %v8951, %v8951
  %v9016 = vpack.c.b16 %v8952, %v8952
  %v9017 = vpack.c.b16 %v8953, %v8953
  %v9018 = vpack.c.b16 %v8954, %v8954
  %9083 = vst [vmem:[%s50] sm:$0xf] %v8955
  %9084 = vst [vmem:[%s50 + $0x4] sm:$0xf] %v8956
  %9085 = vst [vmem:[%s50 + $0x8] sm:$0xf] %v8957
  %9086 = vst [vmem:[%s50 + $0xc] sm:$0xf] %v8958
  %9087 = vst [vmem:[%s50 + $0x10] sm:$0xf] %v8959
  %9088 = vst [vmem:[%s50 + $0x14] sm:$0xf] %v8960
  %9089 = vst [vmem:[%s50 + $0x18] sm:$0xf] %v8961
  %9090 = vst [vmem:[%s50 + $0x1c] sm:$0xf] %v8962
  %9091 = vst [vmem:[%s50 + $0x20] sm:$0xf] %v8963
  %9092 = vst [vmem:[%s50 + $0x24] sm:$0xf] %v8964
  %9093 = vst [vmem:[%s50 + $0x28] sm:$0xf] %v8965
  %9094 = vst [vmem:[%s50 + $0x2c] sm:$0xf] %v8966
  %9095 = vst [vmem:[%s50 + $0x30] sm:$0xf] %v8967
  %9096 = vst [vmem:[%s50 + $0x34] sm:$0xf] %v8968
  %9097 = vst [vmem:[%s50 + $0x38] sm:$0xf] %v8969
  %9098 = vst [vmem:[%s50 + $0x3c] sm:$0xf] %v8970
  %9099 = vst [vmem:[%s50 + $0x40] sm:$0xf] %v8971
  %9100 = vst [vmem:[%s50 + $0x44] sm:$0xf] %v8972
  %9101 = vst [vmem:[%s50 + $0x48] sm:$0xf] %v8973
  %9102 = vst [vmem:[%s50 + $0x4c] sm:$0xf] %v8974
  %9103 = vst [vmem:[%s50 + $0x50] sm:$0xf] %v8975
  %9104 = vst [vmem:[%s50 + $0x54] sm:$0xf] %v8976
  %9105 = vst [vmem:[%s50 + $0x58] sm:$0xf] %v8977
  %9106 = vst [vmem:[%s50 + $0x5c] sm:$0xf] %v8978
  %9107 = vst [vmem:[%s50 + $0x60] sm:$0xf] %v8979
  %9108 = vst [vmem:[%s50 + $0x64] sm:$0xf] %v8980
  %9109 = vst [vmem:[%s50 + $0x68] sm:$0xf] %v8981
  %9110 = vst [vmem:[%s50 + $0x6c] sm:$0xf] %v8982
  %9111 = vst [vmem:[%s50 + $0x70] sm:$0xf] %v8983
  %9112 = vst [vmem:[%s50 + $0x74] sm:$0xf] %v8984
  %9113 = vst [vmem:[%s50 + $0x78] sm:$0xf] %v8985
  %9114 = vst [vmem:[%s50 + $0x7c] sm:$0xf] %v8986
  %9115 = vst [vmem:[%s50 + $0x80] sm:$0xf] %v8987
  %9116 = vst [vmem:[%s50 + $0x84] sm:$0xf] %v8988
  %9117 = vst [vmem:[%s50 + $0x88] sm:$0xf] %v8989
  %9118 = vst [vmem:[%s50 + $0x8c] sm:$0xf] %v8990
  %9119 = vst [vmem:[%s50 + $0x90] sm:$0xf] %v8991
  %9120 = vst [vmem:[%s50 + $0x94] sm:$0xf] %v8992
  %9121 = vst [vmem:[%s50 + $0x98] sm:$0xf] %v8993
  %9122 = vst [vmem:[%s50 + $0x9c] sm:$0xf] %v8994
  %9123 = vst [vmem:[%s50 + $0xa0] sm:$0xf] %v8995
  %9124 = vst [vmem:[%s50 + $0xa4] sm:$0xf] %v8996
  %9125 = vst [vmem:[%s50 + $0xa8] sm:$0xf] %v8997
  %9126 = vst [vmem:[%s50 + $0xac] sm:$0xf] %v8998
  %9127 = vst [vmem:[%s50 + $0xb0] sm:$0xf] %v8999
  %9128 = vst [vmem:[%s50 + $0xb4] sm:$0xf] %v9000
  %9129 = vst [vmem:[%s50 + $0xb8] sm:$0xf] %v9001
  %9130 = vst [vmem:[%s50 + $0xbc] sm:$0xf] %v9002
  %9131 = vst [vmem:[%s50 + $0xc0] sm:$0xf] %v9003
  %9132 = vst [vmem:[%s50 + $0xc4] sm:$0xf] %v9004
  %9133 = vst [vmem:[%s50 + $0xc8] sm:$0xf] %v9005
  %9134 = vst [vmem:[%s50 + $0xcc] sm:$0xf] %v9006
  %9135 = vst [vmem:[%s50 + $0xd0] sm:$0xf] %v9007
  %9136 = vst [vmem:[%s50 + $0xd4] sm:$0xf] %v9008
  %9137 = vst [vmem:[%s50 + $0xd8] sm:$0xf] %v9009
  %9138 = vst [vmem:[%s50 + $0xdc] sm:$0xf] %v9010
  %9139 = vst [vmem:[%s50 + $0xe0] sm:$0xf] %v9011
  %9140 = vst [vmem:[%s50 + $0xe4] sm:$0xf] %v9012
  %9141 = vst [vmem:[%s50 + $0xe8] sm:$0xf] %v9013
  %9142 = vst [vmem:[%s50 + $0xec] sm:$0xf] %v9014
  %9143 = vst [vmem:[%s50 + $0xf0] sm:$0xf] %v9015
  %9144 = vst [vmem:[%s50 + $0xf4] sm:$0xf] %v9016
  %9145 = vst [vmem:[%s50 + $0xf8] sm:$0xf] %v9017
  %9146 = vst [vmem:[%s50 + $0xfc] sm:$0xf] %v9018
  %v9147 = vld [vmem:[%s3] sm:$0x1]
  %v9148 = vadd.f32 %v8763, %v8764
  %v9149 = vadd.f32 %v9148, %v8765
  %v9150 = vadd.f32 %v9149, %v8766
  %v9151 = vadd.f32 %v9150, %v8767
  %v9152 = vadd.f32 %v9151, %v8768
  %v9153 = vadd.f32 %v9152, %v8769
  %v9154 = vadd.f32 %v9153, %v8770
  %v9155 = vadd.f32 %v9154, %v8771
  %v9156 = vadd.f32 %v9155, %v8772
  %v9157 = vadd.f32 %v9156, %v8773
  %v9158 = vadd.f32 %v9157, %v8774
  %v9159 = vadd.f32 %v9158, %v8775
  %v9160 = vadd.f32 %v9159, %v8776
  %v9161 = vadd.f32 %v9160, %v8777
  %v9162 = vadd.f32 %v9161, %v8778
  %v9163 = vadd.f32 %v9162, %v8779
  %v9164 = vadd.f32 %v9163, %v8780
  %v9165 = vadd.f32 %v9164, %v8781
  %v9166 = vadd.f32 %v9165, %v8782
  %v9167 = vadd.f32 %v9166, %v8783
  %v9168 = vadd.f32 %v9167, %v8784
  %v9169 = vadd.f32 %v9168, %v8785
  %v9170 = vadd.f32 %v9169, %v8786
  %v9171 = vadd.f32 %v9170, %v8787
  %v9172 = vadd.f32 %v9171, %v8788
  %v9173 = vadd.f32 %v9172, %v8789
  %v9174 = vadd.f32 %v9173, %v8790
  %v9175 = vadd.f32 %v9174, %v8791
  %v9176 = vadd.f32 %v9175, %v8792
  %v9177 = vadd.f32 %v9176, %v8793
  %v9178 = vadd.f32 %v9177, %v8794
  %v9179 = vadd.f32 %v9178, %v8795
  %v9180 = vadd.f32 %v9179, %v8796
  %v9181 = vadd.f32 %v9180, %v8797
  %v9182 = vadd.f32 %v9181, %v8798
  %v9183 = vadd.f32 %v9182, %v8799
  %v9184 = vadd.f32 %v9183, %v8800
  %v9185 = vadd.f32 %v9184, %v8801
  %v9186 = vadd.f32 %v9185, %v8802
  %v9187 = vadd.f32 %v9186, %v8803
  %v9188 = vadd.f32 %v9187, %v8804
  %v9189 = vadd.f32 %v9188, %v8805
  %v9190 = vadd.f32 %v9189, %v8806
  %v9191 = vadd.f32 %v9190, %v8807
  %v9192 = vadd.f32 %v9191, %v8808
  %v9193 = vadd.f32 %v9192, %v8809
  %v9194 = vadd.f32 %v9193, %v8810
  %v9195 = vadd.f32 %v9194, %v8811
  %v9196 = vadd.f32 %v9195, %v8812
  %v9197 = vadd.f32 %v9196, %v8813
  %v9198 = vadd.f32 %v9197, %v8814
  %v9199 = vadd.f32 %v9198, %v8815
  %v9200 = vadd.f32 %v9199, %v8816
  %v9201 = vadd.f32 %v9200, %v8817
  %v9202 = vadd.f32 %v9201, %v8818
  %v9203 = vadd.f32 %v9202, %v8819
  %v9204 = vadd.f32 %v9203, %v8820
  %v9205 = vadd.f32 %v9204, %v8821
  %v9206 = vadd.f32 %v9205, %v8822
  %v9207 = vadd.f32 %v9206, %v8823
  %v9208 = vadd.f32 %v9207, %v8824
  %v9209 = vadd.f32 %v9208, %v8825
  %v9210 = vadd.f32 %v9209, %v8826
  %v9211 = vrot.slane %v9210, 4
  %v9212 = vadd.f32 %v9210, %v9211
  %v9213 = vrot.slane %v9212, 2
  %v9214 = vadd.f32 %v9212, %v9213
  %v9215 = vrot.slane %v9214, 1
  %v9216 = vadd.f32 %v9214, %v9215
  %v9217 = vadd.f32 %v9147, %v9216
  %9218 = vst [vmem:[%s3] sm:$0x1] %v9217
  %v9219 = vld [vmem:[%s4] sm:$0x1]
  %v9220 = vmul.f32 %v8763, %v8763
  %v9221 = vmul.f32 %v8764, %v8764
  %v9222 = vmul.f32 %v8765, %v8765
  %v9223 = vmul.f32 %v8766, %v8766
  %v9224 = vmul.f32 %v8767, %v8767
  %v9225 = vmul.f32 %v8768, %v8768
  %v9226 = vmul.f32 %v8769, %v8769
  %v9227 = vmul.f32 %v8770, %v8770
  %v9228 = vmul.f32 %v8771, %v8771
  %v9229 = vmul.f32 %v8772, %v8772
  %v9230 = vmul.f32 %v8773, %v8773
  %v9231 = vmul.f32 %v8774, %v8774
  %v9232 = vmul.f32 %v8775, %v8775
  %v9233 = vmul.f32 %v8776, %v8776
  %v9234 = vmul.f32 %v8777, %v8777
  %v9235 = vmul.f32 %v8778, %v8778
  %v9236 = vmul.f32 %v8779, %v8779
  %v9237 = vmul.f32 %v8780, %v8780
  %v9238 = vmul.f32 %v8781, %v8781
  %v9239 = vmul.f32 %v8782, %v8782
  %v9240 = vmul.f32 %v8783, %v8783
  %v9241 = vmul.f32 %v8784, %v8784
  %v9242 = vmul.f32 %v8785, %v8785
  %v9243 = vmul.f32 %v8786, %v8786
  %v9244 = vmul.f32 %v8787, %v8787
  %v9245 = vmul.f32 %v8788, %v8788
  %v9246 = vmul.f32 %v8789, %v8789
  %v9247 = vmul.f32 %v8790, %v8790
  %v9248 = vmul.f32 %v8791, %v8791
  %v9249 = vmul.f32 %v8792, %v8792
  %v9250 = vmul.f32 %v8793, %v8793
  %v9251 = vmul.f32 %v8794, %v8794
  %v9252 = vmul.f32 %v8795, %v8795
  %v9253 = vmul.f32 %v8796, %v8796
  %v9254 = vmul.f32 %v8797, %v8797
  %v9255 = vmul.f32 %v8798, %v8798
  %v9256 = vmul.f32 %v8799, %v8799
  %v9257 = vmul.f32 %v8800, %v8800
  %v9258 = vmul.f32 %v8801, %v8801
  %v9259 = vmul.f32 %v8802, %v8802
  %v9260 = vmul.f32 %v8803, %v8803
  %v9261 = vmul.f32 %v8804, %v8804
  %v9262 = vmul.f32 %v8805, %v8805
  %v9263 = vmul.f32 %v8806, %v8806
  %v9264 = vmul.f32 %v8807, %v8807
  %v9265 = vmul.f32 %v8808, %v8808
  %v9266 = vmul.f32 %v8809, %v8809
  %v9267 = vmul.f32 %v8810, %v8810
  %v9268 = vmul.f32 %v8811, %v8811
  %v9269 = vmul.f32 %v8812, %v8812
  %v9270 = vmul.f32 %v8813, %v8813
  %v9271 = vmul.f32 %v8814, %v8814
  %v9272 = vmul.f32 %v8815, %v8815
  %v9273 = vmul.f32 %v8816, %v8816
  %v9274 = vmul.f32 %v8817, %v8817
  %v9275 = vmul.f32 %v8818, %v8818
  %v9276 = vmul.f32 %v8819, %v8819
  %v9277 = vmul.f32 %v8820, %v8820
  %v9278 = vmul.f32 %v8821, %v8821
  %v9279 = vmul.f32 %v8822, %v8822
  %v9280 = vmul.f32 %v8823, %v8823
  %v9281 = vmul.f32 %v8824, %v8824
  %v9282 = vmul.f32 %v8825, %v8825
  %v9283 = vmul.f32 %v8826, %v8826
  %v9284 = vadd.f32 %v9220, %v9221
  %v9285 = vadd.f32 %v9284, %v9222
  %v9286 = vadd.f32 %v9285, %v9223
  %v9287 = vadd.f32 %v9286, %v9224
  %v9288 = vadd.f32 %v9287, %v9225
  %v9289 = vadd.f32 %v9288, %v9226
  %v9290 = vadd.f32 %v9289, %v9227
  %v9291 = vadd.f32 %v9290, %v9228
  %v9292 = vadd.f32 %v9291, %v9229
  %v9293 = vadd.f32 %v9292, %v9230
  %v9294 = vadd.f32 %v9293, %v9231
  %v9295 = vadd.f32 %v9294, %v9232
  %v9296 = vadd.f32 %v9295, %v9233
  %v9297 = vadd.f32 %v9296, %v9234
  %v9298 = vadd.f32 %v9297, %v9235
  %v9299 = vadd.f32 %v9298, %v9236
  %v9300 = vadd.f32 %v9299, %v9237
  %v9301 = vadd.f32 %v9300, %v9238
  %v9302 = vadd.f32 %v9301, %v9239
  %v9303 = vadd.f32 %v9302, %v9240
  %v9304 = vadd.f32 %v9303, %v9241
  %v9305 = vadd.f32 %v9304, %v9242
  %v9306 = vadd.f32 %v9305, %v9243
  %v9307 = vadd.f32 %v9306, %v9244
  %v9308 = vadd.f32 %v9307, %v9245
  %v9309 = vadd.f32 %v9308, %v9246
  %v9310 = vadd.f32 %v9309, %v9247
  %v9311 = vadd.f32 %v9310, %v9248
  %v9312 = vadd.f32 %v9311, %v9249
  %v9313 = vadd.f32 %v9312, %v9250
  %v9314 = vadd.f32 %v9313, %v9251
  %v9315 = vadd.f32 %v9314, %v9252
  %v9316 = vadd.f32 %v9315, %v9253
  %v9317 = vadd.f32 %v9316, %v9254
  %v9318 = vadd.f32 %v9317, %v9255
  %v9319 = vadd.f32 %v9318, %v9256
  %v9320 = vadd.f32 %v9319, %v9257
  %v9321 = vadd.f32 %v9320, %v9258
  %v9322 = vadd.f32 %v9321, %v9259
  %v9323 = vadd.f32 %v9322, %v9260
  %v9324 = vadd.f32 %v9323, %v9261
  %v9325 = vadd.f32 %v9324, %v9262
  %v9326 = vadd.f32 %v9325, %v9263
  %v9327 = vadd.f32 %v9326, %v9264
  %v9328 = vadd.f32 %v9327, %v9265
  %v9329 = vadd.f32 %v9328, %v9266
  %v9330 = vadd.f32 %v9329, %v9267
  %v9331 = vadd.f32 %v9330, %v9268
  %v9332 = vadd.f32 %v9331, %v9269
  %v9333 = vadd.f32 %v9332, %v9270
  %v9334 = vadd.f32 %v9333, %v9271
  %v9335 = vadd.f32 %v9334, %v9272
  %v9336 = vadd.f32 %v9335, %v9273
  %v9337 = vadd.f32 %v9336, %v9274
  %v9338 = vadd.f32 %v9337, %v9275
  %v9339 = vadd.f32 %v9338, %v9276
  %v9340 = vadd.f32 %v9339, %v9277
  %v9341 = vadd.f32 %v9340, %v9278
  %v9342 = vadd.f32 %v9341, %v9279
  %v9343 = vadd.f32 %v9342, %v9280
  %v9344 = vadd.f32 %v9343, %v9281
  %v9345 = vadd.f32 %v9344, %v9282
  %v9346 = vadd.f32 %v9345, %v9283
  %v9347 = vrot.slane %v9346, 4
  %v9348 = vadd.f32 %v9346, %v9347
  %v9349 = vrot.slane %v9348, 2
  %v9350 = vadd.f32 %v9348, %v9349
  %v9351 = vrot.slane %v9350, 1
  %v9352 = vadd.f32 %v9350, %v9351
  %v9353 = vadd.f32 %v9219, %v9352
  %9354 = vst [vmem:[%s4] sm:$0x1] %v9353
  %s9355 = sadd.s32 0, 0
  %s9356 = smul.u32 64, %s9355
  %p9357 = scmp.lt.s32.totalorder %s9356, 63
  %s9358 = scalar_select %p9357, %s9356, 63
  %s9359 = smul.addr %s9358, 4
  %s9360 = scalar_lea.vmem %s2, %s9359
  // Predicated region
  $region14: #{conv_bn_act.2} parent=0 // pred_check
    _
  $region15: #{conv_bn_act.2} parent=0 // pred_check_branch
    %9362 = sbr.rel (0) target = $region17
  $region16: #{conv_bn_act.2} parent=0 // pred_region
    %s9363 = sadd.s32 0, 0
    %s9364 = smul.u32 64, %s9363
  $region17: #{conv_bn_act.2} parent=0 // pred_fallthru
    _
  // Predicated region
  $region18: #{conv_bn_act.2} parent=0 // pred_check
    _
  $region19: #{conv_bn_act.2} parent=0 // pred_check_branch
    %9366 = sbr.rel (0) target = $region21
  $region20: #{conv_bn_act.2} parent=0 // pred_region
    _
  $region21: #{conv_bn_act.2} parent=0 // pred_fallthru
    _
  // Predicated region
  $region22: #{conv_bn_act.2} parent=0 // pred_check
    _
  $region23: #{conv_bn_act.2} parent=0 // pred_check_branch
    %9368 = sbr.rel (0) target = $region25
  $region24: #{conv_bn_act.2} parent=0 // pred_region
    _
  $region25: #{conv_bn_act.2} parent=0 // pred_fallthru
    _
  // Predicated region
  $region26: #{conv_bn_act.2} parent=0 // pred_check
    _
  $region27: #{conv_bn_act.2} parent=0 // pred_check_branch
    %9370 = sbr.rel (0) target = $region29
  $region28: #{conv_bn_act.2} parent=0 // pred_region
    %s9371 = sadd.s32 0, 0
    %s9372 = smul.u32 64, %s9371
    %p9373 = scmp.lt.s32.totalorder %s9372, 63
    %s9374 = scalar_select %p9373, %s9372, 63
    %s9375 = smul.addr %s9374, 4
    %s9376 = scalar_lea.vmem %s2, %s9375
  $region29: #{conv_bn_act.2} parent=0 // pred_fallthru
    _
  // Predicated region
  $region30: #{conv_bn_act.2} parent=0 // pred_check
    _
  $region31: #{conv_bn_act.2} parent=0 // pred_check_branch
    %9378 = sbr.rel (0) target = $region33
  $region32: #{conv_bn_act.2} parent=0 // pred_region
    _
  $region33: #{conv_bn_act.2} parent=0 // pred_fallthru
    _
  // Predicated region
  $region34: #{conv_bn_act.2} parent=0 // pred_check
    _
  $region35: #{conv_bn_act.2} parent=0 // pred_check_branch
    %9380 = sbr.rel (0) target = $region37
  $region36: #{conv_bn_act.2} parent=0 // pred_region
    _
  $region37: #{conv_bn_act.2} parent=0 // pred_fallthru
    _

</llo_original>
